<compile_context>
chip_gen: v7x
topology: tpu7x:2x2x1
jax: 0.10.0
libtpu: 0.0.40
codegen_flags: <defaults>
</compile_context>

<pallas_src>
import jax
import jax.numpy as jnp
from jax.experimental import pallas as pl
from jax.experimental.pallas import tpu as pltpu

CPAD = 128            # padded channel / lane width
K1 = 75               # conv1 im2col depth (3*5*5)
K2 = 25 * CPAD        # conv2 weight rows: 25 taps x padded input channels (3200)
FC1_OUT = 256
P1_ROWS = 196         # 14*14 pool-1 output positions
P1_PAD_ROWS = 208     # scratch rows (padded so shifted 140-row slices stay in-bounds)
CW_ROWS = 140         # conv2 "wide" map: 10 output rows x 14 (10 valid + 4 junk) cols


# ------------------------------ Pallas kernel ------------------------------

def _lenet_kernel(p1_ref, w1_ref, b1_ref, w2_ref, b2_ref,
                  fw1_ref, fb1_ref, fw2_ref, fb2_ref, fw3_ref, fb3_ref,
                  o_ref, p1s_scr):
    f32 = jnp.float32

    # ---- conv1 (im2col GEMM) + bias + ReLU; rows are corner-major (4 x 196) --
    c1 = jnp.dot(p1_ref[...], w1_ref[...], preferred_element_type=f32)
    c1 = jnp.maximum(c1 + b1_ref[...], 0.0)                        # (784, 128)

    # ---- 2x2 max-pool #1: max over the 4 contiguous corner blocks. ----------
    # Resulting row order is natural: row = h*14 + w  (h, w in [0,14)).
    p1s_scr[pl.ds(0, P1_ROWS), :] = jnp.maximum(
        jnp.maximum(c1[0:196], c1[196:392]),
        jnp.maximum(c1[392:588], c1[588:784]))
    # Zero the pad rows so the shifted conv2 slices never read garbage.
    p1s_scr[pl.ds(P1_ROWS, P1_PAD_ROWS - P1_ROWS), :] = jnp.zeros(
        (P1_PAD_ROWS - P1_ROWS, CPAD), f32)

    # ---- conv2 as 25 shifted GEMMs accumulated into a (140,128) wide map ----
    # Wide-map row k = oh*14 + ow_ext; columns ow_ext in [10,14) are junk and
    # are never consumed by pool #2.
    cw = None
    for i in range(5):                   # kernel row tap
        for j in range(5):               # kernel col tap
            lhs = p1s_scr[pl.ds(i * 14 + j, CW_ROWS), :]            # (140, 128)
            rhs = w2_ref[pl.ds((i * 5 + j) * CPAD, CPAD), :]        # (128, 128)
            part = jnp.dot(lhs, rhs, preferred_element_type=f32)
            cw = part if cw is None else cw + part
    cw = jnp.maximum(cw + b2_ref[...], 0.0)                         # (140, 128)

    # ---- 2x2 max-pool #2 + flatten; fcin lane order = (hp*5 + wp)*128 + c ---
    fc_parts = []
    for hp in range(5):
        base = 28 * hp
        v = jnp.maximum(cw[base:base + 14], cw[base + 14:base + 28])   # (14,128)
        for wp in range(5):
            fc_parts.append(jnp.maximum(v[2 * wp:2 * wp + 1, :],
                                        v[2 * wp + 1:2 * wp + 2, :]))  # (1,128)
    fcin = jnp.concatenate(fc_parts, axis=1)                           # (1, 3200)

    # ---- fc1 -> fc2 -> fc3 (no activations, matching the PyTorch module) ----
    y = jnp.dot(fcin, fw1_ref[...], preferred_element_type=f32) + fb1_ref[...]
    y = jnp.dot(y, fw2_ref[...], preferred_element_type=f32) + fb2_ref[...]
    y = jnp.dot(y, fw3_ref[...], preferred_element_type=f32) + fb3_ref[...]
    o_ref[...] = jnp.broadcast_to(y, (8, CPAD)).astype(o_ref.dtype)


# ------------------------------ JAX glue (prep) -----------------------------

def _build_conv1_patches(x):
    """x: (N,3,32,32) -> conv1 im2col patches, rows ordered pool-corner major.

    Per-image row layout: r = q*196 + h*14 + w, where q = 2a + b is the 2x2
    pool corner of conv1 output position (2h+a, 2w+b).
    Column layout: (i*5 + j)*3 + c, zero-padded 75 -> 128.
    """
    n = x.shape[0]
    xh = jnp.transpose(x, (0, 2, 3, 1))                               # (N,32,32,3)
    t = jnp.concatenate([xh[:, i:i + 28, j:j + 28, :]
                         for i in range(5) for j in range(5)], axis=-1)  # (N,28,28,75)
    t = t.reshape(n, 14, 2, 14, 2, K1)       # [n, h, a, w, b, K]
    t = t.transpose(0, 2, 4, 1, 3, 5)        # [n, a, b, h, w, K]
    t = t.reshape(n * 784, K1)
    return jnp.pad(t, ((0, 0), (0, CPAD - K1)))


def _prepare_params(p):
    """Reorder / zero-pad all weights once so every kernel operand is lane-dense."""
    f32 = jnp.float32
    w1 = jnp.transpose(p["conv1_w"].astype(f32), (2, 3, 1, 0)).reshape(K1, 6)
    w1m = jnp.zeros((CPAD, CPAD), f32).at[:K1, :6].set(w1)
    b1 = jnp.zeros((1, CPAD), f32).at[0, :6].set(p["conv1_b"].astype(f32))

    w2 = jnp.transpose(p["conv2_w"].astype(f32), (2, 3, 1, 0))        # (5,5,6,16)
    w2m = jnp.zeros((5, 5, CPAD, CPAD), f32).at[:, :, :6, :16].set(w2).reshape(K2, CPAD)
    b2 = jnp.zeros((1, CPAD), f32).at[0, :16].set(p["conv2_b"].astype(f32))

    # fc1 columns permuted from torch's NCHW .view(400) order to (hp, wp, c_pad).
    fw1 = jnp.transpose(p["fc1_w"].astype(f32).reshape(256, 16, 5, 5), (2, 3, 1, 0))
    fw1 = jnp.zeros((5, 5, CPAD, FC1_OUT), f32).at[:, :, :16, :].set(fw1).reshape(K2, FC1_OUT)
    fb1 = p["fc1_b"].astype(f32).reshape(1, FC1_OUT)

    fw2 = jnp.zeros((FC1_OUT, CPAD), f32).at[:, :64].set(p["fc2_w"].astype(f32).T)
    fb2 = jnp.zeros((1, CPAD), f32).at[0, :64].set(p["fc2_b"].astype(f32))

    fw3 = jnp.zeros((CPAD, CPAD), f32).at[:64, :10].set(p["fc3_w"].astype(f32).T)
    fb3 = jnp.zeros((1, CPAD), f32).at[0, :10].set(p["fc3_b"].astype(f32))
    return (w1m, b1, w2m, b2, fw1, fb1, fw2, fb2, fw3, fb3)


def lenet5_forward(params, x):
    n = x.shape[0]
    assert x.shape[1:] == (3, 32, 32)
    weights = _prepare_params(params)
    p1 = _build_conv1_patches(x)

    const = lambda b: (0, 0)
    out = pl.pallas_call(
        _lenet_kernel,
        grid=(n,),
        in_specs=[
            pl.BlockSpec((784, CPAD), lambda b: (b, 0)),      # conv1 patches (per image)
            pl.BlockSpec((CPAD, CPAD), const),                # conv1 weight matrix
            pl.BlockSpec((1, CPAD), const),                   # conv1 bias
            pl.BlockSpec((K2, CPAD), const),                  # conv2 weight matrix
            pl.BlockSpec((1, CPAD), const),                   # conv2 bias
            pl.BlockSpec((K2, FC1_OUT), const),               # fc1 weight
            pl.BlockSpec((1, FC1_OUT), const),                # fc1 bias
            pl.BlockSpec((FC1_OUT, CPAD), const),             # fc2 weight
            pl.BlockSpec((1, CPAD), const),                   # fc2 bias
            pl.BlockSpec((CPAD, CPAD), const),                # fc3 weight
            pl.BlockSpec((1, CPAD), const),                   # fc3 bias
        ],
        out_specs=pl.BlockSpec((8, CPAD), lambda b: (b, 0)),
        out_shape=jax.ShapeDtypeStruct((n * 8, CPAD), jnp.float32),
        scratch_shapes=[pltpu.VMEM((P1_PAD_ROWS, CPAD), jnp.float32)],
        compiler_params=pltpu.CompilerParams(
            dimension_semantics=("parallel",),
            vmem_limit_bytes=32 * 1024 * 1024),
    )(p1, *weights)
    return out.reshape(n, 8, CPAD)[:, 0, :10]


# ----------------------- pure-JAX reference (for checking) ------------------

def lenet5_reference(params, x):
    hi = jax.lax.Precision.HIGHEST
    y = jax.lax.conv_general_dilated(
        x, params["conv1_w"], (1, 1), "VALID",
        dimension_numbers=("NCHW", "OIHW", "NCHW"), precision=hi)
    y = jnp.maximum(y + params["conv1_b"][None, :, None, None], 0.0)
    y = y.reshape(y.shape[0], y.shape[1], 14, 2, 14, 2).max(axis=(3, 5))
    y = jax.lax.conv_general_dilated(
        y, params["conv2_w"], (1, 1), "VALID",
        dimension_numbers=("NCHW", "OIHW", "NCHW"), precision=hi)
    y = jnp.maximum(y + params["conv2_b"][None, :, None, None], 0.0)
    y = y.reshape(y.shape[0], y.shape[1], 5, 2, 5, 2).max(axis=(3, 5))
    y = y.reshape(y.shape[0], -1)
    y = jnp.dot(y, params["fc1_w"].T, precision=hi) + params["fc1_b"]
    y = jnp.dot(y, params["fc2_w"].T, precision=hi) + params["fc2_b"]
    y = jnp.dot(y, params["fc3_w"].T, precision=hi) + params["fc3_b"]
    return y


def init_params(key):
    """Deterministic init mimicking PyTorch default U(-1/sqrt(fan_in), 1/sqrt(fan_in))."""
    def uni(k, shape, fan_in):
        bound = 1.0 / (float(fan_in) ** 0.5)
        return jax.random.uniform(k, shape, jnp.float32, -bound, bound)

    keys = jax.random.split(key, 10)
    return {
        "conv1_w": uni(keys[0], (6, 3, 5, 5), 3 * 25),
        "conv1_b": uni(keys[1], (6,), 3 * 25),
        "conv2_w": uni(keys[2], (16, 6, 5, 5), 6 * 25),
        "conv2_b": uni(keys[3], (16,), 6 * 25),
        "fc1_w": uni(keys[4], (256, 400), 400),
        "fc1_b": uni(keys[5], (256,), 400),
        "fc2_w": uni(keys[6], (64, 256), 256),
        "fc2_b": uni(keys[7], (64,), 256),
        "fc3_w": uni(keys[8], (10, 64), 64),
        "fc3_b": uni(keys[9], (10,), 64),
    }


if __name__ == "__main__":
    key = jax.random.PRNGKey(0)
    pkey, xkey = jax.random.split(key)
    params = init_params(pkey)
    # fc1 in_features=400 (16*5*5) implies a 3x32x32 (CIFAR-sized) input.
    x = jax.random.normal(xkey, (2, 3, 32, 32), jnp.float32)

    out = jax.block_until_ready(jax.jit(lenet5_forward)(params, x))
    assert out.shape == (2, 10) and out.dtype == jnp.float32

    ref = jax.block_until_ready(jax.jit(lenet5_reference)(params, x))
    max_err = float(jnp.max(jnp.abs(out - ref)))
    assert max_err < 5e-2, f"kernel/reference mismatch: max abs err {max_err}"
    print("KERNEL_OK")
</pallas_src>

<mosaic_0001>
module attributes {stable_mosaic.version = 11 : i64} {
  func.func @_lenet_kernel(%arg0: i32, %arg1: memref<784x128xf32, #tpu.memory_space<vmem>>, %arg2: memref<128x128xf32, #tpu.memory_space<vmem>>, %arg3: memref<1x128xf32, #tpu.memory_space<vmem>>, %arg4: memref<3200x128xf32, #tpu.memory_space<vmem>>, %arg5: memref<1x128xf32, #tpu.memory_space<vmem>>, %arg6: memref<3200x256xf32, #tpu.memory_space<vmem>>, %arg7: memref<1x256xf32, #tpu.memory_space<vmem>>, %arg8: memref<256x128xf32, #tpu.memory_space<vmem>>, %arg9: memref<1x128xf32, #tpu.memory_space<vmem>>, %arg10: memref<128x128xf32, #tpu.memory_space<vmem>>, %arg11: memref<1x128xf32, #tpu.memory_space<vmem>>, %arg12: memref<8x128xf32, #tpu.memory_space<vmem>>, %arg13: memref<208x128xf32, #tpu.memory_space<vmem>>) attributes {dimension_semantics = [#tpu.dimension_semantics<parallel>], iteration_bounds = array<i64: 2>, scalar_prefetch = 0 : i64, scratch_operands = 1 : i64, tpu.core_type = #tpu.core_type<tc>, window_params = [{transform_indices = @transform_0, window_bounds = array<i64: 784, 128>}, {pipeline_mode = #tpu.pipeline_mode<synchronous>, transform_indices = @transform_1, window_bounds = array<i64: 128, 128>}, {pipeline_mode = #tpu.pipeline_mode<synchronous>, transform_indices = @transform_2, window_bounds = array<i64: 1, 128>}, {pipeline_mode = #tpu.pipeline_mode<synchronous>, transform_indices = @transform_3, window_bounds = array<i64: 3200, 128>}, {pipeline_mode = #tpu.pipeline_mode<synchronous>, transform_indices = @transform_4, window_bounds = array<i64: 1, 128>}, {pipeline_mode = #tpu.pipeline_mode<synchronous>, transform_indices = @transform_5, window_bounds = array<i64: 3200, 256>}, {pipeline_mode = #tpu.pipeline_mode<synchronous>, transform_indices = @transform_6, window_bounds = array<i64: 1, 256>}, {pipeline_mode = #tpu.pipeline_mode<synchronous>, transform_indices = @transform_7, window_bounds = array<i64: 256, 128>}, {pipeline_mode = #tpu.pipeline_mode<synchronous>, transform_indices = @transform_8, window_bounds = array<i64: 1, 128>}, {pipeline_mode = #tpu.pipeline_mode<synchronous>, transform_indices = @transform_9, window_bounds = array<i64: 128, 128>}, {pipeline_mode = #tpu.pipeline_mode<synchronous>, transform_indices = @transform_10, window_bounds = array<i64: 1, 128>}, {transform_indices = @transform_11, window_bounds = array<i64: 8, 128>}]} {
    %c0 = arith.constant 0 : index
    %c0_0 = arith.constant 0 : index
    %0 = vector.load %arg1[%c0, %c0_0] : memref<784x128xf32, #tpu.memory_space<vmem>>, vector<784x128xf32>
    %c0_1 = arith.constant 0 : index
    %c0_2 = arith.constant 0 : index
    %1 = vector.load %arg2[%c0_1, %c0_2] : memref<128x128xf32, #tpu.memory_space<vmem>>, vector<128x128xf32>
    %cst = arith.constant dense<0.000000e+00> : vector<784x128xf32>
    %2 = tpu.matmul %0, %1, %cst {dimension_numbers = #tpu.dot_dimension_numbers<[1], [0], [0], [1], [0, 0, 1, 1], [], []>} : vector<784x128xf32>, vector<128x128xf32>, vector<784x128xf32> -> vector<784x128xf32>
    %c0_3 = arith.constant 0 : index
    %c0_4 = arith.constant 0 : index
    %3 = vector.load %arg3[%c0_3, %c0_4] : memref<1x128xf32, #tpu.memory_space<vmem>>, vector<1x128xf32>
    %4 = vector.broadcast %3 : vector<1x128xf32> to vector<784x128xf32>
    %5 = arith.addf %2, %4 : vector<784x128xf32>
    %cst_5 = arith.constant 0.000000e+00 : f32
    %6 = vector.broadcast %cst_5 : f32 to vector<784x128xf32>
    %7 = arith.maximumf %5, %6 : vector<784x128xf32>
    %8 = vector.extract_strided_slice %7 {offsets = [0, 0], sizes = [196, 128], strides = [1, 1]} : vector<784x128xf32> to vector<196x128xf32>
    %9 = vector.extract_strided_slice %7 {offsets = [196, 0], sizes = [196, 128], strides = [1, 1]} : vector<784x128xf32> to vector<196x128xf32>
    %10 = arith.maximumf %8, %9 : vector<196x128xf32>
    %11 = vector.extract_strided_slice %7 {offsets = [392, 0], sizes = [196, 128], strides = [1, 1]} : vector<784x128xf32> to vector<196x128xf32>
    %12 = vector.extract_strided_slice %7 {offsets = [588, 0], sizes = [196, 128], strides = [1, 1]} : vector<784x128xf32> to vector<196x128xf32>
    %13 = arith.maximumf %11, %12 : vector<196x128xf32>
    %14 = arith.maximumf %10, %13 : vector<196x128xf32>
    %c0_6 = arith.constant 0 : index
    %c0_7 = arith.constant 0 : index
    %15 = vector.load %arg13[%c0_6, %c0_7] : memref<208x128xf32, #tpu.memory_space<vmem>>, vector<196x128xf32>
    tpu.vector_store %arg13[%c0_6, %c0_7], %14 {strides = array<i32>} : memref<208x128xf32, #tpu.memory_space<vmem>>, vector<196x128xf32>,
    %cst_8 = arith.constant 0.000000e+00 : f32
    %16 = vector.broadcast %cst_8 : f32 to vector<12x128xf32>
    %c196 = arith.constant 196 : index
    %c0_9 = arith.constant 0 : index
    %17 = vector.load %arg13[%c196, %c0_9] : memref<208x128xf32, #tpu.memory_space<vmem>>, vector<12x128xf32>
    tpu.vector_store %arg13[%c196, %c0_9], %16 {strides = array<i32>} : memref<208x128xf32, #tpu.memory_space<vmem>>, vector<12x128xf32>,
    %c0_10 = arith.constant 0 : index
    %c0_11 = arith.constant 0 : index
    %18 = vector.load %arg13[%c0_10, %c0_11] : memref<208x128xf32, #tpu.memory_space<vmem>>, vector<140x128xf32>
    %c0_12 = arith.constant 0 : index
    %c0_13 = arith.constant 0 : index
    %19 = vector.load %arg4[%c0_12, %c0_13] : memref<3200x128xf32, #tpu.memory_space<vmem>>, vector<128x128xf32>
    %cst_14 = arith.constant dense<0.000000e+00> : vector<140x128xf32>
    %20 = tpu.matmul %18, %19, %cst_14 {dimension_numbers = #tpu.dot_dimension_numbers<[1], [0], [0], [1], [0, 0, 1, 1], [], []>} : vector<140x128xf32>, vector<128x128xf32>, vector<140x128xf32> -> vector<140x128xf32>
    %c1 = arith.constant 1 : index
    %c0_15 = arith.constant 0 : index
    %21 = vector.load %arg13[%c1, %c0_15] : memref<208x128xf32, #tpu.memory_space<vmem>>, vector<140x128xf32>
    %c128 = arith.constant 128 : index
    %c0_16 = arith.constant 0 : index
    %22 = vector.load %arg4[%c128, %c0_16] : memref<3200x128xf32, #tpu.memory_space<vmem>>, vector<128x128xf32>
    %cst_17 = arith.constant dense<0.000000e+00> : vector<140x128xf32>
    %23 = tpu.matmul %21, %22, %cst_17 {dimension_numbers = #tpu.dot_dimension_numbers<[1], [0], [0], [1], [0, 0, 1, 1], [], []>} : vector<140x128xf32>, vector<128x128xf32>, vector<140x128xf32> -> vector<140x128xf32>
    %24 = arith.addf %20, %23 : vector<140x128xf32>
    %c2 = arith.constant 2 : index
    %c0_18 = arith.constant 0 : index
    %25 = vector.load %arg13[%c2, %c0_18] : memref<208x128xf32, #tpu.memory_space<vmem>>, vector<140x128xf32>
    %c256 = arith.constant 256 : index
    %c0_19 = arith.constant 0 : index
    %26 = vector.load %arg4[%c256, %c0_19] : memref<3200x128xf32, #tpu.memory_space<vmem>>, vector<128x128xf32>
    %cst_20 = arith.constant dense<0.000000e+00> : vector<140x128xf32>
    %27 = tpu.matmul %25, %26, %cst_20 {dimension_numbers = #tpu.dot_dimension_numbers<[1], [0], [0], [1], [0, 0, 1, 1], [], []>} : vector<140x128xf32>, vector<128x128xf32>, vector<140x128xf32> -> vector<140x128xf32>
    %28 = arith.addf %24, %27 : vector<140x128xf32>
    %c3 = arith.constant 3 : index
    %c0_21 = arith.constant 0 : index
    %29 = vector.load %arg13[%c3, %c0_21] : memref<208x128xf32, #tpu.memory_space<vmem>>, vector<140x128xf32>
    %c384 = arith.constant 384 : index
    %c0_22 = arith.constant 0 : index
    %30 = vector.load %arg4[%c384, %c0_22] : memref<3200x128xf32, #tpu.memory_space<vmem>>, vector<128x128xf32>
    %cst_23 = arith.constant dense<0.000000e+00> : vector<140x128xf32>
    %31 = tpu.matmul %29, %30, %cst_23 {dimension_numbers = #tpu.dot_dimension_numbers<[1], [0], [0], [1], [0, 0, 1, 1], [], []>} : vector<140x128xf32>, vector<128x128xf32>, vector<140x128xf32> -> vector<140x128xf32>
    %32 = arith.addf %28, %31 : vector<140x128xf32>
    %c4 = arith.constant 4 : index
    %c0_24 = arith.constant 0 : index
    %33 = vector.load %arg13[%c4, %c0_24] : memref<208x128xf32, #tpu.memory_space<vmem>>, vector<140x128xf32>
    %c512 = arith.constant 512 : index
    %c0_25 = arith.constant 0 : index
    %34 = vector.load %arg4[%c512, %c0_25] : memref<3200x128xf32, #tpu.memory_space<vmem>>, vector<128x128xf32>
    %cst_26 = arith.constant dense<0.000000e+00> : vector<140x128xf32>
    %35 = tpu.matmul %33, %34, %cst_26 {dimension_numbers = #tpu.dot_dimension_numbers<[1], [0], [0], [1], [0, 0, 1, 1], [], []>} : vector<140x128xf32>, vector<128x128xf32>, vector<140x128xf32> -> vector<140x128xf32>
    %36 = arith.addf %32, %35 : vector<140x128xf32>
    %c14 = arith.constant 14 : index
    %c0_27 = arith.constant 0 : index
    %37 = vector.load %arg13[%c14, %c0_27] : memref<208x128xf32, #tpu.memory_space<vmem>>, vector<140x128xf32>
    %c640 = arith.constant 640 : index
    %c0_28 = arith.constant 0 : index
    %38 = vector.load %arg4[%c640, %c0_28] : memref<3200x128xf32, #tpu.memory_space<vmem>>, vector<128x128xf32>
    %cst_29 = arith.constant dense<0.000000e+00> : vector<140x128xf32>
    %39 = tpu.matmul %37, %38, %cst_29 {dimension_numbers = #tpu.dot_dimension_numbers<[1], [0], [0], [1], [0, 0, 1, 1], [], []>} : vector<140x128xf32>, vector<128x128xf32>, vector<140x128xf32> -> vector<140x128xf32>
    %40 = arith.addf %36, %39 : vector<140x128xf32>
    %c15 = arith.constant 15 : index
    %c0_30 = arith.constant 0 : index
    %41 = vector.load %arg13[%c15, %c0_30] : memref<208x128xf32, #tpu.memory_space<vmem>>, vector<140x128xf32>
    %c768 = arith.constant 768 : index
    %c0_31 = arith.constant 0 : index
    %42 = vector.load %arg4[%c768, %c0_31] : memref<3200x128xf32, #tpu.memory_space<vmem>>, vector<128x128xf32>
    %cst_32 = arith.constant dense<0.000000e+00> : vector<140x128xf32>
    %43 = tpu.matmul %41, %42, %cst_32 {dimension_numbers = #tpu.dot_dimension_numbers<[1], [0], [0], [1], [0, 0, 1, 1], [], []>} : vector<140x128xf32>, vector<128x128xf32>, vector<140x128xf32> -> vector<140x128xf32>
    %44 = arith.addf %40, %43 : vector<140x128xf32>
    %c16 = arith.constant 16 : index
    %c0_33 = arith.constant 0 : index
    %45 = vector.load %arg13[%c16, %c0_33] : memref<208x128xf32, #tpu.memory_space<vmem>>, vector<140x128xf32>
    %c896 = arith.constant 896 : index
    %c0_34 = arith.constant 0 : index
    %46 = vector.load %arg4[%c896, %c0_34] : memref<3200x128xf32, #tpu.memory_space<vmem>>, vector<128x128xf32>
    %cst_35 = arith.constant dense<0.000000e+00> : vector<140x128xf32>
    %47 = tpu.matmul %45, %46, %cst_35 {dimension_numbers = #tpu.dot_dimension_numbers<[1], [0], [0], [1], [0, 0, 1, 1], [], []>} : vector<140x128xf32>, vector<128x128xf32>, vector<140x128xf32> -> vector<140x128xf32>
    %48 = arith.addf %44, %47 : vector<140x128xf32>
    %c17 = arith.constant 17 : index
    %c0_36 = arith.constant 0 : index
    %49 = vector.load %arg13[%c17, %c0_36] : memref<208x128xf32, #tpu.memory_space<vmem>>, vector<140x128xf32>
    %c1024 = arith.constant 1024 : index
    %c0_37 = arith.constant 0 : index
    %50 = vector.load %arg4[%c1024, %c0_37] : memref<3200x128xf32, #tpu.memory_space<vmem>>, vector<128x128xf32>
    %cst_38 = arith.constant dense<0.000000e+00> : vector<140x128xf32>
    %51 = tpu.matmul %49, %50, %cst_38 {dimension_numbers = #tpu.dot_dimension_numbers<[1], [0], [0], [1], [0, 0, 1, 1], [], []>} : vector<140x128xf32>, vector<128x128xf32>, vector<140x128xf32> -> vector<140x128xf32>
    %52 = arith.addf %48, %51 : vector<140x128xf32>
    %c18 = arith.constant 18 : index
    %c0_39 = arith.constant 0 : index
    %53 = vector.load %arg13[%c18, %c0_39] : memref<208x128xf32, #tpu.memory_space<vmem>>, vector<140x128xf32>
    %c1152 = arith.constant 1152 : index
    %c0_40 = arith.constant 0 : index
    %54 = vector.load %arg4[%c1152, %c0_40] : memref<3200x128xf32, #tpu.memory_space<vmem>>, vector<128x128xf32>
    %cst_41 = arith.constant dense<0.000000e+00> : vector<140x128xf32>
    %55 = tpu.matmul %53, %54, %cst_41 {dimension_numbers = #tpu.dot_dimension_numbers<[1], [0], [0], [1], [0, 0, 1, 1], [], []>} : vector<140x128xf32>, vector<128x128xf32>, vector<140x128xf32> -> vector<140x128xf32>
    %56 = arith.addf %52, %55 : vector<140x128xf32>
    %c28 = arith.constant 28 : index
    %c0_42 = arith.constant 0 : index
    %57 = vector.load %arg13[%c28, %c0_42] : memref<208x128xf32, #tpu.memory_space<vmem>>, vector<140x128xf32>
    %c1280 = arith.constant 1280 : index
    %c0_43 = arith.constant 0 : index
    %58 = vector.load %arg4[%c1280, %c0_43] : memref<3200x128xf32, #tpu.memory_space<vmem>>, vector<128x128xf32>
    %cst_44 = arith.constant dense<0.000000e+00> : vector<140x128xf32>
    %59 = tpu.matmul %57, %58, %cst_44 {dimension_numbers = #tpu.dot_dimension_numbers<[1], [0], [0], [1], [0, 0, 1, 1], [], []>} : vector<140x128xf32>, vector<128x128xf32>, vector<140x128xf32> -> vector<140x128xf32>
    %60 = arith.addf %56, %59 : vector<140x128xf32>
    %c29 = arith.constant 29 : index
    %c0_45 = arith.constant 0 : index
    %61 = vector.load %arg13[%c29, %c0_45] : memref<208x128xf32, #tpu.memory_space<vmem>>, vector<140x128xf32>
    %c1408 = arith.constant 1408 : index
    %c0_46 = arith.constant 0 : index
    %62 = vector.load %arg4[%c1408, %c0_46] : memref<3200x128xf32, #tpu.memory_space<vmem>>, vector<128x128xf32>
    %cst_47 = arith.constant dense<0.000000e+00> : vector<140x128xf32>
    %63 = tpu.matmul %61, %62, %cst_47 {dimension_numbers = #tpu.dot_dimension_numbers<[1], [0], [0], [1], [0, 0, 1, 1], [], []>} : vector<140x128xf32>, vector<128x128xf32>, vector<140x128xf32> -> vector<140x128xf32>
    %64 = arith.addf %60, %63 : vector<140x128xf32>
    %c30 = arith.constant 30 : index
    %c0_48 = arith.constant 0 : index
    %65 = vector.load %arg13[%c30, %c0_48] : memref<208x128xf32, #tpu.memory_space<vmem>>, vector<140x128xf32>
    %c1536 = arith.constant 1536 : index
    %c0_49 = arith.constant 0 : index
    %66 = vector.load %arg4[%c1536, %c0_49] : memref<3200x128xf32, #tpu.memory_space<vmem>>, vector<128x128xf32>
    %cst_50 = arith.constant dense<0.000000e+00> : vector<140x128xf32>
    %67 = tpu.matmul %65, %66, %cst_50 {dimension_numbers = #tpu.dot_dimension_numbers<[1], [0], [0], [1], [0, 0, 1, 1], [], []>} : vector<140x128xf32>, vector<128x128xf32>, vector<140x128xf32> -> vector<140x128xf32>
    %68 = arith.addf %64, %67 : vector<140x128xf32>
    %c31 = arith.constant 31 : index
    %c0_51 = arith.constant 0 : index
    %69 = vector.load %arg13[%c31, %c0_51] : memref<208x128xf32, #tpu.memory_space<vmem>>, vector<140x128xf32>
    %c1664 = arith.constant 1664 : index
    %c0_52 = arith.constant 0 : index
    %70 = vector.load %arg4[%c1664, %c0_52] : memref<3200x128xf32, #tpu.memory_space<vmem>>, vector<128x128xf32>
    %cst_53 = arith.constant dense<0.000000e+00> : vector<140x128xf32>
    %71 = tpu.matmul %69, %70, %cst_53 {dimension_numbers = #tpu.dot_dimension_numbers<[1], [0], [0], [1], [0, 0, 1, 1], [], []>} : vector<140x128xf32>, vector<128x128xf32>, vector<140x128xf32> -> vector<140x128xf32>
    %72 = arith.addf %68, %71 : vector<140x128xf32>
    %c32 = arith.constant 32 : index
    %c0_54 = arith.constant 0 : index
    %73 = vector.load %arg13[%c32, %c0_54] : memref<208x128xf32, #tpu.memory_space<vmem>>, vector<140x128xf32>
    %c1792 = arith.constant 1792 : index
    %c0_55 = arith.constant 0 : index
    %74 = vector.load %arg4[%c1792, %c0_55] : memref<3200x128xf32, #tpu.memory_space<vmem>>, vector<128x128xf32>
    %cst_56 = arith.constant dense<0.000000e+00> : vector<140x128xf32>
    %75 = tpu.matmul %73, %74, %cst_56 {dimension_numbers = #tpu.dot_dimension_numbers<[1], [0], [0], [1], [0, 0, 1, 1], [], []>} : vector<140x128xf32>, vector<128x128xf32>, vector<140x128xf32> -> vector<140x128xf32>
    %76 = arith.addf %72, %75 : vector<140x128xf32>
    %c42 = arith.constant 42 : index
    %c0_57 = arith.constant 0 : index
    %77 = vector.load %arg13[%c42, %c0_57] : memref<208x128xf32, #tpu.memory_space<vmem>>, vector<140x128xf32>
    %c1920 = arith.constant 1920 : index
    %c0_58 = arith.constant 0 : index
    %78 = vector.load %arg4[%c1920, %c0_58] : memref<3200x128xf32, #tpu.memory_space<vmem>>, vector<128x128xf32>
    %cst_59 = arith.constant dense<0.000000e+00> : vector<140x128xf32>
    %79 = tpu.matmul %77, %78, %cst_59 {dimension_numbers = #tpu.dot_dimension_numbers<[1], [0], [0], [1], [0, 0, 1, 1], [], []>} : vector<140x128xf32>, vector<128x128xf32>, vector<140x128xf32> -> vector<140x128xf32>
    %80 = arith.addf %76, %79 : vector<140x128xf32>
    %c43 = arith.constant 43 : index
    %c0_60 = arith.constant 0 : index
    %81 = vector.load %arg13[%c43, %c0_60] : memref<208x128xf32, #tpu.memory_space<vmem>>, vector<140x128xf32>
    %c2048 = arith.constant 2048 : index
    %c0_61 = arith.constant 0 : index
    %82 = vector.load %arg4[%c2048, %c0_61] : memref<3200x128xf32, #tpu.memory_space<vmem>>, vector<128x128xf32>
    %cst_62 = arith.constant dense<0.000000e+00> : vector<140x128xf32>
    %83 = tpu.matmul %81, %82, %cst_62 {dimension_numbers = #tpu.dot_dimension_numbers<[1], [0], [0], [1], [0, 0, 1, 1], [], []>} : vector<140x128xf32>, vector<128x128xf32>, vector<140x128xf32> -> vector<140x128xf32>
    %84 = arith.addf %80, %83 : vector<140x128xf32>
    %c44 = arith.constant 44 : index
    %c0_63 = arith.constant 0 : index
    %85 = vector.load %arg13[%c44, %c0_63] : memref<208x128xf32, #tpu.memory_space<vmem>>, vector<140x128xf32>
    %c2176 = arith.constant 2176 : index
    %c0_64 = arith.constant 0 : index
    %86 = vector.load %arg4[%c2176, %c0_64] : memref<3200x128xf32, #tpu.memory_space<vmem>>, vector<128x128xf32>
    %cst_65 = arith.constant dense<0.000000e+00> : vector<140x128xf32>
    %87 = tpu.matmul %85, %86, %cst_65 {dimension_numbers = #tpu.dot_dimension_numbers<[1], [0], [0], [1], [0, 0, 1, 1], [], []>} : vector<140x128xf32>, vector<128x128xf32>, vector<140x128xf32> -> vector<140x128xf32>
    %88 = arith.addf %84, %87 : vector<140x128xf32>
    %c45 = arith.constant 45 : index
    %c0_66 = arith.constant 0 : index
    %89 = vector.load %arg13[%c45, %c0_66] : memref<208x128xf32, #tpu.memory_space<vmem>>, vector<140x128xf32>
    %c2304 = arith.constant 2304 : index
    %c0_67 = arith.constant 0 : index
    %90 = vector.load %arg4[%c2304, %c0_67] : memref<3200x128xf32, #tpu.memory_space<vmem>>, vector<128x128xf32>
    %cst_68 = arith.constant dense<0.000000e+00> : vector<140x128xf32>
    %91 = tpu.matmul %89, %90, %cst_68 {dimension_numbers = #tpu.dot_dimension_numbers<[1], [0], [0], [1], [0, 0, 1, 1], [], []>} : vector<140x128xf32>, vector<128x128xf32>, vector<140x128xf32> -> vector<140x128xf32>
    %92 = arith.addf %88, %91 : vector<140x128xf32>
    %c46 = arith.constant 46 : index
    %c0_69 = arith.constant 0 : index
    %93 = vector.load %arg13[%c46, %c0_69] : memref<208x128xf32, #tpu.memory_space<vmem>>, vector<140x128xf32>
    %c2432 = arith.constant 2432 : index
    %c0_70 = arith.constant 0 : index
    %94 = vector.load %arg4[%c2432, %c0_70] : memref<3200x128xf32, #tpu.memory_space<vmem>>, vector<128x128xf32>
    %cst_71 = arith.constant dense<0.000000e+00> : vector<140x128xf32>
    %95 = tpu.matmul %93, %94, %cst_71 {dimension_numbers = #tpu.dot_dimension_numbers<[1], [0], [0], [1], [0, 0, 1, 1], [], []>} : vector<140x128xf32>, vector<128x128xf32>, vector<140x128xf32> -> vector<140x128xf32>
    %96 = arith.addf %92, %95 : vector<140x128xf32>
    %c56 = arith.constant 56 : index
    %c0_72 = arith.constant 0 : index
    %97 = vector.load %arg13[%c56, %c0_72] : memref<208x128xf32, #tpu.memory_space<vmem>>, vector<140x128xf32>
    %c2560 = arith.constant 2560 : index
    %c0_73 = arith.constant 0 : index
    %98 = vector.load %arg4[%c2560, %c0_73] : memref<3200x128xf32, #tpu.memory_space<vmem>>, vector<128x128xf32>
    %cst_74 = arith.constant dense<0.000000e+00> : vector<140x128xf32>
    %99 = tpu.matmul %97, %98, %cst_74 {dimension_numbers = #tpu.dot_dimension_numbers<[1], [0], [0], [1], [0, 0, 1, 1], [], []>} : vector<140x128xf32>, vector<128x128xf32>, vector<140x128xf32> -> vector<140x128xf32>
    %100 = arith.addf %96, %99 : vector<140x128xf32>
    %c57 = arith.constant 57 : index
    %c0_75 = arith.constant 0 : index
    %101 = vector.load %arg13[%c57, %c0_75] : memref<208x128xf32, #tpu.memory_space<vmem>>, vector<140x128xf32>
    %c2688 = arith.constant 2688 : index
    %c0_76 = arith.constant 0 : index
    %102 = vector.load %arg4[%c2688, %c0_76] : memref<3200x128xf32, #tpu.memory_space<vmem>>, vector<128x128xf32>
    %cst_77 = arith.constant dense<0.000000e+00> : vector<140x128xf32>
    %103 = tpu.matmul %101, %102, %cst_77 {dimension_numbers = #tpu.dot_dimension_numbers<[1], [0], [0], [1], [0, 0, 1, 1], [], []>} : vector<140x128xf32>, vector<128x128xf32>, vector<140x128xf32> -> vector<140x128xf32>
    %104 = arith.addf %100, %103 : vector<140x128xf32>
    %c58 = arith.constant 58 : index
    %c0_78 = arith.constant 0 : index
    %105 = vector.load %arg13[%c58, %c0_78] : memref<208x128xf32, #tpu.memory_space<vmem>>, vector<140x128xf32>
    %c2816 = arith.constant 2816 : index
    %c0_79 = arith.constant 0 : index
    %106 = vector.load %arg4[%c2816, %c0_79] : memref<3200x128xf32, #tpu.memory_space<vmem>>, vector<128x128xf32>
    %cst_80 = arith.constant dense<0.000000e+00> : vector<140x128xf32>
    %107 = tpu.matmul %105, %106, %cst_80 {dimension_numbers = #tpu.dot_dimension_numbers<[1], [0], [0], [1], [0, 0, 1, 1], [], []>} : vector<140x128xf32>, vector<128x128xf32>, vector<140x128xf32> -> vector<140x128xf32>
    %108 = arith.addf %104, %107 : vector<140x128xf32>
    %c59 = arith.constant 59 : index
    %c0_81 = arith.constant 0 : index
    %109 = vector.load %arg13[%c59, %c0_81] : memref<208x128xf32, #tpu.memory_space<vmem>>, vector<140x128xf32>
    %c2944 = arith.constant 2944 : index
    %c0_82 = arith.constant 0 : index
    %110 = vector.load %arg4[%c2944, %c0_82] : memref<3200x128xf32, #tpu.memory_space<vmem>>, vector<128x128xf32>
    %cst_83 = arith.constant dense<0.000000e+00> : vector<140x128xf32>
    %111 = tpu.matmul %109, %110, %cst_83 {dimension_numbers = #tpu.dot_dimension_numbers<[1], [0], [0], [1], [0, 0, 1, 1], [], []>} : vector<140x128xf32>, vector<128x128xf32>, vector<140x128xf32> -> vector<140x128xf32>
    %112 = arith.addf %108, %111 : vector<140x128xf32>
    %c60 = arith.constant 60 : index
    %c0_84 = arith.constant 0 : index
    %113 = vector.load %arg13[%c60, %c0_84] : memref<208x128xf32, #tpu.memory_space<vmem>>, vector<140x128xf32>
    %c3072 = arith.constant 3072 : index
    %c0_85 = arith.constant 0 : index
    %114 = vector.load %arg4[%c3072, %c0_85] : memref<3200x128xf32, #tpu.memory_space<vmem>>, vector<128x128xf32>
    %cst_86 = arith.constant dense<0.000000e+00> : vector<140x128xf32>
    %115 = tpu.matmul %113, %114, %cst_86 {dimension_numbers = #tpu.dot_dimension_numbers<[1], [0], [0], [1], [0, 0, 1, 1], [], []>} : vector<140x128xf32>, vector<128x128xf32>, vector<140x128xf32> -> vector<140x128xf32>
    %116 = arith.addf %112, %115 : vector<140x128xf32>
    %c0_87 = arith.constant 0 : index
    %c0_88 = arith.constant 0 : index
    %117 = vector.load %arg5[%c0_87, %c0_88] : memref<1x128xf32, #tpu.memory_space<vmem>>, vector<1x128xf32>
    %118 = vector.broadcast %117 : vector<1x128xf32> to vector<140x128xf32>
    %119 = arith.addf %116, %118 : vector<140x128xf32>
    %cst_89 = arith.constant 0.000000e+00 : f32
    %120 = vector.broadcast %cst_89 : f32 to vector<140x128xf32>
    %121 = arith.maximumf %119, %120 : vector<140x128xf32>
    %122 = vector.extract_strided_slice %121 {offsets = [0, 0], sizes = [14, 128], strides = [1, 1]} : vector<140x128xf32> to vector<14x128xf32>
    %123 = vector.extract_strided_slice %121 {offsets = [14, 0], sizes = [14, 128], strides = [1, 1]} : vector<140x128xf32> to vector<14x128xf32>
    %124 = arith.maximumf %122, %123 : vector<14x128xf32>
    %125 = vector.extract_strided_slice %124 {offsets = [0, 0], sizes = [1, 128], strides = [1, 1]} : vector<14x128xf32> to vector<1x128xf32>
    %126 = vector.extract_strided_slice %124 {offsets = [1, 0], sizes = [1, 128], strides = [1, 1]} : vector<14x128xf32> to vector<1x128xf32>
    %127 = arith.maximumf %125, %126 : vector<1x128xf32>
    %128 = vector.extract_strided_slice %124 {offsets = [2, 0], sizes = [1, 128], strides = [1, 1]} : vector<14x128xf32> to vector<1x128xf32>
    %129 = vector.extract_strided_slice %124 {offsets = [3, 0], sizes = [1, 128], strides = [1, 1]} : vector<14x128xf32> to vector<1x128xf32>
    %130 = arith.maximumf %128, %129 : vector<1x128xf32>
    %131 = vector.extract_strided_slice %124 {offsets = [4, 0], sizes = [1, 128], strides = [1, 1]} : vector<14x128xf32> to vector<1x128xf32>
    %132 = vector.extract_strided_slice %124 {offsets = [5, 0], sizes = [1, 128], strides = [1, 1]} : vector<14x128xf32> to vector<1x128xf32>
    %133 = arith.maximumf %131, %132 : vector<1x128xf32>
    %134 = vector.extract_strided_slice %124 {offsets = [6, 0], sizes = [1, 128], strides = [1, 1]} : vector<14x128xf32> to vector<1x128xf32>
    %135 = vector.extract_strided_slice %124 {offsets = [7, 0], sizes = [1, 128], strides = [1, 1]} : vector<14x128xf32> to vector<1x128xf32>
    %136 = arith.maximumf %134, %135 : vector<1x128xf32>
    %137 = vector.extract_strided_slice %124 {offsets = [8, 0], sizes = [1, 128], strides = [1, 1]} : vector<14x128xf32> to vector<1x128xf32>
    %138 = vector.extract_strided_slice %124 {offsets = [9, 0], sizes = [1, 128], strides = [1, 1]} : vector<14x128xf32> to vector<1x128xf32>
    %139 = arith.maximumf %137, %138 : vector<1x128xf32>
    %140 = vector.extract_strided_slice %121 {offsets = [28, 0], sizes = [14, 128], strides = [1, 1]} : vector<140x128xf32> to vector<14x128xf32>
    %141 = vector.extract_strided_slice %121 {offsets = [42, 0], sizes = [14, 128], strides = [1, 1]} : vector<140x128xf32> to vector<14x128xf32>
    %142 = arith.maximumf %140, %141 : vector<14x128xf32>
    %143 = vector.extract_strided_slice %142 {offsets = [0, 0], sizes = [1, 128], strides = [1, 1]} : vector<14x128xf32> to vector<1x128xf32>
    %144 = vector.extract_strided_slice %142 {offsets = [1, 0], sizes = [1, 128], strides = [1, 1]} : vector<14x128xf32> to vector<1x128xf32>
    %145 = arith.maximumf %143, %144 : vector<1x128xf32>
    %146 = vector.extract_strided_slice %142 {offsets = [2, 0], sizes = [1, 128], strides = [1, 1]} : vector<14x128xf32> to vector<1x128xf32>
    %147 = vector.extract_strided_slice %142 {offsets = [3, 0], sizes = [1, 128], strides = [1, 1]} : vector<14x128xf32> to vector<1x128xf32>
    %148 = arith.maximumf %146, %147 : vector<1x128xf32>
    %149 = vector.extract_strided_slice %142 {offsets = [4, 0], sizes = [1, 128], strides = [1, 1]} : vector<14x128xf32> to vector<1x128xf32>
    %150 = vector.extract_strided_slice %142 {offsets = [5, 0], sizes = [1, 128], strides = [1, 1]} : vector<14x128xf32> to vector<1x128xf32>
    %151 = arith.maximumf %149, %150 : vector<1x128xf32>
    %152 = vector.extract_strided_slice %142 {offsets = [6, 0], sizes = [1, 128], strides = [1, 1]} : vector<14x128xf32> to vector<1x128xf32>
    %153 = vector.extract_strided_slice %142 {offsets = [7, 0], sizes = [1, 128], strides = [1, 1]} : vector<14x128xf32> to vector<1x128xf32>
    %154 = arith.maximumf %152, %153 : vector<1x128xf32>
    %155 = vector.extract_strided_slice %142 {offsets = [8, 0], sizes = [1, 128], strides = [1, 1]} : vector<14x128xf32> to vector<1x128xf32>
    %156 = vector.extract_strided_slice %142 {offsets = [9, 0], sizes = [1, 128], strides = [1, 1]} : vector<14x128xf32> to vector<1x128xf32>
    %157 = arith.maximumf %155, %156 : vector<1x128xf32>
    %158 = vector.extract_strided_slice %121 {offsets = [56, 0], sizes = [14, 128], strides = [1, 1]} : vector<140x128xf32> to vector<14x128xf32>
    %159 = vector.extract_strided_slice %121 {offsets = [70, 0], sizes = [14, 128], strides = [1, 1]} : vector<140x128xf32> to vector<14x128xf32>
    %160 = arith.maximumf %158, %159 : vector<14x128xf32>
    %161 = vector.extract_strided_slice %160 {offsets = [0, 0], sizes = [1, 128], strides = [1, 1]} : vector<14x128xf32> to vector<1x128xf32>
    %162 = vector.extract_strided_slice %160 {offsets = [1, 0], sizes = [1, 128], strides = [1, 1]} : vector<14x128xf32> to vector<1x128xf32>
    %163 = arith.maximumf %161, %162 : vector<1x128xf32>
    %164 = vector.extract_strided_slice %160 {offsets = [2, 0], sizes = [1, 128], strides = [1, 1]} : vector<14x128xf32> to vector<1x128xf32>
    %165 = vector.extract_strided_slice %160 {offsets = [3, 0], sizes = [1, 128], strides = [1, 1]} : vector<14x128xf32> to vector<1x128xf32>
    %166 = arith.maximumf %164, %165 : vector<1x128xf32>
    %167 = vector.extract_strided_slice %160 {offsets = [4, 0], sizes = [1, 128], strides = [1, 1]} : vector<14x128xf32> to vector<1x128xf32>
    %168 = vector.extract_strided_slice %160 {offsets = [5, 0], sizes = [1, 128], strides = [1, 1]} : vector<14x128xf32> to vector<1x128xf32>
    %169 = arith.maximumf %167, %168 : vector<1x128xf32>
    %170 = vector.extract_strided_slice %160 {offsets = [6, 0], sizes = [1, 128], strides = [1, 1]} : vector<14x128xf32> to vector<1x128xf32>
    %171 = vector.extract_strided_slice %160 {offsets = [7, 0], sizes = [1, 128], strides = [1, 1]} : vector<14x128xf32> to vector<1x128xf32>
    %172 = arith.maximumf %170, %171 : vector<1x128xf32>
    %173 = vector.extract_strided_slice %160 {offsets = [8, 0], sizes = [1, 128], strides = [1, 1]} : vector<14x128xf32> to vector<1x128xf32>
    %174 = vector.extract_strided_slice %160 {offsets = [9, 0], sizes = [1, 128], strides = [1, 1]} : vector<14x128xf32> to vector<1x128xf32>
    %175 = arith.maximumf %173, %174 : vector<1x128xf32>
    %176 = vector.extract_strided_slice %121 {offsets = [84, 0], sizes = [14, 128], strides = [1, 1]} : vector<140x128xf32> to vector<14x128xf32>
    %177 = vector.extract_strided_slice %121 {offsets = [98, 0], sizes = [14, 128], strides = [1, 1]} : vector<140x128xf32> to vector<14x128xf32>
    %178 = arith.maximumf %176, %177 : vector<14x128xf32>
    %179 = vector.extract_strided_slice %178 {offsets = [0, 0], sizes = [1, 128], strides = [1, 1]} : vector<14x128xf32> to vector<1x128xf32>
    %180 = vector.extract_strided_slice %178 {offsets = [1, 0], sizes = [1, 128], strides = [1, 1]} : vector<14x128xf32> to vector<1x128xf32>
    %181 = arith.maximumf %179, %180 : vector<1x128xf32>
    %182 = vector.extract_strided_slice %178 {offsets = [2, 0], sizes = [1, 128], strides = [1, 1]} : vector<14x128xf32> to vector<1x128xf32>
    %183 = vector.extract_strided_slice %178 {offsets = [3, 0], sizes = [1, 128], strides = [1, 1]} : vector<14x128xf32> to vector<1x128xf32>
    %184 = arith.maximumf %182, %183 : vector<1x128xf32>
    %185 = vector.extract_strided_slice %178 {offsets = [4, 0], sizes = [1, 128], strides = [1, 1]} : vector<14x128xf32> to vector<1x128xf32>
    %186 = vector.extract_strided_slice %178 {offsets = [5, 0], sizes = [1, 128], strides = [1, 1]} : vector<14x128xf32> to vector<1x128xf32>
    %187 = arith.maximumf %185, %186 : vector<1x128xf32>
    %188 = vector.extract_strided_slice %178 {offsets = [6, 0], sizes = [1, 128], strides = [1, 1]} : vector<14x128xf32> to vector<1x128xf32>
    %189 = vector.extract_strided_slice %178 {offsets = [7, 0], sizes = [1, 128], strides = [1, 1]} : vector<14x128xf32> to vector<1x128xf32>
    %190 = arith.maximumf %188, %189 : vector<1x128xf32>
    %191 = vector.extract_strided_slice %178 {offsets = [8, 0], sizes = [1, 128], strides = [1, 1]} : vector<14x128xf32> to vector<1x128xf32>
    %192 = vector.extract_strided_slice %178 {offsets = [9, 0], sizes = [1, 128], strides = [1, 1]} : vector<14x128xf32> to vector<1x128xf32>
    %193 = arith.maximumf %191, %192 : vector<1x128xf32>
    %194 = vector.extract_strided_slice %121 {offsets = [112, 0], sizes = [14, 128], strides = [1, 1]} : vector<140x128xf32> to vector<14x128xf32>
    %195 = vector.extract_strided_slice %121 {offsets = [126, 0], sizes = [14, 128], strides = [1, 1]} : vector<140x128xf32> to vector<14x128xf32>
    %196 = arith.maximumf %194, %195 : vector<14x128xf32>
    %197 = vector.extract_strided_slice %196 {offsets = [0, 0], sizes = [1, 128], strides = [1, 1]} : vector<14x128xf32> to vector<1x128xf32>
    %198 = vector.extract_strided_slice %196 {offsets = [1, 0], sizes = [1, 128], strides = [1, 1]} : vector<14x128xf32> to vector<1x128xf32>
    %199 = arith.maximumf %197, %198 : vector<1x128xf32>
    %200 = vector.extract_strided_slice %196 {offsets = [2, 0], sizes = [1, 128], strides = [1, 1]} : vector<14x128xf32> to vector<1x128xf32>
    %201 = vector.extract_strided_slice %196 {offsets = [3, 0], sizes = [1, 128], strides = [1, 1]} : vector<14x128xf32> to vector<1x128xf32>
    %202 = arith.maximumf %200, %201 : vector<1x128xf32>
    %203 = vector.extract_strided_slice %196 {offsets = [4, 0], sizes = [1, 128], strides = [1, 1]} : vector<14x128xf32> to vector<1x128xf32>
    %204 = vector.extract_strided_slice %196 {offsets = [5, 0], sizes = [1, 128], strides = [1, 1]} : vector<14x128xf32> to vector<1x128xf32>
    %205 = arith.maximumf %203, %204 : vector<1x128xf32>
    %206 = vector.extract_strided_slice %196 {offsets = [6, 0], sizes = [1, 128], strides = [1, 1]} : vector<14x128xf32> to vector<1x128xf32>
    %207 = vector.extract_strided_slice %196 {offsets = [7, 0], sizes = [1, 128], strides = [1, 1]} : vector<14x128xf32> to vector<1x128xf32>
    %208 = arith.maximumf %206, %207 : vector<1x128xf32>
    %209 = vector.extract_strided_slice %196 {offsets = [8, 0], sizes = [1, 128], strides = [1, 1]} : vector<14x128xf32> to vector<1x128xf32>
    %210 = vector.extract_strided_slice %196 {offsets = [9, 0], sizes = [1, 128], strides = [1, 1]} : vector<14x128xf32> to vector<1x128xf32>
    %211 = arith.maximumf %209, %210 : vector<1x128xf32>
    %212 = tpu.concatenate %127, %130, %133, %136, %139, %145, %148, %151, %154, %157, %163, %166, %169, %172, %175, %181 in 1 : vector<1x128xf32>, vector<1x128xf32>, vector<1x128xf32>, vector<1x128xf32>, vector<1x128xf32>, vector<1x128xf32>, vector<1x128xf32>, vector<1x128xf32>, vector<1x128xf32>, vector<1x128xf32>, vector<1x128xf32>, vector<1x128xf32>, vector<1x128xf32>, vector<1x128xf32>, vector<1x128xf32>, vector<1x128xf32> -> vector<1x2048xf32>
    %213 = tpu.concatenate %184, %187, %190, %193, %199, %202, %205, %208, %211 in 1 : vector<1x128xf32>, vector<1x128xf32>, vector<1x128xf32>, vector<1x128xf32>, vector<1x128xf32>, vector<1x128xf32>, vector<1x128xf32>, vector<1x128xf32>, vector<1x128xf32> -> vector<1x1152xf32>
    %214 = tpu.concatenate %212, %213 in 1 : vector<1x2048xf32>, vector<1x1152xf32> -> vector<1x3200xf32>
    %c0_90 = arith.constant 0 : index
    %c0_91 = arith.constant 0 : index
    %215 = vector.load %arg6[%c0_90, %c0_91] : memref<3200x256xf32, #tpu.memory_space<vmem>>, vector<3200x256xf32>
    %cst_92 = arith.constant dense<0.000000e+00> : vector<1x256xf32>
    %216 = tpu.matmul %214, %215, %cst_92 {dimension_numbers = #tpu.dot_dimension_numbers<[1], [0], [0], [1], [0, 0, 1, 1], [], []>} : vector<1x3200xf32>, vector<3200x256xf32>, vector<1x256xf32> -> vector<1x256xf32>
    %c0_93 = arith.constant 0 : index
    %c0_94 = arith.constant 0 : index
    %217 = vector.load %arg7[%c0_93, %c0_94] : memref<1x256xf32, #tpu.memory_space<vmem>>, vector<1x256xf32>
    %218 = arith.addf %216, %217 : vector<1x256xf32>
    %c0_95 = arith.constant 0 : index
    %c0_96 = arith.constant 0 : index
    %219 = vector.load %arg8[%c0_95, %c0_96] : memref<256x128xf32, #tpu.memory_space<vmem>>, vector<256x128xf32>
    %cst_97 = arith.constant dense<0.000000e+00> : vector<1x128xf32>
    %220 = tpu.matmul %218, %219, %cst_97 {dimension_numbers = #tpu.dot_dimension_numbers<[1], [0], [0], [1], [0, 0, 1, 1], [], []>} : vector<1x256xf32>, vector<256x128xf32>, vector<1x128xf32> -> vector<1x128xf32>
    %c0_98 = arith.constant 0 : index
    %c0_99 = arith.constant 0 : index
    %221 = vector.load %arg9[%c0_98, %c0_99] : memref<1x128xf32, #tpu.memory_space<vmem>>, vector<1x128xf32>
    %222 = arith.addf %220, %221 : vector<1x128xf32>
    %c0_100 = arith.constant 0 : index
    %c0_101 = arith.constant 0 : index
    %223 = vector.load %arg10[%c0_100, %c0_101] : memref<128x128xf32, #tpu.memory_space<vmem>>, vector<128x128xf32>
    %cst_102 = arith.constant dense<0.000000e+00> : vector<1x128xf32>
    %224 = tpu.matmul %222, %223, %cst_102 {dimension_numbers = #tpu.dot_dimension_numbers<[1], [0], [0], [1], [0, 0, 1, 1], [], []>} : vector<1x128xf32>, vector<128x128xf32>, vector<1x128xf32> -> vector<1x128xf32>
    %c0_103 = arith.constant 0 : index
    %c0_104 = arith.constant 0 : index
    %225 = vector.load %arg11[%c0_103, %c0_104] : memref<1x128xf32, #tpu.memory_space<vmem>>, vector<1x128xf32>
    %226 = arith.addf %224, %225 : vector<1x128xf32>
    %227 = vector.shape_cast %226 : vector<1x128xf32> to vector<1x128xf32>
    %228 = vector.broadcast %227 : vector<1x128xf32> to vector<8x128xf32>
    %c0_105 = arith.constant 0 : index
    %c0_106 = arith.constant 0 : index
    %229 = vector.load %arg12[%c0_105, %c0_106] : memref<8x128xf32, #tpu.memory_space<vmem>>, vector<8x128xf32>
    tpu.vector_store %arg12[%c0_105, %c0_106], %228 {strides = array<i32>} : memref<8x128xf32, #tpu.memory_space<vmem>>, vector<8x128xf32>,
    return
  }
  func.func @transform_0(%arg0: i32) -> (i32, i32) {
    %c0_i32 = arith.constant 0 : i32
    %c0_i32_0 = arith.constant 0 : i32
    return %arg0, %c0_i32 : i32, i32
  }
  func.func @transform_1(%arg0: i32) -> (i32, i32) {
    %c0_i32 = arith.constant 0 : i32
    %c0_i32_0 = arith.constant 0 : i32
    %c0_i32_1 = arith.constant 0 : i32
    return %c0_i32, %c0_i32_0 : i32, i32
  }
  func.func @transform_2(%arg0: i32) -> (i32, i32) {
    %c0_i32 = arith.constant 0 : i32
    %c0_i32_0 = arith.constant 0 : i32
    %c0_i32_1 = arith.constant 0 : i32
    return %c0_i32, %c0_i32_0 : i32, i32
  }
  func.func @transform_3(%arg0: i32) -> (i32, i32) {
    %c0_i32 = arith.constant 0 : i32
    %c0_i32_0 = arith.constant 0 : i32
    %c0_i32_1 = arith.constant 0 : i32
    return %c0_i32, %c0_i32_0 : i32, i32
  }
  func.func @transform_4(%arg0: i32) -> (i32, i32) {
    %c0_i32 = arith.constant 0 : i32
    %c0_i32_0 = arith.constant 0 : i32
    %c0_i32_1 = arith.constant 0 : i32
    return %c0_i32, %c0_i32_0 : i32, i32
  }
  func.func @transform_5(%arg0: i32) -> (i32, i32) {
    %c0_i32 = arith.constant 0 : i32
    %c0_i32_0 = arith.constant 0 : i32
    %c0_i32_1 = arith.constant 0 : i32
    return %c0_i32, %c0_i32_0 : i32, i32
  }
  func.func @transform_6(%arg0: i32) -> (i32, i32) {
    %c0_i32 = arith.constant 0 : i32
    %c0_i32_0 = arith.constant 0 : i32
    %c0_i32_1 = arith.constant 0 : i32
    return %c0_i32, %c0_i32_0 : i32, i32
  }
  func.func @transform_7(%arg0: i32) -> (i32, i32) {
    %c0_i32 = arith.constant 0 : i32
    %c0_i32_0 = arith.constant 0 : i32
    %c0_i32_1 = arith.constant 0 : i32
    return %c0_i32, %c0_i32_0 : i32, i32
  }
  func.func @transform_8(%arg0: i32) -> (i32, i32) {
    %c0_i32 = arith.constant 0 : i32
    %c0_i32_0 = arith.constant 0 : i32
    %c0_i32_1 = arith.constant 0 : i32
    return %c0_i32, %c0_i32_0 : i32, i32
  }
  func.func @transform_9(%arg0: i32) -> (i32, i32) {
    %c0_i32 = arith.constant 0 : i32
    %c0_i32_0 = arith.constant 0 : i32
    %c0_i32_1 = arith.constant 0 : i32
    return %c0_i32, %c0_i32_0 : i32, i32
  }
  func.func @transform_10(%arg0: i32) -> (i32, i32) {
    %c0_i32 = arith.constant 0 : i32
    %c0_i32_0 = arith.constant 0 : i32
    %c0_i32_1 = arith.constant 0 : i32
    return %c0_i32, %c0_i32_0 : i32, i32
  }
  func.func @transform_11(%arg0: i32) -> (i32, i32) {
    %c0_i32 = arith.constant 0 : i32
    %c0_i32_0 = arith.constant 0 : i32
    return %arg0, %c0_i32 : i32, i32
  }
}

</mosaic_0001>

<llo_original>
// kernel: lenet5_forward.1
$region0: #{lenet5_forward.1}
  #allocation0 [shape = 'u32[]', space=smem, size = 0x4, offset = 0x4, fixed_abs, tag = 'smem constant byte address 0x4 - core index']
  #allocation1 [shape = 'u32[144,128]{1,0:T(1,128)}', space=vmem, size = 0x12000, scoped, tag = 'internal scratch']
  #allocation2 [shape = 'f32[208,128]{1,0:T(8,128)}', space=vmem, size = 0x1a000, scoped, tag = 'scratch operand']
  %s0 = inlined_call_operand.vmem [shape: f32[1568,128], index: 0, kind: input, shape index: {}]
  %s1 = inlined_call_operand.vmem [shape: f32[128,128], index: 1, kind: input, shape index: {}]
  %s2 = inlined_call_operand.vmem [shape: f32[1,128], index: 2, kind: input, shape index: {}]
  %s3 = inlined_call_operand.vmem [shape: f32[3200,128], index: 3, kind: input, shape index: {}]
  %s4 = inlined_call_operand.vmem [shape: f32[1,128], index: 4, kind: input, shape index: {}]
  %s5 = inlined_call_operand.vmem [shape: f32[3200,256], index: 5, kind: input, shape index: {}]
  %s6 = inlined_call_operand.vmem [shape: f32[1,256], index: 6, kind: input, shape index: {}]
  %s7 = inlined_call_operand.vmem [shape: f32[256,128], index: 7, kind: input, shape index: {}]
  %s8 = inlined_call_operand.vmem [shape: f32[1,128], index: 8, kind: input, shape index: {}]
  %s9 = inlined_call_operand.vmem [shape: f32[128,128], index: 9, kind: input, shape index: {}]
  %s10 = inlined_call_operand.vmem [shape: f32[1,128], index: 10, kind: input, shape index: {}]
  %s11 = inlined_call_operand.vmem [shape: f32[16,128], index: 11, kind: output, shape index: {}]
  %s12 = sld [smem:[#allocation0]]
  $region77: #{lenet5_forward.1} parent=0
    _
  %s14 = ssub.s32 1, %s12
  %s15 = scalar_select 0, %s14, %s12
  loop: start=0, step=1, limit=4
  $region2: #{lenet5_forward.1} parent=0 // loop_pre_header
    _
  $region3: #{lenet5_forward.1} parent=0 // loop_header
    %s17 = sphi 0, %s21
    %p18 = scmp.ge.s32.totalorder %s17, 4
    %s27 = sphi 0, %s29
    %s30 = sphi 0, %s27
    %s31 = sphi 0, %s30
    %s47 = sphi 0, %s31
    %s51 = sphi 0, %s51
    %s53 = sphi 0, %s51
    %s54 = sphi 0, %s53
    %s68 = sphi 0, %s54
    %s72 = sphi 0, %s72
    %s74 = sphi 0, %s72
    %s75 = sphi 0, %s74
    %s89 = sphi 0, %s75
    %s93 = sphi 0, %s93
    %s95 = sphi 0, %s93
    %s96 = sphi 0, %s95
    %s110 = sphi 0, %s96
    %s114 = sphi 0, %s114
    %s116 = sphi 0, %s114
    %s117 = sphi 0, %s116
    %s131 = sphi 0, %s117
    %s135 = sphi 0, %s135
    %s137 = sphi 0, %s135
    %s138 = sphi 0, %s137
    %s152 = sphi 0, %s138
    %s156 = sphi 0, %s156
    %s158 = sphi 0, %s156
    %s159 = sphi 0, %s158
    %s173 = sphi 0, %s159
    %s177 = sphi 0, %s177
    %s179 = sphi 0, %s177
    %s180 = sphi 0, %s179
    %s194 = sphi 0, %s180
    %s198 = sphi 0, %s198
    %s200 = sphi 0, %s198
    %s201 = sphi 0, %s200
    %s215 = sphi 0, %s201
    %s219 = sphi 0, %s219
    %s221 = sphi 0, %s219
    %s222 = sphi 0, %s221
    %s236 = sphi 0, %s222
    %s240 = sphi 0, %s240
    %s242 = sphi 0, %s240
    %s243 = sphi 0, %s242
    %s257 = sphi 0, %s243
    %s263 = sphi 0, %s265
    %s266 = sphi 0, %s263
    %s267 = sphi 0, %s266
    %s283 = sphi 0, %s267
  $region4: #{lenet5_forward.1} parent=0 // loop_header_branch
    %20 = sbr.rel (%p18) target = $region8
  $region5: #{lenet5_forward.1} parent=0 // loop_body
    %s22 = ssub.s32 %s17, 1
    %s23 = ssub.s32 %s17, 2
    %s24 = sadd.s32 %s17, 1
    %s25 = ssub.s32 %s17, %s24
    %p26 = scmp.eq.s32.totalorder %s25, 0
    %s28 = sadd.s32 %s27, 1
    %s29 = scalar_select %p26, %s27, %s28
    %p32 = pneg %p26
    %p33 = scmp.eq.s32.totalorder %s17, 1
    %p34 = por %p32, %p33
    %p35 = scmp.ne.s32.totalorder %s27, %s30
    %p36 = scmp.eq.s32.totalorder %s17, 0
    %p37 = por %p35, %p36
    %p38 = scmp.ne.s32.totalorder %s27, %s30
    %p39 = scmp.eq.s32.totalorder %s22, 1
    %p40 = por %p38, %p39
    %p41 = scmp.ne.s32.totalorder %s30, %s31
    %p42 = scmp.eq.s32.totalorder %s22, 0
    %p43 = por %p41, %p42
    %p44 = scmp.ne.s32.totalorder %s30, %s31
    %p45 = scmp.eq.s32.totalorder %s23, 1
    %p46 = por %p44, %p45
    %p48 = scmp.ne.s32.totalorder %s31, %s47
    %p49 = scmp.eq.s32.totalorder %s23, 0
    %p50 = por %p48, %p49
    %s52 = sadd.s32 %s51, 1
    %p55 = scmp.eq.s32.totalorder %s17, 1
    %p56 = scmp.ne.s32.totalorder %s51, %s53
    %p57 = scmp.eq.s32.totalorder %s17, 0
    %p58 = por %p56, %p57
    %p59 = scmp.ne.s32.totalorder %s51, %s53
    %p60 = scmp.eq.s32.totalorder %s22, 1
    %p61 = por %p59, %p60
    %p62 = scmp.ne.s32.totalorder %s53, %s54
    %p63 = scmp.eq.s32.totalorder %s22, 0
    %p64 = por %p62, %p63
    %p65 = scmp.ne.s32.totalorder %s53, %s54
    %p66 = scmp.eq.s32.totalorder %s23, 1
    %p67 = por %p65, %p66
    %p69 = scmp.ne.s32.totalorder %s54, %s68
    %p70 = scmp.eq.s32.totalorder %s23, 0
    %p71 = por %p69, %p70
    %s73 = sadd.s32 %s72, 1
    %p76 = scmp.eq.s32.totalorder %s17, 1
    %p77 = scmp.ne.s32.totalorder %s72, %s74
    %p78 = scmp.eq.s32.totalorder %s17, 0
    %p79 = por %p77, %p78
    %p80 = scmp.ne.s32.totalorder %s72, %s74
    %p81 = scmp.eq.s32.totalorder %s22, 1
    %p82 = por %p80, %p81
    %p83 = scmp.ne.s32.totalorder %s74, %s75
    %p84 = scmp.eq.s32.totalorder %s22, 0
    %p85 = por %p83, %p84
    %p86 = scmp.ne.s32.totalorder %s74, %s75
    %p87 = scmp.eq.s32.totalorder %s23, 1
    %p88 = por %p86, %p87
    %p90 = scmp.ne.s32.totalorder %s75, %s89
    %p91 = scmp.eq.s32.totalorder %s23, 0
    %p92 = por %p90, %p91
    %s94 = sadd.s32 %s93, 1
    %p97 = scmp.eq.s32.totalorder %s17, 1
    %p98 = scmp.ne.s32.totalorder %s93, %s95
    %p99 = scmp.eq.s32.totalorder %s17, 0
    %p100 = por %p98, %p99
    %p101 = scmp.ne.s32.totalorder %s93, %s95
    %p102 = scmp.eq.s32.totalorder %s22, 1
    %p103 = por %p101, %p102
    %p104 = scmp.ne.s32.totalorder %s95, %s96
    %p105 = scmp.eq.s32.totalorder %s22, 0
    %p106 = por %p104, %p105
    %p107 = scmp.ne.s32.totalorder %s95, %s96
    %p108 = scmp.eq.s32.totalorder %s23, 1
    %p109 = por %p107, %p108
    %p111 = scmp.ne.s32.totalorder %s96, %s110
    %p112 = scmp.eq.s32.totalorder %s23, 0
    %p113 = por %p111, %p112
    %s115 = sadd.s32 %s114, 1
    %p118 = scmp.eq.s32.totalorder %s17, 1
    %p119 = scmp.ne.s32.totalorder %s114, %s116
    %p120 = scmp.eq.s32.totalorder %s17, 0
    %p121 = por %p119, %p120
    %p122 = scmp.ne.s32.totalorder %s114, %s116
    %p123 = scmp.eq.s32.totalorder %s22, 1
    %p124 = por %p122, %p123
    %p125 = scmp.ne.s32.totalorder %s116, %s117
    %p126 = scmp.eq.s32.totalorder %s22, 0
    %p127 = por %p125, %p126
    %p128 = scmp.ne.s32.totalorder %s116, %s117
    %p129 = scmp.eq.s32.totalorder %s23, 1
    %p130 = por %p128, %p129
    %p132 = scmp.ne.s32.totalorder %s117, %s131
    %p133 = scmp.eq.s32.totalorder %s23, 0
    %p134 = por %p132, %p133
    %s136 = sadd.s32 %s135, 1
    %p139 = scmp.eq.s32.totalorder %s17, 1
    %p140 = scmp.ne.s32.totalorder %s135, %s137
    %p141 = scmp.eq.s32.totalorder %s17, 0
    %p142 = por %p140, %p141
    %p143 = scmp.ne.s32.totalorder %s135, %s137
    %p144 = scmp.eq.s32.totalorder %s22, 1
    %p145 = por %p143, %p144
    %p146 = scmp.ne.s32.totalorder %s137, %s138
    %p147 = scmp.eq.s32.totalorder %s22, 0
    %p148 = por %p146, %p147
    %p149 = scmp.ne.s32.totalorder %s137, %s138
    %p150 = scmp.eq.s32.totalorder %s23, 1
    %p151 = por %p149, %p150
    %p153 = scmp.ne.s32.totalorder %s138, %s152
    %p154 = scmp.eq.s32.totalorder %s23, 0
    %p155 = por %p153, %p154
    %s157 = sadd.s32 %s156, 1
    %p160 = scmp.eq.s32.totalorder %s17, 1
    %p161 = scmp.ne.s32.totalorder %s156, %s158
    %p162 = scmp.eq.s32.totalorder %s17, 0
    %p163 = por %p161, %p162
    %p164 = scmp.ne.s32.totalorder %s156, %s158
    %p165 = scmp.eq.s32.totalorder %s22, 1
    %p166 = por %p164, %p165
    %p167 = scmp.ne.s32.totalorder %s158, %s159
    %p168 = scmp.eq.s32.totalorder %s22, 0
    %p169 = por %p167, %p168
    %p170 = scmp.ne.s32.totalorder %s158, %s159
    %p171 = scmp.eq.s32.totalorder %s23, 1
    %p172 = por %p170, %p171
    %p174 = scmp.ne.s32.totalorder %s159, %s173
    %p175 = scmp.eq.s32.totalorder %s23, 0
    %p176 = por %p174, %p175
    %s178 = sadd.s32 %s177, 1
    %p181 = scmp.eq.s32.totalorder %s17, 1
    %p182 = scmp.ne.s32.totalorder %s177, %s179
    %p183 = scmp.eq.s32.totalorder %s17, 0
    %p184 = por %p182, %p183
    %p185 = scmp.ne.s32.totalorder %s177, %s179
    %p186 = scmp.eq.s32.totalorder %s22, 1
    %p187 = por %p185, %p186
    %p188 = scmp.ne.s32.totalorder %s179, %s180
    %p189 = scmp.eq.s32.totalorder %s22, 0
    %p190 = por %p188, %p189
    %p191 = scmp.ne.s32.totalorder %s179, %s180
    %p192 = scmp.eq.s32.totalorder %s23, 1
    %p193 = por %p191, %p192
    %p195 = scmp.ne.s32.totalorder %s180, %s194
    %p196 = scmp.eq.s32.totalorder %s23, 0
    %p197 = por %p195, %p196
    %s199 = sadd.s32 %s198, 1
    %p202 = scmp.eq.s32.totalorder %s17, 1
    %p203 = scmp.ne.s32.totalorder %s198, %s200
    %p204 = scmp.eq.s32.totalorder %s17, 0
    %p205 = por %p203, %p204
    %p206 = scmp.ne.s32.totalorder %s198, %s200
    %p207 = scmp.eq.s32.totalorder %s22, 1
    %p208 = por %p206, %p207
    %p209 = scmp.ne.s32.totalorder %s200, %s201
    %p210 = scmp.eq.s32.totalorder %s22, 0
    %p211 = por %p209, %p210
    %p212 = scmp.ne.s32.totalorder %s200, %s201
    %p213 = scmp.eq.s32.totalorder %s23, 1
    %p214 = por %p212, %p213
    %p216 = scmp.ne.s32.totalorder %s201, %s215
    %p217 = scmp.eq.s32.totalorder %s23, 0
    %p218 = por %p216, %p217
    %s220 = sadd.s32 %s219, 1
    %p223 = scmp.eq.s32.totalorder %s17, 1
    %p224 = scmp.ne.s32.totalorder %s219, %s221
    %p225 = scmp.eq.s32.totalorder %s17, 0
    %p226 = por %p224, %p225
    %p227 = scmp.ne.s32.totalorder %s219, %s221
    %p228 = scmp.eq.s32.totalorder %s22, 1
    %p229 = por %p227, %p228
    %p230 = scmp.ne.s32.totalorder %s221, %s222
    %p231 = scmp.eq.s32.totalorder %s22, 0
    %p232 = por %p230, %p231
    %p233 = scmp.ne.s32.totalorder %s221, %s222
    %p234 = scmp.eq.s32.totalorder %s23, 1
    %p235 = por %p233, %p234
    %p237 = scmp.ne.s32.totalorder %s222, %s236
    %p238 = scmp.eq.s32.totalorder %s23, 0
    %p239 = por %p237, %p238
    %s241 = sadd.s32 %s240, 1
    %p244 = scmp.eq.s32.totalorder %s17, 1
    %p245 = scmp.ne.s32.totalorder %s240, %s242
    %p246 = scmp.eq.s32.totalorder %s17, 0
    %p247 = por %p245, %p246
    %p248 = scmp.ne.s32.totalorder %s240, %s242
    %p249 = scmp.eq.s32.totalorder %s22, 1
    %p250 = por %p248, %p249
    %p251 = scmp.ne.s32.totalorder %s242, %s243
    %p252 = scmp.eq.s32.totalorder %s22, 0
    %p253 = por %p251, %p252
    %p254 = scmp.ne.s32.totalorder %s242, %s243
    %p255 = scmp.eq.s32.totalorder %s23, 1
    %p256 = por %p254, %p255
    %p258 = scmp.ne.s32.totalorder %s243, %s257
    %p259 = scmp.eq.s32.totalorder %s23, 0
    %p260 = por %p258, %p259
    %s261 = ssub.s32 %s17, %s24
    %p262 = scmp.eq.s32.totalorder %s261, 0
    %s264 = sadd.s32 %s263, 1
    %s265 = scalar_select %p262, %s263, %s264
    %p268 = pneg %p262
    %p269 = scmp.eq.s32.totalorder %s17, 1
    %p270 = por %p268, %p269
    %p271 = scmp.ne.s32.totalorder %s263, %s266
    %p272 = scmp.eq.s32.totalorder %s17, 0
    %p273 = por %p271, %p272
    %p274 = scmp.ne.s32.totalorder %s263, %s266
    %p275 = scmp.eq.s32.totalorder %s22, 1
    %p276 = por %p274, %p275
    %p277 = scmp.ne.s32.totalorder %s266, %s267
    %p278 = scmp.eq.s32.totalorder %s22, 0
    %p279 = por %p277, %p278
    %p280 = scmp.ne.s32.totalorder %s266, %s267
    %p281 = scmp.eq.s32.totalorder %s23, 1
    %p282 = por %p280, %p281
    %p284 = scmp.ne.s32.totalorder %s267, %s283
    %p285 = scmp.eq.s32.totalorder %s23, 0
    %p286 = por %p284, %p285
    %p287 = scmp.le.s32.totalorder 1, %s17
    %p288 = scmp.lt.s32.totalorder %s17, 3
    %p289 = pnand %p287, %p288
    %p290 = pneg %p289
    // Predicated region
    $region9: #{lenet5_forward.1} parent=5 // pred_check
      _
    $region10: #{lenet5_forward.1} parent=5 // pred_check_branch
      %292 = sbr.rel (%p289) target = $region12
    $region11: #{lenet5_forward.1} parent=5 // pred_region
      %s293 = ssub.s32 %s17, 1
      // Predicated region
      $region13: #{lenet5_forward.1} parent=11 // pred_check
        %p294 = pneg %p64
      $region14: #{lenet5_forward.1} parent=11 // pred_check_branch
        %296 = sbr.rel (%p294) target = $region16
      $region15: #{lenet5_forward.1} parent=11 // pred_region
        _
      $region16: #{lenet5_forward.1} parent=11 // pred_fallthru
        _
      // Predicated region
      $region17: #{lenet5_forward.1} parent=11 // pred_check
        %p297 = pneg %p85
      $region18: #{lenet5_forward.1} parent=11 // pred_check_branch
        %299 = sbr.rel (%p297) target = $region20
      $region19: #{lenet5_forward.1} parent=11 // pred_region
        _
      $region20: #{lenet5_forward.1} parent=11 // pred_fallthru
        _
      // Predicated region
      $region21: #{lenet5_forward.1} parent=11 // pred_check
        %p300 = pneg %p106
      $region22: #{lenet5_forward.1} parent=11 // pred_check_branch
        %302 = sbr.rel (%p300) target = $region24
      $region23: #{lenet5_forward.1} parent=11 // pred_region
        _
      $region24: #{lenet5_forward.1} parent=11 // pred_fallthru
        _
      // Predicated region
      $region25: #{lenet5_forward.1} parent=11 // pred_check
        %p303 = pneg %p127
      $region26: #{lenet5_forward.1} parent=11 // pred_check_branch
        %305 = sbr.rel (%p303) target = $region28
      $region27: #{lenet5_forward.1} parent=11 // pred_region
        _
      $region28: #{lenet5_forward.1} parent=11 // pred_fallthru
        _
      // Predicated region
      $region29: #{lenet5_forward.1} parent=11 // pred_check
        %p306 = pneg %p148
      $region30: #{lenet5_forward.1} parent=11 // pred_check_branch
        %308 = sbr.rel (%p306) target = $region32
      $region31: #{lenet5_forward.1} parent=11 // pred_region
        _
      $region32: #{lenet5_forward.1} parent=11 // pred_fallthru
        _
      // Predicated region
      $region33: #{lenet5_forward.1} parent=11 // pred_check
        %p309 = pneg %p169
      $region34: #{lenet5_forward.1} parent=11 // pred_check_branch
        %311 = sbr.rel (%p309) target = $region36
      $region35: #{lenet5_forward.1} parent=11 // pred_region
        _
      $region36: #{lenet5_forward.1} parent=11 // pred_fallthru
        _
      // Predicated region
      $region37: #{lenet5_forward.1} parent=11 // pred_check
        %p312 = pneg %p190
      $region38: #{lenet5_forward.1} parent=11 // pred_check_branch
        %314 = sbr.rel (%p312) target = $region40
      $region39: #{lenet5_forward.1} parent=11 // pred_region
        _
      $region40: #{lenet5_forward.1} parent=11 // pred_fallthru
        _
      // Predicated region
      $region41: #{lenet5_forward.1} parent=11 // pred_check
        %p315 = pneg %p211
      $region42: #{lenet5_forward.1} parent=11 // pred_check_branch
        %317 = sbr.rel (%p315) target = $region44
      $region43: #{lenet5_forward.1} parent=11 // pred_region
        _
      $region44: #{lenet5_forward.1} parent=11 // pred_fallthru
        _
      // Predicated region
      $region45: #{lenet5_forward.1} parent=11 // pred_check
        %p318 = pneg %p232
      $region46: #{lenet5_forward.1} parent=11 // pred_check_branch
        %320 = sbr.rel (%p318) target = $region48
      $region47: #{lenet5_forward.1} parent=11 // pred_region
        _
      $region48: #{lenet5_forward.1} parent=11 // pred_fallthru
        _
      // Predicated region
      $region49: #{lenet5_forward.1} parent=11 // pred_check
        %p321 = pneg %p253
      $region50: #{lenet5_forward.1} parent=11 // pred_check_branch
        %323 = sbr.rel (%p321) target = $region52
      $region51: #{lenet5_forward.1} parent=11 // pred_region
        _
      $region52: #{lenet5_forward.1} parent=11 // pred_fallthru
        _
    $region12: #{lenet5_forward.1} parent=5 // pred_fallthru
      _
    %p324 = scmp.lt.s32.totalorder %s17, 2
    // Predicated region
    $region53: #{lenet5_forward.1} parent=5 // pred_check
      %p325 = pneg %p324
    $region54: #{lenet5_forward.1} parent=5 // pred_check_branch
      %327 = sbr.rel (%p325) target = $region56
    $region55: #{lenet5_forward.1} parent=5 // pred_region
      // Predicated region
      $region57: #{lenet5_forward.1} parent=55 // pred_check
        %p328 = pneg %p37
      $region58: #{lenet5_forward.1} parent=55 // pred_check_branch
        %330 = sbr.rel (%p328) target = $region60
      $region59: #{lenet5_forward.1} parent=55 // pred_region
        %s331 = smul.u32 98, %s17
        %p332 = scmp.lt.s32.totalorder %s331, 195
        %s333 = scalar_select %p332, %s331, 195
        %s334 = smul.addr %s333, 8
        %s335 = scalar_lea.vmem %s0, %s334
        %s336 = smul.u32 98, %s17
      $region60: #{lenet5_forward.1} parent=55 // pred_fallthru
        _
    $region56: #{lenet5_forward.1} parent=5 // pred_fallthru
      _
    %p337 = scmp.le.s32.totalorder 1, %s17
    %p338 = scmp.lt.s32.totalorder %s17, 3
    %p339 = pnand %p337, %p338
    %p340 = pneg %p339
    // Predicated region
    $region61: #{lenet5_forward.1} parent=5 // pred_check
      _
    $region62: #{lenet5_forward.1} parent=5 // pred_check_branch
      %342 = sbr.rel (%p339) target = $region64
    $region63: #{lenet5_forward.1} parent=5 // pred_region
      %s343 = ssub.s32 %s17, 1
      %s344 = smul.u32 98, %s22
      %p345 = scmp.lt.s32.totalorder %s344, 195
      %s346 = scalar_select %p345, %s344, 195
      %s347 = smul.addr %s346, 8
      %s348 = scalar_lea.vmem %s0, %s347
      %p349 = pneg %p43
      %p350 = pneg %p40
      %p351 = pneg %p64
      %p352 = pneg %p61
      %p353 = pneg %p85
      %p354 = pneg %p82
      %p355 = pneg %p106
      %p356 = pneg %p103
      %p357 = pneg %p127
      %p358 = pneg %p124
      %p359 = pneg %p148
      %p360 = pneg %p145
      %p361 = pneg %p169
      %p362 = pneg %p166
      %p363 = pneg %p190
      %p364 = pneg %p187
      %p365 = pneg %p211
      %p366 = pneg %p208
      %p367 = pneg %p232
      %p368 = pneg %p229
      %p369 = pneg %p253
      %p370 = pneg %p250
      %p371 = pneg %p279
      %p372 = pneg %p276
      %p373 = scmp.lt.s32.totalorder %s22, 1
      %s374 = scalar_select %p373, %s22, 1
      %s375 = smul.addr %s374, 8
      %s376 = scalar_lea.vmem %s11, %s375
      %s377 = smul.u32 98, %s22
      %p378 = scmp.lt.s32.totalorder %s377, 195
      %s379 = scalar_select %p378, %s377, 195
      %s380 = smul.addr %s379, 8
      %s381 = scalar_lea.vmem %s0, %s380
      %s382 = smul.u32 98, %s22
      %p383 = scmp.lt.s32.totalorder %s22, 1
      %s384 = scalar_select %p383, %s22, 1
      %s385 = smul.addr %s384, 8
      %s386 = scalar_lea.vmem %s11, %s385
      %v387 = vld [vmem:[%s381] sm:$0xff]
      %v388 = vld [vmem:[%s381 + $0x8] sm:$0xff]
      %v389 = vld [vmem:[%s381 + $0x10] sm:$0xff]
      %v390 = vld [vmem:[%s381 + $0x18] sm:$0xff]
      %v391 = vld [vmem:[%s381 + $0x20] sm:$0xff]
      %v392 = vld [vmem:[%s381 + $0x28] sm:$0xff]
      %v393 = vld [vmem:[%s381 + $0x30] sm:$0xff]
      %v394 = vld [vmem:[%s381 + $0x38] sm:$0xff]
      %v395 = vld [vmem:[%s381 + $0x40] sm:$0xff]
      %v396 = vld [vmem:[%s381 + $0x48] sm:$0xff]
      %v397 = vld [vmem:[%s381 + $0x50] sm:$0xff]
      %v398 = vld [vmem:[%s381 + $0x58] sm:$0xff]
      %v399 = vld [vmem:[%s381 + $0x60] sm:$0xff]
      %v400 = vld [vmem:[%s381 + $0x68] sm:$0xff]
      %v401 = vld [vmem:[%s381 + $0x70] sm:$0xff]
      %v402 = vld [vmem:[%s381 + $0x78] sm:$0xff]
      %v403 = vld [vmem:[%s381 + $0x80] sm:$0xff]
      %v404 = vld [vmem:[%s381 + $0x88] sm:$0xff]
      %v405 = vld [vmem:[%s381 + $0x90] sm:$0xff]
      %v406 = vld [vmem:[%s381 + $0x98] sm:$0xff]
      %v407 = vld [vmem:[%s381 + $0xa0] sm:$0xff]
      %v408 = vld [vmem:[%s381 + $0xa8] sm:$0xff]
      %v409 = vld [vmem:[%s381 + $0xb0] sm:$0xff]
      %v410 = vld [vmem:[%s381 + $0xb8] sm:$0xff]
      %v411 = vld [vmem:[%s381 + $0xc0] sm:$0xff]
      %v412 = vld [vmem:[%s381 + $0xc8] sm:$0xff]
      %v413 = vld [vmem:[%s381 + $0xd0] sm:$0xff]
      %v414 = vld [vmem:[%s381 + $0xd8] sm:$0xff]
      %v415 = vld [vmem:[%s381 + $0xe0] sm:$0xff]
      %v416 = vld [vmem:[%s381 + $0xe8] sm:$0xff]
      %v417 = vld [vmem:[%s381 + $0xf0] sm:$0xff]
      %v418 = vld [vmem:[%s381 + $0xf8] sm:$0xff]
      %v419 = vld [vmem:[%s381 + $0x100] sm:$0xff]
      %v420 = vld [vmem:[%s381 + $0x108] sm:$0xff]
      %v421 = vld [vmem:[%s381 + $0x110] sm:$0xff]
      %v422 = vld [vmem:[%s381 + $0x118] sm:$0xff]
      %v423 = vld [vmem:[%s381 + $0x120] sm:$0xff]
      %v424 = vld [vmem:[%s381 + $0x128] sm:$0xff]
      %v425 = vld [vmem:[%s381 + $0x130] sm:$0xff]
      %v426 = vld [vmem:[%s381 + $0x138] sm:$0xff]
      %v427 = vld [vmem:[%s381 + $0x140] sm:$0xff]
      %v428 = vld [vmem:[%s381 + $0x148] sm:$0xff]
      %v429 = vld [vmem:[%s381 + $0x150] sm:$0xff]
      %v430 = vld [vmem:[%s381 + $0x158] sm:$0xff]
      %v431 = vld [vmem:[%s381 + $0x160] sm:$0xff]
      %v432 = vld [vmem:[%s381 + $0x168] sm:$0xff]
      %v433 = vld [vmem:[%s381 + $0x170] sm:$0xff]
      %v434 = vld [vmem:[%s381 + $0x178] sm:$0xff]
      %v435 = vld [vmem:[%s381 + $0x180] sm:$0xff]
      %v436 = vld [vmem:[%s381 + $0x188] sm:$0xff]
      %v437 = vld [vmem:[%s381 + $0x190] sm:$0xff]
      %v438 = vld [vmem:[%s381 + $0x198] sm:$0xff]
      %v439 = vld [vmem:[%s381 + $0x1a0] sm:$0xff]
      %v440 = vld [vmem:[%s381 + $0x1a8] sm:$0xff]
      %v441 = vld [vmem:[%s381 + $0x1b0] sm:$0xff]
      %v442 = vld [vmem:[%s381 + $0x1b8] sm:$0xff]
      %v443 = vld [vmem:[%s381 + $0x1c0] sm:$0xff]
      %v444 = vld [vmem:[%s381 + $0x1c8] sm:$0xff]
      %v445 = vld [vmem:[%s381 + $0x1d0] sm:$0xff]
      %v446 = vld [vmem:[%s381 + $0x1d8] sm:$0xff]
      %v447 = vld [vmem:[%s381 + $0x1e0] sm:$0xff]
      %v448 = vld [vmem:[%s381 + $0x1e8] sm:$0xff]
      %v449 = vld [vmem:[%s381 + $0x1f0] sm:$0xff]
      %v450 = vld [vmem:[%s381 + $0x1f8] sm:$0xff]
      %v451 = vld [vmem:[%s381 + $0x200] sm:$0xff]
      %v452 = vld [vmem:[%s381 + $0x208] sm:$0xff]
      %v453 = vld [vmem:[%s381 + $0x210] sm:$0xff]
      %v454 = vld [vmem:[%s381 + $0x218] sm:$0xff]
      %v455 = vld [vmem:[%s381 + $0x220] sm:$0xff]
      %v456 = vld [vmem:[%s381 + $0x228] sm:$0xff]
      %v457 = vld [vmem:[%s381 + $0x230] sm:$0xff]
      %v458 = vld [vmem:[%s381 + $0x238] sm:$0xff]
      %v459 = vld [vmem:[%s381 + $0x240] sm:$0xff]
      %v460 = vld [vmem:[%s381 + $0x248] sm:$0xff]
      %v461 = vld [vmem:[%s381 + $0x250] sm:$0xff]
      %v462 = vld [vmem:[%s381 + $0x258] sm:$0xff]
      %v463 = vld [vmem:[%s381 + $0x260] sm:$0xff]
      %v464 = vld [vmem:[%s381 + $0x268] sm:$0xff]
      %v465 = vld [vmem:[%s381 + $0x270] sm:$0xff]
      %v466 = vld [vmem:[%s381 + $0x278] sm:$0xff]
      %v467 = vld [vmem:[%s381 + $0x280] sm:$0xff]
      %v468 = vld [vmem:[%s381 + $0x288] sm:$0xff]
      %v469 = vld [vmem:[%s381 + $0x290] sm:$0xff]
      %v470 = vld [vmem:[%s381 + $0x298] sm:$0xff]
      %v471 = vld [vmem:[%s381 + $0x2a0] sm:$0xff]
      %v472 = vld [vmem:[%s381 + $0x2a8] sm:$0xff]
      %v473 = vld [vmem:[%s381 + $0x2b0] sm:$0xff]
      %v474 = vld [vmem:[%s381 + $0x2b8] sm:$0xff]
      %v475 = vld [vmem:[%s381 + $0x2c0] sm:$0xff]
      %v476 = vld [vmem:[%s381 + $0x2c8] sm:$0xff]
      %v477 = vld [vmem:[%s381 + $0x2d0] sm:$0xff]
      %v478 = vld [vmem:[%s381 + $0x2d8] sm:$0xff]
      %v479 = vld [vmem:[%s381 + $0x2e0] sm:$0xff]
      %v480 = vld [vmem:[%s381 + $0x2e8] sm:$0xff]
      %v481 = vld [vmem:[%s381 + $0x2f0] sm:$0xff]
      %v482 = vld [vmem:[%s381 + $0x2f8] sm:$0xff]
      %v483 = vld [vmem:[%s381 + $0x300] sm:$0xff]
      %v484 = vld [vmem:[%s381 + $0x308] sm:$0xff]
      %v485 = vld [vmem:[%s1] sm:$0xff]
      %v486 = vld [vmem:[%s1 + $0x8] sm:$0xff]
      %v487 = vld [vmem:[%s1 + $0x10] sm:$0xff]
      %v488 = vld [vmem:[%s1 + $0x18] sm:$0xff]
      %v489 = vld [vmem:[%s1 + $0x20] sm:$0xff]
      %v490 = vld [vmem:[%s1 + $0x28] sm:$0xff]
      %v491 = vld [vmem:[%s1 + $0x30] sm:$0xff]
      %v492 = vld [vmem:[%s1 + $0x38] sm:$0xff]
      %v493 = vld [vmem:[%s1 + $0x40] sm:$0xff]
      %v494 = vld [vmem:[%s1 + $0x48] sm:$0xff]
      %v495 = vld [vmem:[%s1 + $0x50] sm:$0xff]
      %v496 = vld [vmem:[%s1 + $0x58] sm:$0xff]
      %v497 = vld [vmem:[%s1 + $0x60] sm:$0xff]
      %v498 = vld [vmem:[%s1 + $0x68] sm:$0xff]
      %v499 = vld [vmem:[%s1 + $0x70] sm:$0xff]
      %v500 = vld [vmem:[%s1 + $0x78] sm:$0xff]
      %v501 = vld [vmem:[%s2] sm:$0x1]
      %v503 = vlaneseq
      %v504 = vshrl.u32 %v503, 7
      %v505 = vsub.s32 0, %v504
      %v506 = vrot.slane %v501, %v505
      %508 = vmatprep.subr.mxu0 0.0
      %509 = vmatpush1.msra.mxu0 %v485
      %510 = vmatprep.subr.mxu0 0.0
      %511 = vmatpush1.msra.mxu0 %v486
      %512 = vmatprep.subr.mxu0 0.0
      %513 = vmatpush1.msra.mxu0 %v487
      %514 = vmatprep.subr.mxu0 0.0
      %515 = vmatpush1.msra.mxu0 %v488
      %516 = vmatprep.subr.mxu0 0.0
      %517 = vmatpush1.msra.mxu0 %v489
      %518 = vmatprep.subr.mxu0 0.0
      %519 = vmatpush1.msra.mxu0 %v490
      %520 = vmatprep.subr.mxu0 0.0
      %521 = vmatpush1.msra.mxu0 %v491
      %522 = vmatprep.subr.mxu0 0.0
      %523 = vmatpush1.msra.mxu0 %v492
      %524 = vmatprep.subr.mxu0 0.0
      %525 = vmatpush1.msra.mxu0 %v493
      %526 = vmatprep.subr.mxu0 0.0
      %527 = vmatpush1.msra.mxu0 %v494
      %528 = vmatprep.subr.mxu0 0.0
      %529 = vmatpush1.msra.mxu0 %v495
      %530 = vmatprep.subr.mxu0 0.0
      %531 = vmatpush1.msra.mxu0 %v496
      %532 = vmatprep.subr.mxu0 0.0
      %533 = vmatpush1.msra.mxu0 %v497
      %534 = vmatprep.subr.mxu0 0.0
      %535 = vmatpush1.msra.mxu0 %v498
      %536 = vmatprep.subr.mxu0 0.0
      %537 = vmatpush1.msra.mxu0 %v499
      %538 = vmatprep.subr.mxu0 0.0
      %539 = vmatpush1.msra.mxu0 %v500
      %540 = vmatprep.subr.mxu0 0.0
      %541 = vmatpush1.msra.mxu0 0.0
      %542 = vmatprep.subr.mxu0 0.0
      %543 = vmatpush1.msra.mxu0 0.0
      %544 = vmatprep.subr.mxu0 0.0
      %545 = vmatpush1.msra.mxu0 0.0
      %546 = vmatprep.subr.mxu0 0.0
      %547 = vmatpush1.msra.mxu0 0.0
      %548 = vmatprep.subr.mxu0 0.0
      %549 = vmatpush1.msra.mxu0 0.0
      %550 = vmatprep.subr.mxu0 0.0
      %551 = vmatpush1.msra.mxu0 0.0
      %552 = vmatprep.subr.mxu0 0.0
      %553 = vmatpush1.msra.mxu0 0.0
      %554 = vmatprep.subr.mxu0 0.0
      %555 = vmatpush1.msra.mxu0 0.0
      %556 = vmatprep.subr.mxu0 0.0
      %557 = vmatpush1.msra.mxu0 0.0
      %558 = vmatprep.subr.mxu0 0.0
      %559 = vmatpush1.msra.mxu0 0.0
      %560 = vmatprep.subr.mxu0 0.0
      %561 = vmatpush1.msra.mxu0 0.0
      %562 = vmatprep.subr.mxu0 0.0
      %563 = vmatpush1.msra.mxu0 0.0
      %564 = vmatprep.subr.mxu0 0.0
      %565 = vmatpush1.msra.mxu0 0.0
      %566 = vmatprep.subr.mxu0 0.0
      %567 = vmatpush1.msra.mxu0 0.0
      %568 = vmatprep.subr.mxu0 0.0
      %569 = vmatpush1.msra.mxu0 0.0
      %570 = vmatprep.subr.mxu0 0.0
      %571 = vmatpush1.msra.mxu0 0.0
      %572 = vmatprep.mubr.f32.mxu0 0.0
      %573 = vmatmul.mubr.f32.gmra.mrb[0].mxu0 %v387
      %v574 = vpop.f32.mrb[0].mxu0
      %v575 = vadd.f32 %v506, %v574
      %v576 = vpop.f32.mrb[0].mxu0
      %577 = vmatprep.mubr.f32.mxu0 0.0
      %578 = vmatmul.mubr.f32.gmra.mrb[0].mxu0 %v388
      %v579 = vpop.f32.mrb[0].mxu0
      %v580 = vadd.f32 %v506, %v579
      %v581 = vpop.f32.mrb[0].mxu0
      %582 = vmatprep.mubr.f32.mxu0 0.0
      %583 = vmatmul.mubr.f32.gmra.mrb[0].mxu0 %v389
      %v584 = vpop.f32.mrb[0].mxu0
      %v585 = vadd.f32 %v506, %v584
      %v586 = vpop.f32.mrb[0].mxu0
      %587 = vmatprep.mubr.f32.mxu0 0.0
      %588 = vmatmul.mubr.f32.gmra.mrb[0].mxu0 %v390
      %v589 = vpop.f32.mrb[0].mxu0
      %v590 = vadd.f32 %v506, %v589
      %v591 = vpop.f32.mrb[0].mxu0
      %592 = vmatprep.mubr.f32.mxu0 0.0
      %593 = vmatmul.mubr.f32.gmra.mrb[0].mxu0 %v391
      %v594 = vpop.f32.mrb[0].mxu0
      %v595 = vadd.f32 %v506, %v594
      %v596 = vpop.f32.mrb[0].mxu0
      %597 = vmatprep.mubr.f32.mxu0 0.0
      %598 = vmatmul.mubr.f32.gmra.mrb[0].mxu0 %v392
      %v599 = vpop.f32.mrb[0].mxu0
      %v600 = vadd.f32 %v506, %v599
      %v601 = vpop.f32.mrb[0].mxu0
      %602 = vmatprep.mubr.f32.mxu0 0.0
      %603 = vmatmul.mubr.f32.gmra.mrb[0].mxu0 %v393
      %v604 = vpop.f32.mrb[0].mxu0
      %v605 = vadd.f32 %v506, %v604
      %v606 = vpop.f32.mrb[0].mxu0
      %607 = vmatprep.mubr.f32.mxu0 0.0
      %608 = vmatmul.mubr.f32.gmra.mrb[0].mxu0 %v394
      %v609 = vpop.f32.mrb[0].mxu0
      %v610 = vadd.f32 %v506, %v609
      %v611 = vpop.f32.mrb[0].mxu0
      %612 = vmatprep.mubr.f32.mxu0 0.0
      %613 = vmatmul.mubr.f32.gmra.mrb[0].mxu0 %v395
      %v614 = vpop.f32.mrb[0].mxu0
      %v615 = vadd.f32 %v506, %v614
      %v616 = vpop.f32.mrb[0].mxu0
      %617 = vmatprep.mubr.f32.mxu0 0.0
      %618 = vmatmul.mubr.f32.gmra.mrb[0].mxu0 %v396
      %v619 = vpop.f32.mrb[0].mxu0
      %v620 = vadd.f32 %v506, %v619
      %v621 = vpop.f32.mrb[0].mxu0
      %622 = vmatprep.mubr.f32.mxu0 0.0
      %623 = vmatmul.mubr.f32.gmra.mrb[0].mxu0 %v397
      %v624 = vpop.f32.mrb[0].mxu0
      %v625 = vadd.f32 %v506, %v624
      %v626 = vpop.f32.mrb[0].mxu0
      %627 = vmatprep.mubr.f32.mxu0 0.0
      %628 = vmatmul.mubr.f32.gmra.mrb[0].mxu0 %v398
      %v629 = vpop.f32.mrb[0].mxu0
      %v630 = vadd.f32 %v506, %v629
      %v631 = vpop.f32.mrb[0].mxu0
      %632 = vmatprep.mubr.f32.mxu0 0.0
      %633 = vmatmul.mubr.f32.gmra.mrb[0].mxu0 %v399
      %v634 = vpop.f32.mrb[0].mxu0
      %v635 = vadd.f32 %v506, %v634
      %v636 = vpop.f32.mrb[0].mxu0
      %637 = vmatprep.mubr.f32.mxu0 0.0
      %638 = vmatmul.mubr.f32.gmra.mrb[0].mxu0 %v400
      %v639 = vpop.f32.mrb[0].mxu0
      %v640 = vadd.f32 %v506, %v639
      %v641 = vpop.f32.mrb[0].mxu0
      %642 = vmatprep.mubr.f32.mxu0 0.0
      %643 = vmatmul.mubr.f32.gmra.mrb[0].mxu0 %v401
      %v644 = vpop.f32.mrb[0].mxu0
      %v645 = vadd.f32 %v506, %v644
      %v646 = vpop.f32.mrb[0].mxu0
      %647 = vmatprep.mubr.f32.mxu0 0.0
      %648 = vmatmul.mubr.f32.gmra.mrb[0].mxu0 %v402
      %v649 = vpop.f32.mrb[0].mxu0
      %v650 = vadd.f32 %v506, %v649
      %v651 = vpop.f32.mrb[0].mxu0
      %652 = vmatprep.mubr.f32.mxu0 0.0
      %653 = vmatmul.mubr.f32.gmra.mrb[0].mxu0 %v403
      %v654 = vpop.f32.mrb[0].mxu0
      %v655 = vadd.f32 %v506, %v654
      %v656 = vpop.f32.mrb[0].mxu0
      %657 = vmatprep.mubr.f32.mxu0 0.0
      %658 = vmatmul.mubr.f32.gmra.mrb[0].mxu0 %v404
      %v659 = vpop.f32.mrb[0].mxu0
      %v660 = vadd.f32 %v506, %v659
      %v661 = vpop.f32.mrb[0].mxu0
      %662 = vmatprep.mubr.f32.mxu0 0.0
      %663 = vmatmul.mubr.f32.gmra.mrb[0].mxu0 %v405
      %v664 = vpop.f32.mrb[0].mxu0
      %v665 = vadd.f32 %v506, %v664
      %v666 = vpop.f32.mrb[0].mxu0
      %667 = vmatprep.mubr.f32.mxu0 0.0
      %668 = vmatmul.mubr.f32.gmra.mrb[0].mxu0 %v406
      %v669 = vpop.f32.mrb[0].mxu0
      %v670 = vadd.f32 %v506, %v669
      %v671 = vpop.f32.mrb[0].mxu0
      %672 = vmatprep.mubr.f32.mxu0 0.0
      %673 = vmatmul.mubr.f32.gmra.mrb[0].mxu0 %v407
      %v674 = vpop.f32.mrb[0].mxu0
      %v675 = vadd.f32 %v506, %v674
      %v676 = vpop.f32.mrb[0].mxu0
      %677 = vmatprep.mubr.f32.mxu0 0.0
      %678 = vmatmul.mubr.f32.gmra.mrb[0].mxu0 %v408
      %v679 = vpop.f32.mrb[0].mxu0
      %v680 = vadd.f32 %v506, %v679
      %v681 = vpop.f32.mrb[0].mxu0
      %682 = vmatprep.mubr.f32.mxu0 0.0
      %683 = vmatmul.mubr.f32.gmra.mrb[0].mxu0 %v409
      %v684 = vpop.f32.mrb[0].mxu0
      %v685 = vadd.f32 %v506, %v684
      %v686 = vpop.f32.mrb[0].mxu0
      %687 = vmatprep.mubr.f32.mxu0 0.0
      %688 = vmatmul.mubr.f32.gmra.mrb[0].mxu0 %v410
      %v689 = vpop.f32.mrb[0].mxu0
      %v690 = vadd.f32 %v506, %v689
      %v691 = vpop.f32.mrb[0].mxu0
      %692 = vmatprep.mubr.f32.mxu0 0.0
      %693 = vmatmul.mubr.f32.gmra.mrb[0].mxu0 %v411
      %v694 = vpop.f32.mrb[0].mxu0
      %v695 = vadd.f32 %v506, %v694
      %v696 = vpop.f32.mrb[0].mxu0
      %697 = vmatprep.mubr.f32.mxu0 0.0
      %698 = vmatmul.mubr.f32.gmra.mrb[0].mxu0 %v412
      %v699 = vpop.f32.mrb[0].mxu0
      %v700 = vadd.f32 %v506, %v699
      %v701 = vpop.f32.mrb[0].mxu0
      %702 = vmatprep.mubr.f32.mxu0 0.0
      %703 = vmatmul.mubr.f32.gmra.mrb[0].mxu0 %v413
      %v704 = vpop.f32.mrb[0].mxu0
      %v705 = vadd.f32 %v506, %v704
      %v706 = vpop.f32.mrb[0].mxu0
      %707 = vmatprep.mubr.f32.mxu0 0.0
      %708 = vmatmul.mubr.f32.gmra.mrb[0].mxu0 %v414
      %v709 = vpop.f32.mrb[0].mxu0
      %v710 = vadd.f32 %v506, %v709
      %v711 = vpop.f32.mrb[0].mxu0
      %712 = vmatprep.mubr.f32.mxu0 0.0
      %713 = vmatmul.mubr.f32.gmra.mrb[0].mxu0 %v415
      %v714 = vpop.f32.mrb[0].mxu0
      %v715 = vadd.f32 %v506, %v714
      %v716 = vpop.f32.mrb[0].mxu0
      %717 = vmatprep.mubr.f32.mxu0 0.0
      %718 = vmatmul.mubr.f32.gmra.mrb[0].mxu0 %v416
      %v719 = vpop.f32.mrb[0].mxu0
      %v720 = vadd.f32 %v506, %v719
      %v721 = vpop.f32.mrb[0].mxu0
      %722 = vmatprep.mubr.f32.mxu0 0.0
      %723 = vmatmul.mubr.f32.gmra.mrb[0].mxu0 %v417
      %v724 = vpop.f32.mrb[0].mxu0
      %v725 = vadd.f32 %v506, %v724
      %v726 = vpop.f32.mrb[0].mxu0
      %727 = vmatprep.mubr.f32.mxu0 0.0
      %728 = vmatmul.mubr.f32.gmra.mrb[0].mxu0 %v418
      %v729 = vpop.f32.mrb[0].mxu0
      %v730 = vadd.f32 %v506, %v729
      %v731 = vpop.f32.mrb[0].mxu0
      %732 = vmatprep.mubr.f32.mxu0 0.0
      %733 = vmatmul.mubr.f32.gmra.mrb[0].mxu0 %v419
      %v734 = vpop.f32.mrb[0].mxu0
      %v735 = vadd.f32 %v506, %v734
      %v736 = vpop.f32.mrb[0].mxu0
      %737 = vmatprep.mubr.f32.mxu0 0.0
      %738 = vmatmul.mubr.f32.gmra.mrb[0].mxu0 %v420
      %v739 = vpop.f32.mrb[0].mxu0
      %v740 = vadd.f32 %v506, %v739
      %v741 = vpop.f32.mrb[0].mxu0
      %742 = vmatprep.mubr.f32.mxu0 0.0
      %743 = vmatmul.mubr.f32.gmra.mrb[0].mxu0 %v421
      %v744 = vpop.f32.mrb[0].mxu0
      %v745 = vadd.f32 %v506, %v744
      %v746 = vpop.f32.mrb[0].mxu0
      %747 = vmatprep.mubr.f32.mxu0 0.0
      %748 = vmatmul.mubr.f32.gmra.mrb[0].mxu0 %v422
      %v749 = vpop.f32.mrb[0].mxu0
      %v750 = vadd.f32 %v506, %v749
      %v751 = vpop.f32.mrb[0].mxu0
      %752 = vmatprep.mubr.f32.mxu0 0.0
      %753 = vmatmul.mubr.f32.gmra.mrb[0].mxu0 %v423
      %v754 = vpop.f32.mrb[0].mxu0
      %v755 = vadd.f32 %v506, %v754
      %v756 = vpop.f32.mrb[0].mxu0
      %757 = vmatprep.mubr.f32.mxu0 0.0
      %758 = vmatmul.mubr.f32.gmra.mrb[0].mxu0 %v424
      %v759 = vpop.f32.mrb[0].mxu0
      %v760 = vadd.f32 %v506, %v759
      %v761 = vpop.f32.mrb[0].mxu0
      %762 = vmatprep.mubr.f32.mxu0 0.0
      %763 = vmatmul.mubr.f32.gmra.mrb[0].mxu0 %v425
      %v764 = vpop.f32.mrb[0].mxu0
      %v765 = vadd.f32 %v506, %v764
      %v766 = vpop.f32.mrb[0].mxu0
      %767 = vmatprep.mubr.f32.mxu0 0.0
      %768 = vmatmul.mubr.f32.gmra.mrb[0].mxu0 %v426
      %v769 = vpop.f32.mrb[0].mxu0
      %v770 = vadd.f32 %v506, %v769
      %v771 = vpop.f32.mrb[0].mxu0
      %772 = vmatprep.mubr.f32.mxu0 0.0
      %773 = vmatmul.mubr.f32.gmra.mrb[0].mxu0 %v427
      %v774 = vpop.f32.mrb[0].mxu0
      %v775 = vadd.f32 %v506, %v774
      %v776 = vpop.f32.mrb[0].mxu0
      %777 = vmatprep.mubr.f32.mxu0 0.0
      %778 = vmatmul.mubr.f32.gmra.mrb[0].mxu0 %v428
      %v779 = vpop.f32.mrb[0].mxu0
      %v780 = vadd.f32 %v506, %v779
      %v781 = vpop.f32.mrb[0].mxu0
      %782 = vmatprep.mubr.f32.mxu0 0.0
      %783 = vmatmul.mubr.f32.gmra.mrb[0].mxu0 %v429
      %v784 = vpop.f32.mrb[0].mxu0
      %v785 = vadd.f32 %v506, %v784
      %v786 = vpop.f32.mrb[0].mxu0
      %787 = vmatprep.mubr.f32.mxu0 0.0
      %788 = vmatmul.mubr.f32.gmra.mrb[0].mxu0 %v430
      %v789 = vpop.f32.mrb[0].mxu0
      %v790 = vadd.f32 %v506, %v789
      %v791 = vpop.f32.mrb[0].mxu0
      %792 = vmatprep.mubr.f32.mxu0 0.0
      %793 = vmatmul.mubr.f32.gmra.mrb[0].mxu0 %v431
      %v794 = vpop.f32.mrb[0].mxu0
      %v795 = vadd.f32 %v506, %v794
      %v796 = vpop.f32.mrb[0].mxu0
      %797 = vmatprep.mubr.f32.mxu0 0.0
      %798 = vmatmul.mubr.f32.gmra.mrb[0].mxu0 %v432
      %v799 = vpop.f32.mrb[0].mxu0
      %v800 = vadd.f32 %v506, %v799
      %v801 = vpop.f32.mrb[0].mxu0
      %802 = vmatprep.mubr.f32.mxu0 0.0
      %803 = vmatmul.mubr.f32.gmra.mrb[0].mxu0 %v433
      %v804 = vpop.f32.mrb[0].mxu0
      %v805 = vadd.f32 %v506, %v804
      %v806 = vpop.f32.mrb[0].mxu0
      %807 = vmatprep.mubr.f32.mxu0 0.0
      %808 = vmatmul.mubr.f32.gmra.mrb[0].mxu0 %v434
      %v809 = vpop.f32.mrb[0].mxu0
      %v810 = vadd.f32 %v506, %v809
      %v811 = vpop.f32.mrb[0].mxu0
      %812 = vmatprep.mubr.f32.mxu0 0.0
      %813 = vmatmul.mubr.f32.gmra.mrb[0].mxu0 %v435
      %v814 = vpop.f32.mrb[0].mxu0
      %v815 = vadd.f32 %v506, %v814
      %v816 = vpop.f32.mrb[0].mxu0
      %817 = vmatprep.mubr.f32.mxu0 0.0
      %818 = vmatmul.mubr.f32.gmra.mrb[0].mxu0 %v436
      %v819 = vpop.f32.mrb[0].mxu0
      %v820 = vadd.f32 %v506, %v819
      %v821 = vpop.f32.mrb[0].mxu0
      %822 = vmatprep.mubr.f32.mxu0 0.0
      %823 = vmatmul.mubr.f32.gmra.mrb[0].mxu0 %v437
      %v824 = vpop.f32.mrb[0].mxu0
      %v825 = vadd.f32 %v506, %v824
      %v826 = vpop.f32.mrb[0].mxu0
      %827 = vmatprep.mubr.f32.mxu0 0.0
      %828 = vmatmul.mubr.f32.gmra.mrb[0].mxu0 %v438
      %v829 = vpop.f32.mrb[0].mxu0
      %v830 = vadd.f32 %v506, %v829
      %v831 = vpop.f32.mrb[0].mxu0
      %832 = vmatprep.mubr.f32.mxu0 0.0
      %833 = vmatmul.mubr.f32.gmra.mrb[0].mxu0 %v439
      %v834 = vpop.f32.mrb[0].mxu0
      %v835 = vadd.f32 %v506, %v834
      %v836 = vpop.f32.mrb[0].mxu0
      %837 = vmatprep.mubr.f32.mxu0 0.0
      %838 = vmatmul.mubr.f32.gmra.mrb[0].mxu0 %v440
      %v839 = vpop.f32.mrb[0].mxu0
      %v840 = vadd.f32 %v506, %v839
      %v841 = vpop.f32.mrb[0].mxu0
      %842 = vmatprep.mubr.f32.mxu0 0.0
      %843 = vmatmul.mubr.f32.gmra.mrb[0].mxu0 %v441
      %v844 = vpop.f32.mrb[0].mxu0
      %v845 = vadd.f32 %v506, %v844
      %v846 = vpop.f32.mrb[0].mxu0
      %847 = vmatprep.mubr.f32.mxu0 0.0
      %848 = vmatmul.mubr.f32.gmra.mrb[0].mxu0 %v442
      %v849 = vpop.f32.mrb[0].mxu0
      %v850 = vadd.f32 %v506, %v849
      %v851 = vpop.f32.mrb[0].mxu0
      %852 = vmatprep.mubr.f32.mxu0 0.0
      %853 = vmatmul.mubr.f32.gmra.mrb[0].mxu0 %v443
      %v854 = vpop.f32.mrb[0].mxu0
      %v855 = vadd.f32 %v506, %v854
      %v856 = vpop.f32.mrb[0].mxu0
      %857 = vmatprep.mubr.f32.mxu0 0.0
      %858 = vmatmul.mubr.f32.gmra.mrb[0].mxu0 %v444
      %v859 = vpop.f32.mrb[0].mxu0
      %v860 = vadd.f32 %v506, %v859
      %v861 = vpop.f32.mrb[0].mxu0
      %862 = vmatprep.mubr.f32.mxu0 0.0
      %863 = vmatmul.mubr.f32.gmra.mrb[0].mxu0 %v445
      %v864 = vpop.f32.mrb[0].mxu0
      %v865 = vadd.f32 %v506, %v864
      %v866 = vpop.f32.mrb[0].mxu0
      %867 = vmatprep.mubr.f32.mxu0 0.0
      %868 = vmatmul.mubr.f32.gmra.mrb[0].mxu0 %v446
      %v869 = vpop.f32.mrb[0].mxu0
      %v870 = vadd.f32 %v506, %v869
      %v871 = vpop.f32.mrb[0].mxu0
      %872 = vmatprep.mubr.f32.mxu0 0.0
      %873 = vmatmul.mubr.f32.gmra.mrb[0].mxu0 %v447
      %v874 = vpop.f32.mrb[0].mxu0
      %v875 = vadd.f32 %v506, %v874
      %v876 = vpop.f32.mrb[0].mxu0
      %877 = vmatprep.mubr.f32.mxu0 0.0
      %878 = vmatmul.mubr.f32.gmra.mrb[0].mxu0 %v448
      %v879 = vpop.f32.mrb[0].mxu0
      %v880 = vadd.f32 %v506, %v879
      %v881 = vpop.f32.mrb[0].mxu0
      %882 = vmatprep.mubr.f32.mxu0 0.0
      %883 = vmatmul.mubr.f32.gmra.mrb[0].mxu0 %v449
      %v884 = vpop.f32.mrb[0].mxu0
      %v885 = vadd.f32 %v506, %v884
      %v886 = vpop.f32.mrb[0].mxu0
      %887 = vmatprep.mubr.f32.mxu0 0.0
      %888 = vmatmul.mubr.f32.gmra.mrb[0].mxu0 %v450
      %v889 = vpop.f32.mrb[0].mxu0
      %v890 = vadd.f32 %v506, %v889
      %v891 = vpop.f32.mrb[0].mxu0
      %892 = vmatprep.mubr.f32.mxu0 0.0
      %893 = vmatmul.mubr.f32.gmra.mrb[0].mxu0 %v451
      %v894 = vpop.f32.mrb[0].mxu0
      %v895 = vadd.f32 %v506, %v894
      %v896 = vpop.f32.mrb[0].mxu0
      %897 = vmatprep.mubr.f32.mxu0 0.0
      %898 = vmatmul.mubr.f32.gmra.mrb[0].mxu0 %v452
      %v899 = vpop.f32.mrb[0].mxu0
      %v900 = vadd.f32 %v506, %v899
      %v901 = vpop.f32.mrb[0].mxu0
      %902 = vmatprep.mubr.f32.mxu0 0.0
      %903 = vmatmul.mubr.f32.gmra.mrb[0].mxu0 %v453
      %v904 = vpop.f32.mrb[0].mxu0
      %v905 = vadd.f32 %v506, %v904
      %v906 = vpop.f32.mrb[0].mxu0
      %907 = vmatprep.mubr.f32.mxu0 0.0
      %908 = vmatmul.mubr.f32.gmra.mrb[0].mxu0 %v454
      %v909 = vpop.f32.mrb[0].mxu0
      %v910 = vadd.f32 %v506, %v909
      %v911 = vpop.f32.mrb[0].mxu0
      %912 = vmatprep.mubr.f32.mxu0 0.0
      %913 = vmatmul.mubr.f32.gmra.mrb[0].mxu0 %v455
      %v914 = vpop.f32.mrb[0].mxu0
      %v915 = vadd.f32 %v506, %v914
      %v916 = vpop.f32.mrb[0].mxu0
      %917 = vmatprep.mubr.f32.mxu0 0.0
      %918 = vmatmul.mubr.f32.gmra.mrb[0].mxu0 %v456
      %v919 = vpop.f32.mrb[0].mxu0
      %v920 = vadd.f32 %v506, %v919
      %v921 = vpop.f32.mrb[0].mxu0
      %922 = vmatprep.mubr.f32.mxu0 0.0
      %923 = vmatmul.mubr.f32.gmra.mrb[0].mxu0 %v457
      %v924 = vpop.f32.mrb[0].mxu0
      %v925 = vadd.f32 %v506, %v924
      %v926 = vpop.f32.mrb[0].mxu0
      %927 = vmatprep.mubr.f32.mxu0 0.0
      %928 = vmatmul.mubr.f32.gmra.mrb[0].mxu0 %v458
      %v929 = vpop.f32.mrb[0].mxu0
      %v930 = vadd.f32 %v506, %v929
      %v931 = vpop.f32.mrb[0].mxu0
      %932 = vmatprep.mubr.f32.mxu0 0.0
      %933 = vmatmul.mubr.f32.gmra.mrb[0].mxu0 %v459
      %v934 = vpop.f32.mrb[0].mxu0
      %v935 = vadd.f32 %v506, %v934
      %v936 = vpop.f32.mrb[0].mxu0
      %937 = vmatprep.mubr.f32.mxu0 0.0
      %938 = vmatmul.mubr.f32.gmra.mrb[0].mxu0 %v460
      %v939 = vpop.f32.mrb[0].mxu0
      %v940 = vadd.f32 %v506, %v939
      %v941 = vpop.f32.mrb[0].mxu0
      %942 = vmatprep.mubr.f32.mxu0 0.0
      %943 = vmatmul.mubr.f32.gmra.mrb[0].mxu0 %v461
      %v944 = vpop.f32.mrb[0].mxu0
      %v945 = vadd.f32 %v506, %v944
      %v946 = vpop.f32.mrb[0].mxu0
      %947 = vmatprep.mubr.f32.mxu0 0.0
      %948 = vmatmul.mubr.f32.gmra.mrb[0].mxu0 %v462
      %v949 = vpop.f32.mrb[0].mxu0
      %v950 = vadd.f32 %v506, %v949
      %v951 = vpop.f32.mrb[0].mxu0
      %952 = vmatprep.mubr.f32.mxu0 0.0
      %953 = vmatmul.mubr.f32.gmra.mrb[0].mxu0 %v463
      %v954 = vpop.f32.mrb[0].mxu0
      %v955 = vadd.f32 %v506, %v954
      %v956 = vpop.f32.mrb[0].mxu0
      %957 = vmatprep.mubr.f32.mxu0 0.0
      %958 = vmatmul.mubr.f32.gmra.mrb[0].mxu0 %v464
      %v959 = vpop.f32.mrb[0].mxu0
      %v960 = vadd.f32 %v506, %v959
      %v961 = vpop.f32.mrb[0].mxu0
      %962 = vmatprep.mubr.f32.mxu0 0.0
      %963 = vmatmul.mubr.f32.gmra.mrb[0].mxu0 %v465
      %v964 = vpop.f32.mrb[0].mxu0
      %v965 = vadd.f32 %v506, %v964
      %v966 = vpop.f32.mrb[0].mxu0
      %967 = vmatprep.mubr.f32.mxu0 0.0
      %968 = vmatmul.mubr.f32.gmra.mrb[0].mxu0 %v466
      %v969 = vpop.f32.mrb[0].mxu0
      %v970 = vadd.f32 %v506, %v969
      %v971 = vpop.f32.mrb[0].mxu0
      %972 = vmatprep.mubr.f32.mxu0 0.0
      %973 = vmatmul.mubr.f32.gmra.mrb[0].mxu0 %v467
      %v974 = vpop.f32.mrb[0].mxu0
      %v975 = vadd.f32 %v506, %v974
      %v976 = vpop.f32.mrb[0].mxu0
      %977 = vmatprep.mubr.f32.mxu0 0.0
      %978 = vmatmul.mubr.f32.gmra.mrb[0].mxu0 %v468
      %v979 = vpop.f32.mrb[0].mxu0
      %v980 = vadd.f32 %v506, %v979
      %v981 = vpop.f32.mrb[0].mxu0
      %982 = vmatprep.mubr.f32.mxu0 0.0
      %983 = vmatmul.mubr.f32.gmra.mrb[0].mxu0 %v469
      %v984 = vpop.f32.mrb[0].mxu0
      %v985 = vadd.f32 %v506, %v984
      %v986 = vpop.f32.mrb[0].mxu0
      %987 = vmatprep.mubr.f32.mxu0 0.0
      %988 = vmatmul.mubr.f32.gmra.mrb[0].mxu0 %v470
      %v989 = vpop.f32.mrb[0].mxu0
      %v990 = vadd.f32 %v506, %v989
      %v991 = vpop.f32.mrb[0].mxu0
      %992 = vmatprep.mubr.f32.mxu0 0.0
      %993 = vmatmul.mubr.f32.gmra.mrb[0].mxu0 %v471
      %v994 = vpop.f32.mrb[0].mxu0
      %v995 = vadd.f32 %v506, %v994
      %v996 = vpop.f32.mrb[0].mxu0
      %997 = vmatprep.mubr.f32.mxu0 0.0
      %998 = vmatmul.mubr.f32.gmra.mrb[0].mxu0 %v472
      %v999 = vpop.f32.mrb[0].mxu0
      %v1000 = vadd.f32 %v506, %v999
      %v1001 = vpop.f32.mrb[0].mxu0
      %1002 = vmatprep.mubr.f32.mxu0 0.0
      %1003 = vmatmul.mubr.f32.gmra.mrb[0].mxu0 %v473
      %v1004 = vpop.f32.mrb[0].mxu0
      %v1005 = vadd.f32 %v506, %v1004
      %v1006 = vpop.f32.mrb[0].mxu0
      %1007 = vmatprep.mubr.f32.mxu0 0.0
      %1008 = vmatmul.mubr.f32.gmra.mrb[0].mxu0 %v474
      %v1009 = vpop.f32.mrb[0].mxu0
      %v1010 = vadd.f32 %v506, %v1009
      %v1011 = vpop.f32.mrb[0].mxu0
      %1012 = vmatprep.mubr.f32.mxu0 0.0
      %1013 = vmatmul.mubr.f32.gmra.mrb[0].mxu0 %v475
      %v1014 = vpop.f32.mrb[0].mxu0
      %v1015 = vadd.f32 %v506, %v1014
      %v1016 = vpop.f32.mrb[0].mxu0
      %1017 = vmatprep.mubr.f32.mxu0 0.0
      %1018 = vmatmul.mubr.f32.gmra.mrb[0].mxu0 %v476
      %v1019 = vpop.f32.mrb[0].mxu0
      %v1020 = vadd.f32 %v506, %v1019
      %v1021 = vpop.f32.mrb[0].mxu0
      %1022 = vmatprep.mubr.f32.mxu0 0.0
      %1023 = vmatmul.mubr.f32.gmra.mrb[0].mxu0 %v477
      %v1024 = vpop.f32.mrb[0].mxu0
      %v1025 = vadd.f32 %v506, %v1024
      %v1026 = vpop.f32.mrb[0].mxu0
      %1027 = vmatprep.mubr.f32.mxu0 0.0
      %1028 = vmatmul.mubr.f32.gmra.mrb[0].mxu0 %v478
      %v1029 = vpop.f32.mrb[0].mxu0
      %v1030 = vadd.f32 %v506, %v1029
      %v1031 = vpop.f32.mrb[0].mxu0
      %1032 = vmatprep.mubr.f32.mxu0 0.0
      %1033 = vmatmul.mubr.f32.gmra.mrb[0].mxu0 %v479
      %v1034 = vpop.f32.mrb[0].mxu0
      %v1035 = vadd.f32 %v506, %v1034
      %v1036 = vpop.f32.mrb[0].mxu0
      %1037 = vmatprep.mubr.f32.mxu0 0.0
      %1038 = vmatmul.mubr.f32.gmra.mrb[0].mxu0 %v480
      %v1039 = vpop.f32.mrb[0].mxu0
      %v1040 = vadd.f32 %v506, %v1039
      %v1041 = vpop.f32.mrb[0].mxu0
      %1042 = vmatprep.mubr.f32.mxu0 0.0
      %1043 = vmatmul.mubr.f32.gmra.mrb[0].mxu0 %v481
      %v1044 = vpop.f32.mrb[0].mxu0
      %v1045 = vadd.f32 %v506, %v1044
      %v1046 = vpop.f32.mrb[0].mxu0
      %1047 = vmatprep.mubr.f32.mxu0 0.0
      %1048 = vmatmul.mubr.f32.gmra.mrb[0].mxu0 %v482
      %v1049 = vpop.f32.mrb[0].mxu0
      %v1050 = vadd.f32 %v506, %v1049
      %v1051 = vpop.f32.mrb[0].mxu0
      %1052 = vmatprep.mubr.f32.mxu0 0.0
      %1053 = vmatmul.mubr.f32.gmra.mrb[0].mxu0 %v483
      %v1054 = vpop.f32.mrb[0].mxu0
      %v1055 = vadd.f32 %v506, %v1054
      %v1056 = vpop.f32.mrb[0].mxu0
      %1057 = vmatprep.mubr.f32.mxu0 0.0
      %1058 = vmatmul.mubr.f32.gmra.mrb[0].mxu0 %v484
      %v1059 = vpop.f32.mrb[0].mxu0
      %v1060 = vadd.f32 %v506, %v1059
      %v1061 = vpop.f32.mrb[0].mxu0
      %1062 = vdwg.mxu0
      %v1063 = vmax.f32 %v575, 0.0
      %v1064 = vmax.f32 %v580, 0.0
      %v1065 = vmax.f32 %v585, 0.0
      %v1066 = vmax.f32 %v590, 0.0
      %v1067 = vmax.f32 %v595, 0.0
      %v1068 = vmax.f32 %v600, 0.0
      %v1069 = vmax.f32 %v605, 0.0
      %v1070 = vmax.f32 %v610, 0.0
      %v1071 = vmax.f32 %v615, 0.0
      %v1072 = vmax.f32 %v620, 0.0
      %v1073 = vmax.f32 %v625, 0.0
      %v1074 = vmax.f32 %v630, 0.0
      %v1075 = vmax.f32 %v635, 0.0
      %v1076 = vmax.f32 %v640, 0.0
      %v1077 = vmax.f32 %v645, 0.0
      %v1078 = vmax.f32 %v650, 0.0
      %v1079 = vmax.f32 %v655, 0.0
      %v1080 = vmax.f32 %v660, 0.0
      %v1081 = vmax.f32 %v665, 0.0
      %v1082 = vmax.f32 %v670, 0.0
      %v1083 = vmax.f32 %v675, 0.0
      %v1084 = vmax.f32 %v680, 0.0
      %v1085 = vmax.f32 %v685, 0.0
      %v1086 = vmax.f32 %v690, 0.0
      %v1087 = vmax.f32 %v695, 0.0
      %v1088 = vmax.f32 %v700, 0.0
      %v1089 = vmax.f32 %v705, 0.0
      %v1090 = vmax.f32 %v710, 0.0
      %v1091 = vmax.f32 %v715, 0.0
      %v1092 = vmax.f32 %v720, 0.0
      %v1093 = vmax.f32 %v725, 0.0
      %v1094 = vmax.f32 %v730, 0.0
      %v1095 = vmax.f32 %v735, 0.0
      %v1096 = vmax.f32 %v740, 0.0
      %v1097 = vmax.f32 %v745, 0.0
      %v1098 = vmax.f32 %v750, 0.0
      %v1099 = vmax.f32 %v755, 0.0
      %v1100 = vmax.f32 %v760, 0.0
      %v1101 = vmax.f32 %v765, 0.0
      %v1102 = vmax.f32 %v770, 0.0
      %v1103 = vmax.f32 %v775, 0.0
      %v1104 = vmax.f32 %v780, 0.0
      %v1105 = vmax.f32 %v785, 0.0
      %v1106 = vmax.f32 %v790, 0.0
      %v1107 = vmax.f32 %v795, 0.0
      %v1108 = vmax.f32 %v800, 0.0
      %v1109 = vmax.f32 %v805, 0.0
      %v1110 = vmax.f32 %v810, 0.0
      %v1111 = vmax.f32 %v815, 0.0
      %v1112 = vmax.f32 %v820, 0.0
      %v1113 = vmax.f32 %v825, 0.0
      %v1114 = vmax.f32 %v830, 0.0
      %v1115 = vmax.f32 %v835, 0.0
      %v1116 = vmax.f32 %v840, 0.0
      %v1117 = vmax.f32 %v845, 0.0
      %v1118 = vmax.f32 %v850, 0.0
      %v1119 = vmax.f32 %v855, 0.0
      %v1120 = vmax.f32 %v860, 0.0
      %v1121 = vmax.f32 %v865, 0.0
      %v1122 = vmax.f32 %v870, 0.0
      %v1123 = vmax.f32 %v875, 0.0
      %v1124 = vmax.f32 %v880, 0.0
      %v1125 = vmax.f32 %v885, 0.0
      %v1126 = vmax.f32 %v890, 0.0
      %v1127 = vmax.f32 %v895, 0.0
      %v1128 = vmax.f32 %v900, 0.0
      %v1129 = vmax.f32 %v905, 0.0
      %v1130 = vmax.f32 %v910, 0.0
      %v1131 = vmax.f32 %v915, 0.0
      %v1132 = vmax.f32 %v920, 0.0
      %v1133 = vmax.f32 %v925, 0.0
      %v1134 = vmax.f32 %v930, 0.0
      %v1135 = vmax.f32 %v935, 0.0
      %v1136 = vmax.f32 %v940, 0.0
      %v1137 = vmax.f32 %v945, 0.0
      %v1138 = vmax.f32 %v950, 0.0
      %v1139 = vmax.f32 %v955, 0.0
      %v1140 = vmax.f32 %v960, 0.0
      %v1141 = vmax.f32 %v965, 0.0
      %v1142 = vmax.f32 %v970, 0.0
      %v1143 = vmax.f32 %v975, 0.0
      %v1144 = vmax.f32 %v980, 0.0
      %v1145 = vmax.f32 %v985, 0.0
      %v1146 = vmax.f32 %v990, 0.0
      %v1147 = vmax.f32 %v995, 0.0
      %v1148 = vmax.f32 %v1000, 0.0
      %v1149 = vmax.f32 %v1005, 0.0
      %v1150 = vmax.f32 %v1010, 0.0
      %v1151 = vmax.f32 %v1015, 0.0
      %v1152 = vmax.f32 %v1020, 0.0
      %v1153 = vmax.f32 %v1025, 0.0
      %v1154 = vmax.f32 %v1030, 0.0
      %v1155 = vmax.f32 %v1035, 0.0
      %v1156 = vmax.f32 %v1040, 0.0
      %v1157 = vmax.f32 %v1045, 0.0
      %v1158 = vmax.f32 %v1050, 0.0
      %v1159 = vmax.f32 %v1055, 0.0
      %v1160 = vmax.f32 %v1060, 0.0
      %vm1186 = vcmask 1043456
      %v1187 = vrot.slane %v1087, 4
      %v1188 = vrot.slane %v1088, 4
      %v1189 = vsel %vm1186, %v1187, %v1188
      %v1190 = vrot.slane %v1089, 4
      %v1191 = vsel %vm1186, %v1188, %v1190
      %v1192 = vrot.slane %v1090, 4
      %v1193 = vsel %vm1186, %v1190, %v1192
      %v1194 = vrot.slane %v1091, 4
      %v1195 = vsel %vm1186, %v1192, %v1194
      %v1196 = vrot.slane %v1092, 4
      %v1197 = vsel %vm1186, %v1194, %v1196
      %v1198 = vrot.slane %v1093, 4
      %v1199 = vsel %vm1186, %v1196, %v1198
      %v1200 = vrot.slane %v1094, 4
      %v1201 = vsel %vm1186, %v1198, %v1200
      %v1202 = vrot.slane %v1095, 4
      %v1203 = vsel %vm1186, %v1200, %v1202
      %v1204 = vrot.slane %v1096, 4
      %v1205 = vsel %vm1186, %v1202, %v1204
      %v1206 = vrot.slane %v1097, 4
      %v1207 = vsel %vm1186, %v1204, %v1206
      %v1208 = vrot.slane %v1098, 4
      %v1209 = vsel %vm1186, %v1206, %v1208
      %v1210 = vrot.slane %v1099, 4
      %v1211 = vsel %vm1186, %v1208, %v1210
      %v1212 = vrot.slane %v1100, 4
      %v1213 = vsel %vm1186, %v1210, %v1212
      %v1214 = vrot.slane %v1101, 4
      %v1215 = vsel %vm1186, %v1212, %v1214
      %v1216 = vrot.slane %v1102, 4
      %v1217 = vsel %vm1186, %v1214, %v1216
      %v1218 = vrot.slane %v1103, 4
      %v1219 = vsel %vm1186, %v1216, %v1218
      %v1220 = vrot.slane %v1104, 4
      %v1221 = vsel %vm1186, %v1218, %v1220
      %v1222 = vrot.slane %v1105, 4
      %v1223 = vsel %vm1186, %v1220, %v1222
      %v1224 = vrot.slane %v1106, 4
      %v1225 = vsel %vm1186, %v1222, %v1224
      %v1226 = vrot.slane %v1107, 4
      %v1227 = vsel %vm1186, %v1224, %v1226
      %v1228 = vrot.slane %v1108, 4
      %v1229 = vsel %vm1186, %v1226, %v1228
      %v1230 = vrot.slane %v1109, 4
      %v1231 = vsel %vm1186, %v1228, %v1230
      %v1232 = vrot.slane %v1110, 4
      %v1233 = vsel %vm1186, %v1230, %v1232
      %v1234 = vrot.slane %v1111, 4
      %v1235 = vsel %vm1186, %v1232, %v1234
      %v1261 = vmax.f32 %v1063, %v1189
      %v1262 = vmax.f32 %v1064, %v1191
      %v1263 = vmax.f32 %v1065, %v1193
      %v1264 = vmax.f32 %v1066, %v1195
      %v1265 = vmax.f32 %v1067, %v1197
      %v1266 = vmax.f32 %v1068, %v1199
      %v1267 = vmax.f32 %v1069, %v1201
      %v1268 = vmax.f32 %v1070, %v1203
      %v1269 = vmax.f32 %v1071, %v1205
      %v1270 = vmax.f32 %v1072, %v1207
      %v1271 = vmax.f32 %v1073, %v1209
      %v1272 = vmax.f32 %v1074, %v1211
      %v1273 = vmax.f32 %v1075, %v1213
      %v1274 = vmax.f32 %v1076, %v1215
      %v1275 = vmax.f32 %v1077, %v1217
      %v1276 = vmax.f32 %v1078, %v1219
      %v1277 = vmax.f32 %v1079, %v1221
      %v1278 = vmax.f32 %v1080, %v1223
      %v1279 = vmax.f32 %v1081, %v1225
      %v1280 = vmax.f32 %v1082, %v1227
      %v1281 = vmax.f32 %v1083, %v1229
      %v1282 = vmax.f32 %v1084, %v1231
      %v1283 = vmax.f32 %v1085, %v1233
      %v1284 = vmax.f32 %v1086, %v1235
      %v1285 = vmax.f32 %v1087, %v1234
      %v1311 = vrot.slane %v1136, 4
      %v1312 = vrot.slane %v1137, 4
      %v1313 = vsel %vm1186, %v1311, %v1312
      %v1314 = vrot.slane %v1138, 4
      %v1315 = vsel %vm1186, %v1312, %v1314
      %v1316 = vrot.slane %v1139, 4
      %v1317 = vsel %vm1186, %v1314, %v1316
      %v1318 = vrot.slane %v1140, 4
      %v1319 = vsel %vm1186, %v1316, %v1318
      %v1320 = vrot.slane %v1141, 4
      %v1321 = vsel %vm1186, %v1318, %v1320
      %v1322 = vrot.slane %v1142, 4
      %v1323 = vsel %vm1186, %v1320, %v1322
      %v1324 = vrot.slane %v1143, 4
      %v1325 = vsel %vm1186, %v1322, %v1324
      %v1326 = vrot.slane %v1144, 4
      %v1327 = vsel %vm1186, %v1324, %v1326
      %v1328 = vrot.slane %v1145, 4
      %v1329 = vsel %vm1186, %v1326, %v1328
      %v1330 = vrot.slane %v1146, 4
      %v1331 = vsel %vm1186, %v1328, %v1330
      %v1332 = vrot.slane %v1147, 4
      %v1333 = vsel %vm1186, %v1330, %v1332
      %v1334 = vrot.slane %v1148, 4
      %v1335 = vsel %vm1186, %v1332, %v1334
      %v1336 = vrot.slane %v1149, 4
      %v1337 = vsel %vm1186, %v1334, %v1336
      %v1338 = vrot.slane %v1150, 4
      %v1339 = vsel %vm1186, %v1336, %v1338
      %v1340 = vrot.slane %v1151, 4
      %v1341 = vsel %vm1186, %v1338, %v1340
      %v1342 = vrot.slane %v1152, 4
      %v1343 = vsel %vm1186, %v1340, %v1342
      %v1344 = vrot.slane %v1153, 4
      %v1345 = vsel %vm1186, %v1342, %v1344
      %v1346 = vrot.slane %v1154, 4
      %v1347 = vsel %vm1186, %v1344, %v1346
      %v1348 = vrot.slane %v1155, 4
      %v1349 = vsel %vm1186, %v1346, %v1348
      %v1350 = vrot.slane %v1156, 4
      %v1351 = vsel %vm1186, %v1348, %v1350
      %v1352 = vrot.slane %v1157, 4
      %v1353 = vsel %vm1186, %v1350, %v1352
      %v1354 = vrot.slane %v1158, 4
      %v1355 = vsel %vm1186, %v1352, %v1354
      %v1356 = vrot.slane %v1159, 4
      %v1357 = vsel %vm1186, %v1354, %v1356
      %v1358 = vrot.slane %v1160, 4
      %v1359 = vsel %vm1186, %v1356, %v1358
      %v1385 = vmax.f32 %v1112, %v1313
      %v1386 = vmax.f32 %v1113, %v1315
      %v1387 = vmax.f32 %v1114, %v1317
      %v1388 = vmax.f32 %v1115, %v1319
      %v1389 = vmax.f32 %v1116, %v1321
      %v1390 = vmax.f32 %v1117, %v1323
      %v1391 = vmax.f32 %v1118, %v1325
      %v1392 = vmax.f32 %v1119, %v1327
      %v1393 = vmax.f32 %v1120, %v1329
      %v1394 = vmax.f32 %v1121, %v1331
      %v1395 = vmax.f32 %v1122, %v1333
      %v1396 = vmax.f32 %v1123, %v1335
      %v1397 = vmax.f32 %v1124, %v1337
      %v1398 = vmax.f32 %v1125, %v1339
      %v1399 = vmax.f32 %v1126, %v1341
      %v1400 = vmax.f32 %v1127, %v1343
      %v1401 = vmax.f32 %v1128, %v1345
      %v1402 = vmax.f32 %v1129, %v1347
      %v1403 = vmax.f32 %v1130, %v1349
      %v1404 = vmax.f32 %v1131, %v1351
      %v1405 = vmax.f32 %v1132, %v1353
      %v1406 = vmax.f32 %v1133, %v1355
      %v1407 = vmax.f32 %v1134, %v1357
      %v1408 = vmax.f32 %v1135, %v1359
      %v1409 = vmax.f32 %v1136, %v1358
      %v1410 = vmax.f32 %v1261, %v1385
      %v1411 = vmax.f32 %v1262, %v1386
      %v1412 = vmax.f32 %v1263, %v1387
      %v1413 = vmax.f32 %v1264, %v1388
      %v1414 = vmax.f32 %v1265, %v1389
      %v1415 = vmax.f32 %v1266, %v1390
      %v1416 = vmax.f32 %v1267, %v1391
      %v1417 = vmax.f32 %v1268, %v1392
      %v1418 = vmax.f32 %v1269, %v1393
      %v1419 = vmax.f32 %v1270, %v1394
      %v1420 = vmax.f32 %v1271, %v1395
      %v1421 = vmax.f32 %v1272, %v1396
      %v1422 = vmax.f32 %v1273, %v1397
      %v1423 = vmax.f32 %v1274, %v1398
      %v1424 = vmax.f32 %v1275, %v1399
      %v1425 = vmax.f32 %v1276, %v1400
      %v1426 = vmax.f32 %v1277, %v1401
      %v1427 = vmax.f32 %v1278, %v1402
      %v1428 = vmax.f32 %v1279, %v1403
      %v1429 = vmax.f32 %v1280, %v1404
      %v1430 = vmax.f32 %v1281, %v1405
      %v1431 = vmax.f32 %v1282, %v1406
      %v1432 = vmax.f32 %v1283, %v1407
      %v1433 = vmax.f32 %v1284, %v1408
      %v1434 = vmax.f32 %v1285, %v1409
      %1435 = vst [vmem:[#allocation2] sm:$0xff] %v1410
      %1436 = vst [vmem:[#allocation2 + $0x8] sm:$0xff] %v1411
      %1437 = vst [vmem:[#allocation2 + $0x10] sm:$0xff] %v1412
      %1438 = vst [vmem:[#allocation2 + $0x18] sm:$0xff] %v1413
      %1439 = vst [vmem:[#allocation2 + $0x20] sm:$0xff] %v1414
      %1440 = vst [vmem:[#allocation2 + $0x28] sm:$0xff] %v1415
      %1441 = vst [vmem:[#allocation2 + $0x30] sm:$0xff] %v1416
      %1442 = vst [vmem:[#allocation2 + $0x38] sm:$0xff] %v1417
      %1443 = vst [vmem:[#allocation2 + $0x40] sm:$0xff] %v1418
      %1444 = vst [vmem:[#allocation2 + $0x48] sm:$0xff] %v1419
      %1445 = vst [vmem:[#allocation2 + $0x50] sm:$0xff] %v1420
      %1446 = vst [vmem:[#allocation2 + $0x58] sm:$0xff] %v1421
      %1447 = vst [vmem:[#allocation2 + $0x60] sm:$0xff] %v1422
      %1448 = vst [vmem:[#allocation2 + $0x68] sm:$0xff] %v1423
      %1449 = vst [vmem:[#allocation2 + $0x70] sm:$0xff] %v1424
      %1450 = vst [vmem:[#allocation2 + $0x78] sm:$0xff] %v1425
      %1451 = vst [vmem:[#allocation2 + $0x80] sm:$0xff] %v1426
      %1452 = vst [vmem:[#allocation2 + $0x88] sm:$0xff] %v1427
      %1453 = vst [vmem:[#allocation2 + $0x90] sm:$0xff] %v1428
      %1454 = vst [vmem:[#allocation2 + $0x98] sm:$0xff] %v1429
      %1455 = vst [vmem:[#allocation2 + $0xa0] sm:$0xff] %v1430
      %1456 = vst [vmem:[#allocation2 + $0xa8] sm:$0xff] %v1431
      %1457 = vst [vmem:[#allocation2 + $0xb0] sm:$0xff] %v1432
      %1458 = vst [vmem:[#allocation2 + $0xb8] sm:$0xff] %v1433
      %1459 = vst [vmem:[#allocation2 + $0xc0] sm:$0xf] %v1434
      %1460 = vst [vmem:[#allocation2 + $0xc4] sm:$0xff] 0.0
      %1461 = vst [vmem:[#allocation2 + $0xcc] sm:$0xf] 0.0
      %v1462 = vld [vmem:[#allocation2] sm:$0xff]
      %v1463 = vld [vmem:[#allocation2 + $0x8] sm:$0xff]
      %v1464 = vld [vmem:[#allocation2 + $0x10] sm:$0xff]
      %v1465 = vld [vmem:[#allocation2 + $0x18] sm:$0xff]
      %v1466 = vld [vmem:[#allocation2 + $0x20] sm:$0xff]
      %v1467 = vld [vmem:[#allocation2 + $0x28] sm:$0xff]
      %v1468 = vld [vmem:[#allocation2 + $0x30] sm:$0xff]
      %v1469 = vld [vmem:[#allocation2 + $0x38] sm:$0xff]
      %v1470 = vld [vmem:[#allocation2 + $0x40] sm:$0xff]
      %v1471 = vld [vmem:[#allocation2 + $0x48] sm:$0xff]
      %v1472 = vld [vmem:[#allocation2 + $0x50] sm:$0xff]
      %v1473 = vld [vmem:[#allocation2 + $0x58] sm:$0xff]
      %v1474 = vld [vmem:[#allocation2 + $0x60] sm:$0xff]
      %v1475 = vld [vmem:[#allocation2 + $0x68] sm:$0xff]
      %v1476 = vld [vmem:[#allocation2 + $0x70] sm:$0xff]
      %v1477 = vld [vmem:[#allocation2 + $0x78] sm:$0xff]
      %v1478 = vld [vmem:[#allocation2 + $0x80] sm:$0xff]
      %v1479 = vld [vmem:[#allocation2 + $0x88] sm:$0xf]
      %v1480 = vld [vmem:[%s3] sm:$0xff]
      %v1481 = vld [vmem:[%s3 + $0x8] sm:$0xff]
      %v1482 = vld [vmem:[%s3 + $0x10] sm:$0xff]
      %v1483 = vld [vmem:[%s3 + $0x18] sm:$0xff]
      %v1484 = vld [vmem:[%s3 + $0x20] sm:$0xff]
      %v1485 = vld [vmem:[%s3 + $0x28] sm:$0xff]
      %v1486 = vld [vmem:[%s3 + $0x30] sm:$0xff]
      %v1487 = vld [vmem:[%s3 + $0x38] sm:$0xff]
      %v1488 = vld [vmem:[%s3 + $0x40] sm:$0xff]
      %v1489 = vld [vmem:[%s3 + $0x48] sm:$0xff]
      %v1490 = vld [vmem:[%s3 + $0x50] sm:$0xff]
      %v1491 = vld [vmem:[%s3 + $0x58] sm:$0xff]
      %v1492 = vld [vmem:[%s3 + $0x60] sm:$0xff]
      %v1493 = vld [vmem:[%s3 + $0x68] sm:$0xff]
      %v1494 = vld [vmem:[%s3 + $0x70] sm:$0xff]
      %v1495 = vld [vmem:[%s3 + $0x78] sm:$0xff]
      %v1496 = vld [vmem:[#allocation2 + $0x1] sm:$0xff]
      %v1497 = vld [vmem:[#allocation2 + $0x9] sm:$0xff]
      %v1498 = vld [vmem:[#allocation2 + $0x11] sm:$0xff]
      %v1499 = vld [vmem:[#allocation2 + $0x19] sm:$0xff]
      %v1500 = vld [vmem:[#allocation2 + $0x21] sm:$0xff]
      %v1501 = vld [vmem:[#allocation2 + $0x29] sm:$0xff]
      %v1502 = vld [vmem:[#allocation2 + $0x31] sm:$0xff]
      %v1503 = vld [vmem:[#allocation2 + $0x39] sm:$0xff]
      %v1504 = vld [vmem:[#allocation2 + $0x41] sm:$0xff]
      %v1505 = vld [vmem:[#allocation2 + $0x49] sm:$0xff]
      %v1506 = vld [vmem:[#allocation2 + $0x51] sm:$0xff]
      %v1507 = vld [vmem:[#allocation2 + $0x59] sm:$0xff]
      %v1508 = vld [vmem:[#allocation2 + $0x61] sm:$0xff]
      %v1509 = vld [vmem:[#allocation2 + $0x69] sm:$0xff]
      %v1510 = vld [vmem:[#allocation2 + $0x71] sm:$0xff]
      %v1511 = vld [vmem:[#allocation2 + $0x79] sm:$0xff]
      %v1512 = vld [vmem:[#allocation2 + $0x81] sm:$0xff]
      %v1513 = vld [vmem:[#allocation2 + $0x89] sm:$0xf]
      %v1514 = vld [vmem:[%s3 + $0x80] sm:$0xff]
      %v1515 = vld [vmem:[%s3 + $0x88] sm:$0xff]
      %v1516 = vld [vmem:[%s3 + $0x90] sm:$0xff]
      %v1517 = vld [vmem:[%s3 + $0x98] sm:$0xff]
      %v1518 = vld [vmem:[%s3 + $0xa0] sm:$0xff]
      %v1519 = vld [vmem:[%s3 + $0xa8] sm:$0xff]
      %v1520 = vld [vmem:[%s3 + $0xb0] sm:$0xff]
      %v1521 = vld [vmem:[%s3 + $0xb8] sm:$0xff]
      %v1522 = vld [vmem:[%s3 + $0xc0] sm:$0xff]
      %v1523 = vld [vmem:[%s3 + $0xc8] sm:$0xff]
      %v1524 = vld [vmem:[%s3 + $0xd0] sm:$0xff]
      %v1525 = vld [vmem:[%s3 + $0xd8] sm:$0xff]
      %v1526 = vld [vmem:[%s3 + $0xe0] sm:$0xff]
      %v1527 = vld [vmem:[%s3 + $0xe8] sm:$0xff]
      %v1528 = vld [vmem:[%s3 + $0xf0] sm:$0xff]
      %v1529 = vld [vmem:[%s3 + $0xf8] sm:$0xff]
      %1530 = vmatprep.subr.mxu0 0.0
      %1531 = vmatpush1.msra.mxu0 %v1514
      %1532 = vmatprep.subr.mxu0 0.0
      %1533 = vmatpush1.msra.mxu0 %v1515
      %1534 = vmatprep.subr.mxu0 0.0
      %1535 = vmatpush1.msra.mxu0 %v1516
      %1536 = vmatprep.subr.mxu0 0.0
      %1537 = vmatpush1.msra.mxu0 %v1517
      %1538 = vmatprep.subr.mxu0 0.0
      %1539 = vmatpush1.msra.mxu0 %v1518
      %1540 = vmatprep.subr.mxu0 0.0
      %1541 = vmatpush1.msra.mxu0 %v1519
      %1542 = vmatprep.subr.mxu0 0.0
      %1543 = vmatpush1.msra.mxu0 %v1520
      %1544 = vmatprep.subr.mxu0 0.0
      %1545 = vmatpush1.msra.mxu0 %v1521
      %1546 = vmatprep.subr.mxu0 0.0
      %1547 = vmatpush1.msra.mxu0 %v1522
      %1548 = vmatprep.subr.mxu0 0.0
      %1549 = vmatpush1.msra.mxu0 %v1523
      %1550 = vmatprep.subr.mxu0 0.0
      %1551 = vmatpush1.msra.mxu0 %v1524
      %1552 = vmatprep.subr.mxu0 0.0
      %1553 = vmatpush1.msra.mxu0 %v1525
      %1554 = vmatprep.subr.mxu0 0.0
      %1555 = vmatpush1.msra.mxu0 %v1526
      %1556 = vmatprep.subr.mxu0 0.0
      %1557 = vmatpush1.msra.mxu0 %v1527
      %1558 = vmatprep.subr.mxu0 0.0
      %1559 = vmatpush1.msra.mxu0 %v1528
      %1560 = vmatprep.subr.mxu0 0.0
      %1561 = vmatpush1.msra.mxu0 %v1529
      %1562 = vmatprep.subr.mxu0 0.0
      %1563 = vmatpush1.msra.mxu0 0.0
      %1564 = vmatprep.subr.mxu0 0.0
      %1565 = vmatpush1.msra.mxu0 0.0
      %1566 = vmatprep.subr.mxu0 0.0
      %1567 = vmatpush1.msra.mxu0 0.0
      %1568 = vmatprep.subr.mxu0 0.0
      %1569 = vmatpush1.msra.mxu0 0.0
      %1570 = vmatprep.subr.mxu0 0.0
      %1571 = vmatpush1.msra.mxu0 0.0
      %1572 = vmatprep.subr.mxu0 0.0
      %1573 = vmatpush1.msra.mxu0 0.0
      %1574 = vmatprep.subr.mxu0 0.0
      %1575 = vmatpush1.msra.mxu0 0.0
      %1576 = vmatprep.subr.mxu0 0.0
      %1577 = vmatpush1.msra.mxu0 0.0
      %1578 = vmatprep.subr.mxu0 0.0
      %1579 = vmatpush1.msra.mxu0 0.0
      %1580 = vmatprep.subr.mxu0 0.0
      %1581 = vmatpush1.msra.mxu0 0.0
      %1582 = vmatprep.subr.mxu0 0.0
      %1583 = vmatpush1.msra.mxu0 0.0
      %1584 = vmatprep.subr.mxu0 0.0
      %1585 = vmatpush1.msra.mxu0 0.0
      %1586 = vmatprep.subr.mxu0 0.0
      %1587 = vmatpush1.msra.mxu0 0.0
      %1588 = vmatprep.subr.mxu0 0.0
      %1589 = vmatpush1.msra.mxu0 0.0
      %1590 = vmatprep.subr.mxu0 0.0
      %1591 = vmatpush1.msra.mxu0 0.0
      %1592 = vmatprep.subr.mxu0 0.0
      %1593 = vmatpush1.msra.mxu0 0.0
      %1594 = vmatprep.mubr.f32.mxu0 0.0
      %1595 = vmatmul.mubr.f32.gmra.mrb[0].mxu0 %v1496
      %v1596 = vpop.f32.mrb[0].mxu0
      %v1597 = vadd.f32 0.0, %v1596
      %v1598 = vpop.f32.mrb[0].mxu0
      %1599 = vmatprep.mubr.f32.mxu0 0.0
      %1600 = vmatmul.mubr.f32.gmra.mrb[0].mxu0 %v1497
      %v1601 = vpop.f32.mrb[0].mxu0
      %v1602 = vadd.f32 0.0, %v1601
      %v1603 = vpop.f32.mrb[0].mxu0
      %1604 = vmatprep.mubr.f32.mxu0 0.0
      %1605 = vmatmul.mubr.f32.gmra.mrb[0].mxu0 %v1498
      %v1606 = vpop.f32.mrb[0].mxu0
      %v1607 = vadd.f32 0.0, %v1606
      %v1608 = vpop.f32.mrb[0].mxu0
      %1609 = vmatprep.mubr.f32.mxu0 0.0
      %1610 = vmatmul.mubr.f32.gmra.mrb[0].mxu0 %v1499
      %v1611 = vpop.f32.mrb[0].mxu0
      %v1612 = vadd.f32 0.0, %v1611
      %v1613 = vpop.f32.mrb[0].mxu0
      %1614 = vmatprep.mubr.f32.mxu0 0.0
      %1615 = vmatmul.mubr.f32.gmra.mrb[0].mxu0 %v1500
      %v1616 = vpop.f32.mrb[0].mxu0
      %v1617 = vadd.f32 0.0, %v1616
      %v1618 = vpop.f32.mrb[0].mxu0
      %1619 = vmatprep.mubr.f32.mxu0 0.0
      %1620 = vmatmul.mubr.f32.gmra.mrb[0].mxu0 %v1501
      %v1621 = vpop.f32.mrb[0].mxu0
      %v1622 = vadd.f32 0.0, %v1621
      %v1623 = vpop.f32.mrb[0].mxu0
      %1624 = vmatprep.mubr.f32.mxu0 0.0
      %1625 = vmatmul.mubr.f32.gmra.mrb[0].mxu0 %v1502
      %v1626 = vpop.f32.mrb[0].mxu0
      %v1627 = vadd.f32 0.0, %v1626
      %v1628 = vpop.f32.mrb[0].mxu0
      %1629 = vmatprep.mubr.f32.mxu0 0.0
      %1630 = vmatmul.mubr.f32.gmra.mrb[0].mxu0 %v1503
      %v1631 = vpop.f32.mrb[0].mxu0
      %v1632 = vadd.f32 0.0, %v1631
      %v1633 = vpop.f32.mrb[0].mxu0
      %1634 = vmatprep.mubr.f32.mxu0 0.0
      %1635 = vmatmul.mubr.f32.gmra.mrb[0].mxu0 %v1504
      %v1636 = vpop.f32.mrb[0].mxu0
      %v1637 = vadd.f32 0.0, %v1636
      %v1638 = vpop.f32.mrb[0].mxu0
      %1639 = vmatprep.mubr.f32.mxu0 0.0
      %1640 = vmatmul.mubr.f32.gmra.mrb[0].mxu0 %v1505
      %v1641 = vpop.f32.mrb[0].mxu0
      %v1642 = vadd.f32 0.0, %v1641
      %v1643 = vpop.f32.mrb[0].mxu0
      %1644 = vmatprep.mubr.f32.mxu0 0.0
      %1645 = vmatmul.mubr.f32.gmra.mrb[0].mxu0 %v1506
      %v1646 = vpop.f32.mrb[0].mxu0
      %v1647 = vadd.f32 0.0, %v1646
      %v1648 = vpop.f32.mrb[0].mxu0
      %1649 = vmatprep.mubr.f32.mxu0 0.0
      %1650 = vmatmul.mubr.f32.gmra.mrb[0].mxu0 %v1507
      %v1651 = vpop.f32.mrb[0].mxu0
      %v1652 = vadd.f32 0.0, %v1651
      %v1653 = vpop.f32.mrb[0].mxu0
      %1654 = vmatprep.mubr.f32.mxu0 0.0
      %1655 = vmatmul.mubr.f32.gmra.mrb[0].mxu0 %v1508
      %v1656 = vpop.f32.mrb[0].mxu0
      %v1657 = vadd.f32 0.0, %v1656
      %v1658 = vpop.f32.mrb[0].mxu0
      %1659 = vmatprep.mubr.f32.mxu0 0.0
      %1660 = vmatmul.mubr.f32.gmra.mrb[0].mxu0 %v1509
      %v1661 = vpop.f32.mrb[0].mxu0
      %v1662 = vadd.f32 0.0, %v1661
      %v1663 = vpop.f32.mrb[0].mxu0
      %1664 = vmatprep.mubr.f32.mxu0 0.0
      %1665 = vmatmul.mubr.f32.gmra.mrb[0].mxu0 %v1510
      %v1666 = vpop.f32.mrb[0].mxu0
      %v1667 = vadd.f32 0.0, %v1666
      %v1668 = vpop.f32.mrb[0].mxu0
      %1669 = vmatprep.mubr.f32.mxu0 0.0
      %1670 = vmatmul.mubr.f32.gmra.mrb[0].mxu0 %v1511
      %v1671 = vpop.f32.mrb[0].mxu0
      %v1672 = vadd.f32 0.0, %v1671
      %v1673 = vpop.f32.mrb[0].mxu0
      %1674 = vmatprep.mubr.f32.mxu0 0.0
      %1675 = vmatmul.mubr.f32.gmra.mrb[0].mxu0 %v1512
      %v1676 = vpop.f32.mrb[0].mxu0
      %v1677 = vadd.f32 0.0, %v1676
      %v1678 = vpop.f32.mrb[0].mxu0
      %1679 = vmatprep.mubr.f32.mxu0 0.0
      %1680 = vmatmul.mubr.f32.gmra.mrb[0].mxu0 %v1513
      %v1681 = vpop.f32.mrb[0].mxu0
      %v1682 = vadd.f32 0.0, %v1681
      %v1683 = vpop.f32.mrb[0].mxu0
      %1684 = vdwg.mxu0
      %1685 = vmatprep.subr.mxu0 0.0
      %1686 = vmatpush1.msra.mxu0 %v1480
      %1687 = vmatprep.subr.mxu0 0.0
      %1688 = vmatpush1.msra.mxu0 %v1481
      %1689 = vmatprep.subr.mxu0 0.0
      %1690 = vmatpush1.msra.mxu0 %v1482
      %1691 = vmatprep.subr.mxu0 0.0
      %1692 = vmatpush1.msra.mxu0 %v1483
      %1693 = vmatprep.subr.mxu0 0.0
      %1694 = vmatpush1.msra.mxu0 %v1484
      %1695 = vmatprep.subr.mxu0 0.0
      %1696 = vmatpush1.msra.mxu0 %v1485
      %1697 = vmatprep.subr.mxu0 0.0
      %1698 = vmatpush1.msra.mxu0 %v1486
      %1699 = vmatprep.subr.mxu0 0.0
      %1700 = vmatpush1.msra.mxu0 %v1487
      %1701 = vmatprep.subr.mxu0 0.0
      %1702 = vmatpush1.msra.mxu0 %v1488
      %1703 = vmatprep.subr.mxu0 0.0
      %1704 = vmatpush1.msra.mxu0 %v1489
      %1705 = vmatprep.subr.mxu0 0.0
      %1706 = vmatpush1.msra.mxu0 %v1490
      %1707 = vmatprep.subr.mxu0 0.0
      %1708 = vmatpush1.msra.mxu0 %v1491
      %1709 = vmatprep.subr.mxu0 0.0
      %1710 = vmatpush1.msra.mxu0 %v1492
      %1711 = vmatprep.subr.mxu0 0.0
      %1712 = vmatpush1.msra.mxu0 %v1493
      %1713 = vmatprep.subr.mxu0 0.0
      %1714 = vmatpush1.msra.mxu0 %v1494
      %1715 = vmatprep.subr.mxu0 0.0
      %1716 = vmatpush1.msra.mxu0 %v1495
      %1717 = vmatprep.subr.mxu0 0.0
      %1718 = vmatpush1.msra.mxu0 0.0
      %1719 = vmatprep.subr.mxu0 0.0
      %1720 = vmatpush1.msra.mxu0 0.0
      %1721 = vmatprep.subr.mxu0 0.0
      %1722 = vmatpush1.msra.mxu0 0.0
      %1723 = vmatprep.subr.mxu0 0.0
      %1724 = vmatpush1.msra.mxu0 0.0
      %1725 = vmatprep.subr.mxu0 0.0
      %1726 = vmatpush1.msra.mxu0 0.0
      %1727 = vmatprep.subr.mxu0 0.0
      %1728 = vmatpush1.msra.mxu0 0.0
      %1729 = vmatprep.subr.mxu0 0.0
      %1730 = vmatpush1.msra.mxu0 0.0
      %1731 = vmatprep.subr.mxu0 0.0
      %1732 = vmatpush1.msra.mxu0 0.0
      %1733 = vmatprep.subr.mxu0 0.0
      %1734 = vmatpush1.msra.mxu0 0.0
      %1735 = vmatprep.subr.mxu0 0.0
      %1736 = vmatpush1.msra.mxu0 0.0
      %1737 = vmatprep.subr.mxu0 0.0
      %1738 = vmatpush1.msra.mxu0 0.0
      %1739 = vmatprep.subr.mxu0 0.0
      %1740 = vmatpush1.msra.mxu0 0.0
      %1741 = vmatprep.subr.mxu0 0.0
      %1742 = vmatpush1.msra.mxu0 0.0
      %1743 = vmatprep.subr.mxu0 0.0
      %1744 = vmatpush1.msra.mxu0 0.0
      %1745 = vmatprep.subr.mxu0 0.0
      %1746 = vmatpush1.msra.mxu0 0.0
      %1747 = vmatprep.subr.mxu0 0.0
      %1748 = vmatpush1.msra.mxu0 0.0
      %1749 = vmatprep.mubr.f32.mxu0 0.0
      %1750 = vmatmul.mubr.f32.gmra.mrb[0].mxu0 %v1462
      %v1751 = vpop.f32.mrb[0].mxu0
      %v1752 = vadd.f32 %v1597, %v1751
      %v1753 = vpop.f32.mrb[0].mxu0
      %1754 = vmatprep.mubr.f32.mxu0 0.0
      %1755 = vmatmul.mubr.f32.gmra.mrb[0].mxu0 %v1463
      %v1756 = vpop.f32.mrb[0].mxu0
      %v1757 = vadd.f32 %v1602, %v1756
      %v1758 = vpop.f32.mrb[0].mxu0
      %1759 = vmatprep.mubr.f32.mxu0 0.0
      %1760 = vmatmul.mubr.f32.gmra.mrb[0].mxu0 %v1464
      %v1761 = vpop.f32.mrb[0].mxu0
      %v1762 = vadd.f32 %v1607, %v1761
      %v1763 = vpop.f32.mrb[0].mxu0
      %1764 = vmatprep.mubr.f32.mxu0 0.0
      %1765 = vmatmul.mubr.f32.gmra.mrb[0].mxu0 %v1465
      %v1766 = vpop.f32.mrb[0].mxu0
      %v1767 = vadd.f32 %v1612, %v1766
      %v1768 = vpop.f32.mrb[0].mxu0
      %1769 = vmatprep.mubr.f32.mxu0 0.0
      %1770 = vmatmul.mubr.f32.gmra.mrb[0].mxu0 %v1466
      %v1771 = vpop.f32.mrb[0].mxu0
      %v1772 = vadd.f32 %v1617, %v1771
      %v1773 = vpop.f32.mrb[0].mxu0
      %1774 = vmatprep.mubr.f32.mxu0 0.0
      %1775 = vmatmul.mubr.f32.gmra.mrb[0].mxu0 %v1467
      %v1776 = vpop.f32.mrb[0].mxu0
      %v1777 = vadd.f32 %v1622, %v1776
      %v1778 = vpop.f32.mrb[0].mxu0
      %1779 = vmatprep.mubr.f32.mxu0 0.0
      %1780 = vmatmul.mubr.f32.gmra.mrb[0].mxu0 %v1468
      %v1781 = vpop.f32.mrb[0].mxu0
      %v1782 = vadd.f32 %v1627, %v1781
      %v1783 = vpop.f32.mrb[0].mxu0
      %1784 = vmatprep.mubr.f32.mxu0 0.0
      %1785 = vmatmul.mubr.f32.gmra.mrb[0].mxu0 %v1469
      %v1786 = vpop.f32.mrb[0].mxu0
      %v1787 = vadd.f32 %v1632, %v1786
      %v1788 = vpop.f32.mrb[0].mxu0
      %1789 = vmatprep.mubr.f32.mxu0 0.0
      %1790 = vmatmul.mubr.f32.gmra.mrb[0].mxu0 %v1470
      %v1791 = vpop.f32.mrb[0].mxu0
      %v1792 = vadd.f32 %v1637, %v1791
      %v1793 = vpop.f32.mrb[0].mxu0
      %1794 = vmatprep.mubr.f32.mxu0 0.0
      %1795 = vmatmul.mubr.f32.gmra.mrb[0].mxu0 %v1471
      %v1796 = vpop.f32.mrb[0].mxu0
      %v1797 = vadd.f32 %v1642, %v1796
      %v1798 = vpop.f32.mrb[0].mxu0
      %1799 = vmatprep.mubr.f32.mxu0 0.0
      %1800 = vmatmul.mubr.f32.gmra.mrb[0].mxu0 %v1472
      %v1801 = vpop.f32.mrb[0].mxu0
      %v1802 = vadd.f32 %v1647, %v1801
      %v1803 = vpop.f32.mrb[0].mxu0
      %1804 = vmatprep.mubr.f32.mxu0 0.0
      %1805 = vmatmul.mubr.f32.gmra.mrb[0].mxu0 %v1473
      %v1806 = vpop.f32.mrb[0].mxu0
      %v1807 = vadd.f32 %v1652, %v1806
      %v1808 = vpop.f32.mrb[0].mxu0
      %1809 = vmatprep.mubr.f32.mxu0 0.0
      %1810 = vmatmul.mubr.f32.gmra.mrb[0].mxu0 %v1474
      %v1811 = vpop.f32.mrb[0].mxu0
      %v1812 = vadd.f32 %v1657, %v1811
      %v1813 = vpop.f32.mrb[0].mxu0
      %1814 = vmatprep.mubr.f32.mxu0 0.0
      %1815 = vmatmul.mubr.f32.gmra.mrb[0].mxu0 %v1475
      %v1816 = vpop.f32.mrb[0].mxu0
      %v1817 = vadd.f32 %v1662, %v1816
      %v1818 = vpop.f32.mrb[0].mxu0
      %1819 = vmatprep.mubr.f32.mxu0 0.0
      %1820 = vmatmul.mubr.f32.gmra.mrb[0].mxu0 %v1476
      %v1821 = vpop.f32.mrb[0].mxu0
      %v1822 = vadd.f32 %v1667, %v1821
      %v1823 = vpop.f32.mrb[0].mxu0
      %1824 = vmatprep.mubr.f32.mxu0 0.0
      %1825 = vmatmul.mubr.f32.gmra.mrb[0].mxu0 %v1477
      %v1826 = vpop.f32.mrb[0].mxu0
      %v1827 = vadd.f32 %v1672, %v1826
      %v1828 = vpop.f32.mrb[0].mxu0
      %1829 = vmatprep.mubr.f32.mxu0 0.0
      %1830 = vmatmul.mubr.f32.gmra.mrb[0].mxu0 %v1478
      %v1831 = vpop.f32.mrb[0].mxu0
      %v1832 = vadd.f32 %v1677, %v1831
      %v1833 = vpop.f32.mrb[0].mxu0
      %1834 = vmatprep.mubr.f32.mxu0 0.0
      %1835 = vmatmul.mubr.f32.gmra.mrb[0].mxu0 %v1479
      %v1836 = vpop.f32.mrb[0].mxu0
      %v1837 = vadd.f32 %v1682, %v1836
      %v1838 = vpop.f32.mrb[0].mxu0
      %1839 = vdwg.mxu0
      %v1840 = vld [vmem:[#allocation2 + $0x2] sm:$0xff]
      %v1841 = vld [vmem:[#allocation2 + $0xa] sm:$0xff]
      %v1842 = vld [vmem:[#allocation2 + $0x12] sm:$0xff]
      %v1843 = vld [vmem:[#allocation2 + $0x1a] sm:$0xff]
      %v1844 = vld [vmem:[#allocation2 + $0x22] sm:$0xff]
      %v1845 = vld [vmem:[#allocation2 + $0x2a] sm:$0xff]
      %v1846 = vld [vmem:[#allocation2 + $0x32] sm:$0xff]
      %v1847 = vld [vmem:[#allocation2 + $0x3a] sm:$0xff]
      %v1848 = vld [vmem:[#allocation2 + $0x42] sm:$0xff]
      %v1849 = vld [vmem:[#allocation2 + $0x4a] sm:$0xff]
      %v1850 = vld [vmem:[#allocation2 + $0x52] sm:$0xff]
      %v1851 = vld [vmem:[#allocation2 + $0x5a] sm:$0xff]
      %v1852 = vld [vmem:[#allocation2 + $0x62] sm:$0xff]
      %v1853 = vld [vmem:[#allocation2 + $0x6a] sm:$0xff]
      %v1854 = vld [vmem:[#allocation2 + $0x72] sm:$0xff]
      %v1855 = vld [vmem:[#allocation2 + $0x7a] sm:$0xff]
      %v1856 = vld [vmem:[#allocation2 + $0x82] sm:$0xff]
      %v1857 = vld [vmem:[#allocation2 + $0x8a] sm:$0xf]
      %v1858 = vld [vmem:[%s3 + $0x100] sm:$0xff]
      %v1859 = vld [vmem:[%s3 + $0x108] sm:$0xff]
      %v1860 = vld [vmem:[%s3 + $0x110] sm:$0xff]
      %v1861 = vld [vmem:[%s3 + $0x118] sm:$0xff]
      %v1862 = vld [vmem:[%s3 + $0x120] sm:$0xff]
      %v1863 = vld [vmem:[%s3 + $0x128] sm:$0xff]
      %v1864 = vld [vmem:[%s3 + $0x130] sm:$0xff]
      %v1865 = vld [vmem:[%s3 + $0x138] sm:$0xff]
      %v1866 = vld [vmem:[%s3 + $0x140] sm:$0xff]
      %v1867 = vld [vmem:[%s3 + $0x148] sm:$0xff]
      %v1868 = vld [vmem:[%s3 + $0x150] sm:$0xff]
      %v1869 = vld [vmem:[%s3 + $0x158] sm:$0xff]
      %v1870 = vld [vmem:[%s3 + $0x160] sm:$0xff]
      %v1871 = vld [vmem:[%s3 + $0x168] sm:$0xff]
      %v1872 = vld [vmem:[%s3 + $0x170] sm:$0xff]
      %v1873 = vld [vmem:[%s3 + $0x178] sm:$0xff]
      %1874 = vmatprep.subr.mxu0 0.0
      %1875 = vmatpush1.msra.mxu0 %v1858
      %1876 = vmatprep.subr.mxu0 0.0
      %1877 = vmatpush1.msra.mxu0 %v1859
      %1878 = vmatprep.subr.mxu0 0.0
      %1879 = vmatpush1.msra.mxu0 %v1860
      %1880 = vmatprep.subr.mxu0 0.0
      %1881 = vmatpush1.msra.mxu0 %v1861
      %1882 = vmatprep.subr.mxu0 0.0
      %1883 = vmatpush1.msra.mxu0 %v1862
      %1884 = vmatprep.subr.mxu0 0.0
      %1885 = vmatpush1.msra.mxu0 %v1863
      %1886 = vmatprep.subr.mxu0 0.0
      %1887 = vmatpush1.msra.mxu0 %v1864
      %1888 = vmatprep.subr.mxu0 0.0
      %1889 = vmatpush1.msra.mxu0 %v1865
      %1890 = vmatprep.subr.mxu0 0.0
      %1891 = vmatpush1.msra.mxu0 %v1866
      %1892 = vmatprep.subr.mxu0 0.0
      %1893 = vmatpush1.msra.mxu0 %v1867
      %1894 = vmatprep.subr.mxu0 0.0
      %1895 = vmatpush1.msra.mxu0 %v1868
      %1896 = vmatprep.subr.mxu0 0.0
      %1897 = vmatpush1.msra.mxu0 %v1869
      %1898 = vmatprep.subr.mxu0 0.0
      %1899 = vmatpush1.msra.mxu0 %v1870
      %1900 = vmatprep.subr.mxu0 0.0
      %1901 = vmatpush1.msra.mxu0 %v1871
      %1902 = vmatprep.subr.mxu0 0.0
      %1903 = vmatpush1.msra.mxu0 %v1872
      %1904 = vmatprep.subr.mxu0 0.0
      %1905 = vmatpush1.msra.mxu0 %v1873
      %1906 = vmatprep.subr.mxu0 0.0
      %1907 = vmatpush1.msra.mxu0 0.0
      %1908 = vmatprep.subr.mxu0 0.0
      %1909 = vmatpush1.msra.mxu0 0.0
      %1910 = vmatprep.subr.mxu0 0.0
      %1911 = vmatpush1.msra.mxu0 0.0
      %1912 = vmatprep.subr.mxu0 0.0
      %1913 = vmatpush1.msra.mxu0 0.0
      %1914 = vmatprep.subr.mxu0 0.0
      %1915 = vmatpush1.msra.mxu0 0.0
      %1916 = vmatprep.subr.mxu0 0.0
      %1917 = vmatpush1.msra.mxu0 0.0
      %1918 = vmatprep.subr.mxu0 0.0
      %1919 = vmatpush1.msra.mxu0 0.0
      %1920 = vmatprep.subr.mxu0 0.0
      %1921 = vmatpush1.msra.mxu0 0.0
      %1922 = vmatprep.subr.mxu0 0.0
      %1923 = vmatpush1.msra.mxu0 0.0
      %1924 = vmatprep.subr.mxu0 0.0
      %1925 = vmatpush1.msra.mxu0 0.0
      %1926 = vmatprep.subr.mxu0 0.0
      %1927 = vmatpush1.msra.mxu0 0.0
      %1928 = vmatprep.subr.mxu0 0.0
      %1929 = vmatpush1.msra.mxu0 0.0
      %1930 = vmatprep.subr.mxu0 0.0
      %1931 = vmatpush1.msra.mxu0 0.0
      %1932 = vmatprep.subr.mxu0 0.0
      %1933 = vmatpush1.msra.mxu0 0.0
      %1934 = vmatprep.subr.mxu0 0.0
      %1935 = vmatpush1.msra.mxu0 0.0
      %1936 = vmatprep.subr.mxu0 0.0
      %1937 = vmatpush1.msra.mxu0 0.0
      %1938 = vmatprep.mubr.f32.mxu0 0.0
      %1939 = vmatmul.mubr.f32.gmra.mrb[0].mxu0 %v1840
      %v1940 = vpop.f32.mrb[0].mxu0
      %v1941 = vadd.f32 0.0, %v1940
      %v1942 = vpop.f32.mrb[0].mxu0
      %1943 = vmatprep.mubr.f32.mxu0 0.0
      %1944 = vmatmul.mubr.f32.gmra.mrb[0].mxu0 %v1841
      %v1945 = vpop.f32.mrb[0].mxu0
      %v1946 = vadd.f32 0.0, %v1945
      %v1947 = vpop.f32.mrb[0].mxu0
      %1948 = vmatprep.mubr.f32.mxu0 0.0
      %1949 = vmatmul.mubr.f32.gmra.mrb[0].mxu0 %v1842
      %v1950 = vpop.f32.mrb[0].mxu0
      %v1951 = vadd.f32 0.0, %v1950
      %v1952 = vpop.f32.mrb[0].mxu0
      %1953 = vmatprep.mubr.f32.mxu0 0.0
      %1954 = vmatmul.mubr.f32.gmra.mrb[0].mxu0 %v1843
      %v1955 = vpop.f32.mrb[0].mxu0
      %v1956 = vadd.f32 0.0, %v1955
      %v1957 = vpop.f32.mrb[0].mxu0
      %1958 = vmatprep.mubr.f32.mxu0 0.0
      %1959 = vmatmul.mubr.f32.gmra.mrb[0].mxu0 %v1844
      %v1960 = vpop.f32.mrb[0].mxu0
      %v1961 = vadd.f32 0.0, %v1960
      %v1962 = vpop.f32.mrb[0].mxu0
      %1963 = vmatprep.mubr.f32.mxu0 0.0
      %1964 = vmatmul.mubr.f32.gmra.mrb[0].mxu0 %v1845
      %v1965 = vpop.f32.mrb[0].mxu0
      %v1966 = vadd.f32 0.0, %v1965
      %v1967 = vpop.f32.mrb[0].mxu0
      %1968 = vmatprep.mubr.f32.mxu0 0.0
      %1969 = vmatmul.mubr.f32.gmra.mrb[0].mxu0 %v1846
      %v1970 = vpop.f32.mrb[0].mxu0
      %v1971 = vadd.f32 0.0, %v1970
      %v1972 = vpop.f32.mrb[0].mxu0
      %1973 = vmatprep.mubr.f32.mxu0 0.0
      %1974 = vmatmul.mubr.f32.gmra.mrb[0].mxu0 %v1847
      %v1975 = vpop.f32.mrb[0].mxu0
      %v1976 = vadd.f32 0.0, %v1975
      %v1977 = vpop.f32.mrb[0].mxu0
      %1978 = vmatprep.mubr.f32.mxu0 0.0
      %1979 = vmatmul.mubr.f32.gmra.mrb[0].mxu0 %v1848
      %v1980 = vpop.f32.mrb[0].mxu0
      %v1981 = vadd.f32 0.0, %v1980
      %v1982 = vpop.f32.mrb[0].mxu0
      %1983 = vmatprep.mubr.f32.mxu0 0.0
      %1984 = vmatmul.mubr.f32.gmra.mrb[0].mxu0 %v1849
      %v1985 = vpop.f32.mrb[0].mxu0
      %v1986 = vadd.f32 0.0, %v1985
      %v1987 = vpop.f32.mrb[0].mxu0
      %1988 = vmatprep.mubr.f32.mxu0 0.0
      %1989 = vmatmul.mubr.f32.gmra.mrb[0].mxu0 %v1850
      %v1990 = vpop.f32.mrb[0].mxu0
      %v1991 = vadd.f32 0.0, %v1990
      %v1992 = vpop.f32.mrb[0].mxu0
      %1993 = vmatprep.mubr.f32.mxu0 0.0
      %1994 = vmatmul.mubr.f32.gmra.mrb[0].mxu0 %v1851
      %v1995 = vpop.f32.mrb[0].mxu0
      %v1996 = vadd.f32 0.0, %v1995
      %v1997 = vpop.f32.mrb[0].mxu0
      %1998 = vmatprep.mubr.f32.mxu0 0.0
      %1999 = vmatmul.mubr.f32.gmra.mrb[0].mxu0 %v1852
      %v2000 = vpop.f32.mrb[0].mxu0
      %v2001 = vadd.f32 0.0, %v2000
      %v2002 = vpop.f32.mrb[0].mxu0
      %2003 = vmatprep.mubr.f32.mxu0 0.0
      %2004 = vmatmul.mubr.f32.gmra.mrb[0].mxu0 %v1853
      %v2005 = vpop.f32.mrb[0].mxu0
      %v2006 = vadd.f32 0.0, %v2005
      %v2007 = vpop.f32.mrb[0].mxu0
      %2008 = vmatprep.mubr.f32.mxu0 0.0
      %2009 = vmatmul.mubr.f32.gmra.mrb[0].mxu0 %v1854
      %v2010 = vpop.f32.mrb[0].mxu0
      %v2011 = vadd.f32 0.0, %v2010
      %v2012 = vpop.f32.mrb[0].mxu0
      %2013 = vmatprep.mubr.f32.mxu0 0.0
      %2014 = vmatmul.mubr.f32.gmra.mrb[0].mxu0 %v1855
      %v2015 = vpop.f32.mrb[0].mxu0
      %v2016 = vadd.f32 0.0, %v2015
      %v2017 = vpop.f32.mrb[0].mxu0
      %2018 = vmatprep.mubr.f32.mxu0 0.0
      %2019 = vmatmul.mubr.f32.gmra.mrb[0].mxu0 %v1856
      %v2020 = vpop.f32.mrb[0].mxu0
      %v2021 = vadd.f32 0.0, %v2020
      %v2022 = vpop.f32.mrb[0].mxu0
      %2023 = vmatprep.mubr.f32.mxu0 0.0
      %2024 = vmatmul.mubr.f32.gmra.mrb[0].mxu0 %v1857
      %v2025 = vpop.f32.mrb[0].mxu0
      %v2026 = vadd.f32 0.0, %v2025
      %v2027 = vpop.f32.mrb[0].mxu0
      %2028 = vdwg.mxu0
      %v2029 = vadd.f32 %v1752, %v1941
      %v2030 = vadd.f32 %v1757, %v1946
      %v2031 = vadd.f32 %v1762, %v1951
      %v2032 = vadd.f32 %v1767, %v1956
      %v2033 = vadd.f32 %v1772, %v1961
      %v2034 = vadd.f32 %v1777, %v1966
      %v2035 = vadd.f32 %v1782, %v1971
      %v2036 = vadd.f32 %v1787, %v1976
      %v2037 = vadd.f32 %v1792, %v1981
      %v2038 = vadd.f32 %v1797, %v1986
      %v2039 = vadd.f32 %v1802, %v1991
      %v2040 = vadd.f32 %v1807, %v1996
      %v2041 = vadd.f32 %v1812, %v2001
      %v2042 = vadd.f32 %v1817, %v2006
      %v2043 = vadd.f32 %v1822, %v2011
      %v2044 = vadd.f32 %v1827, %v2016
      %v2045 = vadd.f32 %v1832, %v2021
      %v2046 = vadd.f32 %v1837, %v2026
      %v2047 = vld [vmem:[#allocation2 + $0x3] sm:$0xff]
      %v2048 = vld [vmem:[#allocation2 + $0xb] sm:$0xff]
      %v2049 = vld [vmem:[#allocation2 + $0x13] sm:$0xff]
      %v2050 = vld [vmem:[#allocation2 + $0x1b] sm:$0xff]
      %v2051 = vld [vmem:[#allocation2 + $0x23] sm:$0xff]
      %v2052 = vld [vmem:[#allocation2 + $0x2b] sm:$0xff]
      %v2053 = vld [vmem:[#allocation2 + $0x33] sm:$0xff]
      %v2054 = vld [vmem:[#allocation2 + $0x3b] sm:$0xff]
      %v2055 = vld [vmem:[#allocation2 + $0x43] sm:$0xff]
      %v2056 = vld [vmem:[#allocation2 + $0x4b] sm:$0xff]
      %v2057 = vld [vmem:[#allocation2 + $0x53] sm:$0xff]
      %v2058 = vld [vmem:[#allocation2 + $0x5b] sm:$0xff]
      %v2059 = vld [vmem:[#allocation2 + $0x63] sm:$0xff]
      %v2060 = vld [vmem:[#allocation2 + $0x6b] sm:$0xff]
      %v2061 = vld [vmem:[#allocation2 + $0x73] sm:$0xff]
      %v2062 = vld [vmem:[#allocation2 + $0x7b] sm:$0xff]
      %v2063 = vld [vmem:[#allocation2 + $0x83] sm:$0xff]
      %v2064 = vld [vmem:[#allocation2 + $0x8b] sm:$0xf]
      %v2065 = vld [vmem:[%s3 + $0x180] sm:$0xff]
      %v2066 = vld [vmem:[%s3 + $0x188] sm:$0xff]
      %v2067 = vld [vmem:[%s3 + $0x190] sm:$0xff]
      %v2068 = vld [vmem:[%s3 + $0x198] sm:$0xff]
      %v2069 = vld [vmem:[%s3 + $0x1a0] sm:$0xff]
      %v2070 = vld [vmem:[%s3 + $0x1a8] sm:$0xff]
      %v2071 = vld [vmem:[%s3 + $0x1b0] sm:$0xff]
      %v2072 = vld [vmem:[%s3 + $0x1b8] sm:$0xff]
      %v2073 = vld [vmem:[%s3 + $0x1c0] sm:$0xff]
      %v2074 = vld [vmem:[%s3 + $0x1c8] sm:$0xff]
      %v2075 = vld [vmem:[%s3 + $0x1d0] sm:$0xff]
      %v2076 = vld [vmem:[%s3 + $0x1d8] sm:$0xff]
      %v2077 = vld [vmem:[%s3 + $0x1e0] sm:$0xff]
      %v2078 = vld [vmem:[%s3 + $0x1e8] sm:$0xff]
      %v2079 = vld [vmem:[%s3 + $0x1f0] sm:$0xff]
      %v2080 = vld [vmem:[%s3 + $0x1f8] sm:$0xff]
      %2081 = vmatprep.subr.mxu0 0.0
      %2082 = vmatpush1.msra.mxu0 %v2065
      %2083 = vmatprep.subr.mxu0 0.0
      %2084 = vmatpush1.msra.mxu0 %v2066
      %2085 = vmatprep.subr.mxu0 0.0
      %2086 = vmatpush1.msra.mxu0 %v2067
      %2087 = vmatprep.subr.mxu0 0.0
      %2088 = vmatpush1.msra.mxu0 %v2068
      %2089 = vmatprep.subr.mxu0 0.0
      %2090 = vmatpush1.msra.mxu0 %v2069
      %2091 = vmatprep.subr.mxu0 0.0
      %2092 = vmatpush1.msra.mxu0 %v2070
      %2093 = vmatprep.subr.mxu0 0.0
      %2094 = vmatpush1.msra.mxu0 %v2071
      %2095 = vmatprep.subr.mxu0 0.0
      %2096 = vmatpush1.msra.mxu0 %v2072
      %2097 = vmatprep.subr.mxu0 0.0
      %2098 = vmatpush1.msra.mxu0 %v2073
      %2099 = vmatprep.subr.mxu0 0.0
      %2100 = vmatpush1.msra.mxu0 %v2074
      %2101 = vmatprep.subr.mxu0 0.0
      %2102 = vmatpush1.msra.mxu0 %v2075
      %2103 = vmatprep.subr.mxu0 0.0
      %2104 = vmatpush1.msra.mxu0 %v2076
      %2105 = vmatprep.subr.mxu0 0.0
      %2106 = vmatpush1.msra.mxu0 %v2077
      %2107 = vmatprep.subr.mxu0 0.0
      %2108 = vmatpush1.msra.mxu0 %v2078
      %2109 = vmatprep.subr.mxu0 0.0
      %2110 = vmatpush1.msra.mxu0 %v2079
      %2111 = vmatprep.subr.mxu0 0.0
      %2112 = vmatpush1.msra.mxu0 %v2080
      %2113 = vmatprep.subr.mxu0 0.0
      %2114 = vmatpush1.msra.mxu0 0.0
      %2115 = vmatprep.subr.mxu0 0.0
      %2116 = vmatpush1.msra.mxu0 0.0
      %2117 = vmatprep.subr.mxu0 0.0
      %2118 = vmatpush1.msra.mxu0 0.0
      %2119 = vmatprep.subr.mxu0 0.0
      %2120 = vmatpush1.msra.mxu0 0.0
      %2121 = vmatprep.subr.mxu0 0.0
      %2122 = vmatpush1.msra.mxu0 0.0
      %2123 = vmatprep.subr.mxu0 0.0
      %2124 = vmatpush1.msra.mxu0 0.0
      %2125 = vmatprep.subr.mxu0 0.0
      %2126 = vmatpush1.msra.mxu0 0.0
      %2127 = vmatprep.subr.mxu0 0.0
      %2128 = vmatpush1.msra.mxu0 0.0
      %2129 = vmatprep.subr.mxu0 0.0
      %2130 = vmatpush1.msra.mxu0 0.0
      %2131 = vmatprep.subr.mxu0 0.0
      %2132 = vmatpush1.msra.mxu0 0.0
      %2133 = vmatprep.subr.mxu0 0.0
      %2134 = vmatpush1.msra.mxu0 0.0
      %2135 = vmatprep.subr.mxu0 0.0
      %2136 = vmatpush1.msra.mxu0 0.0
      %2137 = vmatprep.subr.mxu0 0.0
      %2138 = vmatpush1.msra.mxu0 0.0
      %2139 = vmatprep.subr.mxu0 0.0
      %2140 = vmatpush1.msra.mxu0 0.0
      %2141 = vmatprep.subr.mxu0 0.0
      %2142 = vmatpush1.msra.mxu0 0.0
      %2143 = vmatprep.subr.mxu0 0.0
      %2144 = vmatpush1.msra.mxu0 0.0
      %2145 = vmatprep.mubr.f32.mxu0 0.0
      %2146 = vmatmul.mubr.f32.gmra.mrb[0].mxu0 %v2047
      %v2147 = vpop.f32.mrb[0].mxu0
      %v2148 = vadd.f32 0.0, %v2147
      %v2149 = vpop.f32.mrb[0].mxu0
      %2150 = vmatprep.mubr.f32.mxu0 0.0
      %2151 = vmatmul.mubr.f32.gmra.mrb[0].mxu0 %v2048
      %v2152 = vpop.f32.mrb[0].mxu0
      %v2153 = vadd.f32 0.0, %v2152
      %v2154 = vpop.f32.mrb[0].mxu0
      %2155 = vmatprep.mubr.f32.mxu0 0.0
      %2156 = vmatmul.mubr.f32.gmra.mrb[0].mxu0 %v2049
      %v2157 = vpop.f32.mrb[0].mxu0
      %v2158 = vadd.f32 0.0, %v2157
      %v2159 = vpop.f32.mrb[0].mxu0
      %2160 = vmatprep.mubr.f32.mxu0 0.0
      %2161 = vmatmul.mubr.f32.gmra.mrb[0].mxu0 %v2050
      %v2162 = vpop.f32.mrb[0].mxu0
      %v2163 = vadd.f32 0.0, %v2162
      %v2164 = vpop.f32.mrb[0].mxu0
      %2165 = vmatprep.mubr.f32.mxu0 0.0
      %2166 = vmatmul.mubr.f32.gmra.mrb[0].mxu0 %v2051
      %v2167 = vpop.f32.mrb[0].mxu0
      %v2168 = vadd.f32 0.0, %v2167
      %v2169 = vpop.f32.mrb[0].mxu0
      %2170 = vmatprep.mubr.f32.mxu0 0.0
      %2171 = vmatmul.mubr.f32.gmra.mrb[0].mxu0 %v2052
      %v2172 = vpop.f32.mrb[0].mxu0
      %v2173 = vadd.f32 0.0, %v2172
      %v2174 = vpop.f32.mrb[0].mxu0
      %2175 = vmatprep.mubr.f32.mxu0 0.0
      %2176 = vmatmul.mubr.f32.gmra.mrb[0].mxu0 %v2053
      %v2177 = vpop.f32.mrb[0].mxu0
      %v2178 = vadd.f32 0.0, %v2177
      %v2179 = vpop.f32.mrb[0].mxu0
      %2180 = vmatprep.mubr.f32.mxu0 0.0
      %2181 = vmatmul.mubr.f32.gmra.mrb[0].mxu0 %v2054
      %v2182 = vpop.f32.mrb[0].mxu0
      %v2183 = vadd.f32 0.0, %v2182
      %v2184 = vpop.f32.mrb[0].mxu0
      %2185 = vmatprep.mubr.f32.mxu0 0.0
      %2186 = vmatmul.mubr.f32.gmra.mrb[0].mxu0 %v2055
      %v2187 = vpop.f32.mrb[0].mxu0
      %v2188 = vadd.f32 0.0, %v2187
      %v2189 = vpop.f32.mrb[0].mxu0
      %2190 = vmatprep.mubr.f32.mxu0 0.0
      %2191 = vmatmul.mubr.f32.gmra.mrb[0].mxu0 %v2056
      %v2192 = vpop.f32.mrb[0].mxu0
      %v2193 = vadd.f32 0.0, %v2192
      %v2194 = vpop.f32.mrb[0].mxu0
      %2195 = vmatprep.mubr.f32.mxu0 0.0
      %2196 = vmatmul.mubr.f32.gmra.mrb[0].mxu0 %v2057
      %v2197 = vpop.f32.mrb[0].mxu0
      %v2198 = vadd.f32 0.0, %v2197
      %v2199 = vpop.f32.mrb[0].mxu0
      %2200 = vmatprep.mubr.f32.mxu0 0.0
      %2201 = vmatmul.mubr.f32.gmra.mrb[0].mxu0 %v2058
      %v2202 = vpop.f32.mrb[0].mxu0
      %v2203 = vadd.f32 0.0, %v2202
      %v2204 = vpop.f32.mrb[0].mxu0
      %2205 = vmatprep.mubr.f32.mxu0 0.0
      %2206 = vmatmul.mubr.f32.gmra.mrb[0].mxu0 %v2059
      %v2207 = vpop.f32.mrb[0].mxu0
      %v2208 = vadd.f32 0.0, %v2207
      %v2209 = vpop.f32.mrb[0].mxu0
      %2210 = vmatprep.mubr.f32.mxu0 0.0
      %2211 = vmatmul.mubr.f32.gmra.mrb[0].mxu0 %v2060
      %v2212 = vpop.f32.mrb[0].mxu0
      %v2213 = vadd.f32 0.0, %v2212
      %v2214 = vpop.f32.mrb[0].mxu0
      %2215 = vmatprep.mubr.f32.mxu0 0.0
      %2216 = vmatmul.mubr.f32.gmra.mrb[0].mxu0 %v2061
      %v2217 = vpop.f32.mrb[0].mxu0
      %v2218 = vadd.f32 0.0, %v2217
      %v2219 = vpop.f32.mrb[0].mxu0
      %2220 = vmatprep.mubr.f32.mxu0 0.0
      %2221 = vmatmul.mubr.f32.gmra.mrb[0].mxu0 %v2062
      %v2222 = vpop.f32.mrb[0].mxu0
      %v2223 = vadd.f32 0.0, %v2222
      %v2224 = vpop.f32.mrb[0].mxu0
      %2225 = vmatprep.mubr.f32.mxu0 0.0
      %2226 = vmatmul.mubr.f32.gmra.mrb[0].mxu0 %v2063
      %v2227 = vpop.f32.mrb[0].mxu0
      %v2228 = vadd.f32 0.0, %v2227
      %v2229 = vpop.f32.mrb[0].mxu0
      %2230 = vmatprep.mubr.f32.mxu0 0.0
      %2231 = vmatmul.mubr.f32.gmra.mrb[0].mxu0 %v2064
      %v2232 = vpop.f32.mrb[0].mxu0
      %v2233 = vadd.f32 0.0, %v2232
      %v2234 = vpop.f32.mrb[0].mxu0
      %2235 = vdwg.mxu0
      %v2236 = vadd.f32 %v2029, %v2148
      %v2237 = vadd.f32 %v2030, %v2153
      %v2238 = vadd.f32 %v2031, %v2158
      %v2239 = vadd.f32 %v2032, %v2163
      %v2240 = vadd.f32 %v2033, %v2168
      %v2241 = vadd.f32 %v2034, %v2173
      %v2242 = vadd.f32 %v2035, %v2178
      %v2243 = vadd.f32 %v2036, %v2183
      %v2244 = vadd.f32 %v2037, %v2188
      %v2245 = vadd.f32 %v2038, %v2193
      %v2246 = vadd.f32 %v2039, %v2198
      %v2247 = vadd.f32 %v2040, %v2203
      %v2248 = vadd.f32 %v2041, %v2208
      %v2249 = vadd.f32 %v2042, %v2213
      %v2250 = vadd.f32 %v2043, %v2218
      %v2251 = vadd.f32 %v2044, %v2223
      %v2252 = vadd.f32 %v2045, %v2228
      %v2253 = vadd.f32 %v2046, %v2233
      %v2254 = vld [vmem:[#allocation2 + $0x4] sm:$0xff]
      %v2255 = vld [vmem:[#allocation2 + $0xc] sm:$0xff]
      %v2256 = vld [vmem:[#allocation2 + $0x14] sm:$0xff]
      %v2257 = vld [vmem:[#allocation2 + $0x1c] sm:$0xff]
      %v2258 = vld [vmem:[#allocation2 + $0x24] sm:$0xff]
      %v2259 = vld [vmem:[#allocation2 + $0x2c] sm:$0xff]
      %v2260 = vld [vmem:[#allocation2 + $0x34] sm:$0xff]
      %v2261 = vld [vmem:[#allocation2 + $0x3c] sm:$0xff]
      %v2262 = vld [vmem:[#allocation2 + $0x44] sm:$0xff]
      %v2263 = vld [vmem:[#allocation2 + $0x4c] sm:$0xff]
      %v2264 = vld [vmem:[#allocation2 + $0x54] sm:$0xff]
      %v2265 = vld [vmem:[#allocation2 + $0x5c] sm:$0xff]
      %v2266 = vld [vmem:[#allocation2 + $0x64] sm:$0xff]
      %v2267 = vld [vmem:[#allocation2 + $0x6c] sm:$0xff]
      %v2268 = vld [vmem:[#allocation2 + $0x74] sm:$0xff]
      %v2269 = vld [vmem:[#allocation2 + $0x7c] sm:$0xff]
      %v2270 = vld [vmem:[#allocation2 + $0x84] sm:$0xff]
      %v2271 = vld [vmem:[#allocation2 + $0x8c] sm:$0xf]
      %v2272 = vld [vmem:[%s3 + $0x200] sm:$0xff]
      %v2273 = vld [vmem:[%s3 + $0x208] sm:$0xff]
      %v2274 = vld [vmem:[%s3 + $0x210] sm:$0xff]
      %v2275 = vld [vmem:[%s3 + $0x218] sm:$0xff]
      %v2276 = vld [vmem:[%s3 + $0x220] sm:$0xff]
      %v2277 = vld [vmem:[%s3 + $0x228] sm:$0xff]
      %v2278 = vld [vmem:[%s3 + $0x230] sm:$0xff]
      %v2279 = vld [vmem:[%s3 + $0x238] sm:$0xff]
      %v2280 = vld [vmem:[%s3 + $0x240] sm:$0xff]
      %v2281 = vld [vmem:[%s3 + $0x248] sm:$0xff]
      %v2282 = vld [vmem:[%s3 + $0x250] sm:$0xff]
      %v2283 = vld [vmem:[%s3 + $0x258] sm:$0xff]
      %v2284 = vld [vmem:[%s3 + $0x260] sm:$0xff]
      %v2285 = vld [vmem:[%s3 + $0x268] sm:$0xff]
      %v2286 = vld [vmem:[%s3 + $0x270] sm:$0xff]
      %v2287 = vld [vmem:[%s3 + $0x278] sm:$0xff]
      %2288 = vmatprep.subr.mxu0 0.0
      %2289 = vmatpush1.msra.mxu0 %v2272
      %2290 = vmatprep.subr.mxu0 0.0
      %2291 = vmatpush1.msra.mxu0 %v2273
      %2292 = vmatprep.subr.mxu0 0.0
      %2293 = vmatpush1.msra.mxu0 %v2274
      %2294 = vmatprep.subr.mxu0 0.0
      %2295 = vmatpush1.msra.mxu0 %v2275
      %2296 = vmatprep.subr.mxu0 0.0
      %2297 = vmatpush1.msra.mxu0 %v2276
      %2298 = vmatprep.subr.mxu0 0.0
      %2299 = vmatpush1.msra.mxu0 %v2277
      %2300 = vmatprep.subr.mxu0 0.0
      %2301 = vmatpush1.msra.mxu0 %v2278
      %2302 = vmatprep.subr.mxu0 0.0
      %2303 = vmatpush1.msra.mxu0 %v2279
      %2304 = vmatprep.subr.mxu0 0.0
      %2305 = vmatpush1.msra.mxu0 %v2280
      %2306 = vmatprep.subr.mxu0 0.0
      %2307 = vmatpush1.msra.mxu0 %v2281
      %2308 = vmatprep.subr.mxu0 0.0
      %2309 = vmatpush1.msra.mxu0 %v2282
      %2310 = vmatprep.subr.mxu0 0.0
      %2311 = vmatpush1.msra.mxu0 %v2283
      %2312 = vmatprep.subr.mxu0 0.0
      %2313 = vmatpush1.msra.mxu0 %v2284
      %2314 = vmatprep.subr.mxu0 0.0
      %2315 = vmatpush1.msra.mxu0 %v2285
      %2316 = vmatprep.subr.mxu0 0.0
      %2317 = vmatpush1.msra.mxu0 %v2286
      %2318 = vmatprep.subr.mxu0 0.0
      %2319 = vmatpush1.msra.mxu0 %v2287
      %2320 = vmatprep.subr.mxu0 0.0
      %2321 = vmatpush1.msra.mxu0 0.0
      %2322 = vmatprep.subr.mxu0 0.0
      %2323 = vmatpush1.msra.mxu0 0.0
      %2324 = vmatprep.subr.mxu0 0.0
      %2325 = vmatpush1.msra.mxu0 0.0
      %2326 = vmatprep.subr.mxu0 0.0
      %2327 = vmatpush1.msra.mxu0 0.0
      %2328 = vmatprep.subr.mxu0 0.0
      %2329 = vmatpush1.msra.mxu0 0.0
      %2330 = vmatprep.subr.mxu0 0.0
      %2331 = vmatpush1.msra.mxu0 0.0
      %2332 = vmatprep.subr.mxu0 0.0
      %2333 = vmatpush1.msra.mxu0 0.0
      %2334 = vmatprep.subr.mxu0 0.0
      %2335 = vmatpush1.msra.mxu0 0.0
      %2336 = vmatprep.subr.mxu0 0.0
      %2337 = vmatpush1.msra.mxu0 0.0
      %2338 = vmatprep.subr.mxu0 0.0
      %2339 = vmatpush1.msra.mxu0 0.0
      %2340 = vmatprep.subr.mxu0 0.0
      %2341 = vmatpush1.msra.mxu0 0.0
      %2342 = vmatprep.subr.mxu0 0.0
      %2343 = vmatpush1.msra.mxu0 0.0
      %2344 = vmatprep.subr.mxu0 0.0
      %2345 = vmatpush1.msra.mxu0 0.0
      %2346 = vmatprep.subr.mxu0 0.0
      %2347 = vmatpush1.msra.mxu0 0.0
      %2348 = vmatprep.subr.mxu0 0.0
      %2349 = vmatpush1.msra.mxu0 0.0
      %2350 = vmatprep.subr.mxu0 0.0
      %2351 = vmatpush1.msra.mxu0 0.0
      %2352 = vmatprep.mubr.f32.mxu0 0.0
      %2353 = vmatmul.mubr.f32.gmra.mrb[0].mxu0 %v2254
      %v2354 = vpop.f32.mrb[0].mxu0
      %v2355 = vadd.f32 0.0, %v2354
      %v2356 = vpop.f32.mrb[0].mxu0
      %2357 = vmatprep.mubr.f32.mxu0 0.0
      %2358 = vmatmul.mubr.f32.gmra.mrb[0].mxu0 %v2255
      %v2359 = vpop.f32.mrb[0].mxu0
      %v2360 = vadd.f32 0.0, %v2359
      %v2361 = vpop.f32.mrb[0].mxu0
      %2362 = vmatprep.mubr.f32.mxu0 0.0
      %2363 = vmatmul.mubr.f32.gmra.mrb[0].mxu0 %v2256
      %v2364 = vpop.f32.mrb[0].mxu0
      %v2365 = vadd.f32 0.0, %v2364
      %v2366 = vpop.f32.mrb[0].mxu0
      %2367 = vmatprep.mubr.f32.mxu0 0.0
      %2368 = vmatmul.mubr.f32.gmra.mrb[0].mxu0 %v2257
      %v2369 = vpop.f32.mrb[0].mxu0
      %v2370 = vadd.f32 0.0, %v2369
      %v2371 = vpop.f32.mrb[0].mxu0
      %2372 = vmatprep.mubr.f32.mxu0 0.0
      %2373 = vmatmul.mubr.f32.gmra.mrb[0].mxu0 %v2258
      %v2374 = vpop.f32.mrb[0].mxu0
      %v2375 = vadd.f32 0.0, %v2374
      %v2376 = vpop.f32.mrb[0].mxu0
      %2377 = vmatprep.mubr.f32.mxu0 0.0
      %2378 = vmatmul.mubr.f32.gmra.mrb[0].mxu0 %v2259
      %v2379 = vpop.f32.mrb[0].mxu0
      %v2380 = vadd.f32 0.0, %v2379
      %v2381 = vpop.f32.mrb[0].mxu0
      %2382 = vmatprep.mubr.f32.mxu0 0.0
      %2383 = vmatmul.mubr.f32.gmra.mrb[0].mxu0 %v2260
      %v2384 = vpop.f32.mrb[0].mxu0
      %v2385 = vadd.f32 0.0, %v2384
      %v2386 = vpop.f32.mrb[0].mxu0
      %2387 = vmatprep.mubr.f32.mxu0 0.0
      %2388 = vmatmul.mubr.f32.gmra.mrb[0].mxu0 %v2261
      %v2389 = vpop.f32.mrb[0].mxu0
      %v2390 = vadd.f32 0.0, %v2389
      %v2391 = vpop.f32.mrb[0].mxu0
      %2392 = vmatprep.mubr.f32.mxu0 0.0
      %2393 = vmatmul.mubr.f32.gmra.mrb[0].mxu0 %v2262
      %v2394 = vpop.f32.mrb[0].mxu0
      %v2395 = vadd.f32 0.0, %v2394
      %v2396 = vpop.f32.mrb[0].mxu0
      %2397 = vmatprep.mubr.f32.mxu0 0.0
      %2398 = vmatmul.mubr.f32.gmra.mrb[0].mxu0 %v2263
      %v2399 = vpop.f32.mrb[0].mxu0
      %v2400 = vadd.f32 0.0, %v2399
      %v2401 = vpop.f32.mrb[0].mxu0
      %2402 = vmatprep.mubr.f32.mxu0 0.0
      %2403 = vmatmul.mubr.f32.gmra.mrb[0].mxu0 %v2264
      %v2404 = vpop.f32.mrb[0].mxu0
      %v2405 = vadd.f32 0.0, %v2404
      %v2406 = vpop.f32.mrb[0].mxu0
      %2407 = vmatprep.mubr.f32.mxu0 0.0
      %2408 = vmatmul.mubr.f32.gmra.mrb[0].mxu0 %v2265
      %v2409 = vpop.f32.mrb[0].mxu0
      %v2410 = vadd.f32 0.0, %v2409
      %v2411 = vpop.f32.mrb[0].mxu0
      %2412 = vmatprep.mubr.f32.mxu0 0.0
      %2413 = vmatmul.mubr.f32.gmra.mrb[0].mxu0 %v2266
      %v2414 = vpop.f32.mrb[0].mxu0
      %v2415 = vadd.f32 0.0, %v2414
      %v2416 = vpop.f32.mrb[0].mxu0
      %2417 = vmatprep.mubr.f32.mxu0 0.0
      %2418 = vmatmul.mubr.f32.gmra.mrb[0].mxu0 %v2267
      %v2419 = vpop.f32.mrb[0].mxu0
      %v2420 = vadd.f32 0.0, %v2419
      %v2421 = vpop.f32.mrb[0].mxu0
      %2422 = vmatprep.mubr.f32.mxu0 0.0
      %2423 = vmatmul.mubr.f32.gmra.mrb[0].mxu0 %v2268
      %v2424 = vpop.f32.mrb[0].mxu0
      %v2425 = vadd.f32 0.0, %v2424
      %v2426 = vpop.f32.mrb[0].mxu0
      %2427 = vmatprep.mubr.f32.mxu0 0.0
      %2428 = vmatmul.mubr.f32.gmra.mrb[0].mxu0 %v2269
      %v2429 = vpop.f32.mrb[0].mxu0
      %v2430 = vadd.f32 0.0, %v2429
      %v2431 = vpop.f32.mrb[0].mxu0
      %2432 = vmatprep.mubr.f32.mxu0 0.0
      %2433 = vmatmul.mubr.f32.gmra.mrb[0].mxu0 %v2270
      %v2434 = vpop.f32.mrb[0].mxu0
      %v2435 = vadd.f32 0.0, %v2434
      %v2436 = vpop.f32.mrb[0].mxu0
      %2437 = vmatprep.mubr.f32.mxu0 0.0
      %2438 = vmatmul.mubr.f32.gmra.mrb[0].mxu0 %v2271
      %v2439 = vpop.f32.mrb[0].mxu0
      %v2440 = vadd.f32 0.0, %v2439
      %v2441 = vpop.f32.mrb[0].mxu0
      %2442 = vdwg.mxu0
      %v2443 = vadd.f32 %v2236, %v2355
      %v2444 = vadd.f32 %v2237, %v2360
      %v2445 = vadd.f32 %v2238, %v2365
      %v2446 = vadd.f32 %v2239, %v2370
      %v2447 = vadd.f32 %v2240, %v2375
      %v2448 = vadd.f32 %v2241, %v2380
      %v2449 = vadd.f32 %v2242, %v2385
      %v2450 = vadd.f32 %v2243, %v2390
      %v2451 = vadd.f32 %v2244, %v2395
      %v2452 = vadd.f32 %v2245, %v2400
      %v2453 = vadd.f32 %v2246, %v2405
      %v2454 = vadd.f32 %v2247, %v2410
      %v2455 = vadd.f32 %v2248, %v2415
      %v2456 = vadd.f32 %v2249, %v2420
      %v2457 = vadd.f32 %v2250, %v2425
      %v2458 = vadd.f32 %v2251, %v2430
      %v2459 = vadd.f32 %v2252, %v2435
      %v2460 = vadd.f32 %v2253, %v2440
      %v2461 = vld [vmem:[#allocation2 + $0xe] sm:$0xff]
      %v2462 = vld [vmem:[#allocation2 + $0x16] sm:$0xff]
      %v2463 = vld [vmem:[#allocation2 + $0x1e] sm:$0xff]
      %v2464 = vld [vmem:[#allocation2 + $0x26] sm:$0xff]
      %v2465 = vld [vmem:[#allocation2 + $0x2e] sm:$0xff]
      %v2466 = vld [vmem:[#allocation2 + $0x36] sm:$0xff]
      %v2467 = vld [vmem:[#allocation2 + $0x3e] sm:$0xff]
      %v2468 = vld [vmem:[#allocation2 + $0x46] sm:$0xff]
      %v2469 = vld [vmem:[#allocation2 + $0x4e] sm:$0xff]
      %v2470 = vld [vmem:[#allocation2 + $0x56] sm:$0xff]
      %v2471 = vld [vmem:[#allocation2 + $0x5e] sm:$0xff]
      %v2472 = vld [vmem:[#allocation2 + $0x66] sm:$0xff]
      %v2473 = vld [vmem:[#allocation2 + $0x6e] sm:$0xff]
      %v2474 = vld [vmem:[#allocation2 + $0x76] sm:$0xff]
      %v2475 = vld [vmem:[#allocation2 + $0x7e] sm:$0xff]
      %v2476 = vld [vmem:[#allocation2 + $0x86] sm:$0xff]
      %v2477 = vld [vmem:[#allocation2 + $0x8e] sm:$0xff]
      %v2478 = vld [vmem:[#allocation2 + $0x96] sm:$0xf]
      %v2479 = vld [vmem:[%s3 + $0x280] sm:$0xff]
      %v2480 = vld [vmem:[%s3 + $0x288] sm:$0xff]
      %v2481 = vld [vmem:[%s3 + $0x290] sm:$0xff]
      %v2482 = vld [vmem:[%s3 + $0x298] sm:$0xff]
      %v2483 = vld [vmem:[%s3 + $0x2a0] sm:$0xff]
      %v2484 = vld [vmem:[%s3 + $0x2a8] sm:$0xff]
      %v2485 = vld [vmem:[%s3 + $0x2b0] sm:$0xff]
      %v2486 = vld [vmem:[%s3 + $0x2b8] sm:$0xff]
      %v2487 = vld [vmem:[%s3 + $0x2c0] sm:$0xff]
      %v2488 = vld [vmem:[%s3 + $0x2c8] sm:$0xff]
      %v2489 = vld [vmem:[%s3 + $0x2d0] sm:$0xff]
      %v2490 = vld [vmem:[%s3 + $0x2d8] sm:$0xff]
      %v2491 = vld [vmem:[%s3 + $0x2e0] sm:$0xff]
      %v2492 = vld [vmem:[%s3 + $0x2e8] sm:$0xff]
      %v2493 = vld [vmem:[%s3 + $0x2f0] sm:$0xff]
      %v2494 = vld [vmem:[%s3 + $0x2f8] sm:$0xff]
      %2495 = vmatprep.subr.mxu0 0.0
      %2496 = vmatpush1.msra.mxu0 %v2479
      %2497 = vmatprep.subr.mxu0 0.0
      %2498 = vmatpush1.msra.mxu0 %v2480
      %2499 = vmatprep.subr.mxu0 0.0
      %2500 = vmatpush1.msra.mxu0 %v2481
      %2501 = vmatprep.subr.mxu0 0.0
      %2502 = vmatpush1.msra.mxu0 %v2482
      %2503 = vmatprep.subr.mxu0 0.0
      %2504 = vmatpush1.msra.mxu0 %v2483
      %2505 = vmatprep.subr.mxu0 0.0
      %2506 = vmatpush1.msra.mxu0 %v2484
      %2507 = vmatprep.subr.mxu0 0.0
      %2508 = vmatpush1.msra.mxu0 %v2485
      %2509 = vmatprep.subr.mxu0 0.0
      %2510 = vmatpush1.msra.mxu0 %v2486
      %2511 = vmatprep.subr.mxu0 0.0
      %2512 = vmatpush1.msra.mxu0 %v2487
      %2513 = vmatprep.subr.mxu0 0.0
      %2514 = vmatpush1.msra.mxu0 %v2488
      %2515 = vmatprep.subr.mxu0 0.0
      %2516 = vmatpush1.msra.mxu0 %v2489
      %2517 = vmatprep.subr.mxu0 0.0
      %2518 = vmatpush1.msra.mxu0 %v2490
      %2519 = vmatprep.subr.mxu0 0.0
      %2520 = vmatpush1.msra.mxu0 %v2491
      %2521 = vmatprep.subr.mxu0 0.0
      %2522 = vmatpush1.msra.mxu0 %v2492
      %2523 = vmatprep.subr.mxu0 0.0
      %2524 = vmatpush1.msra.mxu0 %v2493
      %2525 = vmatprep.subr.mxu0 0.0
      %2526 = vmatpush1.msra.mxu0 %v2494
      %2527 = vmatprep.subr.mxu0 0.0
      %2528 = vmatpush1.msra.mxu0 0.0
      %2529 = vmatprep.subr.mxu0 0.0
      %2530 = vmatpush1.msra.mxu0 0.0
      %2531 = vmatprep.subr.mxu0 0.0
      %2532 = vmatpush1.msra.mxu0 0.0
      %2533 = vmatprep.subr.mxu0 0.0
      %2534 = vmatpush1.msra.mxu0 0.0
      %2535 = vmatprep.subr.mxu0 0.0
      %2536 = vmatpush1.msra.mxu0 0.0
      %2537 = vmatprep.subr.mxu0 0.0
      %2538 = vmatpush1.msra.mxu0 0.0
      %2539 = vmatprep.subr.mxu0 0.0
      %2540 = vmatpush1.msra.mxu0 0.0
      %2541 = vmatprep.subr.mxu0 0.0
      %2542 = vmatpush1.msra.mxu0 0.0
      %2543 = vmatprep.subr.mxu0 0.0
      %2544 = vmatpush1.msra.mxu0 0.0
      %2545 = vmatprep.subr.mxu0 0.0
      %2546 = vmatpush1.msra.mxu0 0.0
      %2547 = vmatprep.subr.mxu0 0.0
      %2548 = vmatpush1.msra.mxu0 0.0
      %2549 = vmatprep.subr.mxu0 0.0
      %2550 = vmatpush1.msra.mxu0 0.0
      %2551 = vmatprep.subr.mxu0 0.0
      %2552 = vmatpush1.msra.mxu0 0.0
      %2553 = vmatprep.subr.mxu0 0.0
      %2554 = vmatpush1.msra.mxu0 0.0
      %2555 = vmatprep.subr.mxu0 0.0
      %2556 = vmatpush1.msra.mxu0 0.0
      %2557 = vmatprep.subr.mxu0 0.0
      %2558 = vmatpush1.msra.mxu0 0.0
      %2559 = vmatprep.mubr.f32.mxu0 0.0
      %2560 = vmatmul.mubr.f32.gmra.mrb[0].mxu0 %v2461
      %v2561 = vpop.f32.mrb[0].mxu0
      %v2562 = vadd.f32 0.0, %v2561
      %v2563 = vpop.f32.mrb[0].mxu0
      %2564 = vmatprep.mubr.f32.mxu0 0.0
      %2565 = vmatmul.mubr.f32.gmra.mrb[0].mxu0 %v2462
      %v2566 = vpop.f32.mrb[0].mxu0
      %v2567 = vadd.f32 0.0, %v2566
      %v2568 = vpop.f32.mrb[0].mxu0
      %2569 = vmatprep.mubr.f32.mxu0 0.0
      %2570 = vmatmul.mubr.f32.gmra.mrb[0].mxu0 %v2463
      %v2571 = vpop.f32.mrb[0].mxu0
      %v2572 = vadd.f32 0.0, %v2571
      %v2573 = vpop.f32.mrb[0].mxu0
      %2574 = vmatprep.mubr.f32.mxu0 0.0
      %2575 = vmatmul.mubr.f32.gmra.mrb[0].mxu0 %v2464
      %v2576 = vpop.f32.mrb[0].mxu0
      %v2577 = vadd.f32 0.0, %v2576
      %v2578 = vpop.f32.mrb[0].mxu0
      %2579 = vmatprep.mubr.f32.mxu0 0.0
      %2580 = vmatmul.mubr.f32.gmra.mrb[0].mxu0 %v2465
      %v2581 = vpop.f32.mrb[0].mxu0
      %v2582 = vadd.f32 0.0, %v2581
      %v2583 = vpop.f32.mrb[0].mxu0
      %2584 = vmatprep.mubr.f32.mxu0 0.0
      %2585 = vmatmul.mubr.f32.gmra.mrb[0].mxu0 %v2466
      %v2586 = vpop.f32.mrb[0].mxu0
      %v2587 = vadd.f32 0.0, %v2586
      %v2588 = vpop.f32.mrb[0].mxu0
      %2589 = vmatprep.mubr.f32.mxu0 0.0
      %2590 = vmatmul.mubr.f32.gmra.mrb[0].mxu0 %v2467
      %v2591 = vpop.f32.mrb[0].mxu0
      %v2592 = vadd.f32 0.0, %v2591
      %v2593 = vpop.f32.mrb[0].mxu0
      %2594 = vmatprep.mubr.f32.mxu0 0.0
      %2595 = vmatmul.mubr.f32.gmra.mrb[0].mxu0 %v2468
      %v2596 = vpop.f32.mrb[0].mxu0
      %v2597 = vadd.f32 0.0, %v2596
      %v2598 = vpop.f32.mrb[0].mxu0
      %2599 = vmatprep.mubr.f32.mxu0 0.0
      %2600 = vmatmul.mubr.f32.gmra.mrb[0].mxu0 %v2469
      %v2601 = vpop.f32.mrb[0].mxu0
      %v2602 = vadd.f32 0.0, %v2601
      %v2603 = vpop.f32.mrb[0].mxu0
      %2604 = vmatprep.mubr.f32.mxu0 0.0
      %2605 = vmatmul.mubr.f32.gmra.mrb[0].mxu0 %v2470
      %v2606 = vpop.f32.mrb[0].mxu0
      %v2607 = vadd.f32 0.0, %v2606
      %v2608 = vpop.f32.mrb[0].mxu0
      %2609 = vmatprep.mubr.f32.mxu0 0.0
      %2610 = vmatmul.mubr.f32.gmra.mrb[0].mxu0 %v2471
      %v2611 = vpop.f32.mrb[0].mxu0
      %v2612 = vadd.f32 0.0, %v2611
      %v2613 = vpop.f32.mrb[0].mxu0
      %2614 = vmatprep.mubr.f32.mxu0 0.0
      %2615 = vmatmul.mubr.f32.gmra.mrb[0].mxu0 %v2472
      %v2616 = vpop.f32.mrb[0].mxu0
      %v2617 = vadd.f32 0.0, %v2616
      %v2618 = vpop.f32.mrb[0].mxu0
      %2619 = vmatprep.mubr.f32.mxu0 0.0
      %2620 = vmatmul.mubr.f32.gmra.mrb[0].mxu0 %v2473
      %v2621 = vpop.f32.mrb[0].mxu0
      %v2622 = vadd.f32 0.0, %v2621
      %v2623 = vpop.f32.mrb[0].mxu0
      %2624 = vmatprep.mubr.f32.mxu0 0.0
      %2625 = vmatmul.mubr.f32.gmra.mrb[0].mxu0 %v2474
      %v2626 = vpop.f32.mrb[0].mxu0
      %v2627 = vadd.f32 0.0, %v2626
      %v2628 = vpop.f32.mrb[0].mxu0
      %2629 = vmatprep.mubr.f32.mxu0 0.0
      %2630 = vmatmul.mubr.f32.gmra.mrb[0].mxu0 %v2475
      %v2631 = vpop.f32.mrb[0].mxu0
      %v2632 = vadd.f32 0.0, %v2631
      %v2633 = vpop.f32.mrb[0].mxu0
      %2634 = vmatprep.mubr.f32.mxu0 0.0
      %2635 = vmatmul.mubr.f32.gmra.mrb[0].mxu0 %v2476
      %v2636 = vpop.f32.mrb[0].mxu0
      %v2637 = vadd.f32 0.0, %v2636
      %v2638 = vpop.f32.mrb[0].mxu0
      %2639 = vmatprep.mubr.f32.mxu0 0.0
      %2640 = vmatmul.mubr.f32.gmra.mrb[0].mxu0 %v2477
      %v2641 = vpop.f32.mrb[0].mxu0
      %v2642 = vadd.f32 0.0, %v2641
      %v2643 = vpop.f32.mrb[0].mxu0
      %2644 = vmatprep.mubr.f32.mxu0 0.0
      %2645 = vmatmul.mubr.f32.gmra.mrb[0].mxu0 %v2478
      %v2646 = vpop.f32.mrb[0].mxu0
      %v2647 = vadd.f32 0.0, %v2646
      %v2648 = vpop.f32.mrb[0].mxu0
      %2649 = vdwg.mxu0
      %v2650 = vadd.f32 %v2443, %v2562
      %v2651 = vadd.f32 %v2444, %v2567
      %v2652 = vadd.f32 %v2445, %v2572
      %v2653 = vadd.f32 %v2446, %v2577
      %v2654 = vadd.f32 %v2447, %v2582
      %v2655 = vadd.f32 %v2448, %v2587
      %v2656 = vadd.f32 %v2449, %v2592
      %v2657 = vadd.f32 %v2450, %v2597
      %v2658 = vadd.f32 %v2451, %v2602
      %v2659 = vadd.f32 %v2452, %v2607
      %v2660 = vadd.f32 %v2453, %v2612
      %v2661 = vadd.f32 %v2454, %v2617
      %v2662 = vadd.f32 %v2455, %v2622
      %v2663 = vadd.f32 %v2456, %v2627
      %v2664 = vadd.f32 %v2457, %v2632
      %v2665 = vadd.f32 %v2458, %v2637
      %v2666 = vadd.f32 %v2459, %v2642
      %v2667 = vadd.f32 %v2460, %v2647
      %v2668 = vld [vmem:[#allocation2 + $0xf] sm:$0xff]
      %v2669 = vld [vmem:[#allocation2 + $0x17] sm:$0xff]
      %v2670 = vld [vmem:[#allocation2 + $0x1f] sm:$0xff]
      %v2671 = vld [vmem:[#allocation2 + $0x27] sm:$0xff]
      %v2672 = vld [vmem:[#allocation2 + $0x2f] sm:$0xff]
      %v2673 = vld [vmem:[#allocation2 + $0x37] sm:$0xff]
      %v2674 = vld [vmem:[#allocation2 + $0x3f] sm:$0xff]
      %v2675 = vld [vmem:[#allocation2 + $0x47] sm:$0xff]
      %v2676 = vld [vmem:[#allocation2 + $0x4f] sm:$0xff]
      %v2677 = vld [vmem:[#allocation2 + $0x57] sm:$0xff]
      %v2678 = vld [vmem:[#allocation2 + $0x5f] sm:$0xff]
      %v2679 = vld [vmem:[#allocation2 + $0x67] sm:$0xff]
      %v2680 = vld [vmem:[#allocation2 + $0x6f] sm:$0xff]
      %v2681 = vld [vmem:[#allocation2 + $0x77] sm:$0xff]
      %v2682 = vld [vmem:[#allocation2 + $0x7f] sm:$0xff]
      %v2683 = vld [vmem:[#allocation2 + $0x87] sm:$0xff]
      %v2684 = vld [vmem:[#allocation2 + $0x8f] sm:$0xff]
      %v2685 = vld [vmem:[#allocation2 + $0x97] sm:$0xf]
      %v2686 = vld [vmem:[%s3 + $0x300] sm:$0xff]
      %v2687 = vld [vmem:[%s3 + $0x308] sm:$0xff]
      %v2688 = vld [vmem:[%s3 + $0x310] sm:$0xff]
      %v2689 = vld [vmem:[%s3 + $0x318] sm:$0xff]
      %v2690 = vld [vmem:[%s3 + $0x320] sm:$0xff]
      %v2691 = vld [vmem:[%s3 + $0x328] sm:$0xff]
      %v2692 = vld [vmem:[%s3 + $0x330] sm:$0xff]
      %v2693 = vld [vmem:[%s3 + $0x338] sm:$0xff]
      %v2694 = vld [vmem:[%s3 + $0x340] sm:$0xff]
      %v2695 = vld [vmem:[%s3 + $0x348] sm:$0xff]
      %v2696 = vld [vmem:[%s3 + $0x350] sm:$0xff]
      %v2697 = vld [vmem:[%s3 + $0x358] sm:$0xff]
      %v2698 = vld [vmem:[%s3 + $0x360] sm:$0xff]
      %v2699 = vld [vmem:[%s3 + $0x368] sm:$0xff]
      %v2700 = vld [vmem:[%s3 + $0x370] sm:$0xff]
      %v2701 = vld [vmem:[%s3 + $0x378] sm:$0xff]
      %2702 = vmatprep.subr.mxu0 0.0
      %2703 = vmatpush1.msra.mxu0 %v2686
      %2704 = vmatprep.subr.mxu0 0.0
      %2705 = vmatpush1.msra.mxu0 %v2687
      %2706 = vmatprep.subr.mxu0 0.0
      %2707 = vmatpush1.msra.mxu0 %v2688
      %2708 = vmatprep.subr.mxu0 0.0
      %2709 = vmatpush1.msra.mxu0 %v2689
      %2710 = vmatprep.subr.mxu0 0.0
      %2711 = vmatpush1.msra.mxu0 %v2690
      %2712 = vmatprep.subr.mxu0 0.0
      %2713 = vmatpush1.msra.mxu0 %v2691
      %2714 = vmatprep.subr.mxu0 0.0
      %2715 = vmatpush1.msra.mxu0 %v2692
      %2716 = vmatprep.subr.mxu0 0.0
      %2717 = vmatpush1.msra.mxu0 %v2693
      %2718 = vmatprep.subr.mxu0 0.0
      %2719 = vmatpush1.msra.mxu0 %v2694
      %2720 = vmatprep.subr.mxu0 0.0
      %2721 = vmatpush1.msra.mxu0 %v2695
      %2722 = vmatprep.subr.mxu0 0.0
      %2723 = vmatpush1.msra.mxu0 %v2696
      %2724 = vmatprep.subr.mxu0 0.0
      %2725 = vmatpush1.msra.mxu0 %v2697
      %2726 = vmatprep.subr.mxu0 0.0
      %2727 = vmatpush1.msra.mxu0 %v2698
      %2728 = vmatprep.subr.mxu0 0.0
      %2729 = vmatpush1.msra.mxu0 %v2699
      %2730 = vmatprep.subr.mxu0 0.0
      %2731 = vmatpush1.msra.mxu0 %v2700
      %2732 = vmatprep.subr.mxu0 0.0
      %2733 = vmatpush1.msra.mxu0 %v2701
      %2734 = vmatprep.subr.mxu0 0.0
      %2735 = vmatpush1.msra.mxu0 0.0
      %2736 = vmatprep.subr.mxu0 0.0
      %2737 = vmatpush1.msra.mxu0 0.0
      %2738 = vmatprep.subr.mxu0 0.0
      %2739 = vmatpush1.msra.mxu0 0.0
      %2740 = vmatprep.subr.mxu0 0.0
      %2741 = vmatpush1.msra.mxu0 0.0
      %2742 = vmatprep.subr.mxu0 0.0
      %2743 = vmatpush1.msra.mxu0 0.0
      %2744 = vmatprep.subr.mxu0 0.0
      %2745 = vmatpush1.msra.mxu0 0.0
      %2746 = vmatprep.subr.mxu0 0.0
      %2747 = vmatpush1.msra.mxu0 0.0
      %2748 = vmatprep.subr.mxu0 0.0
      %2749 = vmatpush1.msra.mxu0 0.0
      %2750 = vmatprep.subr.mxu0 0.0
      %2751 = vmatpush1.msra.mxu0 0.0
      %2752 = vmatprep.subr.mxu0 0.0
      %2753 = vmatpush1.msra.mxu0 0.0
      %2754 = vmatprep.subr.mxu0 0.0
      %2755 = vmatpush1.msra.mxu0 0.0
      %2756 = vmatprep.subr.mxu0 0.0
      %2757 = vmatpush1.msra.mxu0 0.0
      %2758 = vmatprep.subr.mxu0 0.0
      %2759 = vmatpush1.msra.mxu0 0.0
      %2760 = vmatprep.subr.mxu0 0.0
      %2761 = vmatpush1.msra.mxu0 0.0
      %2762 = vmatprep.subr.mxu0 0.0
      %2763 = vmatpush1.msra.mxu0 0.0
      %2764 = vmatprep.subr.mxu0 0.0
      %2765 = vmatpush1.msra.mxu0 0.0
      %2766 = vmatprep.mubr.f32.mxu0 0.0
      %2767 = vmatmul.mubr.f32.gmra.mrb[0].mxu0 %v2668
      %v2768 = vpop.f32.mrb[0].mxu0
      %v2769 = vadd.f32 0.0, %v2768
      %v2770 = vpop.f32.mrb[0].mxu0
      %2771 = vmatprep.mubr.f32.mxu0 0.0
      %2772 = vmatmul.mubr.f32.gmra.mrb[0].mxu0 %v2669
      %v2773 = vpop.f32.mrb[0].mxu0
      %v2774 = vadd.f32 0.0, %v2773
      %v2775 = vpop.f32.mrb[0].mxu0
      %2776 = vmatprep.mubr.f32.mxu0 0.0
      %2777 = vmatmul.mubr.f32.gmra.mrb[0].mxu0 %v2670
      %v2778 = vpop.f32.mrb[0].mxu0
      %v2779 = vadd.f32 0.0, %v2778
      %v2780 = vpop.f32.mrb[0].mxu0
      %2781 = vmatprep.mubr.f32.mxu0 0.0
      %2782 = vmatmul.mubr.f32.gmra.mrb[0].mxu0 %v2671
      %v2783 = vpop.f32.mrb[0].mxu0
      %v2784 = vadd.f32 0.0, %v2783
      %v2785 = vpop.f32.mrb[0].mxu0
      %2786 = vmatprep.mubr.f32.mxu0 0.0
      %2787 = vmatmul.mubr.f32.gmra.mrb[0].mxu0 %v2672
      %v2788 = vpop.f32.mrb[0].mxu0
      %v2789 = vadd.f32 0.0, %v2788
      %v2790 = vpop.f32.mrb[0].mxu0
      %2791 = vmatprep.mubr.f32.mxu0 0.0
      %2792 = vmatmul.mubr.f32.gmra.mrb[0].mxu0 %v2673
      %v2793 = vpop.f32.mrb[0].mxu0
      %v2794 = vadd.f32 0.0, %v2793
      %v2795 = vpop.f32.mrb[0].mxu0
      %2796 = vmatprep.mubr.f32.mxu0 0.0
      %2797 = vmatmul.mubr.f32.gmra.mrb[0].mxu0 %v2674
      %v2798 = vpop.f32.mrb[0].mxu0
      %v2799 = vadd.f32 0.0, %v2798
      %v2800 = vpop.f32.mrb[0].mxu0
      %2801 = vmatprep.mubr.f32.mxu0 0.0
      %2802 = vmatmul.mubr.f32.gmra.mrb[0].mxu0 %v2675
      %v2803 = vpop.f32.mrb[0].mxu0
      %v2804 = vadd.f32 0.0, %v2803
      %v2805 = vpop.f32.mrb[0].mxu0
      %2806 = vmatprep.mubr.f32.mxu0 0.0
      %2807 = vmatmul.mubr.f32.gmra.mrb[0].mxu0 %v2676
      %v2808 = vpop.f32.mrb[0].mxu0
      %v2809 = vadd.f32 0.0, %v2808
      %v2810 = vpop.f32.mrb[0].mxu0
      %2811 = vmatprep.mubr.f32.mxu0 0.0
      %2812 = vmatmul.mubr.f32.gmra.mrb[0].mxu0 %v2677
      %v2813 = vpop.f32.mrb[0].mxu0
      %v2814 = vadd.f32 0.0, %v2813
      %v2815 = vpop.f32.mrb[0].mxu0
      %2816 = vmatprep.mubr.f32.mxu0 0.0
      %2817 = vmatmul.mubr.f32.gmra.mrb[0].mxu0 %v2678
      %v2818 = vpop.f32.mrb[0].mxu0
      %v2819 = vadd.f32 0.0, %v2818
      %v2820 = vpop.f32.mrb[0].mxu0
      %2821 = vmatprep.mubr.f32.mxu0 0.0
      %2822 = vmatmul.mubr.f32.gmra.mrb[0].mxu0 %v2679
      %v2823 = vpop.f32.mrb[0].mxu0
      %v2824 = vadd.f32 0.0, %v2823
      %v2825 = vpop.f32.mrb[0].mxu0
      %2826 = vmatprep.mubr.f32.mxu0 0.0
      %2827 = vmatmul.mubr.f32.gmra.mrb[0].mxu0 %v2680
      %v2828 = vpop.f32.mrb[0].mxu0
      %v2829 = vadd.f32 0.0, %v2828
      %v2830 = vpop.f32.mrb[0].mxu0
      %2831 = vmatprep.mubr.f32.mxu0 0.0
      %2832 = vmatmul.mubr.f32.gmra.mrb[0].mxu0 %v2681
      %v2833 = vpop.f32.mrb[0].mxu0
      %v2834 = vadd.f32 0.0, %v2833
      %v2835 = vpop.f32.mrb[0].mxu0
      %2836 = vmatprep.mubr.f32.mxu0 0.0
      %2837 = vmatmul.mubr.f32.gmra.mrb[0].mxu0 %v2682
      %v2838 = vpop.f32.mrb[0].mxu0
      %v2839 = vadd.f32 0.0, %v2838
      %v2840 = vpop.f32.mrb[0].mxu0
      %2841 = vmatprep.mubr.f32.mxu0 0.0
      %2842 = vmatmul.mubr.f32.gmra.mrb[0].mxu0 %v2683
      %v2843 = vpop.f32.mrb[0].mxu0
      %v2844 = vadd.f32 0.0, %v2843
      %v2845 = vpop.f32.mrb[0].mxu0
      %2846 = vmatprep.mubr.f32.mxu0 0.0
      %2847 = vmatmul.mubr.f32.gmra.mrb[0].mxu0 %v2684
      %v2848 = vpop.f32.mrb[0].mxu0
      %v2849 = vadd.f32 0.0, %v2848
      %v2850 = vpop.f32.mrb[0].mxu0
      %2851 = vmatprep.mubr.f32.mxu0 0.0
      %2852 = vmatmul.mubr.f32.gmra.mrb[0].mxu0 %v2685
      %v2853 = vpop.f32.mrb[0].mxu0
      %v2854 = vadd.f32 0.0, %v2853
      %v2855 = vpop.f32.mrb[0].mxu0
      %2856 = vdwg.mxu0
      %v2857 = vadd.f32 %v2650, %v2769
      %v2858 = vadd.f32 %v2651, %v2774
      %v2859 = vadd.f32 %v2652, %v2779
      %v2860 = vadd.f32 %v2653, %v2784
      %v2861 = vadd.f32 %v2654, %v2789
      %v2862 = vadd.f32 %v2655, %v2794
      %v2863 = vadd.f32 %v2656, %v2799
      %v2864 = vadd.f32 %v2657, %v2804
      %v2865 = vadd.f32 %v2658, %v2809
      %v2866 = vadd.f32 %v2659, %v2814
      %v2867 = vadd.f32 %v2660, %v2819
      %v2868 = vadd.f32 %v2661, %v2824
      %v2869 = vadd.f32 %v2662, %v2829
      %v2870 = vadd.f32 %v2663, %v2834
      %v2871 = vadd.f32 %v2664, %v2839
      %v2872 = vadd.f32 %v2665, %v2844
      %v2873 = vadd.f32 %v2666, %v2849
      %v2874 = vadd.f32 %v2667, %v2854
      %v2875 = vld [vmem:[#allocation2 + $0x10] sm:$0xff]
      %v2876 = vld [vmem:[#allocation2 + $0x18] sm:$0xff]
      %v2877 = vld [vmem:[#allocation2 + $0x20] sm:$0xff]
      %v2878 = vld [vmem:[#allocation2 + $0x28] sm:$0xff]
      %v2879 = vld [vmem:[#allocation2 + $0x30] sm:$0xff]
      %v2880 = vld [vmem:[#allocation2 + $0x38] sm:$0xff]
      %v2881 = vld [vmem:[#allocation2 + $0x40] sm:$0xff]
      %v2882 = vld [vmem:[#allocation2 + $0x48] sm:$0xff]
      %v2883 = vld [vmem:[#allocation2 + $0x50] sm:$0xff]
      %v2884 = vld [vmem:[#allocation2 + $0x58] sm:$0xff]
      %v2885 = vld [vmem:[#allocation2 + $0x60] sm:$0xff]
      %v2886 = vld [vmem:[#allocation2 + $0x68] sm:$0xff]
      %v2887 = vld [vmem:[#allocation2 + $0x70] sm:$0xff]
      %v2888 = vld [vmem:[#allocation2 + $0x78] sm:$0xff]
      %v2889 = vld [vmem:[#allocation2 + $0x80] sm:$0xff]
      %v2890 = vld [vmem:[#allocation2 + $0x88] sm:$0xff]
      %v2891 = vld [vmem:[#allocation2 + $0x90] sm:$0xff]
      %v2892 = vld [vmem:[#allocation2 + $0x98] sm:$0xf]
      %v2893 = vld [vmem:[%s3 + $0x380] sm:$0xff]
      %v2894 = vld [vmem:[%s3 + $0x388] sm:$0xff]
      %v2895 = vld [vmem:[%s3 + $0x390] sm:$0xff]
      %v2896 = vld [vmem:[%s3 + $0x398] sm:$0xff]
      %v2897 = vld [vmem:[%s3 + $0x3a0] sm:$0xff]
      %v2898 = vld [vmem:[%s3 + $0x3a8] sm:$0xff]
      %v2899 = vld [vmem:[%s3 + $0x3b0] sm:$0xff]
      %v2900 = vld [vmem:[%s3 + $0x3b8] sm:$0xff]
      %v2901 = vld [vmem:[%s3 + $0x3c0] sm:$0xff]
      %v2902 = vld [vmem:[%s3 + $0x3c8] sm:$0xff]
      %v2903 = vld [vmem:[%s3 + $0x3d0] sm:$0xff]
      %v2904 = vld [vmem:[%s3 + $0x3d8] sm:$0xff]
      %v2905 = vld [vmem:[%s3 + $0x3e0] sm:$0xff]
      %v2906 = vld [vmem:[%s3 + $0x3e8] sm:$0xff]
      %v2907 = vld [vmem:[%s3 + $0x3f0] sm:$0xff]
      %v2908 = vld [vmem:[%s3 + $0x3f8] sm:$0xff]
      %2909 = vmatprep.subr.mxu0 0.0
      %2910 = vmatpush1.msra.mxu0 %v2893
      %2911 = vmatprep.subr.mxu0 0.0
      %2912 = vmatpush1.msra.mxu0 %v2894
      %2913 = vmatprep.subr.mxu0 0.0
      %2914 = vmatpush1.msra.mxu0 %v2895
      %2915 = vmatprep.subr.mxu0 0.0
      %2916 = vmatpush1.msra.mxu0 %v2896
      %2917 = vmatprep.subr.mxu0 0.0
      %2918 = vmatpush1.msra.mxu0 %v2897
      %2919 = vmatprep.subr.mxu0 0.0
      %2920 = vmatpush1.msra.mxu0 %v2898
      %2921 = vmatprep.subr.mxu0 0.0
      %2922 = vmatpush1.msra.mxu0 %v2899
      %2923 = vmatprep.subr.mxu0 0.0
      %2924 = vmatpush1.msra.mxu0 %v2900
      %2925 = vmatprep.subr.mxu0 0.0
      %2926 = vmatpush1.msra.mxu0 %v2901
      %2927 = vmatprep.subr.mxu0 0.0
      %2928 = vmatpush1.msra.mxu0 %v2902
      %2929 = vmatprep.subr.mxu0 0.0
      %2930 = vmatpush1.msra.mxu0 %v2903
      %2931 = vmatprep.subr.mxu0 0.0
      %2932 = vmatpush1.msra.mxu0 %v2904
      %2933 = vmatprep.subr.mxu0 0.0
      %2934 = vmatpush1.msra.mxu0 %v2905
      %2935 = vmatprep.subr.mxu0 0.0
      %2936 = vmatpush1.msra.mxu0 %v2906
      %2937 = vmatprep.subr.mxu0 0.0
      %2938 = vmatpush1.msra.mxu0 %v2907
      %2939 = vmatprep.subr.mxu0 0.0
      %2940 = vmatpush1.msra.mxu0 %v2908
      %2941 = vmatprep.subr.mxu0 0.0
      %2942 = vmatpush1.msra.mxu0 0.0
      %2943 = vmatprep.subr.mxu0 0.0
      %2944 = vmatpush1.msra.mxu0 0.0
      %2945 = vmatprep.subr.mxu0 0.0
      %2946 = vmatpush1.msra.mxu0 0.0
      %2947 = vmatprep.subr.mxu0 0.0
      %2948 = vmatpush1.msra.mxu0 0.0
      %2949 = vmatprep.subr.mxu0 0.0
      %2950 = vmatpush1.msra.mxu0 0.0
      %2951 = vmatprep.subr.mxu0 0.0
      %2952 = vmatpush1.msra.mxu0 0.0
      %2953 = vmatprep.subr.mxu0 0.0
      %2954 = vmatpush1.msra.mxu0 0.0
      %2955 = vmatprep.subr.mxu0 0.0
      %2956 = vmatpush1.msra.mxu0 0.0
      %2957 = vmatprep.subr.mxu0 0.0
      %2958 = vmatpush1.msra.mxu0 0.0
      %2959 = vmatprep.subr.mxu0 0.0
      %2960 = vmatpush1.msra.mxu0 0.0
      %2961 = vmatprep.subr.mxu0 0.0
      %2962 = vmatpush1.msra.mxu0 0.0
      %2963 = vmatprep.subr.mxu0 0.0
      %2964 = vmatpush1.msra.mxu0 0.0
      %2965 = vmatprep.subr.mxu0 0.0
      %2966 = vmatpush1.msra.mxu0 0.0
      %2967 = vmatprep.subr.mxu0 0.0
      %2968 = vmatpush1.msra.mxu0 0.0
      %2969 = vmatprep.subr.mxu0 0.0
      %2970 = vmatpush1.msra.mxu0 0.0
      %2971 = vmatprep.subr.mxu0 0.0
      %2972 = vmatpush1.msra.mxu0 0.0
      %2973 = vmatprep.mubr.f32.mxu0 0.0
      %2974 = vmatmul.mubr.f32.gmra.mrb[0].mxu0 %v2875
      %v2975 = vpop.f32.mrb[0].mxu0
      %v2976 = vadd.f32 0.0, %v2975
      %v2977 = vpop.f32.mrb[0].mxu0
      %2978 = vmatprep.mubr.f32.mxu0 0.0
      %2979 = vmatmul.mubr.f32.gmra.mrb[0].mxu0 %v2876
      %v2980 = vpop.f32.mrb[0].mxu0
      %v2981 = vadd.f32 0.0, %v2980
      %v2982 = vpop.f32.mrb[0].mxu0
      %2983 = vmatprep.mubr.f32.mxu0 0.0
      %2984 = vmatmul.mubr.f32.gmra.mrb[0].mxu0 %v2877
      %v2985 = vpop.f32.mrb[0].mxu0
      %v2986 = vadd.f32 0.0, %v2985
      %v2987 = vpop.f32.mrb[0].mxu0
      %2988 = vmatprep.mubr.f32.mxu0 0.0
      %2989 = vmatmul.mubr.f32.gmra.mrb[0].mxu0 %v2878
      %v2990 = vpop.f32.mrb[0].mxu0
      %v2991 = vadd.f32 0.0, %v2990
      %v2992 = vpop.f32.mrb[0].mxu0
      %2993 = vmatprep.mubr.f32.mxu0 0.0
      %2994 = vmatmul.mubr.f32.gmra.mrb[0].mxu0 %v2879
      %v2995 = vpop.f32.mrb[0].mxu0
      %v2996 = vadd.f32 0.0, %v2995
      %v2997 = vpop.f32.mrb[0].mxu0
      %2998 = vmatprep.mubr.f32.mxu0 0.0
      %2999 = vmatmul.mubr.f32.gmra.mrb[0].mxu0 %v2880
      %v3000 = vpop.f32.mrb[0].mxu0
      %v3001 = vadd.f32 0.0, %v3000
      %v3002 = vpop.f32.mrb[0].mxu0
      %3003 = vmatprep.mubr.f32.mxu0 0.0
      %3004 = vmatmul.mubr.f32.gmra.mrb[0].mxu0 %v2881
      %v3005 = vpop.f32.mrb[0].mxu0
      %v3006 = vadd.f32 0.0, %v3005
      %v3007 = vpop.f32.mrb[0].mxu0
      %3008 = vmatprep.mubr.f32.mxu0 0.0
      %3009 = vmatmul.mubr.f32.gmra.mrb[0].mxu0 %v2882
      %v3010 = vpop.f32.mrb[0].mxu0
      %v3011 = vadd.f32 0.0, %v3010
      %v3012 = vpop.f32.mrb[0].mxu0
      %3013 = vmatprep.mubr.f32.mxu0 0.0
      %3014 = vmatmul.mubr.f32.gmra.mrb[0].mxu0 %v2883
      %v3015 = vpop.f32.mrb[0].mxu0
      %v3016 = vadd.f32 0.0, %v3015
      %v3017 = vpop.f32.mrb[0].mxu0
      %3018 = vmatprep.mubr.f32.mxu0 0.0
      %3019 = vmatmul.mubr.f32.gmra.mrb[0].mxu0 %v2884
      %v3020 = vpop.f32.mrb[0].mxu0
      %v3021 = vadd.f32 0.0, %v3020
      %v3022 = vpop.f32.mrb[0].mxu0
      %3023 = vmatprep.mubr.f32.mxu0 0.0
      %3024 = vmatmul.mubr.f32.gmra.mrb[0].mxu0 %v2885
      %v3025 = vpop.f32.mrb[0].mxu0
      %v3026 = vadd.f32 0.0, %v3025
      %v3027 = vpop.f32.mrb[0].mxu0
      %3028 = vmatprep.mubr.f32.mxu0 0.0
      %3029 = vmatmul.mubr.f32.gmra.mrb[0].mxu0 %v2886
      %v3030 = vpop.f32.mrb[0].mxu0
      %v3031 = vadd.f32 0.0, %v3030
      %v3032 = vpop.f32.mrb[0].mxu0
      %3033 = vmatprep.mubr.f32.mxu0 0.0
      %3034 = vmatmul.mubr.f32.gmra.mrb[0].mxu0 %v2887
      %v3035 = vpop.f32.mrb[0].mxu0
      %v3036 = vadd.f32 0.0, %v3035
      %v3037 = vpop.f32.mrb[0].mxu0
      %3038 = vmatprep.mubr.f32.mxu0 0.0
      %3039 = vmatmul.mubr.f32.gmra.mrb[0].mxu0 %v2888
      %v3040 = vpop.f32.mrb[0].mxu0
      %v3041 = vadd.f32 0.0, %v3040
      %v3042 = vpop.f32.mrb[0].mxu0
      %3043 = vmatprep.mubr.f32.mxu0 0.0
      %3044 = vmatmul.mubr.f32.gmra.mrb[0].mxu0 %v2889
      %v3045 = vpop.f32.mrb[0].mxu0
      %v3046 = vadd.f32 0.0, %v3045
      %v3047 = vpop.f32.mrb[0].mxu0
      %3048 = vmatprep.mubr.f32.mxu0 0.0
      %3049 = vmatmul.mubr.f32.gmra.mrb[0].mxu0 %v2890
      %v3050 = vpop.f32.mrb[0].mxu0
      %v3051 = vadd.f32 0.0, %v3050
      %v3052 = vpop.f32.mrb[0].mxu0
      %3053 = vmatprep.mubr.f32.mxu0 0.0
      %3054 = vmatmul.mubr.f32.gmra.mrb[0].mxu0 %v2891
      %v3055 = vpop.f32.mrb[0].mxu0
      %v3056 = vadd.f32 0.0, %v3055
      %v3057 = vpop.f32.mrb[0].mxu0
      %3058 = vmatprep.mubr.f32.mxu0 0.0
      %3059 = vmatmul.mubr.f32.gmra.mrb[0].mxu0 %v2892
      %v3060 = vpop.f32.mrb[0].mxu0
      %v3061 = vadd.f32 0.0, %v3060
      %v3062 = vpop.f32.mrb[0].mxu0
      %3063 = vdwg.mxu0
      %v3064 = vadd.f32 %v2857, %v2976
      %v3065 = vadd.f32 %v2858, %v2981
      %v3066 = vadd.f32 %v2859, %v2986
      %v3067 = vadd.f32 %v2860, %v2991
      %v3068 = vadd.f32 %v2861, %v2996
      %v3069 = vadd.f32 %v2862, %v3001
      %v3070 = vadd.f32 %v2863, %v3006
      %v3071 = vadd.f32 %v2864, %v3011
      %v3072 = vadd.f32 %v2865, %v3016
      %v3073 = vadd.f32 %v2866, %v3021
      %v3074 = vadd.f32 %v2867, %v3026
      %v3075 = vadd.f32 %v2868, %v3031
      %v3076 = vadd.f32 %v2869, %v3036
      %v3077 = vadd.f32 %v2870, %v3041
      %v3078 = vadd.f32 %v2871, %v3046
      %v3079 = vadd.f32 %v2872, %v3051
      %v3080 = vadd.f32 %v2873, %v3056
      %v3081 = vadd.f32 %v2874, %v3061
      %v3082 = vld [vmem:[#allocation2 + $0x11] sm:$0xff]
      %v3083 = vld [vmem:[#allocation2 + $0x19] sm:$0xff]
      %v3084 = vld [vmem:[#allocation2 + $0x21] sm:$0xff]
      %v3085 = vld [vmem:[#allocation2 + $0x29] sm:$0xff]
      %v3086 = vld [vmem:[#allocation2 + $0x31] sm:$0xff]
      %v3087 = vld [vmem:[#allocation2 + $0x39] sm:$0xff]
      %v3088 = vld [vmem:[#allocation2 + $0x41] sm:$0xff]
      %v3089 = vld [vmem:[#allocation2 + $0x49] sm:$0xff]
      %v3090 = vld [vmem:[#allocation2 + $0x51] sm:$0xff]
      %v3091 = vld [vmem:[#allocation2 + $0x59] sm:$0xff]
      %v3092 = vld [vmem:[#allocation2 + $0x61] sm:$0xff]
      %v3093 = vld [vmem:[#allocation2 + $0x69] sm:$0xff]
      %v3094 = vld [vmem:[#allocation2 + $0x71] sm:$0xff]
      %v3095 = vld [vmem:[#allocation2 + $0x79] sm:$0xff]
      %v3096 = vld [vmem:[#allocation2 + $0x81] sm:$0xff]
      %v3097 = vld [vmem:[#allocation2 + $0x89] sm:$0xff]
      %v3098 = vld [vmem:[#allocation2 + $0x91] sm:$0xff]
      %v3099 = vld [vmem:[#allocation2 + $0x99] sm:$0xf]
      %v3100 = vld [vmem:[%s3 + $0x400] sm:$0xff]
      %v3101 = vld [vmem:[%s3 + $0x408] sm:$0xff]
      %v3102 = vld [vmem:[%s3 + $0x410] sm:$0xff]
      %v3103 = vld [vmem:[%s3 + $0x418] sm:$0xff]
      %v3104 = vld [vmem:[%s3 + $0x420] sm:$0xff]
      %v3105 = vld [vmem:[%s3 + $0x428] sm:$0xff]
      %v3106 = vld [vmem:[%s3 + $0x430] sm:$0xff]
      %v3107 = vld [vmem:[%s3 + $0x438] sm:$0xff]
      %v3108 = vld [vmem:[%s3 + $0x440] sm:$0xff]
      %v3109 = vld [vmem:[%s3 + $0x448] sm:$0xff]
      %v3110 = vld [vmem:[%s3 + $0x450] sm:$0xff]
      %v3111 = vld [vmem:[%s3 + $0x458] sm:$0xff]
      %v3112 = vld [vmem:[%s3 + $0x460] sm:$0xff]
      %v3113 = vld [vmem:[%s3 + $0x468] sm:$0xff]
      %v3114 = vld [vmem:[%s3 + $0x470] sm:$0xff]
      %v3115 = vld [vmem:[%s3 + $0x478] sm:$0xff]
      %3116 = vmatprep.subr.mxu0 0.0
      %3117 = vmatpush1.msra.mxu0 %v3100
      %3118 = vmatprep.subr.mxu0 0.0
      %3119 = vmatpush1.msra.mxu0 %v3101
      %3120 = vmatprep.subr.mxu0 0.0
      %3121 = vmatpush1.msra.mxu0 %v3102
      %3122 = vmatprep.subr.mxu0 0.0
      %3123 = vmatpush1.msra.mxu0 %v3103
      %3124 = vmatprep.subr.mxu0 0.0
      %3125 = vmatpush1.msra.mxu0 %v3104
      %3126 = vmatprep.subr.mxu0 0.0
      %3127 = vmatpush1.msra.mxu0 %v3105
      %3128 = vmatprep.subr.mxu0 0.0
      %3129 = vmatpush1.msra.mxu0 %v3106
      %3130 = vmatprep.subr.mxu0 0.0
      %3131 = vmatpush1.msra.mxu0 %v3107
      %3132 = vmatprep.subr.mxu0 0.0
      %3133 = vmatpush1.msra.mxu0 %v3108
      %3134 = vmatprep.subr.mxu0 0.0
      %3135 = vmatpush1.msra.mxu0 %v3109
      %3136 = vmatprep.subr.mxu0 0.0
      %3137 = vmatpush1.msra.mxu0 %v3110
      %3138 = vmatprep.subr.mxu0 0.0
      %3139 = vmatpush1.msra.mxu0 %v3111
      %3140 = vmatprep.subr.mxu0 0.0
      %3141 = vmatpush1.msra.mxu0 %v3112
      %3142 = vmatprep.subr.mxu0 0.0
      %3143 = vmatpush1.msra.mxu0 %v3113
      %3144 = vmatprep.subr.mxu0 0.0
      %3145 = vmatpush1.msra.mxu0 %v3114
      %3146 = vmatprep.subr.mxu0 0.0
      %3147 = vmatpush1.msra.mxu0 %v3115
      %3148 = vmatprep.subr.mxu0 0.0
      %3149 = vmatpush1.msra.mxu0 0.0
      %3150 = vmatprep.subr.mxu0 0.0
      %3151 = vmatpush1.msra.mxu0 0.0
      %3152 = vmatprep.subr.mxu0 0.0
      %3153 = vmatpush1.msra.mxu0 0.0
      %3154 = vmatprep.subr.mxu0 0.0
      %3155 = vmatpush1.msra.mxu0 0.0
      %3156 = vmatprep.subr.mxu0 0.0
      %3157 = vmatpush1.msra.mxu0 0.0
      %3158 = vmatprep.subr.mxu0 0.0
      %3159 = vmatpush1.msra.mxu0 0.0
      %3160 = vmatprep.subr.mxu0 0.0
      %3161 = vmatpush1.msra.mxu0 0.0
      %3162 = vmatprep.subr.mxu0 0.0
      %3163 = vmatpush1.msra.mxu0 0.0
      %3164 = vmatprep.subr.mxu0 0.0
      %3165 = vmatpush1.msra.mxu0 0.0
      %3166 = vmatprep.subr.mxu0 0.0
      %3167 = vmatpush1.msra.mxu0 0.0
      %3168 = vmatprep.subr.mxu0 0.0
      %3169 = vmatpush1.msra.mxu0 0.0
      %3170 = vmatprep.subr.mxu0 0.0
      %3171 = vmatpush1.msra.mxu0 0.0
      %3172 = vmatprep.subr.mxu0 0.0
      %3173 = vmatpush1.msra.mxu0 0.0
      %3174 = vmatprep.subr.mxu0 0.0
      %3175 = vmatpush1.msra.mxu0 0.0
      %3176 = vmatprep.subr.mxu0 0.0
      %3177 = vmatpush1.msra.mxu0 0.0
      %3178 = vmatprep.subr.mxu0 0.0
      %3179 = vmatpush1.msra.mxu0 0.0
      %3180 = vmatprep.mubr.f32.mxu0 0.0
      %3181 = vmatmul.mubr.f32.gmra.mrb[0].mxu0 %v3082
      %v3182 = vpop.f32.mrb[0].mxu0
      %v3183 = vadd.f32 0.0, %v3182
      %v3184 = vpop.f32.mrb[0].mxu0
      %3185 = vmatprep.mubr.f32.mxu0 0.0
      %3186 = vmatmul.mubr.f32.gmra.mrb[0].mxu0 %v3083
      %v3187 = vpop.f32.mrb[0].mxu0
      %v3188 = vadd.f32 0.0, %v3187
      %v3189 = vpop.f32.mrb[0].mxu0
      %3190 = vmatprep.mubr.f32.mxu0 0.0
      %3191 = vmatmul.mubr.f32.gmra.mrb[0].mxu0 %v3084
      %v3192 = vpop.f32.mrb[0].mxu0
      %v3193 = vadd.f32 0.0, %v3192
      %v3194 = vpop.f32.mrb[0].mxu0
      %3195 = vmatprep.mubr.f32.mxu0 0.0
      %3196 = vmatmul.mubr.f32.gmra.mrb[0].mxu0 %v3085
      %v3197 = vpop.f32.mrb[0].mxu0
      %v3198 = vadd.f32 0.0, %v3197
      %v3199 = vpop.f32.mrb[0].mxu0
      %3200 = vmatprep.mubr.f32.mxu0 0.0
      %3201 = vmatmul.mubr.f32.gmra.mrb[0].mxu0 %v3086
      %v3202 = vpop.f32.mrb[0].mxu0
      %v3203 = vadd.f32 0.0, %v3202
      %v3204 = vpop.f32.mrb[0].mxu0
      %3205 = vmatprep.mubr.f32.mxu0 0.0
      %3206 = vmatmul.mubr.f32.gmra.mrb[0].mxu0 %v3087
      %v3207 = vpop.f32.mrb[0].mxu0
      %v3208 = vadd.f32 0.0, %v3207
      %v3209 = vpop.f32.mrb[0].mxu0
      %3210 = vmatprep.mubr.f32.mxu0 0.0
      %3211 = vmatmul.mubr.f32.gmra.mrb[0].mxu0 %v3088
      %v3212 = vpop.f32.mrb[0].mxu0
      %v3213 = vadd.f32 0.0, %v3212
      %v3214 = vpop.f32.mrb[0].mxu0
      %3215 = vmatprep.mubr.f32.mxu0 0.0
      %3216 = vmatmul.mubr.f32.gmra.mrb[0].mxu0 %v3089
      %v3217 = vpop.f32.mrb[0].mxu0
      %v3218 = vadd.f32 0.0, %v3217
      %v3219 = vpop.f32.mrb[0].mxu0
      %3220 = vmatprep.mubr.f32.mxu0 0.0
      %3221 = vmatmul.mubr.f32.gmra.mrb[0].mxu0 %v3090
      %v3222 = vpop.f32.mrb[0].mxu0
      %v3223 = vadd.f32 0.0, %v3222
      %v3224 = vpop.f32.mrb[0].mxu0
      %3225 = vmatprep.mubr.f32.mxu0 0.0
      %3226 = vmatmul.mubr.f32.gmra.mrb[0].mxu0 %v3091
      %v3227 = vpop.f32.mrb[0].mxu0
      %v3228 = vadd.f32 0.0, %v3227
      %v3229 = vpop.f32.mrb[0].mxu0
      %3230 = vmatprep.mubr.f32.mxu0 0.0
      %3231 = vmatmul.mubr.f32.gmra.mrb[0].mxu0 %v3092
      %v3232 = vpop.f32.mrb[0].mxu0
      %v3233 = vadd.f32 0.0, %v3232
      %v3234 = vpop.f32.mrb[0].mxu0
      %3235 = vmatprep.mubr.f32.mxu0 0.0
      %3236 = vmatmul.mubr.f32.gmra.mrb[0].mxu0 %v3093
      %v3237 = vpop.f32.mrb[0].mxu0
      %v3238 = vadd.f32 0.0, %v3237
      %v3239 = vpop.f32.mrb[0].mxu0
      %3240 = vmatprep.mubr.f32.mxu0 0.0
      %3241 = vmatmul.mubr.f32.gmra.mrb[0].mxu0 %v3094
      %v3242 = vpop.f32.mrb[0].mxu0
      %v3243 = vadd.f32 0.0, %v3242
      %v3244 = vpop.f32.mrb[0].mxu0
      %3245 = vmatprep.mubr.f32.mxu0 0.0
      %3246 = vmatmul.mubr.f32.gmra.mrb[0].mxu0 %v3095
      %v3247 = vpop.f32.mrb[0].mxu0
      %v3248 = vadd.f32 0.0, %v3247
      %v3249 = vpop.f32.mrb[0].mxu0
      %3250 = vmatprep.mubr.f32.mxu0 0.0
      %3251 = vmatmul.mubr.f32.gmra.mrb[0].mxu0 %v3096
      %v3252 = vpop.f32.mrb[0].mxu0
      %v3253 = vadd.f32 0.0, %v3252
      %v3254 = vpop.f32.mrb[0].mxu0
      %3255 = vmatprep.mubr.f32.mxu0 0.0
      %3256 = vmatmul.mubr.f32.gmra.mrb[0].mxu0 %v3097
      %v3257 = vpop.f32.mrb[0].mxu0
      %v3258 = vadd.f32 0.0, %v3257
      %v3259 = vpop.f32.mrb[0].mxu0
      %3260 = vmatprep.mubr.f32.mxu0 0.0
      %3261 = vmatmul.mubr.f32.gmra.mrb[0].mxu0 %v3098
      %v3262 = vpop.f32.mrb[0].mxu0
      %v3263 = vadd.f32 0.0, %v3262
      %v3264 = vpop.f32.mrb[0].mxu0
      %3265 = vmatprep.mubr.f32.mxu0 0.0
      %3266 = vmatmul.mubr.f32.gmra.mrb[0].mxu0 %v3099
      %v3267 = vpop.f32.mrb[0].mxu0
      %v3268 = vadd.f32 0.0, %v3267
      %v3269 = vpop.f32.mrb[0].mxu0
      %3270 = vdwg.mxu0
      %v3271 = vadd.f32 %v3064, %v3183
      %v3272 = vadd.f32 %v3065, %v3188
      %v3273 = vadd.f32 %v3066, %v3193
      %v3274 = vadd.f32 %v3067, %v3198
      %v3275 = vadd.f32 %v3068, %v3203
      %v3276 = vadd.f32 %v3069, %v3208
      %v3277 = vadd.f32 %v3070, %v3213
      %v3278 = vadd.f32 %v3071, %v3218
      %v3279 = vadd.f32 %v3072, %v3223
      %v3280 = vadd.f32 %v3073, %v3228
      %v3281 = vadd.f32 %v3074, %v3233
      %v3282 = vadd.f32 %v3075, %v3238
      %v3283 = vadd.f32 %v3076, %v3243
      %v3284 = vadd.f32 %v3077, %v3248
      %v3285 = vadd.f32 %v3078, %v3253
      %v3286 = vadd.f32 %v3079, %v3258
      %v3287 = vadd.f32 %v3080, %v3263
      %v3288 = vadd.f32 %v3081, %v3268
      %v3289 = vld [vmem:[#allocation2 + $0x12] sm:$0xff]
      %v3290 = vld [vmem:[#allocation2 + $0x1a] sm:$0xff]
      %v3291 = vld [vmem:[#allocation2 + $0x22] sm:$0xff]
      %v3292 = vld [vmem:[#allocation2 + $0x2a] sm:$0xff]
      %v3293 = vld [vmem:[#allocation2 + $0x32] sm:$0xff]
      %v3294 = vld [vmem:[#allocation2 + $0x3a] sm:$0xff]
      %v3295 = vld [vmem:[#allocation2 + $0x42] sm:$0xff]
      %v3296 = vld [vmem:[#allocation2 + $0x4a] sm:$0xff]
      %v3297 = vld [vmem:[#allocation2 + $0x52] sm:$0xff]
      %v3298 = vld [vmem:[#allocation2 + $0x5a] sm:$0xff]
      %v3299 = vld [vmem:[#allocation2 + $0x62] sm:$0xff]
      %v3300 = vld [vmem:[#allocation2 + $0x6a] sm:$0xff]
      %v3301 = vld [vmem:[#allocation2 + $0x72] sm:$0xff]
      %v3302 = vld [vmem:[#allocation2 + $0x7a] sm:$0xff]
      %v3303 = vld [vmem:[#allocation2 + $0x82] sm:$0xff]
      %v3304 = vld [vmem:[#allocation2 + $0x8a] sm:$0xff]
      %v3305 = vld [vmem:[#allocation2 + $0x92] sm:$0xff]
      %v3306 = vld [vmem:[#allocation2 + $0x9a] sm:$0xf]
      %v3307 = vld [vmem:[%s3 + $0x480] sm:$0xff]
      %v3308 = vld [vmem:[%s3 + $0x488] sm:$0xff]
      %v3309 = vld [vmem:[%s3 + $0x490] sm:$0xff]
      %v3310 = vld [vmem:[%s3 + $0x498] sm:$0xff]
      %v3311 = vld [vmem:[%s3 + $0x4a0] sm:$0xff]
      %v3312 = vld [vmem:[%s3 + $0x4a8] sm:$0xff]
      %v3313 = vld [vmem:[%s3 + $0x4b0] sm:$0xff]
      %v3314 = vld [vmem:[%s3 + $0x4b8] sm:$0xff]
      %v3315 = vld [vmem:[%s3 + $0x4c0] sm:$0xff]
      %v3316 = vld [vmem:[%s3 + $0x4c8] sm:$0xff]
      %v3317 = vld [vmem:[%s3 + $0x4d0] sm:$0xff]
      %v3318 = vld [vmem:[%s3 + $0x4d8] sm:$0xff]
      %v3319 = vld [vmem:[%s3 + $0x4e0] sm:$0xff]
      %v3320 = vld [vmem:[%s3 + $0x4e8] sm:$0xff]
      %v3321 = vld [vmem:[%s3 + $0x4f0] sm:$0xff]
      %v3322 = vld [vmem:[%s3 + $0x4f8] sm:$0xff]
      %3323 = vmatprep.subr.mxu0 0.0
      %3324 = vmatpush1.msra.mxu0 %v3307
      %3325 = vmatprep.subr.mxu0 0.0
      %3326 = vmatpush1.msra.mxu0 %v3308
      %3327 = vmatprep.subr.mxu0 0.0
      %3328 = vmatpush1.msra.mxu0 %v3309
      %3329 = vmatprep.subr.mxu0 0.0
      %3330 = vmatpush1.msra.mxu0 %v3310
      %3331 = vmatprep.subr.mxu0 0.0
      %3332 = vmatpush1.msra.mxu0 %v3311
      %3333 = vmatprep.subr.mxu0 0.0
      %3334 = vmatpush1.msra.mxu0 %v3312
      %3335 = vmatprep.subr.mxu0 0.0
      %3336 = vmatpush1.msra.mxu0 %v3313
      %3337 = vmatprep.subr.mxu0 0.0
      %3338 = vmatpush1.msra.mxu0 %v3314
      %3339 = vmatprep.subr.mxu0 0.0
      %3340 = vmatpush1.msra.mxu0 %v3315
      %3341 = vmatprep.subr.mxu0 0.0
      %3342 = vmatpush1.msra.mxu0 %v3316
      %3343 = vmatprep.subr.mxu0 0.0
      %3344 = vmatpush1.msra.mxu0 %v3317
      %3345 = vmatprep.subr.mxu0 0.0
      %3346 = vmatpush1.msra.mxu0 %v3318
      %3347 = vmatprep.subr.mxu0 0.0
      %3348 = vmatpush1.msra.mxu0 %v3319
      %3349 = vmatprep.subr.mxu0 0.0
      %3350 = vmatpush1.msra.mxu0 %v3320
      %3351 = vmatprep.subr.mxu0 0.0
      %3352 = vmatpush1.msra.mxu0 %v3321
      %3353 = vmatprep.subr.mxu0 0.0
      %3354 = vmatpush1.msra.mxu0 %v3322
      %3355 = vmatprep.subr.mxu0 0.0
      %3356 = vmatpush1.msra.mxu0 0.0
      %3357 = vmatprep.subr.mxu0 0.0
      %3358 = vmatpush1.msra.mxu0 0.0
      %3359 = vmatprep.subr.mxu0 0.0
      %3360 = vmatpush1.msra.mxu0 0.0
      %3361 = vmatprep.subr.mxu0 0.0
      %3362 = vmatpush1.msra.mxu0 0.0
      %3363 = vmatprep.subr.mxu0 0.0
      %3364 = vmatpush1.msra.mxu0 0.0
      %3365 = vmatprep.subr.mxu0 0.0
      %3366 = vmatpush1.msra.mxu0 0.0
      %3367 = vmatprep.subr.mxu0 0.0
      %3368 = vmatpush1.msra.mxu0 0.0
      %3369 = vmatprep.subr.mxu0 0.0
      %3370 = vmatpush1.msra.mxu0 0.0
      %3371 = vmatprep.subr.mxu0 0.0
      %3372 = vmatpush1.msra.mxu0 0.0
      %3373 = vmatprep.subr.mxu0 0.0
      %3374 = vmatpush1.msra.mxu0 0.0
      %3375 = vmatprep.subr.mxu0 0.0
      %3376 = vmatpush1.msra.mxu0 0.0
      %3377 = vmatprep.subr.mxu0 0.0
      %3378 = vmatpush1.msra.mxu0 0.0
      %3379 = vmatprep.subr.mxu0 0.0
      %3380 = vmatpush1.msra.mxu0 0.0
      %3381 = vmatprep.subr.mxu0 0.0
      %3382 = vmatpush1.msra.mxu0 0.0
      %3383 = vmatprep.subr.mxu0 0.0
      %3384 = vmatpush1.msra.mxu0 0.0
      %3385 = vmatprep.subr.mxu0 0.0
      %3386 = vmatpush1.msra.mxu0 0.0
      %3387 = vmatprep.mubr.f32.mxu0 0.0
      %3388 = vmatmul.mubr.f32.gmra.mrb[0].mxu0 %v3289
      %v3389 = vpop.f32.mrb[0].mxu0
      %v3390 = vadd.f32 0.0, %v3389
      %v3391 = vpop.f32.mrb[0].mxu0
      %3392 = vmatprep.mubr.f32.mxu0 0.0
      %3393 = vmatmul.mubr.f32.gmra.mrb[0].mxu0 %v3290
      %v3394 = vpop.f32.mrb[0].mxu0
      %v3395 = vadd.f32 0.0, %v3394
      %v3396 = vpop.f32.mrb[0].mxu0
      %3397 = vmatprep.mubr.f32.mxu0 0.0
      %3398 = vmatmul.mubr.f32.gmra.mrb[0].mxu0 %v3291
      %v3399 = vpop.f32.mrb[0].mxu0
      %v3400 = vadd.f32 0.0, %v3399
      %v3401 = vpop.f32.mrb[0].mxu0
      %3402 = vmatprep.mubr.f32.mxu0 0.0
      %3403 = vmatmul.mubr.f32.gmra.mrb[0].mxu0 %v3292
      %v3404 = vpop.f32.mrb[0].mxu0
      %v3405 = vadd.f32 0.0, %v3404
      %v3406 = vpop.f32.mrb[0].mxu0
      %3407 = vmatprep.mubr.f32.mxu0 0.0
      %3408 = vmatmul.mubr.f32.gmra.mrb[0].mxu0 %v3293
      %v3409 = vpop.f32.mrb[0].mxu0
      %v3410 = vadd.f32 0.0, %v3409
      %v3411 = vpop.f32.mrb[0].mxu0
      %3412 = vmatprep.mubr.f32.mxu0 0.0
      %3413 = vmatmul.mubr.f32.gmra.mrb[0].mxu0 %v3294
      %v3414 = vpop.f32.mrb[0].mxu0
      %v3415 = vadd.f32 0.0, %v3414
      %v3416 = vpop.f32.mrb[0].mxu0
      %3417 = vmatprep.mubr.f32.mxu0 0.0
      %3418 = vmatmul.mubr.f32.gmra.mrb[0].mxu0 %v3295
      %v3419 = vpop.f32.mrb[0].mxu0
      %v3420 = vadd.f32 0.0, %v3419
      %v3421 = vpop.f32.mrb[0].mxu0
      %3422 = vmatprep.mubr.f32.mxu0 0.0
      %3423 = vmatmul.mubr.f32.gmra.mrb[0].mxu0 %v3296
      %v3424 = vpop.f32.mrb[0].mxu0
      %v3425 = vadd.f32 0.0, %v3424
      %v3426 = vpop.f32.mrb[0].mxu0
      %3427 = vmatprep.mubr.f32.mxu0 0.0
      %3428 = vmatmul.mubr.f32.gmra.mrb[0].mxu0 %v3297
      %v3429 = vpop.f32.mrb[0].mxu0
      %v3430 = vadd.f32 0.0, %v3429
      %v3431 = vpop.f32.mrb[0].mxu0
      %3432 = vmatprep.mubr.f32.mxu0 0.0
      %3433 = vmatmul.mubr.f32.gmra.mrb[0].mxu0 %v3298
      %v3434 = vpop.f32.mrb[0].mxu0
      %v3435 = vadd.f32 0.0, %v3434
      %v3436 = vpop.f32.mrb[0].mxu0
      %3437 = vmatprep.mubr.f32.mxu0 0.0
      %3438 = vmatmul.mubr.f32.gmra.mrb[0].mxu0 %v3299
      %v3439 = vpop.f32.mrb[0].mxu0
      %v3440 = vadd.f32 0.0, %v3439
      %v3441 = vpop.f32.mrb[0].mxu0
      %3442 = vmatprep.mubr.f32.mxu0 0.0
      %3443 = vmatmul.mubr.f32.gmra.mrb[0].mxu0 %v3300
      %v3444 = vpop.f32.mrb[0].mxu0
      %v3445 = vadd.f32 0.0, %v3444
      %v3446 = vpop.f32.mrb[0].mxu0
      %3447 = vmatprep.mubr.f32.mxu0 0.0
      %3448 = vmatmul.mubr.f32.gmra.mrb[0].mxu0 %v3301
      %v3449 = vpop.f32.mrb[0].mxu0
      %v3450 = vadd.f32 0.0, %v3449
      %v3451 = vpop.f32.mrb[0].mxu0
      %3452 = vmatprep.mubr.f32.mxu0 0.0
      %3453 = vmatmul.mubr.f32.gmra.mrb[0].mxu0 %v3302
      %v3454 = vpop.f32.mrb[0].mxu0
      %v3455 = vadd.f32 0.0, %v3454
      %v3456 = vpop.f32.mrb[0].mxu0
      %3457 = vmatprep.mubr.f32.mxu0 0.0
      %3458 = vmatmul.mubr.f32.gmra.mrb[0].mxu0 %v3303
      %v3459 = vpop.f32.mrb[0].mxu0
      %v3460 = vadd.f32 0.0, %v3459
      %v3461 = vpop.f32.mrb[0].mxu0
      %3462 = vmatprep.mubr.f32.mxu0 0.0
      %3463 = vmatmul.mubr.f32.gmra.mrb[0].mxu0 %v3304
      %v3464 = vpop.f32.mrb[0].mxu0
      %v3465 = vadd.f32 0.0, %v3464
      %v3466 = vpop.f32.mrb[0].mxu0
      %3467 = vmatprep.mubr.f32.mxu0 0.0
      %3468 = vmatmul.mubr.f32.gmra.mrb[0].mxu0 %v3305
      %v3469 = vpop.f32.mrb[0].mxu0
      %v3470 = vadd.f32 0.0, %v3469
      %v3471 = vpop.f32.mrb[0].mxu0
      %3472 = vmatprep.mubr.f32.mxu0 0.0
      %3473 = vmatmul.mubr.f32.gmra.mrb[0].mxu0 %v3306
      %v3474 = vpop.f32.mrb[0].mxu0
      %v3475 = vadd.f32 0.0, %v3474
      %v3476 = vpop.f32.mrb[0].mxu0
      %3477 = vdwg.mxu0
      %v3478 = vadd.f32 %v3271, %v3390
      %v3479 = vadd.f32 %v3272, %v3395
      %v3480 = vadd.f32 %v3273, %v3400
      %v3481 = vadd.f32 %v3274, %v3405
      %v3482 = vadd.f32 %v3275, %v3410
      %v3483 = vadd.f32 %v3276, %v3415
      %v3484 = vadd.f32 %v3277, %v3420
      %v3485 = vadd.f32 %v3278, %v3425
      %v3486 = vadd.f32 %v3279, %v3430
      %v3487 = vadd.f32 %v3280, %v3435
      %v3488 = vadd.f32 %v3281, %v3440
      %v3489 = vadd.f32 %v3282, %v3445
      %v3490 = vadd.f32 %v3283, %v3450
      %v3491 = vadd.f32 %v3284, %v3455
      %v3492 = vadd.f32 %v3285, %v3460
      %v3493 = vadd.f32 %v3286, %v3465
      %v3494 = vadd.f32 %v3287, %v3470
      %v3495 = vadd.f32 %v3288, %v3475
      %v3496 = vld [vmem:[#allocation2 + $0x1c] sm:$0xff]
      %v3497 = vld [vmem:[#allocation2 + $0x24] sm:$0xff]
      %v3498 = vld [vmem:[#allocation2 + $0x2c] sm:$0xff]
      %v3499 = vld [vmem:[#allocation2 + $0x34] sm:$0xff]
      %v3500 = vld [vmem:[#allocation2 + $0x3c] sm:$0xff]
      %v3501 = vld [vmem:[#allocation2 + $0x44] sm:$0xff]
      %v3502 = vld [vmem:[#allocation2 + $0x4c] sm:$0xff]
      %v3503 = vld [vmem:[#allocation2 + $0x54] sm:$0xff]
      %v3504 = vld [vmem:[#allocation2 + $0x5c] sm:$0xff]
      %v3505 = vld [vmem:[#allocation2 + $0x64] sm:$0xff]
      %v3506 = vld [vmem:[#allocation2 + $0x6c] sm:$0xff]
      %v3507 = vld [vmem:[#allocation2 + $0x74] sm:$0xff]
      %v3508 = vld [vmem:[#allocation2 + $0x7c] sm:$0xff]
      %v3509 = vld [vmem:[#allocation2 + $0x84] sm:$0xff]
      %v3510 = vld [vmem:[#allocation2 + $0x8c] sm:$0xff]
      %v3511 = vld [vmem:[#allocation2 + $0x94] sm:$0xff]
      %v3512 = vld [vmem:[#allocation2 + $0x9c] sm:$0xff]
      %v3513 = vld [vmem:[#allocation2 + $0xa4] sm:$0xf]
      %v3514 = vld [vmem:[%s3 + $0x500] sm:$0xff]
      %v3515 = vld [vmem:[%s3 + $0x508] sm:$0xff]
      %v3516 = vld [vmem:[%s3 + $0x510] sm:$0xff]
      %v3517 = vld [vmem:[%s3 + $0x518] sm:$0xff]
      %v3518 = vld [vmem:[%s3 + $0x520] sm:$0xff]
      %v3519 = vld [vmem:[%s3 + $0x528] sm:$0xff]
      %v3520 = vld [vmem:[%s3 + $0x530] sm:$0xff]
      %v3521 = vld [vmem:[%s3 + $0x538] sm:$0xff]
      %v3522 = vld [vmem:[%s3 + $0x540] sm:$0xff]
      %v3523 = vld [vmem:[%s3 + $0x548] sm:$0xff]
      %v3524 = vld [vmem:[%s3 + $0x550] sm:$0xff]
      %v3525 = vld [vmem:[%s3 + $0x558] sm:$0xff]
      %v3526 = vld [vmem:[%s3 + $0x560] sm:$0xff]
      %v3527 = vld [vmem:[%s3 + $0x568] sm:$0xff]
      %v3528 = vld [vmem:[%s3 + $0x570] sm:$0xff]
      %v3529 = vld [vmem:[%s3 + $0x578] sm:$0xff]
      %3530 = vmatprep.subr.mxu0 0.0
      %3531 = vmatpush1.msra.mxu0 %v3514
      %3532 = vmatprep.subr.mxu0 0.0
      %3533 = vmatpush1.msra.mxu0 %v3515
      %3534 = vmatprep.subr.mxu0 0.0
      %3535 = vmatpush1.msra.mxu0 %v3516
      %3536 = vmatprep.subr.mxu0 0.0
      %3537 = vmatpush1.msra.mxu0 %v3517
      %3538 = vmatprep.subr.mxu0 0.0
      %3539 = vmatpush1.msra.mxu0 %v3518
      %3540 = vmatprep.subr.mxu0 0.0
      %3541 = vmatpush1.msra.mxu0 %v3519
      %3542 = vmatprep.subr.mxu0 0.0
      %3543 = vmatpush1.msra.mxu0 %v3520
      %3544 = vmatprep.subr.mxu0 0.0
      %3545 = vmatpush1.msra.mxu0 %v3521
      %3546 = vmatprep.subr.mxu0 0.0
      %3547 = vmatpush1.msra.mxu0 %v3522
      %3548 = vmatprep.subr.mxu0 0.0
      %3549 = vmatpush1.msra.mxu0 %v3523
      %3550 = vmatprep.subr.mxu0 0.0
      %3551 = vmatpush1.msra.mxu0 %v3524
      %3552 = vmatprep.subr.mxu0 0.0
      %3553 = vmatpush1.msra.mxu0 %v3525
      %3554 = vmatprep.subr.mxu0 0.0
      %3555 = vmatpush1.msra.mxu0 %v3526
      %3556 = vmatprep.subr.mxu0 0.0
      %3557 = vmatpush1.msra.mxu0 %v3527
      %3558 = vmatprep.subr.mxu0 0.0
      %3559 = vmatpush1.msra.mxu0 %v3528
      %3560 = vmatprep.subr.mxu0 0.0
      %3561 = vmatpush1.msra.mxu0 %v3529
      %3562 = vmatprep.subr.mxu0 0.0
      %3563 = vmatpush1.msra.mxu0 0.0
      %3564 = vmatprep.subr.mxu0 0.0
      %3565 = vmatpush1.msra.mxu0 0.0
      %3566 = vmatprep.subr.mxu0 0.0
      %3567 = vmatpush1.msra.mxu0 0.0
      %3568 = vmatprep.subr.mxu0 0.0
      %3569 = vmatpush1.msra.mxu0 0.0
      %3570 = vmatprep.subr.mxu0 0.0
      %3571 = vmatpush1.msra.mxu0 0.0
      %3572 = vmatprep.subr.mxu0 0.0
      %3573 = vmatpush1.msra.mxu0 0.0
      %3574 = vmatprep.subr.mxu0 0.0
      %3575 = vmatpush1.msra.mxu0 0.0
      %3576 = vmatprep.subr.mxu0 0.0
      %3577 = vmatpush1.msra.mxu0 0.0
      %3578 = vmatprep.subr.mxu0 0.0
      %3579 = vmatpush1.msra.mxu0 0.0
      %3580 = vmatprep.subr.mxu0 0.0
      %3581 = vmatpush1.msra.mxu0 0.0
      %3582 = vmatprep.subr.mxu0 0.0
      %3583 = vmatpush1.msra.mxu0 0.0
      %3584 = vmatprep.subr.mxu0 0.0
      %3585 = vmatpush1.msra.mxu0 0.0
      %3586 = vmatprep.subr.mxu0 0.0
      %3587 = vmatpush1.msra.mxu0 0.0
      %3588 = vmatprep.subr.mxu0 0.0
      %3589 = vmatpush1.msra.mxu0 0.0
      %3590 = vmatprep.subr.mxu0 0.0
      %3591 = vmatpush1.msra.mxu0 0.0
      %3592 = vmatprep.subr.mxu0 0.0
      %3593 = vmatpush1.msra.mxu0 0.0
      %3594 = vmatprep.mubr.f32.mxu0 0.0
      %3595 = vmatmul.mubr.f32.gmra.mrb[0].mxu0 %v3496
      %v3596 = vpop.f32.mrb[0].mxu0
      %v3597 = vadd.f32 0.0, %v3596
      %v3598 = vpop.f32.mrb[0].mxu0
      %3599 = vmatprep.mubr.f32.mxu0 0.0
      %3600 = vmatmul.mubr.f32.gmra.mrb[0].mxu0 %v3497
      %v3601 = vpop.f32.mrb[0].mxu0
      %v3602 = vadd.f32 0.0, %v3601
      %v3603 = vpop.f32.mrb[0].mxu0
      %3604 = vmatprep.mubr.f32.mxu0 0.0
      %3605 = vmatmul.mubr.f32.gmra.mrb[0].mxu0 %v3498
      %v3606 = vpop.f32.mrb[0].mxu0
      %v3607 = vadd.f32 0.0, %v3606
      %v3608 = vpop.f32.mrb[0].mxu0
      %3609 = vmatprep.mubr.f32.mxu0 0.0
      %3610 = vmatmul.mubr.f32.gmra.mrb[0].mxu0 %v3499
      %v3611 = vpop.f32.mrb[0].mxu0
      %v3612 = vadd.f32 0.0, %v3611
      %v3613 = vpop.f32.mrb[0].mxu0
      %3614 = vmatprep.mubr.f32.mxu0 0.0
      %3615 = vmatmul.mubr.f32.gmra.mrb[0].mxu0 %v3500
      %v3616 = vpop.f32.mrb[0].mxu0
      %v3617 = vadd.f32 0.0, %v3616
      %v3618 = vpop.f32.mrb[0].mxu0
      %3619 = vmatprep.mubr.f32.mxu0 0.0
      %3620 = vmatmul.mubr.f32.gmra.mrb[0].mxu0 %v3501
      %v3621 = vpop.f32.mrb[0].mxu0
      %v3622 = vadd.f32 0.0, %v3621
      %v3623 = vpop.f32.mrb[0].mxu0
      %3624 = vmatprep.mubr.f32.mxu0 0.0
      %3625 = vmatmul.mubr.f32.gmra.mrb[0].mxu0 %v3502
      %v3626 = vpop.f32.mrb[0].mxu0
      %v3627 = vadd.f32 0.0, %v3626
      %v3628 = vpop.f32.mrb[0].mxu0
      %3629 = vmatprep.mubr.f32.mxu0 0.0
      %3630 = vmatmul.mubr.f32.gmra.mrb[0].mxu0 %v3503
      %v3631 = vpop.f32.mrb[0].mxu0
      %v3632 = vadd.f32 0.0, %v3631
      %v3633 = vpop.f32.mrb[0].mxu0
      %3634 = vmatprep.mubr.f32.mxu0 0.0
      %3635 = vmatmul.mubr.f32.gmra.mrb[0].mxu0 %v3504
      %v3636 = vpop.f32.mrb[0].mxu0
      %v3637 = vadd.f32 0.0, %v3636
      %v3638 = vpop.f32.mrb[0].mxu0
      %3639 = vmatprep.mubr.f32.mxu0 0.0
      %3640 = vmatmul.mubr.f32.gmra.mrb[0].mxu0 %v3505
      %v3641 = vpop.f32.mrb[0].mxu0
      %v3642 = vadd.f32 0.0, %v3641
      %v3643 = vpop.f32.mrb[0].mxu0
      %3644 = vmatprep.mubr.f32.mxu0 0.0
      %3645 = vmatmul.mubr.f32.gmra.mrb[0].mxu0 %v3506
      %v3646 = vpop.f32.mrb[0].mxu0
      %v3647 = vadd.f32 0.0, %v3646
      %v3648 = vpop.f32.mrb[0].mxu0
      %3649 = vmatprep.mubr.f32.mxu0 0.0
      %3650 = vmatmul.mubr.f32.gmra.mrb[0].mxu0 %v3507
      %v3651 = vpop.f32.mrb[0].mxu0
      %v3652 = vadd.f32 0.0, %v3651
      %v3653 = vpop.f32.mrb[0].mxu0
      %3654 = vmatprep.mubr.f32.mxu0 0.0
      %3655 = vmatmul.mubr.f32.gmra.mrb[0].mxu0 %v3508
      %v3656 = vpop.f32.mrb[0].mxu0
      %v3657 = vadd.f32 0.0, %v3656
      %v3658 = vpop.f32.mrb[0].mxu0
      %3659 = vmatprep.mubr.f32.mxu0 0.0
      %3660 = vmatmul.mubr.f32.gmra.mrb[0].mxu0 %v3509
      %v3661 = vpop.f32.mrb[0].mxu0
      %v3662 = vadd.f32 0.0, %v3661
      %v3663 = vpop.f32.mrb[0].mxu0
      %3664 = vmatprep.mubr.f32.mxu0 0.0
      %3665 = vmatmul.mubr.f32.gmra.mrb[0].mxu0 %v3510
      %v3666 = vpop.f32.mrb[0].mxu0
      %v3667 = vadd.f32 0.0, %v3666
      %v3668 = vpop.f32.mrb[0].mxu0
      %3669 = vmatprep.mubr.f32.mxu0 0.0
      %3670 = vmatmul.mubr.f32.gmra.mrb[0].mxu0 %v3511
      %v3671 = vpop.f32.mrb[0].mxu0
      %v3672 = vadd.f32 0.0, %v3671
      %v3673 = vpop.f32.mrb[0].mxu0
      %3674 = vmatprep.mubr.f32.mxu0 0.0
      %3675 = vmatmul.mubr.f32.gmra.mrb[0].mxu0 %v3512
      %v3676 = vpop.f32.mrb[0].mxu0
      %v3677 = vadd.f32 0.0, %v3676
      %v3678 = vpop.f32.mrb[0].mxu0
      %3679 = vmatprep.mubr.f32.mxu0 0.0
      %3680 = vmatmul.mubr.f32.gmra.mrb[0].mxu0 %v3513
      %v3681 = vpop.f32.mrb[0].mxu0
      %v3682 = vadd.f32 0.0, %v3681
      %v3683 = vpop.f32.mrb[0].mxu0
      %3684 = vdwg.mxu0
      %v3685 = vadd.f32 %v3478, %v3597
      %v3686 = vadd.f32 %v3479, %v3602
      %v3687 = vadd.f32 %v3480, %v3607
      %v3688 = vadd.f32 %v3481, %v3612
      %v3689 = vadd.f32 %v3482, %v3617
      %v3690 = vadd.f32 %v3483, %v3622
      %v3691 = vadd.f32 %v3484, %v3627
      %v3692 = vadd.f32 %v3485, %v3632
      %v3693 = vadd.f32 %v3486, %v3637
      %v3694 = vadd.f32 %v3487, %v3642
      %v3695 = vadd.f32 %v3488, %v3647
      %v3696 = vadd.f32 %v3489, %v3652
      %v3697 = vadd.f32 %v3490, %v3657
      %v3698 = vadd.f32 %v3491, %v3662
      %v3699 = vadd.f32 %v3492, %v3667
      %v3700 = vadd.f32 %v3493, %v3672
      %v3701 = vadd.f32 %v3494, %v3677
      %v3702 = vadd.f32 %v3495, %v3682
      %v3703 = vld [vmem:[#allocation2 + $0x1d] sm:$0xff]
      %v3704 = vld [vmem:[#allocation2 + $0x25] sm:$0xff]
      %v3705 = vld [vmem:[#allocation2 + $0x2d] sm:$0xff]
      %v3706 = vld [vmem:[#allocation2 + $0x35] sm:$0xff]
      %v3707 = vld [vmem:[#allocation2 + $0x3d] sm:$0xff]
      %v3708 = vld [vmem:[#allocation2 + $0x45] sm:$0xff]
      %v3709 = vld [vmem:[#allocation2 + $0x4d] sm:$0xff]
      %v3710 = vld [vmem:[#allocation2 + $0x55] sm:$0xff]
      %v3711 = vld [vmem:[#allocation2 + $0x5d] sm:$0xff]
      %v3712 = vld [vmem:[#allocation2 + $0x65] sm:$0xff]
      %v3713 = vld [vmem:[#allocation2 + $0x6d] sm:$0xff]
      %v3714 = vld [vmem:[#allocation2 + $0x75] sm:$0xff]
      %v3715 = vld [vmem:[#allocation2 + $0x7d] sm:$0xff]
      %v3716 = vld [vmem:[#allocation2 + $0x85] sm:$0xff]
      %v3717 = vld [vmem:[#allocation2 + $0x8d] sm:$0xff]
      %v3718 = vld [vmem:[#allocation2 + $0x95] sm:$0xff]
      %v3719 = vld [vmem:[#allocation2 + $0x9d] sm:$0xff]
      %v3720 = vld [vmem:[#allocation2 + $0xa5] sm:$0xf]
      %v3721 = vld [vmem:[%s3 + $0x580] sm:$0xff]
      %v3722 = vld [vmem:[%s3 + $0x588] sm:$0xff]
      %v3723 = vld [vmem:[%s3 + $0x590] sm:$0xff]
      %v3724 = vld [vmem:[%s3 + $0x598] sm:$0xff]
      %v3725 = vld [vmem:[%s3 + $0x5a0] sm:$0xff]
      %v3726 = vld [vmem:[%s3 + $0x5a8] sm:$0xff]
      %v3727 = vld [vmem:[%s3 + $0x5b0] sm:$0xff]
      %v3728 = vld [vmem:[%s3 + $0x5b8] sm:$0xff]
      %v3729 = vld [vmem:[%s3 + $0x5c0] sm:$0xff]
      %v3730 = vld [vmem:[%s3 + $0x5c8] sm:$0xff]
      %v3731 = vld [vmem:[%s3 + $0x5d0] sm:$0xff]
      %v3732 = vld [vmem:[%s3 + $0x5d8] sm:$0xff]
      %v3733 = vld [vmem:[%s3 + $0x5e0] sm:$0xff]
      %v3734 = vld [vmem:[%s3 + $0x5e8] sm:$0xff]
      %v3735 = vld [vmem:[%s3 + $0x5f0] sm:$0xff]
      %v3736 = vld [vmem:[%s3 + $0x5f8] sm:$0xff]
      %3737 = vmatprep.subr.mxu0 0.0
      %3738 = vmatpush1.msra.mxu0 %v3721
      %3739 = vmatprep.subr.mxu0 0.0
      %3740 = vmatpush1.msra.mxu0 %v3722
      %3741 = vmatprep.subr.mxu0 0.0
      %3742 = vmatpush1.msra.mxu0 %v3723
      %3743 = vmatprep.subr.mxu0 0.0
      %3744 = vmatpush1.msra.mxu0 %v3724
      %3745 = vmatprep.subr.mxu0 0.0
      %3746 = vmatpush1.msra.mxu0 %v3725
      %3747 = vmatprep.subr.mxu0 0.0
      %3748 = vmatpush1.msra.mxu0 %v3726
      %3749 = vmatprep.subr.mxu0 0.0
      %3750 = vmatpush1.msra.mxu0 %v3727
      %3751 = vmatprep.subr.mxu0 0.0
      %3752 = vmatpush1.msra.mxu0 %v3728
      %3753 = vmatprep.subr.mxu0 0.0
      %3754 = vmatpush1.msra.mxu0 %v3729
      %3755 = vmatprep.subr.mxu0 0.0
      %3756 = vmatpush1.msra.mxu0 %v3730
      %3757 = vmatprep.subr.mxu0 0.0
      %3758 = vmatpush1.msra.mxu0 %v3731
      %3759 = vmatprep.subr.mxu0 0.0
      %3760 = vmatpush1.msra.mxu0 %v3732
      %3761 = vmatprep.subr.mxu0 0.0
      %3762 = vmatpush1.msra.mxu0 %v3733
      %3763 = vmatprep.subr.mxu0 0.0
      %3764 = vmatpush1.msra.mxu0 %v3734
      %3765 = vmatprep.subr.mxu0 0.0
      %3766 = vmatpush1.msra.mxu0 %v3735
      %3767 = vmatprep.subr.mxu0 0.0
      %3768 = vmatpush1.msra.mxu0 %v3736
      %3769 = vmatprep.subr.mxu0 0.0
      %3770 = vmatpush1.msra.mxu0 0.0
      %3771 = vmatprep.subr.mxu0 0.0
      %3772 = vmatpush1.msra.mxu0 0.0
      %3773 = vmatprep.subr.mxu0 0.0
      %3774 = vmatpush1.msra.mxu0 0.0
      %3775 = vmatprep.subr.mxu0 0.0
      %3776 = vmatpush1.msra.mxu0 0.0
      %3777 = vmatprep.subr.mxu0 0.0
      %3778 = vmatpush1.msra.mxu0 0.0
      %3779 = vmatprep.subr.mxu0 0.0
      %3780 = vmatpush1.msra.mxu0 0.0
      %3781 = vmatprep.subr.mxu0 0.0
      %3782 = vmatpush1.msra.mxu0 0.0
      %3783 = vmatprep.subr.mxu0 0.0
      %3784 = vmatpush1.msra.mxu0 0.0
      %3785 = vmatprep.subr.mxu0 0.0
      %3786 = vmatpush1.msra.mxu0 0.0
      %3787 = vmatprep.subr.mxu0 0.0
      %3788 = vmatpush1.msra.mxu0 0.0
      %3789 = vmatprep.subr.mxu0 0.0
      %3790 = vmatpush1.msra.mxu0 0.0
      %3791 = vmatprep.subr.mxu0 0.0
      %3792 = vmatpush1.msra.mxu0 0.0
      %3793 = vmatprep.subr.mxu0 0.0
      %3794 = vmatpush1.msra.mxu0 0.0
      %3795 = vmatprep.subr.mxu0 0.0
      %3796 = vmatpush1.msra.mxu0 0.0
      %3797 = vmatprep.subr.mxu0 0.0
      %3798 = vmatpush1.msra.mxu0 0.0
      %3799 = vmatprep.subr.mxu0 0.0
      %3800 = vmatpush1.msra.mxu0 0.0
      %3801 = vmatprep.mubr.f32.mxu0 0.0
      %3802 = vmatmul.mubr.f32.gmra.mrb[0].mxu0 %v3703
      %v3803 = vpop.f32.mrb[0].mxu0
      %v3804 = vadd.f32 0.0, %v3803
      %v3805 = vpop.f32.mrb[0].mxu0
      %3806 = vmatprep.mubr.f32.mxu0 0.0
      %3807 = vmatmul.mubr.f32.gmra.mrb[0].mxu0 %v3704
      %v3808 = vpop.f32.mrb[0].mxu0
      %v3809 = vadd.f32 0.0, %v3808
      %v3810 = vpop.f32.mrb[0].mxu0
      %3811 = vmatprep.mubr.f32.mxu0 0.0
      %3812 = vmatmul.mubr.f32.gmra.mrb[0].mxu0 %v3705
      %v3813 = vpop.f32.mrb[0].mxu0
      %v3814 = vadd.f32 0.0, %v3813
      %v3815 = vpop.f32.mrb[0].mxu0
      %3816 = vmatprep.mubr.f32.mxu0 0.0
      %3817 = vmatmul.mubr.f32.gmra.mrb[0].mxu0 %v3706
      %v3818 = vpop.f32.mrb[0].mxu0
      %v3819 = vadd.f32 0.0, %v3818
      %v3820 = vpop.f32.mrb[0].mxu0
      %3821 = vmatprep.mubr.f32.mxu0 0.0
      %3822 = vmatmul.mubr.f32.gmra.mrb[0].mxu0 %v3707
      %v3823 = vpop.f32.mrb[0].mxu0
      %v3824 = vadd.f32 0.0, %v3823
      %v3825 = vpop.f32.mrb[0].mxu0
      %3826 = vmatprep.mubr.f32.mxu0 0.0
      %3827 = vmatmul.mubr.f32.gmra.mrb[0].mxu0 %v3708
      %v3828 = vpop.f32.mrb[0].mxu0
      %v3829 = vadd.f32 0.0, %v3828
      %v3830 = vpop.f32.mrb[0].mxu0
      %3831 = vmatprep.mubr.f32.mxu0 0.0
      %3832 = vmatmul.mubr.f32.gmra.mrb[0].mxu0 %v3709
      %v3833 = vpop.f32.mrb[0].mxu0
      %v3834 = vadd.f32 0.0, %v3833
      %v3835 = vpop.f32.mrb[0].mxu0
      %3836 = vmatprep.mubr.f32.mxu0 0.0
      %3837 = vmatmul.mubr.f32.gmra.mrb[0].mxu0 %v3710
      %v3838 = vpop.f32.mrb[0].mxu0
      %v3839 = vadd.f32 0.0, %v3838
      %v3840 = vpop.f32.mrb[0].mxu0
      %3841 = vmatprep.mubr.f32.mxu0 0.0
      %3842 = vmatmul.mubr.f32.gmra.mrb[0].mxu0 %v3711
      %v3843 = vpop.f32.mrb[0].mxu0
      %v3844 = vadd.f32 0.0, %v3843
      %v3845 = vpop.f32.mrb[0].mxu0
      %3846 = vmatprep.mubr.f32.mxu0 0.0
      %3847 = vmatmul.mubr.f32.gmra.mrb[0].mxu0 %v3712
      %v3848 = vpop.f32.mrb[0].mxu0
      %v3849 = vadd.f32 0.0, %v3848
      %v3850 = vpop.f32.mrb[0].mxu0
      %3851 = vmatprep.mubr.f32.mxu0 0.0
      %3852 = vmatmul.mubr.f32.gmra.mrb[0].mxu0 %v3713
      %v3853 = vpop.f32.mrb[0].mxu0
      %v3854 = vadd.f32 0.0, %v3853
      %v3855 = vpop.f32.mrb[0].mxu0
      %3856 = vmatprep.mubr.f32.mxu0 0.0
      %3857 = vmatmul.mubr.f32.gmra.mrb[0].mxu0 %v3714
      %v3858 = vpop.f32.mrb[0].mxu0
      %v3859 = vadd.f32 0.0, %v3858
      %v3860 = vpop.f32.mrb[0].mxu0
      %3861 = vmatprep.mubr.f32.mxu0 0.0
      %3862 = vmatmul.mubr.f32.gmra.mrb[0].mxu0 %v3715
      %v3863 = vpop.f32.mrb[0].mxu0
      %v3864 = vadd.f32 0.0, %v3863
      %v3865 = vpop.f32.mrb[0].mxu0
      %3866 = vmatprep.mubr.f32.mxu0 0.0
      %3867 = vmatmul.mubr.f32.gmra.mrb[0].mxu0 %v3716
      %v3868 = vpop.f32.mrb[0].mxu0
      %v3869 = vadd.f32 0.0, %v3868
      %v3870 = vpop.f32.mrb[0].mxu0
      %3871 = vmatprep.mubr.f32.mxu0 0.0
      %3872 = vmatmul.mubr.f32.gmra.mrb[0].mxu0 %v3717
      %v3873 = vpop.f32.mrb[0].mxu0
      %v3874 = vadd.f32 0.0, %v3873
      %v3875 = vpop.f32.mrb[0].mxu0
      %3876 = vmatprep.mubr.f32.mxu0 0.0
      %3877 = vmatmul.mubr.f32.gmra.mrb[0].mxu0 %v3718
      %v3878 = vpop.f32.mrb[0].mxu0
      %v3879 = vadd.f32 0.0, %v3878
      %v3880 = vpop.f32.mrb[0].mxu0
      %3881 = vmatprep.mubr.f32.mxu0 0.0
      %3882 = vmatmul.mubr.f32.gmra.mrb[0].mxu0 %v3719
      %v3883 = vpop.f32.mrb[0].mxu0
      %v3884 = vadd.f32 0.0, %v3883
      %v3885 = vpop.f32.mrb[0].mxu0
      %3886 = vmatprep.mubr.f32.mxu0 0.0
      %3887 = vmatmul.mubr.f32.gmra.mrb[0].mxu0 %v3720
      %v3888 = vpop.f32.mrb[0].mxu0
      %v3889 = vadd.f32 0.0, %v3888
      %v3890 = vpop.f32.mrb[0].mxu0
      %3891 = vdwg.mxu0
      %v3892 = vadd.f32 %v3685, %v3804
      %v3893 = vadd.f32 %v3686, %v3809
      %v3894 = vadd.f32 %v3687, %v3814
      %v3895 = vadd.f32 %v3688, %v3819
      %v3896 = vadd.f32 %v3689, %v3824
      %v3897 = vadd.f32 %v3690, %v3829
      %v3898 = vadd.f32 %v3691, %v3834
      %v3899 = vadd.f32 %v3692, %v3839
      %v3900 = vadd.f32 %v3693, %v3844
      %v3901 = vadd.f32 %v3694, %v3849
      %v3902 = vadd.f32 %v3695, %v3854
      %v3903 = vadd.f32 %v3696, %v3859
      %v3904 = vadd.f32 %v3697, %v3864
      %v3905 = vadd.f32 %v3698, %v3869
      %v3906 = vadd.f32 %v3699, %v3874
      %v3907 = vadd.f32 %v3700, %v3879
      %v3908 = vadd.f32 %v3701, %v3884
      %v3909 = vadd.f32 %v3702, %v3889
      %v3910 = vld [vmem:[#allocation2 + $0x1e] sm:$0xff]
      %v3911 = vld [vmem:[#allocation2 + $0x26] sm:$0xff]
      %v3912 = vld [vmem:[#allocation2 + $0x2e] sm:$0xff]
      %v3913 = vld [vmem:[#allocation2 + $0x36] sm:$0xff]
      %v3914 = vld [vmem:[#allocation2 + $0x3e] sm:$0xff]
      %v3915 = vld [vmem:[#allocation2 + $0x46] sm:$0xff]
      %v3916 = vld [vmem:[#allocation2 + $0x4e] sm:$0xff]
      %v3917 = vld [vmem:[#allocation2 + $0x56] sm:$0xff]
      %v3918 = vld [vmem:[#allocation2 + $0x5e] sm:$0xff]
      %v3919 = vld [vmem:[#allocation2 + $0x66] sm:$0xff]
      %v3920 = vld [vmem:[#allocation2 + $0x6e] sm:$0xff]
      %v3921 = vld [vmem:[#allocation2 + $0x76] sm:$0xff]
      %v3922 = vld [vmem:[#allocation2 + $0x7e] sm:$0xff]
      %v3923 = vld [vmem:[#allocation2 + $0x86] sm:$0xff]
      %v3924 = vld [vmem:[#allocation2 + $0x8e] sm:$0xff]
      %v3925 = vld [vmem:[#allocation2 + $0x96] sm:$0xff]
      %v3926 = vld [vmem:[#allocation2 + $0x9e] sm:$0xff]
      %v3927 = vld [vmem:[#allocation2 + $0xa6] sm:$0xf]
      %v3928 = vld [vmem:[%s3 + $0x600] sm:$0xff]
      %v3929 = vld [vmem:[%s3 + $0x608] sm:$0xff]
      %v3930 = vld [vmem:[%s3 + $0x610] sm:$0xff]
      %v3931 = vld [vmem:[%s3 + $0x618] sm:$0xff]
      %v3932 = vld [vmem:[%s3 + $0x620] sm:$0xff]
      %v3933 = vld [vmem:[%s3 + $0x628] sm:$0xff]
      %v3934 = vld [vmem:[%s3 + $0x630] sm:$0xff]
      %v3935 = vld [vmem:[%s3 + $0x638] sm:$0xff]
      %v3936 = vld [vmem:[%s3 + $0x640] sm:$0xff]
      %v3937 = vld [vmem:[%s3 + $0x648] sm:$0xff]
      %v3938 = vld [vmem:[%s3 + $0x650] sm:$0xff]
      %v3939 = vld [vmem:[%s3 + $0x658] sm:$0xff]
      %v3940 = vld [vmem:[%s3 + $0x660] sm:$0xff]
      %v3941 = vld [vmem:[%s3 + $0x668] sm:$0xff]
      %v3942 = vld [vmem:[%s3 + $0x670] sm:$0xff]
      %v3943 = vld [vmem:[%s3 + $0x678] sm:$0xff]
      %3944 = vmatprep.subr.mxu0 0.0
      %3945 = vmatpush1.msra.mxu0 %v3928
      %3946 = vmatprep.subr.mxu0 0.0
      %3947 = vmatpush1.msra.mxu0 %v3929
      %3948 = vmatprep.subr.mxu0 0.0
      %3949 = vmatpush1.msra.mxu0 %v3930
      %3950 = vmatprep.subr.mxu0 0.0
      %3951 = vmatpush1.msra.mxu0 %v3931
      %3952 = vmatprep.subr.mxu0 0.0
      %3953 = vmatpush1.msra.mxu0 %v3932
      %3954 = vmatprep.subr.mxu0 0.0
      %3955 = vmatpush1.msra.mxu0 %v3933
      %3956 = vmatprep.subr.mxu0 0.0
      %3957 = vmatpush1.msra.mxu0 %v3934
      %3958 = vmatprep.subr.mxu0 0.0
      %3959 = vmatpush1.msra.mxu0 %v3935
      %3960 = vmatprep.subr.mxu0 0.0
      %3961 = vmatpush1.msra.mxu0 %v3936
      %3962 = vmatprep.subr.mxu0 0.0
      %3963 = vmatpush1.msra.mxu0 %v3937
      %3964 = vmatprep.subr.mxu0 0.0
      %3965 = vmatpush1.msra.mxu0 %v3938
      %3966 = vmatprep.subr.mxu0 0.0
      %3967 = vmatpush1.msra.mxu0 %v3939
      %3968 = vmatprep.subr.mxu0 0.0
      %3969 = vmatpush1.msra.mxu0 %v3940
      %3970 = vmatprep.subr.mxu0 0.0
      %3971 = vmatpush1.msra.mxu0 %v3941
      %3972 = vmatprep.subr.mxu0 0.0
      %3973 = vmatpush1.msra.mxu0 %v3942
      %3974 = vmatprep.subr.mxu0 0.0
      %3975 = vmatpush1.msra.mxu0 %v3943
      %3976 = vmatprep.subr.mxu0 0.0
      %3977 = vmatpush1.msra.mxu0 0.0
      %3978 = vmatprep.subr.mxu0 0.0
      %3979 = vmatpush1.msra.mxu0 0.0
      %3980 = vmatprep.subr.mxu0 0.0
      %3981 = vmatpush1.msra.mxu0 0.0
      %3982 = vmatprep.subr.mxu0 0.0
      %3983 = vmatpush1.msra.mxu0 0.0
      %3984 = vmatprep.subr.mxu0 0.0
      %3985 = vmatpush1.msra.mxu0 0.0
      %3986 = vmatprep.subr.mxu0 0.0
      %3987 = vmatpush1.msra.mxu0 0.0
      %3988 = vmatprep.subr.mxu0 0.0
      %3989 = vmatpush1.msra.mxu0 0.0
      %3990 = vmatprep.subr.mxu0 0.0
      %3991 = vmatpush1.msra.mxu0 0.0
      %3992 = vmatprep.subr.mxu0 0.0
      %3993 = vmatpush1.msra.mxu0 0.0
      %3994 = vmatprep.subr.mxu0 0.0
      %3995 = vmatpush1.msra.mxu0 0.0
      %3996 = vmatprep.subr.mxu0 0.0
      %3997 = vmatpush1.msra.mxu0 0.0
      %3998 = vmatprep.subr.mxu0 0.0
      %3999 = vmatpush1.msra.mxu0 0.0
      %4000 = vmatprep.subr.mxu0 0.0
      %4001 = vmatpush1.msra.mxu0 0.0
      %4002 = vmatprep.subr.mxu0 0.0
      %4003 = vmatpush1.msra.mxu0 0.0
      %4004 = vmatprep.subr.mxu0 0.0
      %4005 = vmatpush1.msra.mxu0 0.0
      %4006 = vmatprep.subr.mxu0 0.0
      %4007 = vmatpush1.msra.mxu0 0.0
      %4008 = vmatprep.mubr.f32.mxu0 0.0
      %4009 = vmatmul.mubr.f32.gmra.mrb[0].mxu0 %v3910
      %v4010 = vpop.f32.mrb[0].mxu0
      %v4011 = vadd.f32 0.0, %v4010
      %v4012 = vpop.f32.mrb[0].mxu0
      %4013 = vmatprep.mubr.f32.mxu0 0.0
      %4014 = vmatmul.mubr.f32.gmra.mrb[0].mxu0 %v3911
      %v4015 = vpop.f32.mrb[0].mxu0
      %v4016 = vadd.f32 0.0, %v4015
      %v4017 = vpop.f32.mrb[0].mxu0
      %4018 = vmatprep.mubr.f32.mxu0 0.0
      %4019 = vmatmul.mubr.f32.gmra.mrb[0].mxu0 %v3912
      %v4020 = vpop.f32.mrb[0].mxu0
      %v4021 = vadd.f32 0.0, %v4020
      %v4022 = vpop.f32.mrb[0].mxu0
      %4023 = vmatprep.mubr.f32.mxu0 0.0
      %4024 = vmatmul.mubr.f32.gmra.mrb[0].mxu0 %v3913
      %v4025 = vpop.f32.mrb[0].mxu0
      %v4026 = vadd.f32 0.0, %v4025
      %v4027 = vpop.f32.mrb[0].mxu0
      %4028 = vmatprep.mubr.f32.mxu0 0.0
      %4029 = vmatmul.mubr.f32.gmra.mrb[0].mxu0 %v3914
      %v4030 = vpop.f32.mrb[0].mxu0
      %v4031 = vadd.f32 0.0, %v4030
      %v4032 = vpop.f32.mrb[0].mxu0
      %4033 = vmatprep.mubr.f32.mxu0 0.0
      %4034 = vmatmul.mubr.f32.gmra.mrb[0].mxu0 %v3915
      %v4035 = vpop.f32.mrb[0].mxu0
      %v4036 = vadd.f32 0.0, %v4035
      %v4037 = vpop.f32.mrb[0].mxu0
      %4038 = vmatprep.mubr.f32.mxu0 0.0
      %4039 = vmatmul.mubr.f32.gmra.mrb[0].mxu0 %v3916
      %v4040 = vpop.f32.mrb[0].mxu0
      %v4041 = vadd.f32 0.0, %v4040
      %v4042 = vpop.f32.mrb[0].mxu0
      %4043 = vmatprep.mubr.f32.mxu0 0.0
      %4044 = vmatmul.mubr.f32.gmra.mrb[0].mxu0 %v3917
      %v4045 = vpop.f32.mrb[0].mxu0
      %v4046 = vadd.f32 0.0, %v4045
      %v4047 = vpop.f32.mrb[0].mxu0
      %4048 = vmatprep.mubr.f32.mxu0 0.0
      %4049 = vmatmul.mubr.f32.gmra.mrb[0].mxu0 %v3918
      %v4050 = vpop.f32.mrb[0].mxu0
      %v4051 = vadd.f32 0.0, %v4050
      %v4052 = vpop.f32.mrb[0].mxu0
      %4053 = vmatprep.mubr.f32.mxu0 0.0
      %4054 = vmatmul.mubr.f32.gmra.mrb[0].mxu0 %v3919
      %v4055 = vpop.f32.mrb[0].mxu0
      %v4056 = vadd.f32 0.0, %v4055
      %v4057 = vpop.f32.mrb[0].mxu0
      %4058 = vmatprep.mubr.f32.mxu0 0.0
      %4059 = vmatmul.mubr.f32.gmra.mrb[0].mxu0 %v3920
      %v4060 = vpop.f32.mrb[0].mxu0
      %v4061 = vadd.f32 0.0, %v4060
      %v4062 = vpop.f32.mrb[0].mxu0
      %4063 = vmatprep.mubr.f32.mxu0 0.0
      %4064 = vmatmul.mubr.f32.gmra.mrb[0].mxu0 %v3921
      %v4065 = vpop.f32.mrb[0].mxu0
      %v4066 = vadd.f32 0.0, %v4065
      %v4067 = vpop.f32.mrb[0].mxu0
      %4068 = vmatprep.mubr.f32.mxu0 0.0
      %4069 = vmatmul.mubr.f32.gmra.mrb[0].mxu0 %v3922
      %v4070 = vpop.f32.mrb[0].mxu0
      %v4071 = vadd.f32 0.0, %v4070
      %v4072 = vpop.f32.mrb[0].mxu0
      %4073 = vmatprep.mubr.f32.mxu0 0.0
      %4074 = vmatmul.mubr.f32.gmra.mrb[0].mxu0 %v3923
      %v4075 = vpop.f32.mrb[0].mxu0
      %v4076 = vadd.f32 0.0, %v4075
      %v4077 = vpop.f32.mrb[0].mxu0
      %4078 = vmatprep.mubr.f32.mxu0 0.0
      %4079 = vmatmul.mubr.f32.gmra.mrb[0].mxu0 %v3924
      %v4080 = vpop.f32.mrb[0].mxu0
      %v4081 = vadd.f32 0.0, %v4080
      %v4082 = vpop.f32.mrb[0].mxu0
      %4083 = vmatprep.mubr.f32.mxu0 0.0
      %4084 = vmatmul.mubr.f32.gmra.mrb[0].mxu0 %v3925
      %v4085 = vpop.f32.mrb[0].mxu0
      %v4086 = vadd.f32 0.0, %v4085
      %v4087 = vpop.f32.mrb[0].mxu0
      %4088 = vmatprep.mubr.f32.mxu0 0.0
      %4089 = vmatmul.mubr.f32.gmra.mrb[0].mxu0 %v3926
      %v4090 = vpop.f32.mrb[0].mxu0
      %v4091 = vadd.f32 0.0, %v4090
      %v4092 = vpop.f32.mrb[0].mxu0
      %4093 = vmatprep.mubr.f32.mxu0 0.0
      %4094 = vmatmul.mubr.f32.gmra.mrb[0].mxu0 %v3927
      %v4095 = vpop.f32.mrb[0].mxu0
      %v4096 = vadd.f32 0.0, %v4095
      %v4097 = vpop.f32.mrb[0].mxu0
      %4098 = vdwg.mxu0
      %v4099 = vadd.f32 %v3892, %v4011
      %v4100 = vadd.f32 %v3893, %v4016
      %v4101 = vadd.f32 %v3894, %v4021
      %v4102 = vadd.f32 %v3895, %v4026
      %v4103 = vadd.f32 %v3896, %v4031
      %v4104 = vadd.f32 %v3897, %v4036
      %v4105 = vadd.f32 %v3898, %v4041
      %v4106 = vadd.f32 %v3899, %v4046
      %v4107 = vadd.f32 %v3900, %v4051
      %v4108 = vadd.f32 %v3901, %v4056
      %v4109 = vadd.f32 %v3902, %v4061
      %v4110 = vadd.f32 %v3903, %v4066
      %v4111 = vadd.f32 %v3904, %v4071
      %v4112 = vadd.f32 %v3905, %v4076
      %v4113 = vadd.f32 %v3906, %v4081
      %v4114 = vadd.f32 %v3907, %v4086
      %v4115 = vadd.f32 %v3908, %v4091
      %v4116 = vadd.f32 %v3909, %v4096
      %v4117 = vld [vmem:[#allocation2 + $0x1f] sm:$0xff]
      %v4118 = vld [vmem:[#allocation2 + $0x27] sm:$0xff]
      %v4119 = vld [vmem:[#allocation2 + $0x2f] sm:$0xff]
      %v4120 = vld [vmem:[#allocation2 + $0x37] sm:$0xff]
      %v4121 = vld [vmem:[#allocation2 + $0x3f] sm:$0xff]
      %v4122 = vld [vmem:[#allocation2 + $0x47] sm:$0xff]
      %v4123 = vld [vmem:[#allocation2 + $0x4f] sm:$0xff]
      %v4124 = vld [vmem:[#allocation2 + $0x57] sm:$0xff]
      %v4125 = vld [vmem:[#allocation2 + $0x5f] sm:$0xff]
      %v4126 = vld [vmem:[#allocation2 + $0x67] sm:$0xff]
      %v4127 = vld [vmem:[#allocation2 + $0x6f] sm:$0xff]
      %v4128 = vld [vmem:[#allocation2 + $0x77] sm:$0xff]
      %v4129 = vld [vmem:[#allocation2 + $0x7f] sm:$0xff]
      %v4130 = vld [vmem:[#allocation2 + $0x87] sm:$0xff]
      %v4131 = vld [vmem:[#allocation2 + $0x8f] sm:$0xff]
      %v4132 = vld [vmem:[#allocation2 + $0x97] sm:$0xff]
      %v4133 = vld [vmem:[#allocation2 + $0x9f] sm:$0xff]
      %v4134 = vld [vmem:[#allocation2 + $0xa7] sm:$0xf]
      %v4135 = vld [vmem:[%s3 + $0x680] sm:$0xff]
      %v4136 = vld [vmem:[%s3 + $0x688] sm:$0xff]
      %v4137 = vld [vmem:[%s3 + $0x690] sm:$0xff]
      %v4138 = vld [vmem:[%s3 + $0x698] sm:$0xff]
      %v4139 = vld [vmem:[%s3 + $0x6a0] sm:$0xff]
      %v4140 = vld [vmem:[%s3 + $0x6a8] sm:$0xff]
      %v4141 = vld [vmem:[%s3 + $0x6b0] sm:$0xff]
      %v4142 = vld [vmem:[%s3 + $0x6b8] sm:$0xff]
      %v4143 = vld [vmem:[%s3 + $0x6c0] sm:$0xff]
      %v4144 = vld [vmem:[%s3 + $0x6c8] sm:$0xff]
      %v4145 = vld [vmem:[%s3 + $0x6d0] sm:$0xff]
      %v4146 = vld [vmem:[%s3 + $0x6d8] sm:$0xff]
      %v4147 = vld [vmem:[%s3 + $0x6e0] sm:$0xff]
      %v4148 = vld [vmem:[%s3 + $0x6e8] sm:$0xff]
      %v4149 = vld [vmem:[%s3 + $0x6f0] sm:$0xff]
      %v4150 = vld [vmem:[%s3 + $0x6f8] sm:$0xff]
      %4151 = vmatprep.subr.mxu0 0.0
      %4152 = vmatpush1.msra.mxu0 %v4135
      %4153 = vmatprep.subr.mxu0 0.0
      %4154 = vmatpush1.msra.mxu0 %v4136
      %4155 = vmatprep.subr.mxu0 0.0
      %4156 = vmatpush1.msra.mxu0 %v4137
      %4157 = vmatprep.subr.mxu0 0.0
      %4158 = vmatpush1.msra.mxu0 %v4138
      %4159 = vmatprep.subr.mxu0 0.0
      %4160 = vmatpush1.msra.mxu0 %v4139
      %4161 = vmatprep.subr.mxu0 0.0
      %4162 = vmatpush1.msra.mxu0 %v4140
      %4163 = vmatprep.subr.mxu0 0.0
      %4164 = vmatpush1.msra.mxu0 %v4141
      %4165 = vmatprep.subr.mxu0 0.0
      %4166 = vmatpush1.msra.mxu0 %v4142
      %4167 = vmatprep.subr.mxu0 0.0
      %4168 = vmatpush1.msra.mxu0 %v4143
      %4169 = vmatprep.subr.mxu0 0.0
      %4170 = vmatpush1.msra.mxu0 %v4144
      %4171 = vmatprep.subr.mxu0 0.0
      %4172 = vmatpush1.msra.mxu0 %v4145
      %4173 = vmatprep.subr.mxu0 0.0
      %4174 = vmatpush1.msra.mxu0 %v4146
      %4175 = vmatprep.subr.mxu0 0.0
      %4176 = vmatpush1.msra.mxu0 %v4147
      %4177 = vmatprep.subr.mxu0 0.0
      %4178 = vmatpush1.msra.mxu0 %v4148
      %4179 = vmatprep.subr.mxu0 0.0
      %4180 = vmatpush1.msra.mxu0 %v4149
      %4181 = vmatprep.subr.mxu0 0.0
      %4182 = vmatpush1.msra.mxu0 %v4150
      %4183 = vmatprep.subr.mxu0 0.0
      %4184 = vmatpush1.msra.mxu0 0.0
      %4185 = vmatprep.subr.mxu0 0.0
      %4186 = vmatpush1.msra.mxu0 0.0
      %4187 = vmatprep.subr.mxu0 0.0
      %4188 = vmatpush1.msra.mxu0 0.0
      %4189 = vmatprep.subr.mxu0 0.0
      %4190 = vmatpush1.msra.mxu0 0.0
      %4191 = vmatprep.subr.mxu0 0.0
      %4192 = vmatpush1.msra.mxu0 0.0
      %4193 = vmatprep.subr.mxu0 0.0
      %4194 = vmatpush1.msra.mxu0 0.0
      %4195 = vmatprep.subr.mxu0 0.0
      %4196 = vmatpush1.msra.mxu0 0.0
      %4197 = vmatprep.subr.mxu0 0.0
      %4198 = vmatpush1.msra.mxu0 0.0
      %4199 = vmatprep.subr.mxu0 0.0
      %4200 = vmatpush1.msra.mxu0 0.0
      %4201 = vmatprep.subr.mxu0 0.0
      %4202 = vmatpush1.msra.mxu0 0.0
      %4203 = vmatprep.subr.mxu0 0.0
      %4204 = vmatpush1.msra.mxu0 0.0
      %4205 = vmatprep.subr.mxu0 0.0
      %4206 = vmatpush1.msra.mxu0 0.0
      %4207 = vmatprep.subr.mxu0 0.0
      %4208 = vmatpush1.msra.mxu0 0.0
      %4209 = vmatprep.subr.mxu0 0.0
      %4210 = vmatpush1.msra.mxu0 0.0
      %4211 = vmatprep.subr.mxu0 0.0
      %4212 = vmatpush1.msra.mxu0 0.0
      %4213 = vmatprep.subr.mxu0 0.0
      %4214 = vmatpush1.msra.mxu0 0.0
      %4215 = vmatprep.mubr.f32.mxu0 0.0
      %4216 = vmatmul.mubr.f32.gmra.mrb[0].mxu0 %v4117
      %v4217 = vpop.f32.mrb[0].mxu0
      %v4218 = vadd.f32 0.0, %v4217
      %v4219 = vpop.f32.mrb[0].mxu0
      %4220 = vmatprep.mubr.f32.mxu0 0.0
      %4221 = vmatmul.mubr.f32.gmra.mrb[0].mxu0 %v4118
      %v4222 = vpop.f32.mrb[0].mxu0
      %v4223 = vadd.f32 0.0, %v4222
      %v4224 = vpop.f32.mrb[0].mxu0
      %4225 = vmatprep.mubr.f32.mxu0 0.0
      %4226 = vmatmul.mubr.f32.gmra.mrb[0].mxu0 %v4119
      %v4227 = vpop.f32.mrb[0].mxu0
      %v4228 = vadd.f32 0.0, %v4227
      %v4229 = vpop.f32.mrb[0].mxu0
      %4230 = vmatprep.mubr.f32.mxu0 0.0
      %4231 = vmatmul.mubr.f32.gmra.mrb[0].mxu0 %v4120
      %v4232 = vpop.f32.mrb[0].mxu0
      %v4233 = vadd.f32 0.0, %v4232
      %v4234 = vpop.f32.mrb[0].mxu0
      %4235 = vmatprep.mubr.f32.mxu0 0.0
      %4236 = vmatmul.mubr.f32.gmra.mrb[0].mxu0 %v4121
      %v4237 = vpop.f32.mrb[0].mxu0
      %v4238 = vadd.f32 0.0, %v4237
      %v4239 = vpop.f32.mrb[0].mxu0
      %4240 = vmatprep.mubr.f32.mxu0 0.0
      %4241 = vmatmul.mubr.f32.gmra.mrb[0].mxu0 %v4122
      %v4242 = vpop.f32.mrb[0].mxu0
      %v4243 = vadd.f32 0.0, %v4242
      %v4244 = vpop.f32.mrb[0].mxu0
      %4245 = vmatprep.mubr.f32.mxu0 0.0
      %4246 = vmatmul.mubr.f32.gmra.mrb[0].mxu0 %v4123
      %v4247 = vpop.f32.mrb[0].mxu0
      %v4248 = vadd.f32 0.0, %v4247
      %v4249 = vpop.f32.mrb[0].mxu0
      %4250 = vmatprep.mubr.f32.mxu0 0.0
      %4251 = vmatmul.mubr.f32.gmra.mrb[0].mxu0 %v4124
      %v4252 = vpop.f32.mrb[0].mxu0
      %v4253 = vadd.f32 0.0, %v4252
      %v4254 = vpop.f32.mrb[0].mxu0
      %4255 = vmatprep.mubr.f32.mxu0 0.0
      %4256 = vmatmul.mubr.f32.gmra.mrb[0].mxu0 %v4125
      %v4257 = vpop.f32.mrb[0].mxu0
      %v4258 = vadd.f32 0.0, %v4257
      %v4259 = vpop.f32.mrb[0].mxu0
      %4260 = vmatprep.mubr.f32.mxu0 0.0
      %4261 = vmatmul.mubr.f32.gmra.mrb[0].mxu0 %v4126
      %v4262 = vpop.f32.mrb[0].mxu0
      %v4263 = vadd.f32 0.0, %v4262
      %v4264 = vpop.f32.mrb[0].mxu0
      %4265 = vmatprep.mubr.f32.mxu0 0.0
      %4266 = vmatmul.mubr.f32.gmra.mrb[0].mxu0 %v4127
      %v4267 = vpop.f32.mrb[0].mxu0
      %v4268 = vadd.f32 0.0, %v4267
      %v4269 = vpop.f32.mrb[0].mxu0
      %4270 = vmatprep.mubr.f32.mxu0 0.0
      %4271 = vmatmul.mubr.f32.gmra.mrb[0].mxu0 %v4128
      %v4272 = vpop.f32.mrb[0].mxu0
      %v4273 = vadd.f32 0.0, %v4272
      %v4274 = vpop.f32.mrb[0].mxu0
      %4275 = vmatprep.mubr.f32.mxu0 0.0
      %4276 = vmatmul.mubr.f32.gmra.mrb[0].mxu0 %v4129
      %v4277 = vpop.f32.mrb[0].mxu0
      %v4278 = vadd.f32 0.0, %v4277
      %v4279 = vpop.f32.mrb[0].mxu0
      %4280 = vmatprep.mubr.f32.mxu0 0.0
      %4281 = vmatmul.mubr.f32.gmra.mrb[0].mxu0 %v4130
      %v4282 = vpop.f32.mrb[0].mxu0
      %v4283 = vadd.f32 0.0, %v4282
      %v4284 = vpop.f32.mrb[0].mxu0
      %4285 = vmatprep.mubr.f32.mxu0 0.0
      %4286 = vmatmul.mubr.f32.gmra.mrb[0].mxu0 %v4131
      %v4287 = vpop.f32.mrb[0].mxu0
      %v4288 = vadd.f32 0.0, %v4287
      %v4289 = vpop.f32.mrb[0].mxu0
      %4290 = vmatprep.mubr.f32.mxu0 0.0
      %4291 = vmatmul.mubr.f32.gmra.mrb[0].mxu0 %v4132
      %v4292 = vpop.f32.mrb[0].mxu0
      %v4293 = vadd.f32 0.0, %v4292
      %v4294 = vpop.f32.mrb[0].mxu0
      %4295 = vmatprep.mubr.f32.mxu0 0.0
      %4296 = vmatmul.mubr.f32.gmra.mrb[0].mxu0 %v4133
      %v4297 = vpop.f32.mrb[0].mxu0
      %v4298 = vadd.f32 0.0, %v4297
      %v4299 = vpop.f32.mrb[0].mxu0
      %4300 = vmatprep.mubr.f32.mxu0 0.0
      %4301 = vmatmul.mubr.f32.gmra.mrb[0].mxu0 %v4134
      %v4302 = vpop.f32.mrb[0].mxu0
      %v4303 = vadd.f32 0.0, %v4302
      %v4304 = vpop.f32.mrb[0].mxu0
      %4305 = vdwg.mxu0
      %v4306 = vadd.f32 %v4099, %v4218
      %v4307 = vadd.f32 %v4100, %v4223
      %v4308 = vadd.f32 %v4101, %v4228
      %v4309 = vadd.f32 %v4102, %v4233
      %v4310 = vadd.f32 %v4103, %v4238
      %v4311 = vadd.f32 %v4104, %v4243
      %v4312 = vadd.f32 %v4105, %v4248
      %v4313 = vadd.f32 %v4106, %v4253
      %v4314 = vadd.f32 %v4107, %v4258
      %v4315 = vadd.f32 %v4108, %v4263
      %v4316 = vadd.f32 %v4109, %v4268
      %v4317 = vadd.f32 %v4110, %v4273
      %v4318 = vadd.f32 %v4111, %v4278
      %v4319 = vadd.f32 %v4112, %v4283
      %v4320 = vadd.f32 %v4113, %v4288
      %v4321 = vadd.f32 %v4114, %v4293
      %v4322 = vadd.f32 %v4115, %v4298
      %v4323 = vadd.f32 %v4116, %v4303
      %v4324 = vld [vmem:[#allocation2 + $0x20] sm:$0xff]
      %v4325 = vld [vmem:[#allocation2 + $0x28] sm:$0xff]
      %v4326 = vld [vmem:[#allocation2 + $0x30] sm:$0xff]
      %v4327 = vld [vmem:[#allocation2 + $0x38] sm:$0xff]
      %v4328 = vld [vmem:[#allocation2 + $0x40] sm:$0xff]
      %v4329 = vld [vmem:[#allocation2 + $0x48] sm:$0xff]
      %v4330 = vld [vmem:[#allocation2 + $0x50] sm:$0xff]
      %v4331 = vld [vmem:[#allocation2 + $0x58] sm:$0xff]
      %v4332 = vld [vmem:[#allocation2 + $0x60] sm:$0xff]
      %v4333 = vld [vmem:[#allocation2 + $0x68] sm:$0xff]
      %v4334 = vld [vmem:[#allocation2 + $0x70] sm:$0xff]
      %v4335 = vld [vmem:[#allocation2 + $0x78] sm:$0xff]
      %v4336 = vld [vmem:[#allocation2 + $0x80] sm:$0xff]
      %v4337 = vld [vmem:[#allocation2 + $0x88] sm:$0xff]
      %v4338 = vld [vmem:[#allocation2 + $0x90] sm:$0xff]
      %v4339 = vld [vmem:[#allocation2 + $0x98] sm:$0xff]
      %v4340 = vld [vmem:[#allocation2 + $0xa0] sm:$0xff]
      %v4341 = vld [vmem:[#allocation2 + $0xa8] sm:$0xf]
      %v4342 = vld [vmem:[%s3 + $0x700] sm:$0xff]
      %v4343 = vld [vmem:[%s3 + $0x708] sm:$0xff]
      %v4344 = vld [vmem:[%s3 + $0x710] sm:$0xff]
      %v4345 = vld [vmem:[%s3 + $0x718] sm:$0xff]
      %v4346 = vld [vmem:[%s3 + $0x720] sm:$0xff]
      %v4347 = vld [vmem:[%s3 + $0x728] sm:$0xff]
      %v4348 = vld [vmem:[%s3 + $0x730] sm:$0xff]
      %v4349 = vld [vmem:[%s3 + $0x738] sm:$0xff]
      %v4350 = vld [vmem:[%s3 + $0x740] sm:$0xff]
      %v4351 = vld [vmem:[%s3 + $0x748] sm:$0xff]
      %v4352 = vld [vmem:[%s3 + $0x750] sm:$0xff]
      %v4353 = vld [vmem:[%s3 + $0x758] sm:$0xff]
      %v4354 = vld [vmem:[%s3 + $0x760] sm:$0xff]
      %v4355 = vld [vmem:[%s3 + $0x768] sm:$0xff]
      %v4356 = vld [vmem:[%s3 + $0x770] sm:$0xff]
      %v4357 = vld [vmem:[%s3 + $0x778] sm:$0xff]
      %4358 = vmatprep.subr.mxu0 0.0
      %4359 = vmatpush1.msra.mxu0 %v4342
      %4360 = vmatprep.subr.mxu0 0.0
      %4361 = vmatpush1.msra.mxu0 %v4343
      %4362 = vmatprep.subr.mxu0 0.0
      %4363 = vmatpush1.msra.mxu0 %v4344
      %4364 = vmatprep.subr.mxu0 0.0
      %4365 = vmatpush1.msra.mxu0 %v4345
      %4366 = vmatprep.subr.mxu0 0.0
      %4367 = vmatpush1.msra.mxu0 %v4346
      %4368 = vmatprep.subr.mxu0 0.0
      %4369 = vmatpush1.msra.mxu0 %v4347
      %4370 = vmatprep.subr.mxu0 0.0
      %4371 = vmatpush1.msra.mxu0 %v4348
      %4372 = vmatprep.subr.mxu0 0.0
      %4373 = vmatpush1.msra.mxu0 %v4349
      %4374 = vmatprep.subr.mxu0 0.0
      %4375 = vmatpush1.msra.mxu0 %v4350
      %4376 = vmatprep.subr.mxu0 0.0
      %4377 = vmatpush1.msra.mxu0 %v4351
      %4378 = vmatprep.subr.mxu0 0.0
      %4379 = vmatpush1.msra.mxu0 %v4352
      %4380 = vmatprep.subr.mxu0 0.0
      %4381 = vmatpush1.msra.mxu0 %v4353
      %4382 = vmatprep.subr.mxu0 0.0
      %4383 = vmatpush1.msra.mxu0 %v4354
      %4384 = vmatprep.subr.mxu0 0.0
      %4385 = vmatpush1.msra.mxu0 %v4355
      %4386 = vmatprep.subr.mxu0 0.0
      %4387 = vmatpush1.msra.mxu0 %v4356
      %4388 = vmatprep.subr.mxu0 0.0
      %4389 = vmatpush1.msra.mxu0 %v4357
      %4390 = vmatprep.subr.mxu0 0.0
      %4391 = vmatpush1.msra.mxu0 0.0
      %4392 = vmatprep.subr.mxu0 0.0
      %4393 = vmatpush1.msra.mxu0 0.0
      %4394 = vmatprep.subr.mxu0 0.0
      %4395 = vmatpush1.msra.mxu0 0.0
      %4396 = vmatprep.subr.mxu0 0.0
      %4397 = vmatpush1.msra.mxu0 0.0
      %4398 = vmatprep.subr.mxu0 0.0
      %4399 = vmatpush1.msra.mxu0 0.0
      %4400 = vmatprep.subr.mxu0 0.0
      %4401 = vmatpush1.msra.mxu0 0.0
      %4402 = vmatprep.subr.mxu0 0.0
      %4403 = vmatpush1.msra.mxu0 0.0
      %4404 = vmatprep.subr.mxu0 0.0
      %4405 = vmatpush1.msra.mxu0 0.0
      %4406 = vmatprep.subr.mxu0 0.0
      %4407 = vmatpush1.msra.mxu0 0.0
      %4408 = vmatprep.subr.mxu0 0.0
      %4409 = vmatpush1.msra.mxu0 0.0
      %4410 = vmatprep.subr.mxu0 0.0
      %4411 = vmatpush1.msra.mxu0 0.0
      %4412 = vmatprep.subr.mxu0 0.0
      %4413 = vmatpush1.msra.mxu0 0.0
      %4414 = vmatprep.subr.mxu0 0.0
      %4415 = vmatpush1.msra.mxu0 0.0
      %4416 = vmatprep.subr.mxu0 0.0
      %4417 = vmatpush1.msra.mxu0 0.0
      %4418 = vmatprep.subr.mxu0 0.0
      %4419 = vmatpush1.msra.mxu0 0.0
      %4420 = vmatprep.subr.mxu0 0.0
      %4421 = vmatpush1.msra.mxu0 0.0
      %4422 = vmatprep.mubr.f32.mxu0 0.0
      %4423 = vmatmul.mubr.f32.gmra.mrb[0].mxu0 %v4324
      %v4424 = vpop.f32.mrb[0].mxu0
      %v4425 = vadd.f32 0.0, %v4424
      %v4426 = vpop.f32.mrb[0].mxu0
      %4427 = vmatprep.mubr.f32.mxu0 0.0
      %4428 = vmatmul.mubr.f32.gmra.mrb[0].mxu0 %v4325
      %v4429 = vpop.f32.mrb[0].mxu0
      %v4430 = vadd.f32 0.0, %v4429
      %v4431 = vpop.f32.mrb[0].mxu0
      %4432 = vmatprep.mubr.f32.mxu0 0.0
      %4433 = vmatmul.mubr.f32.gmra.mrb[0].mxu0 %v4326
      %v4434 = vpop.f32.mrb[0].mxu0
      %v4435 = vadd.f32 0.0, %v4434
      %v4436 = vpop.f32.mrb[0].mxu0
      %4437 = vmatprep.mubr.f32.mxu0 0.0
      %4438 = vmatmul.mubr.f32.gmra.mrb[0].mxu0 %v4327
      %v4439 = vpop.f32.mrb[0].mxu0
      %v4440 = vadd.f32 0.0, %v4439
      %v4441 = vpop.f32.mrb[0].mxu0
      %4442 = vmatprep.mubr.f32.mxu0 0.0
      %4443 = vmatmul.mubr.f32.gmra.mrb[0].mxu0 %v4328
      %v4444 = vpop.f32.mrb[0].mxu0
      %v4445 = vadd.f32 0.0, %v4444
      %v4446 = vpop.f32.mrb[0].mxu0
      %4447 = vmatprep.mubr.f32.mxu0 0.0
      %4448 = vmatmul.mubr.f32.gmra.mrb[0].mxu0 %v4329
      %v4449 = vpop.f32.mrb[0].mxu0
      %v4450 = vadd.f32 0.0, %v4449
      %v4451 = vpop.f32.mrb[0].mxu0
      %4452 = vmatprep.mubr.f32.mxu0 0.0
      %4453 = vmatmul.mubr.f32.gmra.mrb[0].mxu0 %v4330
      %v4454 = vpop.f32.mrb[0].mxu0
      %v4455 = vadd.f32 0.0, %v4454
      %v4456 = vpop.f32.mrb[0].mxu0
      %4457 = vmatprep.mubr.f32.mxu0 0.0
      %4458 = vmatmul.mubr.f32.gmra.mrb[0].mxu0 %v4331
      %v4459 = vpop.f32.mrb[0].mxu0
      %v4460 = vadd.f32 0.0, %v4459
      %v4461 = vpop.f32.mrb[0].mxu0
      %4462 = vmatprep.mubr.f32.mxu0 0.0
      %4463 = vmatmul.mubr.f32.gmra.mrb[0].mxu0 %v4332
      %v4464 = vpop.f32.mrb[0].mxu0
      %v4465 = vadd.f32 0.0, %v4464
      %v4466 = vpop.f32.mrb[0].mxu0
      %4467 = vmatprep.mubr.f32.mxu0 0.0
      %4468 = vmatmul.mubr.f32.gmra.mrb[0].mxu0 %v4333
      %v4469 = vpop.f32.mrb[0].mxu0
      %v4470 = vadd.f32 0.0, %v4469
      %v4471 = vpop.f32.mrb[0].mxu0
      %4472 = vmatprep.mubr.f32.mxu0 0.0
      %4473 = vmatmul.mubr.f32.gmra.mrb[0].mxu0 %v4334
      %v4474 = vpop.f32.mrb[0].mxu0
      %v4475 = vadd.f32 0.0, %v4474
      %v4476 = vpop.f32.mrb[0].mxu0
      %4477 = vmatprep.mubr.f32.mxu0 0.0
      %4478 = vmatmul.mubr.f32.gmra.mrb[0].mxu0 %v4335
      %v4479 = vpop.f32.mrb[0].mxu0
      %v4480 = vadd.f32 0.0, %v4479
      %v4481 = vpop.f32.mrb[0].mxu0
      %4482 = vmatprep.mubr.f32.mxu0 0.0
      %4483 = vmatmul.mubr.f32.gmra.mrb[0].mxu0 %v4336
      %v4484 = vpop.f32.mrb[0].mxu0
      %v4485 = vadd.f32 0.0, %v4484
      %v4486 = vpop.f32.mrb[0].mxu0
      %4487 = vmatprep.mubr.f32.mxu0 0.0
      %4488 = vmatmul.mubr.f32.gmra.mrb[0].mxu0 %v4337
      %v4489 = vpop.f32.mrb[0].mxu0
      %v4490 = vadd.f32 0.0, %v4489
      %v4491 = vpop.f32.mrb[0].mxu0
      %4492 = vmatprep.mubr.f32.mxu0 0.0
      %4493 = vmatmul.mubr.f32.gmra.mrb[0].mxu0 %v4338
      %v4494 = vpop.f32.mrb[0].mxu0
      %v4495 = vadd.f32 0.0, %v4494
      %v4496 = vpop.f32.mrb[0].mxu0
      %4497 = vmatprep.mubr.f32.mxu0 0.0
      %4498 = vmatmul.mubr.f32.gmra.mrb[0].mxu0 %v4339
      %v4499 = vpop.f32.mrb[0].mxu0
      %v4500 = vadd.f32 0.0, %v4499
      %v4501 = vpop.f32.mrb[0].mxu0
      %4502 = vmatprep.mubr.f32.mxu0 0.0
      %4503 = vmatmul.mubr.f32.gmra.mrb[0].mxu0 %v4340
      %v4504 = vpop.f32.mrb[0].mxu0
      %v4505 = vadd.f32 0.0, %v4504
      %v4506 = vpop.f32.mrb[0].mxu0
      %4507 = vmatprep.mubr.f32.mxu0 0.0
      %4508 = vmatmul.mubr.f32.gmra.mrb[0].mxu0 %v4341
      %v4509 = vpop.f32.mrb[0].mxu0
      %v4510 = vadd.f32 0.0, %v4509
      %v4511 = vpop.f32.mrb[0].mxu0
      %4512 = vdwg.mxu0
      %v4513 = vadd.f32 %v4306, %v4425
      %v4514 = vadd.f32 %v4307, %v4430
      %v4515 = vadd.f32 %v4308, %v4435
      %v4516 = vadd.f32 %v4309, %v4440
      %v4517 = vadd.f32 %v4310, %v4445
      %v4518 = vadd.f32 %v4311, %v4450
      %v4519 = vadd.f32 %v4312, %v4455
      %v4520 = vadd.f32 %v4313, %v4460
      %v4521 = vadd.f32 %v4314, %v4465
      %v4522 = vadd.f32 %v4315, %v4470
      %v4523 = vadd.f32 %v4316, %v4475
      %v4524 = vadd.f32 %v4317, %v4480
      %v4525 = vadd.f32 %v4318, %v4485
      %v4526 = vadd.f32 %v4319, %v4490
      %v4527 = vadd.f32 %v4320, %v4495
      %v4528 = vadd.f32 %v4321, %v4500
      %v4529 = vadd.f32 %v4322, %v4505
      %v4530 = vadd.f32 %v4323, %v4510
      %v4531 = vld [vmem:[#allocation2 + $0x2a] sm:$0xff]
      %v4532 = vld [vmem:[#allocation2 + $0x32] sm:$0xff]
      %v4533 = vld [vmem:[#allocation2 + $0x3a] sm:$0xff]
      %v4534 = vld [vmem:[#allocation2 + $0x42] sm:$0xff]
      %v4535 = vld [vmem:[#allocation2 + $0x4a] sm:$0xff]
      %v4536 = vld [vmem:[#allocation2 + $0x52] sm:$0xff]
      %v4537 = vld [vmem:[#allocation2 + $0x5a] sm:$0xff]
      %v4538 = vld [vmem:[#allocation2 + $0x62] sm:$0xff]
      %v4539 = vld [vmem:[#allocation2 + $0x6a] sm:$0xff]
      %v4540 = vld [vmem:[#allocation2 + $0x72] sm:$0xff]
      %v4541 = vld [vmem:[#allocation2 + $0x7a] sm:$0xff]
      %v4542 = vld [vmem:[#allocation2 + $0x82] sm:$0xff]
      %v4543 = vld [vmem:[#allocation2 + $0x8a] sm:$0xff]
      %v4544 = vld [vmem:[#allocation2 + $0x92] sm:$0xff]
      %v4545 = vld [vmem:[#allocation2 + $0x9a] sm:$0xff]
      %v4546 = vld [vmem:[#allocation2 + $0xa2] sm:$0xff]
      %v4547 = vld [vmem:[#allocation2 + $0xaa] sm:$0xff]
      %v4548 = vld [vmem:[#allocation2 + $0xb2] sm:$0xf]
      %v4549 = vld [vmem:[%s3 + $0x780] sm:$0xff]
      %v4550 = vld [vmem:[%s3 + $0x788] sm:$0xff]
      %v4551 = vld [vmem:[%s3 + $0x790] sm:$0xff]
      %v4552 = vld [vmem:[%s3 + $0x798] sm:$0xff]
      %v4553 = vld [vmem:[%s3 + $0x7a0] sm:$0xff]
      %v4554 = vld [vmem:[%s3 + $0x7a8] sm:$0xff]
      %v4555 = vld [vmem:[%s3 + $0x7b0] sm:$0xff]
      %v4556 = vld [vmem:[%s3 + $0x7b8] sm:$0xff]
      %v4557 = vld [vmem:[%s3 + $0x7c0] sm:$0xff]
      %v4558 = vld [vmem:[%s3 + $0x7c8] sm:$0xff]
      %v4559 = vld [vmem:[%s3 + $0x7d0] sm:$0xff]
      %v4560 = vld [vmem:[%s3 + $0x7d8] sm:$0xff]
      %v4561 = vld [vmem:[%s3 + $0x7e0] sm:$0xff]
      %v4562 = vld [vmem:[%s3 + $0x7e8] sm:$0xff]
      %v4563 = vld [vmem:[%s3 + $0x7f0] sm:$0xff]
      %v4564 = vld [vmem:[%s3 + $0x7f8] sm:$0xff]
      %4565 = vmatprep.subr.mxu0 0.0
      %4566 = vmatpush1.msra.mxu0 %v4549
      %4567 = vmatprep.subr.mxu0 0.0
      %4568 = vmatpush1.msra.mxu0 %v4550
      %4569 = vmatprep.subr.mxu0 0.0
      %4570 = vmatpush1.msra.mxu0 %v4551
      %4571 = vmatprep.subr.mxu0 0.0
      %4572 = vmatpush1.msra.mxu0 %v4552
      %4573 = vmatprep.subr.mxu0 0.0
      %4574 = vmatpush1.msra.mxu0 %v4553
      %4575 = vmatprep.subr.mxu0 0.0
      %4576 = vmatpush1.msra.mxu0 %v4554
      %4577 = vmatprep.subr.mxu0 0.0
      %4578 = vmatpush1.msra.mxu0 %v4555
      %4579 = vmatprep.subr.mxu0 0.0
      %4580 = vmatpush1.msra.mxu0 %v4556
      %4581 = vmatprep.subr.mxu0 0.0
      %4582 = vmatpush1.msra.mxu0 %v4557
      %4583 = vmatprep.subr.mxu0 0.0
      %4584 = vmatpush1.msra.mxu0 %v4558
      %4585 = vmatprep.subr.mxu0 0.0
      %4586 = vmatpush1.msra.mxu0 %v4559
      %4587 = vmatprep.subr.mxu0 0.0
      %4588 = vmatpush1.msra.mxu0 %v4560
      %4589 = vmatprep.subr.mxu0 0.0
      %4590 = vmatpush1.msra.mxu0 %v4561
      %4591 = vmatprep.subr.mxu0 0.0
      %4592 = vmatpush1.msra.mxu0 %v4562
      %4593 = vmatprep.subr.mxu0 0.0
      %4594 = vmatpush1.msra.mxu0 %v4563
      %4595 = vmatprep.subr.mxu0 0.0
      %4596 = vmatpush1.msra.mxu0 %v4564
      %4597 = vmatprep.subr.mxu0 0.0
      %4598 = vmatpush1.msra.mxu0 0.0
      %4599 = vmatprep.subr.mxu0 0.0
      %4600 = vmatpush1.msra.mxu0 0.0
      %4601 = vmatprep.subr.mxu0 0.0
      %4602 = vmatpush1.msra.mxu0 0.0
      %4603 = vmatprep.subr.mxu0 0.0
      %4604 = vmatpush1.msra.mxu0 0.0
      %4605 = vmatprep.subr.mxu0 0.0
      %4606 = vmatpush1.msra.mxu0 0.0
      %4607 = vmatprep.subr.mxu0 0.0
      %4608 = vmatpush1.msra.mxu0 0.0
      %4609 = vmatprep.subr.mxu0 0.0
      %4610 = vmatpush1.msra.mxu0 0.0
      %4611 = vmatprep.subr.mxu0 0.0
      %4612 = vmatpush1.msra.mxu0 0.0
      %4613 = vmatprep.subr.mxu0 0.0
      %4614 = vmatpush1.msra.mxu0 0.0
      %4615 = vmatprep.subr.mxu0 0.0
      %4616 = vmatpush1.msra.mxu0 0.0
      %4617 = vmatprep.subr.mxu0 0.0
      %4618 = vmatpush1.msra.mxu0 0.0
      %4619 = vmatprep.subr.mxu0 0.0
      %4620 = vmatpush1.msra.mxu0 0.0
      %4621 = vmatprep.subr.mxu0 0.0
      %4622 = vmatpush1.msra.mxu0 0.0
      %4623 = vmatprep.subr.mxu0 0.0
      %4624 = vmatpush1.msra.mxu0 0.0
      %4625 = vmatprep.subr.mxu0 0.0
      %4626 = vmatpush1.msra.mxu0 0.0
      %4627 = vmatprep.subr.mxu0 0.0
      %4628 = vmatpush1.msra.mxu0 0.0
      %4629 = vmatprep.mubr.f32.mxu0 0.0
      %4630 = vmatmul.mubr.f32.gmra.mrb[0].mxu0 %v4531
      %v4631 = vpop.f32.mrb[0].mxu0
      %v4632 = vadd.f32 0.0, %v4631
      %v4633 = vpop.f32.mrb[0].mxu0
      %4634 = vmatprep.mubr.f32.mxu0 0.0
      %4635 = vmatmul.mubr.f32.gmra.mrb[0].mxu0 %v4532
      %v4636 = vpop.f32.mrb[0].mxu0
      %v4637 = vadd.f32 0.0, %v4636
      %v4638 = vpop.f32.mrb[0].mxu0
      %4639 = vmatprep.mubr.f32.mxu0 0.0
      %4640 = vmatmul.mubr.f32.gmra.mrb[0].mxu0 %v4533
      %v4641 = vpop.f32.mrb[0].mxu0
      %v4642 = vadd.f32 0.0, %v4641
      %v4643 = vpop.f32.mrb[0].mxu0
      %4644 = vmatprep.mubr.f32.mxu0 0.0
      %4645 = vmatmul.mubr.f32.gmra.mrb[0].mxu0 %v4534
      %v4646 = vpop.f32.mrb[0].mxu0
      %v4647 = vadd.f32 0.0, %v4646
      %v4648 = vpop.f32.mrb[0].mxu0
      %4649 = vmatprep.mubr.f32.mxu0 0.0
      %4650 = vmatmul.mubr.f32.gmra.mrb[0].mxu0 %v4535
      %v4651 = vpop.f32.mrb[0].mxu0
      %v4652 = vadd.f32 0.0, %v4651
      %v4653 = vpop.f32.mrb[0].mxu0
      %4654 = vmatprep.mubr.f32.mxu0 0.0
      %4655 = vmatmul.mubr.f32.gmra.mrb[0].mxu0 %v4536
      %v4656 = vpop.f32.mrb[0].mxu0
      %v4657 = vadd.f32 0.0, %v4656
      %v4658 = vpop.f32.mrb[0].mxu0
      %4659 = vmatprep.mubr.f32.mxu0 0.0
      %4660 = vmatmul.mubr.f32.gmra.mrb[0].mxu0 %v4537
      %v4661 = vpop.f32.mrb[0].mxu0
      %v4662 = vadd.f32 0.0, %v4661
      %v4663 = vpop.f32.mrb[0].mxu0
      %4664 = vmatprep.mubr.f32.mxu0 0.0
      %4665 = vmatmul.mubr.f32.gmra.mrb[0].mxu0 %v4538
      %v4666 = vpop.f32.mrb[0].mxu0
      %v4667 = vadd.f32 0.0, %v4666
      %v4668 = vpop.f32.mrb[0].mxu0
      %4669 = vmatprep.mubr.f32.mxu0 0.0
      %4670 = vmatmul.mubr.f32.gmra.mrb[0].mxu0 %v4539
      %v4671 = vpop.f32.mrb[0].mxu0
      %v4672 = vadd.f32 0.0, %v4671
      %v4673 = vpop.f32.mrb[0].mxu0
      %4674 = vmatprep.mubr.f32.mxu0 0.0
      %4675 = vmatmul.mubr.f32.gmra.mrb[0].mxu0 %v4540
      %v4676 = vpop.f32.mrb[0].mxu0
      %v4677 = vadd.f32 0.0, %v4676
      %v4678 = vpop.f32.mrb[0].mxu0
      %4679 = vmatprep.mubr.f32.mxu0 0.0
      %4680 = vmatmul.mubr.f32.gmra.mrb[0].mxu0 %v4541
      %v4681 = vpop.f32.mrb[0].mxu0
      %v4682 = vadd.f32 0.0, %v4681
      %v4683 = vpop.f32.mrb[0].mxu0
      %4684 = vmatprep.mubr.f32.mxu0 0.0
      %4685 = vmatmul.mubr.f32.gmra.mrb[0].mxu0 %v4542
      %v4686 = vpop.f32.mrb[0].mxu0
      %v4687 = vadd.f32 0.0, %v4686
      %v4688 = vpop.f32.mrb[0].mxu0
      %4689 = vmatprep.mubr.f32.mxu0 0.0
      %4690 = vmatmul.mubr.f32.gmra.mrb[0].mxu0 %v4543
      %v4691 = vpop.f32.mrb[0].mxu0
      %v4692 = vadd.f32 0.0, %v4691
      %v4693 = vpop.f32.mrb[0].mxu0
      %4694 = vmatprep.mubr.f32.mxu0 0.0
      %4695 = vmatmul.mubr.f32.gmra.mrb[0].mxu0 %v4544
      %v4696 = vpop.f32.mrb[0].mxu0
      %v4697 = vadd.f32 0.0, %v4696
      %v4698 = vpop.f32.mrb[0].mxu0
      %4699 = vmatprep.mubr.f32.mxu0 0.0
      %4700 = vmatmul.mubr.f32.gmra.mrb[0].mxu0 %v4545
      %v4701 = vpop.f32.mrb[0].mxu0
      %v4702 = vadd.f32 0.0, %v4701
      %v4703 = vpop.f32.mrb[0].mxu0
      %4704 = vmatprep.mubr.f32.mxu0 0.0
      %4705 = vmatmul.mubr.f32.gmra.mrb[0].mxu0 %v4546
      %v4706 = vpop.f32.mrb[0].mxu0
      %v4707 = vadd.f32 0.0, %v4706
      %v4708 = vpop.f32.mrb[0].mxu0
      %4709 = vmatprep.mubr.f32.mxu0 0.0
      %4710 = vmatmul.mubr.f32.gmra.mrb[0].mxu0 %v4547
      %v4711 = vpop.f32.mrb[0].mxu0
      %v4712 = vadd.f32 0.0, %v4711
      %v4713 = vpop.f32.mrb[0].mxu0
      %4714 = vmatprep.mubr.f32.mxu0 0.0
      %4715 = vmatmul.mubr.f32.gmra.mrb[0].mxu0 %v4548
      %v4716 = vpop.f32.mrb[0].mxu0
      %v4717 = vadd.f32 0.0, %v4716
      %v4718 = vpop.f32.mrb[0].mxu0
      %4719 = vdwg.mxu0
      %v4720 = vadd.f32 %v4513, %v4632
      %v4721 = vadd.f32 %v4514, %v4637
      %v4722 = vadd.f32 %v4515, %v4642
      %v4723 = vadd.f32 %v4516, %v4647
      %v4724 = vadd.f32 %v4517, %v4652
      %v4725 = vadd.f32 %v4518, %v4657
      %v4726 = vadd.f32 %v4519, %v4662
      %v4727 = vadd.f32 %v4520, %v4667
      %v4728 = vadd.f32 %v4521, %v4672
      %v4729 = vadd.f32 %v4522, %v4677
      %v4730 = vadd.f32 %v4523, %v4682
      %v4731 = vadd.f32 %v4524, %v4687
      %v4732 = vadd.f32 %v4525, %v4692
      %v4733 = vadd.f32 %v4526, %v4697
      %v4734 = vadd.f32 %v4527, %v4702
      %v4735 = vadd.f32 %v4528, %v4707
      %v4736 = vadd.f32 %v4529, %v4712
      %v4737 = vadd.f32 %v4530, %v4717
      %v4738 = vld [vmem:[#allocation2 + $0x2b] sm:$0xff]
      %v4739 = vld [vmem:[#allocation2 + $0x33] sm:$0xff]
      %v4740 = vld [vmem:[#allocation2 + $0x3b] sm:$0xff]
      %v4741 = vld [vmem:[#allocation2 + $0x43] sm:$0xff]
      %v4742 = vld [vmem:[#allocation2 + $0x4b] sm:$0xff]
      %v4743 = vld [vmem:[#allocation2 + $0x53] sm:$0xff]
      %v4744 = vld [vmem:[#allocation2 + $0x5b] sm:$0xff]
      %v4745 = vld [vmem:[#allocation2 + $0x63] sm:$0xff]
      %v4746 = vld [vmem:[#allocation2 + $0x6b] sm:$0xff]
      %v4747 = vld [vmem:[#allocation2 + $0x73] sm:$0xff]
      %v4748 = vld [vmem:[#allocation2 + $0x7b] sm:$0xff]
      %v4749 = vld [vmem:[#allocation2 + $0x83] sm:$0xff]
      %v4750 = vld [vmem:[#allocation2 + $0x8b] sm:$0xff]
      %v4751 = vld [vmem:[#allocation2 + $0x93] sm:$0xff]
      %v4752 = vld [vmem:[#allocation2 + $0x9b] sm:$0xff]
      %v4753 = vld [vmem:[#allocation2 + $0xa3] sm:$0xff]
      %v4754 = vld [vmem:[#allocation2 + $0xab] sm:$0xff]
      %v4755 = vld [vmem:[#allocation2 + $0xb3] sm:$0xf]
      %v4756 = vld [vmem:[%s3 + $0x800] sm:$0xff]
      %v4757 = vld [vmem:[%s3 + $0x808] sm:$0xff]
      %v4758 = vld [vmem:[%s3 + $0x810] sm:$0xff]
      %v4759 = vld [vmem:[%s3 + $0x818] sm:$0xff]
      %v4760 = vld [vmem:[%s3 + $0x820] sm:$0xff]
      %v4761 = vld [vmem:[%s3 + $0x828] sm:$0xff]
      %v4762 = vld [vmem:[%s3 + $0x830] sm:$0xff]
      %v4763 = vld [vmem:[%s3 + $0x838] sm:$0xff]
      %v4764 = vld [vmem:[%s3 + $0x840] sm:$0xff]
      %v4765 = vld [vmem:[%s3 + $0x848] sm:$0xff]
      %v4766 = vld [vmem:[%s3 + $0x850] sm:$0xff]
      %v4767 = vld [vmem:[%s3 + $0x858] sm:$0xff]
      %v4768 = vld [vmem:[%s3 + $0x860] sm:$0xff]
      %v4769 = vld [vmem:[%s3 + $0x868] sm:$0xff]
      %v4770 = vld [vmem:[%s3 + $0x870] sm:$0xff]
      %v4771 = vld [vmem:[%s3 + $0x878] sm:$0xff]
      %4772 = vmatprep.subr.mxu0 0.0
      %4773 = vmatpush1.msra.mxu0 %v4756
      %4774 = vmatprep.subr.mxu0 0.0
      %4775 = vmatpush1.msra.mxu0 %v4757
      %4776 = vmatprep.subr.mxu0 0.0
      %4777 = vmatpush1.msra.mxu0 %v4758
      %4778 = vmatprep.subr.mxu0 0.0
      %4779 = vmatpush1.msra.mxu0 %v4759
      %4780 = vmatprep.subr.mxu0 0.0
      %4781 = vmatpush1.msra.mxu0 %v4760
      %4782 = vmatprep.subr.mxu0 0.0
      %4783 = vmatpush1.msra.mxu0 %v4761
      %4784 = vmatprep.subr.mxu0 0.0
      %4785 = vmatpush1.msra.mxu0 %v4762
      %4786 = vmatprep.subr.mxu0 0.0
      %4787 = vmatpush1.msra.mxu0 %v4763
      %4788 = vmatprep.subr.mxu0 0.0
      %4789 = vmatpush1.msra.mxu0 %v4764
      %4790 = vmatprep.subr.mxu0 0.0
      %4791 = vmatpush1.msra.mxu0 %v4765
      %4792 = vmatprep.subr.mxu0 0.0
      %4793 = vmatpush1.msra.mxu0 %v4766
      %4794 = vmatprep.subr.mxu0 0.0
      %4795 = vmatpush1.msra.mxu0 %v4767
      %4796 = vmatprep.subr.mxu0 0.0
      %4797 = vmatpush1.msra.mxu0 %v4768
      %4798 = vmatprep.subr.mxu0 0.0
      %4799 = vmatpush1.msra.mxu0 %v4769
      %4800 = vmatprep.subr.mxu0 0.0
      %4801 = vmatpush1.msra.mxu0 %v4770
      %4802 = vmatprep.subr.mxu0 0.0
      %4803 = vmatpush1.msra.mxu0 %v4771
      %4804 = vmatprep.subr.mxu0 0.0
      %4805 = vmatpush1.msra.mxu0 0.0
      %4806 = vmatprep.subr.mxu0 0.0
      %4807 = vmatpush1.msra.mxu0 0.0
      %4808 = vmatprep.subr.mxu0 0.0
      %4809 = vmatpush1.msra.mxu0 0.0
      %4810 = vmatprep.subr.mxu0 0.0
      %4811 = vmatpush1.msra.mxu0 0.0
      %4812 = vmatprep.subr.mxu0 0.0
      %4813 = vmatpush1.msra.mxu0 0.0
      %4814 = vmatprep.subr.mxu0 0.0
      %4815 = vmatpush1.msra.mxu0 0.0
      %4816 = vmatprep.subr.mxu0 0.0
      %4817 = vmatpush1.msra.mxu0 0.0
      %4818 = vmatprep.subr.mxu0 0.0
      %4819 = vmatpush1.msra.mxu0 0.0
      %4820 = vmatprep.subr.mxu0 0.0
      %4821 = vmatpush1.msra.mxu0 0.0
      %4822 = vmatprep.subr.mxu0 0.0
      %4823 = vmatpush1.msra.mxu0 0.0
      %4824 = vmatprep.subr.mxu0 0.0
      %4825 = vmatpush1.msra.mxu0 0.0
      %4826 = vmatprep.subr.mxu0 0.0
      %4827 = vmatpush1.msra.mxu0 0.0
      %4828 = vmatprep.subr.mxu0 0.0
      %4829 = vmatpush1.msra.mxu0 0.0
      %4830 = vmatprep.subr.mxu0 0.0
      %4831 = vmatpush1.msra.mxu0 0.0
      %4832 = vmatprep.subr.mxu0 0.0
      %4833 = vmatpush1.msra.mxu0 0.0
      %4834 = vmatprep.subr.mxu0 0.0
      %4835 = vmatpush1.msra.mxu0 0.0
      %4836 = vmatprep.mubr.f32.mxu0 0.0
      %4837 = vmatmul.mubr.f32.gmra.mrb[0].mxu0 %v4738
      %v4838 = vpop.f32.mrb[0].mxu0
      %v4839 = vadd.f32 0.0, %v4838
      %v4840 = vpop.f32.mrb[0].mxu0
      %4841 = vmatprep.mubr.f32.mxu0 0.0
      %4842 = vmatmul.mubr.f32.gmra.mrb[0].mxu0 %v4739
      %v4843 = vpop.f32.mrb[0].mxu0
      %v4844 = vadd.f32 0.0, %v4843
      %v4845 = vpop.f32.mrb[0].mxu0
      %4846 = vmatprep.mubr.f32.mxu0 0.0
      %4847 = vmatmul.mubr.f32.gmra.mrb[0].mxu0 %v4740
      %v4848 = vpop.f32.mrb[0].mxu0
      %v4849 = vadd.f32 0.0, %v4848
      %v4850 = vpop.f32.mrb[0].mxu0
      %4851 = vmatprep.mubr.f32.mxu0 0.0
      %4852 = vmatmul.mubr.f32.gmra.mrb[0].mxu0 %v4741
      %v4853 = vpop.f32.mrb[0].mxu0
      %v4854 = vadd.f32 0.0, %v4853
      %v4855 = vpop.f32.mrb[0].mxu0
      %4856 = vmatprep.mubr.f32.mxu0 0.0
      %4857 = vmatmul.mubr.f32.gmra.mrb[0].mxu0 %v4742
      %v4858 = vpop.f32.mrb[0].mxu0
      %v4859 = vadd.f32 0.0, %v4858
      %v4860 = vpop.f32.mrb[0].mxu0
      %4861 = vmatprep.mubr.f32.mxu0 0.0
      %4862 = vmatmul.mubr.f32.gmra.mrb[0].mxu0 %v4743
      %v4863 = vpop.f32.mrb[0].mxu0
      %v4864 = vadd.f32 0.0, %v4863
      %v4865 = vpop.f32.mrb[0].mxu0
      %4866 = vmatprep.mubr.f32.mxu0 0.0
      %4867 = vmatmul.mubr.f32.gmra.mrb[0].mxu0 %v4744
      %v4868 = vpop.f32.mrb[0].mxu0
      %v4869 = vadd.f32 0.0, %v4868
      %v4870 = vpop.f32.mrb[0].mxu0
      %4871 = vmatprep.mubr.f32.mxu0 0.0
      %4872 = vmatmul.mubr.f32.gmra.mrb[0].mxu0 %v4745
      %v4873 = vpop.f32.mrb[0].mxu0
      %v4874 = vadd.f32 0.0, %v4873
      %v4875 = vpop.f32.mrb[0].mxu0
      %4876 = vmatprep.mubr.f32.mxu0 0.0
      %4877 = vmatmul.mubr.f32.gmra.mrb[0].mxu0 %v4746
      %v4878 = vpop.f32.mrb[0].mxu0
      %v4879 = vadd.f32 0.0, %v4878
      %v4880 = vpop.f32.mrb[0].mxu0
      %4881 = vmatprep.mubr.f32.mxu0 0.0
      %4882 = vmatmul.mubr.f32.gmra.mrb[0].mxu0 %v4747
      %v4883 = vpop.f32.mrb[0].mxu0
      %v4884 = vadd.f32 0.0, %v4883
      %v4885 = vpop.f32.mrb[0].mxu0
      %4886 = vmatprep.mubr.f32.mxu0 0.0
      %4887 = vmatmul.mubr.f32.gmra.mrb[0].mxu0 %v4748
      %v4888 = vpop.f32.mrb[0].mxu0
      %v4889 = vadd.f32 0.0, %v4888
      %v4890 = vpop.f32.mrb[0].mxu0
      %4891 = vmatprep.mubr.f32.mxu0 0.0
      %4892 = vmatmul.mubr.f32.gmra.mrb[0].mxu0 %v4749
      %v4893 = vpop.f32.mrb[0].mxu0
      %v4894 = vadd.f32 0.0, %v4893
      %v4895 = vpop.f32.mrb[0].mxu0
      %4896 = vmatprep.mubr.f32.mxu0 0.0
      %4897 = vmatmul.mubr.f32.gmra.mrb[0].mxu0 %v4750
      %v4898 = vpop.f32.mrb[0].mxu0
      %v4899 = vadd.f32 0.0, %v4898
      %v4900 = vpop.f32.mrb[0].mxu0
      %4901 = vmatprep.mubr.f32.mxu0 0.0
      %4902 = vmatmul.mubr.f32.gmra.mrb[0].mxu0 %v4751
      %v4903 = vpop.f32.mrb[0].mxu0
      %v4904 = vadd.f32 0.0, %v4903
      %v4905 = vpop.f32.mrb[0].mxu0
      %4906 = vmatprep.mubr.f32.mxu0 0.0
      %4907 = vmatmul.mubr.f32.gmra.mrb[0].mxu0 %v4752
      %v4908 = vpop.f32.mrb[0].mxu0
      %v4909 = vadd.f32 0.0, %v4908
      %v4910 = vpop.f32.mrb[0].mxu0
      %4911 = vmatprep.mubr.f32.mxu0 0.0
      %4912 = vmatmul.mubr.f32.gmra.mrb[0].mxu0 %v4753
      %v4913 = vpop.f32.mrb[0].mxu0
      %v4914 = vadd.f32 0.0, %v4913
      %v4915 = vpop.f32.mrb[0].mxu0
      %4916 = vmatprep.mubr.f32.mxu0 0.0
      %4917 = vmatmul.mubr.f32.gmra.mrb[0].mxu0 %v4754
      %v4918 = vpop.f32.mrb[0].mxu0
      %v4919 = vadd.f32 0.0, %v4918
      %v4920 = vpop.f32.mrb[0].mxu0
      %4921 = vmatprep.mubr.f32.mxu0 0.0
      %4922 = vmatmul.mubr.f32.gmra.mrb[0].mxu0 %v4755
      %v4923 = vpop.f32.mrb[0].mxu0
      %v4924 = vadd.f32 0.0, %v4923
      %v4925 = vpop.f32.mrb[0].mxu0
      %4926 = vdwg.mxu0
      %v4927 = vadd.f32 %v4720, %v4839
      %v4928 = vadd.f32 %v4721, %v4844
      %v4929 = vadd.f32 %v4722, %v4849
      %v4930 = vadd.f32 %v4723, %v4854
      %v4931 = vadd.f32 %v4724, %v4859
      %v4932 = vadd.f32 %v4725, %v4864
      %v4933 = vadd.f32 %v4726, %v4869
      %v4934 = vadd.f32 %v4727, %v4874
      %v4935 = vadd.f32 %v4728, %v4879
      %v4936 = vadd.f32 %v4729, %v4884
      %v4937 = vadd.f32 %v4730, %v4889
      %v4938 = vadd.f32 %v4731, %v4894
      %v4939 = vadd.f32 %v4732, %v4899
      %v4940 = vadd.f32 %v4733, %v4904
      %v4941 = vadd.f32 %v4734, %v4909
      %v4942 = vadd.f32 %v4735, %v4914
      %v4943 = vadd.f32 %v4736, %v4919
      %v4944 = vadd.f32 %v4737, %v4924
      %v4945 = vld [vmem:[#allocation2 + $0x2c] sm:$0xff]
      %v4946 = vld [vmem:[#allocation2 + $0x34] sm:$0xff]
      %v4947 = vld [vmem:[#allocation2 + $0x3c] sm:$0xff]
      %v4948 = vld [vmem:[#allocation2 + $0x44] sm:$0xff]
      %v4949 = vld [vmem:[#allocation2 + $0x4c] sm:$0xff]
      %v4950 = vld [vmem:[#allocation2 + $0x54] sm:$0xff]
      %v4951 = vld [vmem:[#allocation2 + $0x5c] sm:$0xff]
      %v4952 = vld [vmem:[#allocation2 + $0x64] sm:$0xff]
      %v4953 = vld [vmem:[#allocation2 + $0x6c] sm:$0xff]
      %v4954 = vld [vmem:[#allocation2 + $0x74] sm:$0xff]
      %v4955 = vld [vmem:[#allocation2 + $0x7c] sm:$0xff]
      %v4956 = vld [vmem:[#allocation2 + $0x84] sm:$0xff]
      %v4957 = vld [vmem:[#allocation2 + $0x8c] sm:$0xff]
      %v4958 = vld [vmem:[#allocation2 + $0x94] sm:$0xff]
      %v4959 = vld [vmem:[#allocation2 + $0x9c] sm:$0xff]
      %v4960 = vld [vmem:[#allocation2 + $0xa4] sm:$0xff]
      %v4961 = vld [vmem:[#allocation2 + $0xac] sm:$0xff]
      %v4962 = vld [vmem:[#allocation2 + $0xb4] sm:$0xf]
      %v4963 = vld [vmem:[%s3 + $0x880] sm:$0xff]
      %v4964 = vld [vmem:[%s3 + $0x888] sm:$0xff]
      %v4965 = vld [vmem:[%s3 + $0x890] sm:$0xff]
      %v4966 = vld [vmem:[%s3 + $0x898] sm:$0xff]
      %v4967 = vld [vmem:[%s3 + $0x8a0] sm:$0xff]
      %v4968 = vld [vmem:[%s3 + $0x8a8] sm:$0xff]
      %v4969 = vld [vmem:[%s3 + $0x8b0] sm:$0xff]
      %v4970 = vld [vmem:[%s3 + $0x8b8] sm:$0xff]
      %v4971 = vld [vmem:[%s3 + $0x8c0] sm:$0xff]
      %v4972 = vld [vmem:[%s3 + $0x8c8] sm:$0xff]
      %v4973 = vld [vmem:[%s3 + $0x8d0] sm:$0xff]
      %v4974 = vld [vmem:[%s3 + $0x8d8] sm:$0xff]
      %v4975 = vld [vmem:[%s3 + $0x8e0] sm:$0xff]
      %v4976 = vld [vmem:[%s3 + $0x8e8] sm:$0xff]
      %v4977 = vld [vmem:[%s3 + $0x8f0] sm:$0xff]
      %v4978 = vld [vmem:[%s3 + $0x8f8] sm:$0xff]
      %4979 = vmatprep.subr.mxu0 0.0
      %4980 = vmatpush1.msra.mxu0 %v4963
      %4981 = vmatprep.subr.mxu0 0.0
      %4982 = vmatpush1.msra.mxu0 %v4964
      %4983 = vmatprep.subr.mxu0 0.0
      %4984 = vmatpush1.msra.mxu0 %v4965
      %4985 = vmatprep.subr.mxu0 0.0
      %4986 = vmatpush1.msra.mxu0 %v4966
      %4987 = vmatprep.subr.mxu0 0.0
      %4988 = vmatpush1.msra.mxu0 %v4967
      %4989 = vmatprep.subr.mxu0 0.0
      %4990 = vmatpush1.msra.mxu0 %v4968
      %4991 = vmatprep.subr.mxu0 0.0
      %4992 = vmatpush1.msra.mxu0 %v4969
      %4993 = vmatprep.subr.mxu0 0.0
      %4994 = vmatpush1.msra.mxu0 %v4970
      %4995 = vmatprep.subr.mxu0 0.0
      %4996 = vmatpush1.msra.mxu0 %v4971
      %4997 = vmatprep.subr.mxu0 0.0
      %4998 = vmatpush1.msra.mxu0 %v4972
      %4999 = vmatprep.subr.mxu0 0.0
      %5000 = vmatpush1.msra.mxu0 %v4973
      %5001 = vmatprep.subr.mxu0 0.0
      %5002 = vmatpush1.msra.mxu0 %v4974
      %5003 = vmatprep.subr.mxu0 0.0
      %5004 = vmatpush1.msra.mxu0 %v4975
      %5005 = vmatprep.subr.mxu0 0.0
      %5006 = vmatpush1.msra.mxu0 %v4976
      %5007 = vmatprep.subr.mxu0 0.0
      %5008 = vmatpush1.msra.mxu0 %v4977
      %5009 = vmatprep.subr.mxu0 0.0
      %5010 = vmatpush1.msra.mxu0 %v4978
      %5011 = vmatprep.subr.mxu0 0.0
      %5012 = vmatpush1.msra.mxu0 0.0
      %5013 = vmatprep.subr.mxu0 0.0
      %5014 = vmatpush1.msra.mxu0 0.0
      %5015 = vmatprep.subr.mxu0 0.0
      %5016 = vmatpush1.msra.mxu0 0.0
      %5017 = vmatprep.subr.mxu0 0.0
      %5018 = vmatpush1.msra.mxu0 0.0
      %5019 = vmatprep.subr.mxu0 0.0
      %5020 = vmatpush1.msra.mxu0 0.0
      %5021 = vmatprep.subr.mxu0 0.0
      %5022 = vmatpush1.msra.mxu0 0.0
      %5023 = vmatprep.subr.mxu0 0.0
      %5024 = vmatpush1.msra.mxu0 0.0
      %5025 = vmatprep.subr.mxu0 0.0
      %5026 = vmatpush1.msra.mxu0 0.0
      %5027 = vmatprep.subr.mxu0 0.0
      %5028 = vmatpush1.msra.mxu0 0.0
      %5029 = vmatprep.subr.mxu0 0.0
      %5030 = vmatpush1.msra.mxu0 0.0
      %5031 = vmatprep.subr.mxu0 0.0
      %5032 = vmatpush1.msra.mxu0 0.0
      %5033 = vmatprep.subr.mxu0 0.0
      %5034 = vmatpush1.msra.mxu0 0.0
      %5035 = vmatprep.subr.mxu0 0.0
      %5036 = vmatpush1.msra.mxu0 0.0
      %5037 = vmatprep.subr.mxu0 0.0
      %5038 = vmatpush1.msra.mxu0 0.0
      %5039 = vmatprep.subr.mxu0 0.0
      %5040 = vmatpush1.msra.mxu0 0.0
      %5041 = vmatprep.subr.mxu0 0.0
      %5042 = vmatpush1.msra.mxu0 0.0
      %5043 = vmatprep.mubr.f32.mxu0 0.0
      %5044 = vmatmul.mubr.f32.gmra.mrb[0].mxu0 %v4945
      %v5045 = vpop.f32.mrb[0].mxu0
      %v5046 = vadd.f32 0.0, %v5045
      %v5047 = vpop.f32.mrb[0].mxu0
      %5048 = vmatprep.mubr.f32.mxu0 0.0
      %5049 = vmatmul.mubr.f32.gmra.mrb[0].mxu0 %v4946
      %v5050 = vpop.f32.mrb[0].mxu0
      %v5051 = vadd.f32 0.0, %v5050
      %v5052 = vpop.f32.mrb[0].mxu0
      %5053 = vmatprep.mubr.f32.mxu0 0.0
      %5054 = vmatmul.mubr.f32.gmra.mrb[0].mxu0 %v4947
      %v5055 = vpop.f32.mrb[0].mxu0
      %v5056 = vadd.f32 0.0, %v5055
      %v5057 = vpop.f32.mrb[0].mxu0
      %5058 = vmatprep.mubr.f32.mxu0 0.0
      %5059 = vmatmul.mubr.f32.gmra.mrb[0].mxu0 %v4948
      %v5060 = vpop.f32.mrb[0].mxu0
      %v5061 = vadd.f32 0.0, %v5060
      %v5062 = vpop.f32.mrb[0].mxu0
      %5063 = vmatprep.mubr.f32.mxu0 0.0
      %5064 = vmatmul.mubr.f32.gmra.mrb[0].mxu0 %v4949
      %v5065 = vpop.f32.mrb[0].mxu0
      %v5066 = vadd.f32 0.0, %v5065
      %v5067 = vpop.f32.mrb[0].mxu0
      %5068 = vmatprep.mubr.f32.mxu0 0.0
      %5069 = vmatmul.mubr.f32.gmra.mrb[0].mxu0 %v4950
      %v5070 = vpop.f32.mrb[0].mxu0
      %v5071 = vadd.f32 0.0, %v5070
      %v5072 = vpop.f32.mrb[0].mxu0
      %5073 = vmatprep.mubr.f32.mxu0 0.0
      %5074 = vmatmul.mubr.f32.gmra.mrb[0].mxu0 %v4951
      %v5075 = vpop.f32.mrb[0].mxu0
      %v5076 = vadd.f32 0.0, %v5075
      %v5077 = vpop.f32.mrb[0].mxu0
      %5078 = vmatprep.mubr.f32.mxu0 0.0
      %5079 = vmatmul.mubr.f32.gmra.mrb[0].mxu0 %v4952
      %v5080 = vpop.f32.mrb[0].mxu0
      %v5081 = vadd.f32 0.0, %v5080
      %v5082 = vpop.f32.mrb[0].mxu0
      %5083 = vmatprep.mubr.f32.mxu0 0.0
      %5084 = vmatmul.mubr.f32.gmra.mrb[0].mxu0 %v4953
      %v5085 = vpop.f32.mrb[0].mxu0
      %v5086 = vadd.f32 0.0, %v5085
      %v5087 = vpop.f32.mrb[0].mxu0
      %5088 = vmatprep.mubr.f32.mxu0 0.0
      %5089 = vmatmul.mubr.f32.gmra.mrb[0].mxu0 %v4954
      %v5090 = vpop.f32.mrb[0].mxu0
      %v5091 = vadd.f32 0.0, %v5090
      %v5092 = vpop.f32.mrb[0].mxu0
      %5093 = vmatprep.mubr.f32.mxu0 0.0
      %5094 = vmatmul.mubr.f32.gmra.mrb[0].mxu0 %v4955
      %v5095 = vpop.f32.mrb[0].mxu0
      %v5096 = vadd.f32 0.0, %v5095
      %v5097 = vpop.f32.mrb[0].mxu0
      %5098 = vmatprep.mubr.f32.mxu0 0.0
      %5099 = vmatmul.mubr.f32.gmra.mrb[0].mxu0 %v4956
      %v5100 = vpop.f32.mrb[0].mxu0
      %v5101 = vadd.f32 0.0, %v5100
      %v5102 = vpop.f32.mrb[0].mxu0
      %5103 = vmatprep.mubr.f32.mxu0 0.0
      %5104 = vmatmul.mubr.f32.gmra.mrb[0].mxu0 %v4957
      %v5105 = vpop.f32.mrb[0].mxu0
      %v5106 = vadd.f32 0.0, %v5105
      %v5107 = vpop.f32.mrb[0].mxu0
      %5108 = vmatprep.mubr.f32.mxu0 0.0
      %5109 = vmatmul.mubr.f32.gmra.mrb[0].mxu0 %v4958
      %v5110 = vpop.f32.mrb[0].mxu0
      %v5111 = vadd.f32 0.0, %v5110
      %v5112 = vpop.f32.mrb[0].mxu0
      %5113 = vmatprep.mubr.f32.mxu0 0.0
      %5114 = vmatmul.mubr.f32.gmra.mrb[0].mxu0 %v4959
      %v5115 = vpop.f32.mrb[0].mxu0
      %v5116 = vadd.f32 0.0, %v5115
      %v5117 = vpop.f32.mrb[0].mxu0
      %5118 = vmatprep.mubr.f32.mxu0 0.0
      %5119 = vmatmul.mubr.f32.gmra.mrb[0].mxu0 %v4960
      %v5120 = vpop.f32.mrb[0].mxu0
      %v5121 = vadd.f32 0.0, %v5120
      %v5122 = vpop.f32.mrb[0].mxu0
      %5123 = vmatprep.mubr.f32.mxu0 0.0
      %5124 = vmatmul.mubr.f32.gmra.mrb[0].mxu0 %v4961
      %v5125 = vpop.f32.mrb[0].mxu0
      %v5126 = vadd.f32 0.0, %v5125
      %v5127 = vpop.f32.mrb[0].mxu0
      %5128 = vmatprep.mubr.f32.mxu0 0.0
      %5129 = vmatmul.mubr.f32.gmra.mrb[0].mxu0 %v4962
      %v5130 = vpop.f32.mrb[0].mxu0
      %v5131 = vadd.f32 0.0, %v5130
      %v5132 = vpop.f32.mrb[0].mxu0
      %5133 = vdwg.mxu0
      %v5134 = vadd.f32 %v4927, %v5046
      %v5135 = vadd.f32 %v4928, %v5051
      %v5136 = vadd.f32 %v4929, %v5056
      %v5137 = vadd.f32 %v4930, %v5061
      %v5138 = vadd.f32 %v4931, %v5066
      %v5139 = vadd.f32 %v4932, %v5071
      %v5140 = vadd.f32 %v4933, %v5076
      %v5141 = vadd.f32 %v4934, %v5081
      %v5142 = vadd.f32 %v4935, %v5086
      %v5143 = vadd.f32 %v4936, %v5091
      %v5144 = vadd.f32 %v4937, %v5096
      %v5145 = vadd.f32 %v4938, %v5101
      %v5146 = vadd.f32 %v4939, %v5106
      %v5147 = vadd.f32 %v4940, %v5111
      %v5148 = vadd.f32 %v4941, %v5116
      %v5149 = vadd.f32 %v4942, %v5121
      %v5150 = vadd.f32 %v4943, %v5126
      %v5151 = vadd.f32 %v4944, %v5131
      %v5152 = vld [vmem:[#allocation2 + $0x2d] sm:$0xff]
      %v5153 = vld [vmem:[#allocation2 + $0x35] sm:$0xff]
      %v5154 = vld [vmem:[#allocation2 + $0x3d] sm:$0xff]
      %v5155 = vld [vmem:[#allocation2 + $0x45] sm:$0xff]
      %v5156 = vld [vmem:[#allocation2 + $0x4d] sm:$0xff]
      %v5157 = vld [vmem:[#allocation2 + $0x55] sm:$0xff]
      %v5158 = vld [vmem:[#allocation2 + $0x5d] sm:$0xff]
      %v5159 = vld [vmem:[#allocation2 + $0x65] sm:$0xff]
      %v5160 = vld [vmem:[#allocation2 + $0x6d] sm:$0xff]
      %v5161 = vld [vmem:[#allocation2 + $0x75] sm:$0xff]
      %v5162 = vld [vmem:[#allocation2 + $0x7d] sm:$0xff]
      %v5163 = vld [vmem:[#allocation2 + $0x85] sm:$0xff]
      %v5164 = vld [vmem:[#allocation2 + $0x8d] sm:$0xff]
      %v5165 = vld [vmem:[#allocation2 + $0x95] sm:$0xff]
      %v5166 = vld [vmem:[#allocation2 + $0x9d] sm:$0xff]
      %v5167 = vld [vmem:[#allocation2 + $0xa5] sm:$0xff]
      %v5168 = vld [vmem:[#allocation2 + $0xad] sm:$0xff]
      %v5169 = vld [vmem:[#allocation2 + $0xb5] sm:$0xf]
      %v5170 = vld [vmem:[%s3 + $0x900] sm:$0xff]
      %v5171 = vld [vmem:[%s3 + $0x908] sm:$0xff]
      %v5172 = vld [vmem:[%s3 + $0x910] sm:$0xff]
      %v5173 = vld [vmem:[%s3 + $0x918] sm:$0xff]
      %v5174 = vld [vmem:[%s3 + $0x920] sm:$0xff]
      %v5175 = vld [vmem:[%s3 + $0x928] sm:$0xff]
      %v5176 = vld [vmem:[%s3 + $0x930] sm:$0xff]
      %v5177 = vld [vmem:[%s3 + $0x938] sm:$0xff]
      %v5178 = vld [vmem:[%s3 + $0x940] sm:$0xff]
      %v5179 = vld [vmem:[%s3 + $0x948] sm:$0xff]
      %v5180 = vld [vmem:[%s3 + $0x950] sm:$0xff]
      %v5181 = vld [vmem:[%s3 + $0x958] sm:$0xff]
      %v5182 = vld [vmem:[%s3 + $0x960] sm:$0xff]
      %v5183 = vld [vmem:[%s3 + $0x968] sm:$0xff]
      %v5184 = vld [vmem:[%s3 + $0x970] sm:$0xff]
      %v5185 = vld [vmem:[%s3 + $0x978] sm:$0xff]
      %5186 = vmatprep.subr.mxu0 0.0
      %5187 = vmatpush1.msra.mxu0 %v5170
      %5188 = vmatprep.subr.mxu0 0.0
      %5189 = vmatpush1.msra.mxu0 %v5171
      %5190 = vmatprep.subr.mxu0 0.0
      %5191 = vmatpush1.msra.mxu0 %v5172
      %5192 = vmatprep.subr.mxu0 0.0
      %5193 = vmatpush1.msra.mxu0 %v5173
      %5194 = vmatprep.subr.mxu0 0.0
      %5195 = vmatpush1.msra.mxu0 %v5174
      %5196 = vmatprep.subr.mxu0 0.0
      %5197 = vmatpush1.msra.mxu0 %v5175
      %5198 = vmatprep.subr.mxu0 0.0
      %5199 = vmatpush1.msra.mxu0 %v5176
      %5200 = vmatprep.subr.mxu0 0.0
      %5201 = vmatpush1.msra.mxu0 %v5177
      %5202 = vmatprep.subr.mxu0 0.0
      %5203 = vmatpush1.msra.mxu0 %v5178
      %5204 = vmatprep.subr.mxu0 0.0
      %5205 = vmatpush1.msra.mxu0 %v5179
      %5206 = vmatprep.subr.mxu0 0.0
      %5207 = vmatpush1.msra.mxu0 %v5180
      %5208 = vmatprep.subr.mxu0 0.0
      %5209 = vmatpush1.msra.mxu0 %v5181
      %5210 = vmatprep.subr.mxu0 0.0
      %5211 = vmatpush1.msra.mxu0 %v5182
      %5212 = vmatprep.subr.mxu0 0.0
      %5213 = vmatpush1.msra.mxu0 %v5183
      %5214 = vmatprep.subr.mxu0 0.0
      %5215 = vmatpush1.msra.mxu0 %v5184
      %5216 = vmatprep.subr.mxu0 0.0
      %5217 = vmatpush1.msra.mxu0 %v5185
      %5218 = vmatprep.subr.mxu0 0.0
      %5219 = vmatpush1.msra.mxu0 0.0
      %5220 = vmatprep.subr.mxu0 0.0
      %5221 = vmatpush1.msra.mxu0 0.0
      %5222 = vmatprep.subr.mxu0 0.0
      %5223 = vmatpush1.msra.mxu0 0.0
      %5224 = vmatprep.subr.mxu0 0.0
      %5225 = vmatpush1.msra.mxu0 0.0
      %5226 = vmatprep.subr.mxu0 0.0
      %5227 = vmatpush1.msra.mxu0 0.0
      %5228 = vmatprep.subr.mxu0 0.0
      %5229 = vmatpush1.msra.mxu0 0.0
      %5230 = vmatprep.subr.mxu0 0.0
      %5231 = vmatpush1.msra.mxu0 0.0
      %5232 = vmatprep.subr.mxu0 0.0
      %5233 = vmatpush1.msra.mxu0 0.0
      %5234 = vmatprep.subr.mxu0 0.0
      %5235 = vmatpush1.msra.mxu0 0.0
      %5236 = vmatprep.subr.mxu0 0.0
      %5237 = vmatpush1.msra.mxu0 0.0
      %5238 = vmatprep.subr.mxu0 0.0
      %5239 = vmatpush1.msra.mxu0 0.0
      %5240 = vmatprep.subr.mxu0 0.0
      %5241 = vmatpush1.msra.mxu0 0.0
      %5242 = vmatprep.subr.mxu0 0.0
      %5243 = vmatpush1.msra.mxu0 0.0
      %5244 = vmatprep.subr.mxu0 0.0
      %5245 = vmatpush1.msra.mxu0 0.0
      %5246 = vmatprep.subr.mxu0 0.0
      %5247 = vmatpush1.msra.mxu0 0.0
      %5248 = vmatprep.subr.mxu0 0.0
      %5249 = vmatpush1.msra.mxu0 0.0
      %5250 = vmatprep.mubr.f32.mxu0 0.0
      %5251 = vmatmul.mubr.f32.gmra.mrb[0].mxu0 %v5152
      %v5252 = vpop.f32.mrb[0].mxu0
      %v5253 = vadd.f32 0.0, %v5252
      %v5254 = vpop.f32.mrb[0].mxu0
      %5255 = vmatprep.mubr.f32.mxu0 0.0
      %5256 = vmatmul.mubr.f32.gmra.mrb[0].mxu0 %v5153
      %v5257 = vpop.f32.mrb[0].mxu0
      %v5258 = vadd.f32 0.0, %v5257
      %v5259 = vpop.f32.mrb[0].mxu0
      %5260 = vmatprep.mubr.f32.mxu0 0.0
      %5261 = vmatmul.mubr.f32.gmra.mrb[0].mxu0 %v5154
      %v5262 = vpop.f32.mrb[0].mxu0
      %v5263 = vadd.f32 0.0, %v5262
      %v5264 = vpop.f32.mrb[0].mxu0
      %5265 = vmatprep.mubr.f32.mxu0 0.0
      %5266 = vmatmul.mubr.f32.gmra.mrb[0].mxu0 %v5155
      %v5267 = vpop.f32.mrb[0].mxu0
      %v5268 = vadd.f32 0.0, %v5267
      %v5269 = vpop.f32.mrb[0].mxu0
      %5270 = vmatprep.mubr.f32.mxu0 0.0
      %5271 = vmatmul.mubr.f32.gmra.mrb[0].mxu0 %v5156
      %v5272 = vpop.f32.mrb[0].mxu0
      %v5273 = vadd.f32 0.0, %v5272
      %v5274 = vpop.f32.mrb[0].mxu0
      %5275 = vmatprep.mubr.f32.mxu0 0.0
      %5276 = vmatmul.mubr.f32.gmra.mrb[0].mxu0 %v5157
      %v5277 = vpop.f32.mrb[0].mxu0
      %v5278 = vadd.f32 0.0, %v5277
      %v5279 = vpop.f32.mrb[0].mxu0
      %5280 = vmatprep.mubr.f32.mxu0 0.0
      %5281 = vmatmul.mubr.f32.gmra.mrb[0].mxu0 %v5158
      %v5282 = vpop.f32.mrb[0].mxu0
      %v5283 = vadd.f32 0.0, %v5282
      %v5284 = vpop.f32.mrb[0].mxu0
      %5285 = vmatprep.mubr.f32.mxu0 0.0
      %5286 = vmatmul.mubr.f32.gmra.mrb[0].mxu0 %v5159
      %v5287 = vpop.f32.mrb[0].mxu0
      %v5288 = vadd.f32 0.0, %v5287
      %v5289 = vpop.f32.mrb[0].mxu0
      %5290 = vmatprep.mubr.f32.mxu0 0.0
      %5291 = vmatmul.mubr.f32.gmra.mrb[0].mxu0 %v5160
      %v5292 = vpop.f32.mrb[0].mxu0
      %v5293 = vadd.f32 0.0, %v5292
      %v5294 = vpop.f32.mrb[0].mxu0
      %5295 = vmatprep.mubr.f32.mxu0 0.0
      %5296 = vmatmul.mubr.f32.gmra.mrb[0].mxu0 %v5161
      %v5297 = vpop.f32.mrb[0].mxu0
      %v5298 = vadd.f32 0.0, %v5297
      %v5299 = vpop.f32.mrb[0].mxu0
      %5300 = vmatprep.mubr.f32.mxu0 0.0
      %5301 = vmatmul.mubr.f32.gmra.mrb[0].mxu0 %v5162
      %v5302 = vpop.f32.mrb[0].mxu0
      %v5303 = vadd.f32 0.0, %v5302
      %v5304 = vpop.f32.mrb[0].mxu0
      %5305 = vmatprep.mubr.f32.mxu0 0.0
      %5306 = vmatmul.mubr.f32.gmra.mrb[0].mxu0 %v5163
      %v5307 = vpop.f32.mrb[0].mxu0
      %v5308 = vadd.f32 0.0, %v5307
      %v5309 = vpop.f32.mrb[0].mxu0
      %5310 = vmatprep.mubr.f32.mxu0 0.0
      %5311 = vmatmul.mubr.f32.gmra.mrb[0].mxu0 %v5164
      %v5312 = vpop.f32.mrb[0].mxu0
      %v5313 = vadd.f32 0.0, %v5312
      %v5314 = vpop.f32.mrb[0].mxu0
      %5315 = vmatprep.mubr.f32.mxu0 0.0
      %5316 = vmatmul.mubr.f32.gmra.mrb[0].mxu0 %v5165
      %v5317 = vpop.f32.mrb[0].mxu0
      %v5318 = vadd.f32 0.0, %v5317
      %v5319 = vpop.f32.mrb[0].mxu0
      %5320 = vmatprep.mubr.f32.mxu0 0.0
      %5321 = vmatmul.mubr.f32.gmra.mrb[0].mxu0 %v5166
      %v5322 = vpop.f32.mrb[0].mxu0
      %v5323 = vadd.f32 0.0, %v5322
      %v5324 = vpop.f32.mrb[0].mxu0
      %5325 = vmatprep.mubr.f32.mxu0 0.0
      %5326 = vmatmul.mubr.f32.gmra.mrb[0].mxu0 %v5167
      %v5327 = vpop.f32.mrb[0].mxu0
      %v5328 = vadd.f32 0.0, %v5327
      %v5329 = vpop.f32.mrb[0].mxu0
      %5330 = vmatprep.mubr.f32.mxu0 0.0
      %5331 = vmatmul.mubr.f32.gmra.mrb[0].mxu0 %v5168
      %v5332 = vpop.f32.mrb[0].mxu0
      %v5333 = vadd.f32 0.0, %v5332
      %v5334 = vpop.f32.mrb[0].mxu0
      %5335 = vmatprep.mubr.f32.mxu0 0.0
      %5336 = vmatmul.mubr.f32.gmra.mrb[0].mxu0 %v5169
      %v5337 = vpop.f32.mrb[0].mxu0
      %v5338 = vadd.f32 0.0, %v5337
      %v5339 = vpop.f32.mrb[0].mxu0
      %5340 = vdwg.mxu0
      %v5341 = vadd.f32 %v5134, %v5253
      %v5342 = vadd.f32 %v5135, %v5258
      %v5343 = vadd.f32 %v5136, %v5263
      %v5344 = vadd.f32 %v5137, %v5268
      %v5345 = vadd.f32 %v5138, %v5273
      %v5346 = vadd.f32 %v5139, %v5278
      %v5347 = vadd.f32 %v5140, %v5283
      %v5348 = vadd.f32 %v5141, %v5288
      %v5349 = vadd.f32 %v5142, %v5293
      %v5350 = vadd.f32 %v5143, %v5298
      %v5351 = vadd.f32 %v5144, %v5303
      %v5352 = vadd.f32 %v5145, %v5308
      %v5353 = vadd.f32 %v5146, %v5313
      %v5354 = vadd.f32 %v5147, %v5318
      %v5355 = vadd.f32 %v5148, %v5323
      %v5356 = vadd.f32 %v5149, %v5328
      %v5357 = vadd.f32 %v5150, %v5333
      %v5358 = vadd.f32 %v5151, %v5338
      %v5359 = vld [vmem:[#allocation2 + $0x2e] sm:$0xff]
      %v5360 = vld [vmem:[#allocation2 + $0x36] sm:$0xff]
      %v5361 = vld [vmem:[#allocation2 + $0x3e] sm:$0xff]
      %v5362 = vld [vmem:[#allocation2 + $0x46] sm:$0xff]
      %v5363 = vld [vmem:[#allocation2 + $0x4e] sm:$0xff]
      %v5364 = vld [vmem:[#allocation2 + $0x56] sm:$0xff]
      %v5365 = vld [vmem:[#allocation2 + $0x5e] sm:$0xff]
      %v5366 = vld [vmem:[#allocation2 + $0x66] sm:$0xff]
      %v5367 = vld [vmem:[#allocation2 + $0x6e] sm:$0xff]
      %v5368 = vld [vmem:[#allocation2 + $0x76] sm:$0xff]
      %v5369 = vld [vmem:[#allocation2 + $0x7e] sm:$0xff]
      %v5370 = vld [vmem:[#allocation2 + $0x86] sm:$0xff]
      %v5371 = vld [vmem:[#allocation2 + $0x8e] sm:$0xff]
      %v5372 = vld [vmem:[#allocation2 + $0x96] sm:$0xff]
      %v5373 = vld [vmem:[#allocation2 + $0x9e] sm:$0xff]
      %v5374 = vld [vmem:[#allocation2 + $0xa6] sm:$0xff]
      %v5375 = vld [vmem:[#allocation2 + $0xae] sm:$0xff]
      %v5376 = vld [vmem:[#allocation2 + $0xb6] sm:$0xf]
      %v5377 = vld [vmem:[%s3 + $0x980] sm:$0xff]
      %v5378 = vld [vmem:[%s3 + $0x988] sm:$0xff]
      %v5379 = vld [vmem:[%s3 + $0x990] sm:$0xff]
      %v5380 = vld [vmem:[%s3 + $0x998] sm:$0xff]
      %v5381 = vld [vmem:[%s3 + $0x9a0] sm:$0xff]
      %v5382 = vld [vmem:[%s3 + $0x9a8] sm:$0xff]
      %v5383 = vld [vmem:[%s3 + $0x9b0] sm:$0xff]
      %v5384 = vld [vmem:[%s3 + $0x9b8] sm:$0xff]
      %v5385 = vld [vmem:[%s3 + $0x9c0] sm:$0xff]
      %v5386 = vld [vmem:[%s3 + $0x9c8] sm:$0xff]
      %v5387 = vld [vmem:[%s3 + $0x9d0] sm:$0xff]
      %v5388 = vld [vmem:[%s3 + $0x9d8] sm:$0xff]
      %v5389 = vld [vmem:[%s3 + $0x9e0] sm:$0xff]
      %v5390 = vld [vmem:[%s3 + $0x9e8] sm:$0xff]
      %v5391 = vld [vmem:[%s3 + $0x9f0] sm:$0xff]
      %v5392 = vld [vmem:[%s3 + $0x9f8] sm:$0xff]
      %5393 = vmatprep.subr.mxu0 0.0
      %5394 = vmatpush1.msra.mxu0 %v5377
      %5395 = vmatprep.subr.mxu0 0.0
      %5396 = vmatpush1.msra.mxu0 %v5378
      %5397 = vmatprep.subr.mxu0 0.0
      %5398 = vmatpush1.msra.mxu0 %v5379
      %5399 = vmatprep.subr.mxu0 0.0
      %5400 = vmatpush1.msra.mxu0 %v5380
      %5401 = vmatprep.subr.mxu0 0.0
      %5402 = vmatpush1.msra.mxu0 %v5381
      %5403 = vmatprep.subr.mxu0 0.0
      %5404 = vmatpush1.msra.mxu0 %v5382
      %5405 = vmatprep.subr.mxu0 0.0
      %5406 = vmatpush1.msra.mxu0 %v5383
      %5407 = vmatprep.subr.mxu0 0.0
      %5408 = vmatpush1.msra.mxu0 %v5384
      %5409 = vmatprep.subr.mxu0 0.0
      %5410 = vmatpush1.msra.mxu0 %v5385
      %5411 = vmatprep.subr.mxu0 0.0
      %5412 = vmatpush1.msra.mxu0 %v5386
      %5413 = vmatprep.subr.mxu0 0.0
      %5414 = vmatpush1.msra.mxu0 %v5387
      %5415 = vmatprep.subr.mxu0 0.0
      %5416 = vmatpush1.msra.mxu0 %v5388
      %5417 = vmatprep.subr.mxu0 0.0
      %5418 = vmatpush1.msra.mxu0 %v5389
      %5419 = vmatprep.subr.mxu0 0.0
      %5420 = vmatpush1.msra.mxu0 %v5390
      %5421 = vmatprep.subr.mxu0 0.0
      %5422 = vmatpush1.msra.mxu0 %v5391
      %5423 = vmatprep.subr.mxu0 0.0
      %5424 = vmatpush1.msra.mxu0 %v5392
      %5425 = vmatprep.subr.mxu0 0.0
      %5426 = vmatpush1.msra.mxu0 0.0
      %5427 = vmatprep.subr.mxu0 0.0
      %5428 = vmatpush1.msra.mxu0 0.0
      %5429 = vmatprep.subr.mxu0 0.0
      %5430 = vmatpush1.msra.mxu0 0.0
      %5431 = vmatprep.subr.mxu0 0.0
      %5432 = vmatpush1.msra.mxu0 0.0
      %5433 = vmatprep.subr.mxu0 0.0
      %5434 = vmatpush1.msra.mxu0 0.0
      %5435 = vmatprep.subr.mxu0 0.0
      %5436 = vmatpush1.msra.mxu0 0.0
      %5437 = vmatprep.subr.mxu0 0.0
      %5438 = vmatpush1.msra.mxu0 0.0
      %5439 = vmatprep.subr.mxu0 0.0
      %5440 = vmatpush1.msra.mxu0 0.0
      %5441 = vmatprep.subr.mxu0 0.0
      %5442 = vmatpush1.msra.mxu0 0.0
      %5443 = vmatprep.subr.mxu0 0.0
      %5444 = vmatpush1.msra.mxu0 0.0
      %5445 = vmatprep.subr.mxu0 0.0
      %5446 = vmatpush1.msra.mxu0 0.0
      %5447 = vmatprep.subr.mxu0 0.0
      %5448 = vmatpush1.msra.mxu0 0.0
      %5449 = vmatprep.subr.mxu0 0.0
      %5450 = vmatpush1.msra.mxu0 0.0
      %5451 = vmatprep.subr.mxu0 0.0
      %5452 = vmatpush1.msra.mxu0 0.0
      %5453 = vmatprep.subr.mxu0 0.0
      %5454 = vmatpush1.msra.mxu0 0.0
      %5455 = vmatprep.subr.mxu0 0.0
      %5456 = vmatpush1.msra.mxu0 0.0
      %5457 = vmatprep.mubr.f32.mxu0 0.0
      %5458 = vmatmul.mubr.f32.gmra.mrb[0].mxu0 %v5359
      %v5459 = vpop.f32.mrb[0].mxu0
      %v5460 = vadd.f32 0.0, %v5459
      %v5461 = vpop.f32.mrb[0].mxu0
      %5462 = vmatprep.mubr.f32.mxu0 0.0
      %5463 = vmatmul.mubr.f32.gmra.mrb[0].mxu0 %v5360
      %v5464 = vpop.f32.mrb[0].mxu0
      %v5465 = vadd.f32 0.0, %v5464
      %v5466 = vpop.f32.mrb[0].mxu0
      %5467 = vmatprep.mubr.f32.mxu0 0.0
      %5468 = vmatmul.mubr.f32.gmra.mrb[0].mxu0 %v5361
      %v5469 = vpop.f32.mrb[0].mxu0
      %v5470 = vadd.f32 0.0, %v5469
      %v5471 = vpop.f32.mrb[0].mxu0
      %5472 = vmatprep.mubr.f32.mxu0 0.0
      %5473 = vmatmul.mubr.f32.gmra.mrb[0].mxu0 %v5362
      %v5474 = vpop.f32.mrb[0].mxu0
      %v5475 = vadd.f32 0.0, %v5474
      %v5476 = vpop.f32.mrb[0].mxu0
      %5477 = vmatprep.mubr.f32.mxu0 0.0
      %5478 = vmatmul.mubr.f32.gmra.mrb[0].mxu0 %v5363
      %v5479 = vpop.f32.mrb[0].mxu0
      %v5480 = vadd.f32 0.0, %v5479
      %v5481 = vpop.f32.mrb[0].mxu0
      %5482 = vmatprep.mubr.f32.mxu0 0.0
      %5483 = vmatmul.mubr.f32.gmra.mrb[0].mxu0 %v5364
      %v5484 = vpop.f32.mrb[0].mxu0
      %v5485 = vadd.f32 0.0, %v5484
      %v5486 = vpop.f32.mrb[0].mxu0
      %5487 = vmatprep.mubr.f32.mxu0 0.0
      %5488 = vmatmul.mubr.f32.gmra.mrb[0].mxu0 %v5365
      %v5489 = vpop.f32.mrb[0].mxu0
      %v5490 = vadd.f32 0.0, %v5489
      %v5491 = vpop.f32.mrb[0].mxu0
      %5492 = vmatprep.mubr.f32.mxu0 0.0
      %5493 = vmatmul.mubr.f32.gmra.mrb[0].mxu0 %v5366
      %v5494 = vpop.f32.mrb[0].mxu0
      %v5495 = vadd.f32 0.0, %v5494
      %v5496 = vpop.f32.mrb[0].mxu0
      %5497 = vmatprep.mubr.f32.mxu0 0.0
      %5498 = vmatmul.mubr.f32.gmra.mrb[0].mxu0 %v5367
      %v5499 = vpop.f32.mrb[0].mxu0
      %v5500 = vadd.f32 0.0, %v5499
      %v5501 = vpop.f32.mrb[0].mxu0
      %5502 = vmatprep.mubr.f32.mxu0 0.0
      %5503 = vmatmul.mubr.f32.gmra.mrb[0].mxu0 %v5368
      %v5504 = vpop.f32.mrb[0].mxu0
      %v5505 = vadd.f32 0.0, %v5504
      %v5506 = vpop.f32.mrb[0].mxu0
      %5507 = vmatprep.mubr.f32.mxu0 0.0
      %5508 = vmatmul.mubr.f32.gmra.mrb[0].mxu0 %v5369
      %v5509 = vpop.f32.mrb[0].mxu0
      %v5510 = vadd.f32 0.0, %v5509
      %v5511 = vpop.f32.mrb[0].mxu0
      %5512 = vmatprep.mubr.f32.mxu0 0.0
      %5513 = vmatmul.mubr.f32.gmra.mrb[0].mxu0 %v5370
      %v5514 = vpop.f32.mrb[0].mxu0
      %v5515 = vadd.f32 0.0, %v5514
      %v5516 = vpop.f32.mrb[0].mxu0
      %5517 = vmatprep.mubr.f32.mxu0 0.0
      %5518 = vmatmul.mubr.f32.gmra.mrb[0].mxu0 %v5371
      %v5519 = vpop.f32.mrb[0].mxu0
      %v5520 = vadd.f32 0.0, %v5519
      %v5521 = vpop.f32.mrb[0].mxu0
      %5522 = vmatprep.mubr.f32.mxu0 0.0
      %5523 = vmatmul.mubr.f32.gmra.mrb[0].mxu0 %v5372
      %v5524 = vpop.f32.mrb[0].mxu0
      %v5525 = vadd.f32 0.0, %v5524
      %v5526 = vpop.f32.mrb[0].mxu0
      %5527 = vmatprep.mubr.f32.mxu0 0.0
      %5528 = vmatmul.mubr.f32.gmra.mrb[0].mxu0 %v5373
      %v5529 = vpop.f32.mrb[0].mxu0
      %v5530 = vadd.f32 0.0, %v5529
      %v5531 = vpop.f32.mrb[0].mxu0
      %5532 = vmatprep.mubr.f32.mxu0 0.0
      %5533 = vmatmul.mubr.f32.gmra.mrb[0].mxu0 %v5374
      %v5534 = vpop.f32.mrb[0].mxu0
      %v5535 = vadd.f32 0.0, %v5534
      %v5536 = vpop.f32.mrb[0].mxu0
      %5537 = vmatprep.mubr.f32.mxu0 0.0
      %5538 = vmatmul.mubr.f32.gmra.mrb[0].mxu0 %v5375
      %v5539 = vpop.f32.mrb[0].mxu0
      %v5540 = vadd.f32 0.0, %v5539
      %v5541 = vpop.f32.mrb[0].mxu0
      %5542 = vmatprep.mubr.f32.mxu0 0.0
      %5543 = vmatmul.mubr.f32.gmra.mrb[0].mxu0 %v5376
      %v5544 = vpop.f32.mrb[0].mxu0
      %v5545 = vadd.f32 0.0, %v5544
      %v5546 = vpop.f32.mrb[0].mxu0
      %5547 = vdwg.mxu0
      %v5548 = vadd.f32 %v5341, %v5460
      %v5549 = vadd.f32 %v5342, %v5465
      %v5550 = vadd.f32 %v5343, %v5470
      %v5551 = vadd.f32 %v5344, %v5475
      %v5552 = vadd.f32 %v5345, %v5480
      %v5553 = vadd.f32 %v5346, %v5485
      %v5554 = vadd.f32 %v5347, %v5490
      %v5555 = vadd.f32 %v5348, %v5495
      %v5556 = vadd.f32 %v5349, %v5500
      %v5557 = vadd.f32 %v5350, %v5505
      %v5558 = vadd.f32 %v5351, %v5510
      %v5559 = vadd.f32 %v5352, %v5515
      %v5560 = vadd.f32 %v5353, %v5520
      %v5561 = vadd.f32 %v5354, %v5525
      %v5562 = vadd.f32 %v5355, %v5530
      %v5563 = vadd.f32 %v5356, %v5535
      %v5564 = vadd.f32 %v5357, %v5540
      %v5565 = vadd.f32 %v5358, %v5545
      %v5566 = vld [vmem:[#allocation2 + $0x38] sm:$0xff]
      %v5567 = vld [vmem:[#allocation2 + $0x40] sm:$0xff]
      %v5568 = vld [vmem:[#allocation2 + $0x48] sm:$0xff]
      %v5569 = vld [vmem:[#allocation2 + $0x50] sm:$0xff]
      %v5570 = vld [vmem:[#allocation2 + $0x58] sm:$0xff]
      %v5571 = vld [vmem:[#allocation2 + $0x60] sm:$0xff]
      %v5572 = vld [vmem:[#allocation2 + $0x68] sm:$0xff]
      %v5573 = vld [vmem:[#allocation2 + $0x70] sm:$0xff]
      %v5574 = vld [vmem:[#allocation2 + $0x78] sm:$0xff]
      %v5575 = vld [vmem:[#allocation2 + $0x80] sm:$0xff]
      %v5576 = vld [vmem:[#allocation2 + $0x88] sm:$0xff]
      %v5577 = vld [vmem:[#allocation2 + $0x90] sm:$0xff]
      %v5578 = vld [vmem:[#allocation2 + $0x98] sm:$0xff]
      %v5579 = vld [vmem:[#allocation2 + $0xa0] sm:$0xff]
      %v5580 = vld [vmem:[#allocation2 + $0xa8] sm:$0xff]
      %v5581 = vld [vmem:[#allocation2 + $0xb0] sm:$0xff]
      %v5582 = vld [vmem:[#allocation2 + $0xb8] sm:$0xff]
      %v5583 = vld [vmem:[#allocation2 + $0xc0] sm:$0xf]
      %v5584 = vld [vmem:[%s3 + $0xa00] sm:$0xff]
      %v5585 = vld [vmem:[%s3 + $0xa08] sm:$0xff]
      %v5586 = vld [vmem:[%s3 + $0xa10] sm:$0xff]
      %v5587 = vld [vmem:[%s3 + $0xa18] sm:$0xff]
      %v5588 = vld [vmem:[%s3 + $0xa20] sm:$0xff]
      %v5589 = vld [vmem:[%s3 + $0xa28] sm:$0xff]
      %v5590 = vld [vmem:[%s3 + $0xa30] sm:$0xff]
      %v5591 = vld [vmem:[%s3 + $0xa38] sm:$0xff]
      %v5592 = vld [vmem:[%s3 + $0xa40] sm:$0xff]
      %v5593 = vld [vmem:[%s3 + $0xa48] sm:$0xff]
      %v5594 = vld [vmem:[%s3 + $0xa50] sm:$0xff]
      %v5595 = vld [vmem:[%s3 + $0xa58] sm:$0xff]
      %v5596 = vld [vmem:[%s3 + $0xa60] sm:$0xff]
      %v5597 = vld [vmem:[%s3 + $0xa68] sm:$0xff]
      %v5598 = vld [vmem:[%s3 + $0xa70] sm:$0xff]
      %v5599 = vld [vmem:[%s3 + $0xa78] sm:$0xff]
      %5600 = vmatprep.subr.mxu0 0.0
      %5601 = vmatpush1.msra.mxu0 %v5584
      %5602 = vmatprep.subr.mxu0 0.0
      %5603 = vmatpush1.msra.mxu0 %v5585
      %5604 = vmatprep.subr.mxu0 0.0
      %5605 = vmatpush1.msra.mxu0 %v5586
      %5606 = vmatprep.subr.mxu0 0.0
      %5607 = vmatpush1.msra.mxu0 %v5587
      %5608 = vmatprep.subr.mxu0 0.0
      %5609 = vmatpush1.msra.mxu0 %v5588
      %5610 = vmatprep.subr.mxu0 0.0
      %5611 = vmatpush1.msra.mxu0 %v5589
      %5612 = vmatprep.subr.mxu0 0.0
      %5613 = vmatpush1.msra.mxu0 %v5590
      %5614 = vmatprep.subr.mxu0 0.0
      %5615 = vmatpush1.msra.mxu0 %v5591
      %5616 = vmatprep.subr.mxu0 0.0
      %5617 = vmatpush1.msra.mxu0 %v5592
      %5618 = vmatprep.subr.mxu0 0.0
      %5619 = vmatpush1.msra.mxu0 %v5593
      %5620 = vmatprep.subr.mxu0 0.0
      %5621 = vmatpush1.msra.mxu0 %v5594
      %5622 = vmatprep.subr.mxu0 0.0
      %5623 = vmatpush1.msra.mxu0 %v5595
      %5624 = vmatprep.subr.mxu0 0.0
      %5625 = vmatpush1.msra.mxu0 %v5596
      %5626 = vmatprep.subr.mxu0 0.0
      %5627 = vmatpush1.msra.mxu0 %v5597
      %5628 = vmatprep.subr.mxu0 0.0
      %5629 = vmatpush1.msra.mxu0 %v5598
      %5630 = vmatprep.subr.mxu0 0.0
      %5631 = vmatpush1.msra.mxu0 %v5599
      %5632 = vmatprep.subr.mxu0 0.0
      %5633 = vmatpush1.msra.mxu0 0.0
      %5634 = vmatprep.subr.mxu0 0.0
      %5635 = vmatpush1.msra.mxu0 0.0
      %5636 = vmatprep.subr.mxu0 0.0
      %5637 = vmatpush1.msra.mxu0 0.0
      %5638 = vmatprep.subr.mxu0 0.0
      %5639 = vmatpush1.msra.mxu0 0.0
      %5640 = vmatprep.subr.mxu0 0.0
      %5641 = vmatpush1.msra.mxu0 0.0
      %5642 = vmatprep.subr.mxu0 0.0
      %5643 = vmatpush1.msra.mxu0 0.0
      %5644 = vmatprep.subr.mxu0 0.0
      %5645 = vmatpush1.msra.mxu0 0.0
      %5646 = vmatprep.subr.mxu0 0.0
      %5647 = vmatpush1.msra.mxu0 0.0
      %5648 = vmatprep.subr.mxu0 0.0
      %5649 = vmatpush1.msra.mxu0 0.0
      %5650 = vmatprep.subr.mxu0 0.0
      %5651 = vmatpush1.msra.mxu0 0.0
      %5652 = vmatprep.subr.mxu0 0.0
      %5653 = vmatpush1.msra.mxu0 0.0
      %5654 = vmatprep.subr.mxu0 0.0
      %5655 = vmatpush1.msra.mxu0 0.0
      %5656 = vmatprep.subr.mxu0 0.0
      %5657 = vmatpush1.msra.mxu0 0.0
      %5658 = vmatprep.subr.mxu0 0.0
      %5659 = vmatpush1.msra.mxu0 0.0
      %5660 = vmatprep.subr.mxu0 0.0
      %5661 = vmatpush1.msra.mxu0 0.0
      %5662 = vmatprep.subr.mxu0 0.0
      %5663 = vmatpush1.msra.mxu0 0.0
      %5664 = vmatprep.mubr.f32.mxu0 0.0
      %5665 = vmatmul.mubr.f32.gmra.mrb[0].mxu0 %v5566
      %v5666 = vpop.f32.mrb[0].mxu0
      %v5667 = vadd.f32 0.0, %v5666
      %v5668 = vpop.f32.mrb[0].mxu0
      %5669 = vmatprep.mubr.f32.mxu0 0.0
      %5670 = vmatmul.mubr.f32.gmra.mrb[0].mxu0 %v5567
      %v5671 = vpop.f32.mrb[0].mxu0
      %v5672 = vadd.f32 0.0, %v5671
      %v5673 = vpop.f32.mrb[0].mxu0
      %5674 = vmatprep.mubr.f32.mxu0 0.0
      %5675 = vmatmul.mubr.f32.gmra.mrb[0].mxu0 %v5568
      %v5676 = vpop.f32.mrb[0].mxu0
      %v5677 = vadd.f32 0.0, %v5676
      %v5678 = vpop.f32.mrb[0].mxu0
      %5679 = vmatprep.mubr.f32.mxu0 0.0
      %5680 = vmatmul.mubr.f32.gmra.mrb[0].mxu0 %v5569
      %v5681 = vpop.f32.mrb[0].mxu0
      %v5682 = vadd.f32 0.0, %v5681
      %v5683 = vpop.f32.mrb[0].mxu0
      %5684 = vmatprep.mubr.f32.mxu0 0.0
      %5685 = vmatmul.mubr.f32.gmra.mrb[0].mxu0 %v5570
      %v5686 = vpop.f32.mrb[0].mxu0
      %v5687 = vadd.f32 0.0, %v5686
      %v5688 = vpop.f32.mrb[0].mxu0
      %5689 = vmatprep.mubr.f32.mxu0 0.0
      %5690 = vmatmul.mubr.f32.gmra.mrb[0].mxu0 %v5571
      %v5691 = vpop.f32.mrb[0].mxu0
      %v5692 = vadd.f32 0.0, %v5691
      %v5693 = vpop.f32.mrb[0].mxu0
      %5694 = vmatprep.mubr.f32.mxu0 0.0
      %5695 = vmatmul.mubr.f32.gmra.mrb[0].mxu0 %v5572
      %v5696 = vpop.f32.mrb[0].mxu0
      %v5697 = vadd.f32 0.0, %v5696
      %v5698 = vpop.f32.mrb[0].mxu0
      %5699 = vmatprep.mubr.f32.mxu0 0.0
      %5700 = vmatmul.mubr.f32.gmra.mrb[0].mxu0 %v5573
      %v5701 = vpop.f32.mrb[0].mxu0
      %v5702 = vadd.f32 0.0, %v5701
      %v5703 = vpop.f32.mrb[0].mxu0
      %5704 = vmatprep.mubr.f32.mxu0 0.0
      %5705 = vmatmul.mubr.f32.gmra.mrb[0].mxu0 %v5574
      %v5706 = vpop.f32.mrb[0].mxu0
      %v5707 = vadd.f32 0.0, %v5706
      %v5708 = vpop.f32.mrb[0].mxu0
      %5709 = vmatprep.mubr.f32.mxu0 0.0
      %5710 = vmatmul.mubr.f32.gmra.mrb[0].mxu0 %v5575
      %v5711 = vpop.f32.mrb[0].mxu0
      %v5712 = vadd.f32 0.0, %v5711
      %v5713 = vpop.f32.mrb[0].mxu0
      %5714 = vmatprep.mubr.f32.mxu0 0.0
      %5715 = vmatmul.mubr.f32.gmra.mrb[0].mxu0 %v5576
      %v5716 = vpop.f32.mrb[0].mxu0
      %v5717 = vadd.f32 0.0, %v5716
      %v5718 = vpop.f32.mrb[0].mxu0
      %5719 = vmatprep.mubr.f32.mxu0 0.0
      %5720 = vmatmul.mubr.f32.gmra.mrb[0].mxu0 %v5577
      %v5721 = vpop.f32.mrb[0].mxu0
      %v5722 = vadd.f32 0.0, %v5721
      %v5723 = vpop.f32.mrb[0].mxu0
      %5724 = vmatprep.mubr.f32.mxu0 0.0
      %5725 = vmatmul.mubr.f32.gmra.mrb[0].mxu0 %v5578
      %v5726 = vpop.f32.mrb[0].mxu0
      %v5727 = vadd.f32 0.0, %v5726
      %v5728 = vpop.f32.mrb[0].mxu0
      %5729 = vmatprep.mubr.f32.mxu0 0.0
      %5730 = vmatmul.mubr.f32.gmra.mrb[0].mxu0 %v5579
      %v5731 = vpop.f32.mrb[0].mxu0
      %v5732 = vadd.f32 0.0, %v5731
      %v5733 = vpop.f32.mrb[0].mxu0
      %5734 = vmatprep.mubr.f32.mxu0 0.0
      %5735 = vmatmul.mubr.f32.gmra.mrb[0].mxu0 %v5580
      %v5736 = vpop.f32.mrb[0].mxu0
      %v5737 = vadd.f32 0.0, %v5736
      %v5738 = vpop.f32.mrb[0].mxu0
      %5739 = vmatprep.mubr.f32.mxu0 0.0
      %5740 = vmatmul.mubr.f32.gmra.mrb[0].mxu0 %v5581
      %v5741 = vpop.f32.mrb[0].mxu0
      %v5742 = vadd.f32 0.0, %v5741
      %v5743 = vpop.f32.mrb[0].mxu0
      %5744 = vmatprep.mubr.f32.mxu0 0.0
      %5745 = vmatmul.mubr.f32.gmra.mrb[0].mxu0 %v5582
      %v5746 = vpop.f32.mrb[0].mxu0
      %v5747 = vadd.f32 0.0, %v5746
      %v5748 = vpop.f32.mrb[0].mxu0
      %5749 = vmatprep.mubr.f32.mxu0 0.0
      %5750 = vmatmul.mubr.f32.gmra.mrb[0].mxu0 %v5583
      %v5751 = vpop.f32.mrb[0].mxu0
      %v5752 = vadd.f32 0.0, %v5751
      %v5753 = vpop.f32.mrb[0].mxu0
      %5754 = vdwg.mxu0
      %v5755 = vadd.f32 %v5548, %v5667
      %v5756 = vadd.f32 %v5549, %v5672
      %v5757 = vadd.f32 %v5550, %v5677
      %v5758 = vadd.f32 %v5551, %v5682
      %v5759 = vadd.f32 %v5552, %v5687
      %v5760 = vadd.f32 %v5553, %v5692
      %v5761 = vadd.f32 %v5554, %v5697
      %v5762 = vadd.f32 %v5555, %v5702
      %v5763 = vadd.f32 %v5556, %v5707
      %v5764 = vadd.f32 %v5557, %v5712
      %v5765 = vadd.f32 %v5558, %v5717
      %v5766 = vadd.f32 %v5559, %v5722
      %v5767 = vadd.f32 %v5560, %v5727
      %v5768 = vadd.f32 %v5561, %v5732
      %v5769 = vadd.f32 %v5562, %v5737
      %v5770 = vadd.f32 %v5563, %v5742
      %v5771 = vadd.f32 %v5564, %v5747
      %v5772 = vadd.f32 %v5565, %v5752
      %v5773 = vld [vmem:[#allocation2 + $0x39] sm:$0xff]
      %v5774 = vld [vmem:[#allocation2 + $0x41] sm:$0xff]
      %v5775 = vld [vmem:[#allocation2 + $0x49] sm:$0xff]
      %v5776 = vld [vmem:[#allocation2 + $0x51] sm:$0xff]
      %v5777 = vld [vmem:[#allocation2 + $0x59] sm:$0xff]
      %v5778 = vld [vmem:[#allocation2 + $0x61] sm:$0xff]
      %v5779 = vld [vmem:[#allocation2 + $0x69] sm:$0xff]
      %v5780 = vld [vmem:[#allocation2 + $0x71] sm:$0xff]
      %v5781 = vld [vmem:[#allocation2 + $0x79] sm:$0xff]
      %v5782 = vld [vmem:[#allocation2 + $0x81] sm:$0xff]
      %v5783 = vld [vmem:[#allocation2 + $0x89] sm:$0xff]
      %v5784 = vld [vmem:[#allocation2 + $0x91] sm:$0xff]
      %v5785 = vld [vmem:[#allocation2 + $0x99] sm:$0xff]
      %v5786 = vld [vmem:[#allocation2 + $0xa1] sm:$0xff]
      %v5787 = vld [vmem:[#allocation2 + $0xa9] sm:$0xff]
      %v5788 = vld [vmem:[#allocation2 + $0xb1] sm:$0xff]
      %v5789 = vld [vmem:[#allocation2 + $0xb9] sm:$0xff]
      %v5790 = vld [vmem:[#allocation2 + $0xc1] sm:$0xf]
      %v5791 = vld [vmem:[%s3 + $0xa80] sm:$0xff]
      %v5792 = vld [vmem:[%s3 + $0xa88] sm:$0xff]
      %v5793 = vld [vmem:[%s3 + $0xa90] sm:$0xff]
      %v5794 = vld [vmem:[%s3 + $0xa98] sm:$0xff]
      %v5795 = vld [vmem:[%s3 + $0xaa0] sm:$0xff]
      %v5796 = vld [vmem:[%s3 + $0xaa8] sm:$0xff]
      %v5797 = vld [vmem:[%s3 + $0xab0] sm:$0xff]
      %v5798 = vld [vmem:[%s3 + $0xab8] sm:$0xff]
      %v5799 = vld [vmem:[%s3 + $0xac0] sm:$0xff]
      %v5800 = vld [vmem:[%s3 + $0xac8] sm:$0xff]
      %v5801 = vld [vmem:[%s3 + $0xad0] sm:$0xff]
      %v5802 = vld [vmem:[%s3 + $0xad8] sm:$0xff]
      %v5803 = vld [vmem:[%s3 + $0xae0] sm:$0xff]
      %v5804 = vld [vmem:[%s3 + $0xae8] sm:$0xff]
      %v5805 = vld [vmem:[%s3 + $0xaf0] sm:$0xff]
      %v5806 = vld [vmem:[%s3 + $0xaf8] sm:$0xff]
      %5807 = vmatprep.subr.mxu0 0.0
      %5808 = vmatpush1.msra.mxu0 %v5791
      %5809 = vmatprep.subr.mxu0 0.0
      %5810 = vmatpush1.msra.mxu0 %v5792
      %5811 = vmatprep.subr.mxu0 0.0
      %5812 = vmatpush1.msra.mxu0 %v5793
      %5813 = vmatprep.subr.mxu0 0.0
      %5814 = vmatpush1.msra.mxu0 %v5794
      %5815 = vmatprep.subr.mxu0 0.0
      %5816 = vmatpush1.msra.mxu0 %v5795
      %5817 = vmatprep.subr.mxu0 0.0
      %5818 = vmatpush1.msra.mxu0 %v5796
      %5819 = vmatprep.subr.mxu0 0.0
      %5820 = vmatpush1.msra.mxu0 %v5797
      %5821 = vmatprep.subr.mxu0 0.0
      %5822 = vmatpush1.msra.mxu0 %v5798
      %5823 = vmatprep.subr.mxu0 0.0
      %5824 = vmatpush1.msra.mxu0 %v5799
      %5825 = vmatprep.subr.mxu0 0.0
      %5826 = vmatpush1.msra.mxu0 %v5800
      %5827 = vmatprep.subr.mxu0 0.0
      %5828 = vmatpush1.msra.mxu0 %v5801
      %5829 = vmatprep.subr.mxu0 0.0
      %5830 = vmatpush1.msra.mxu0 %v5802
      %5831 = vmatprep.subr.mxu0 0.0
      %5832 = vmatpush1.msra.mxu0 %v5803
      %5833 = vmatprep.subr.mxu0 0.0
      %5834 = vmatpush1.msra.mxu0 %v5804
      %5835 = vmatprep.subr.mxu0 0.0
      %5836 = vmatpush1.msra.mxu0 %v5805
      %5837 = vmatprep.subr.mxu0 0.0
      %5838 = vmatpush1.msra.mxu0 %v5806
      %5839 = vmatprep.subr.mxu0 0.0
      %5840 = vmatpush1.msra.mxu0 0.0
      %5841 = vmatprep.subr.mxu0 0.0
      %5842 = vmatpush1.msra.mxu0 0.0
      %5843 = vmatprep.subr.mxu0 0.0
      %5844 = vmatpush1.msra.mxu0 0.0
      %5845 = vmatprep.subr.mxu0 0.0
      %5846 = vmatpush1.msra.mxu0 0.0
      %5847 = vmatprep.subr.mxu0 0.0
      %5848 = vmatpush1.msra.mxu0 0.0
      %5849 = vmatprep.subr.mxu0 0.0
      %5850 = vmatpush1.msra.mxu0 0.0
      %5851 = vmatprep.subr.mxu0 0.0
      %5852 = vmatpush1.msra.mxu0 0.0
      %5853 = vmatprep.subr.mxu0 0.0
      %5854 = vmatpush1.msra.mxu0 0.0
      %5855 = vmatprep.subr.mxu0 0.0
      %5856 = vmatpush1.msra.mxu0 0.0
      %5857 = vmatprep.subr.mxu0 0.0
      %5858 = vmatpush1.msra.mxu0 0.0
      %5859 = vmatprep.subr.mxu0 0.0
      %5860 = vmatpush1.msra.mxu0 0.0
      %5861 = vmatprep.subr.mxu0 0.0
      %5862 = vmatpush1.msra.mxu0 0.0
      %5863 = vmatprep.subr.mxu0 0.0
      %5864 = vmatpush1.msra.mxu0 0.0
      %5865 = vmatprep.subr.mxu0 0.0
      %5866 = vmatpush1.msra.mxu0 0.0
      %5867 = vmatprep.subr.mxu0 0.0
      %5868 = vmatpush1.msra.mxu0 0.0
      %5869 = vmatprep.subr.mxu0 0.0
      %5870 = vmatpush1.msra.mxu0 0.0
      %5871 = vmatprep.mubr.f32.mxu0 0.0
      %5872 = vmatmul.mubr.f32.gmra.mrb[0].mxu0 %v5773
      %v5873 = vpop.f32.mrb[0].mxu0
      %v5874 = vadd.f32 0.0, %v5873
      %v5875 = vpop.f32.mrb[0].mxu0
      %5876 = vmatprep.mubr.f32.mxu0 0.0
      %5877 = vmatmul.mubr.f32.gmra.mrb[0].mxu0 %v5774
      %v5878 = vpop.f32.mrb[0].mxu0
      %v5879 = vadd.f32 0.0, %v5878
      %v5880 = vpop.f32.mrb[0].mxu0
      %5881 = vmatprep.mubr.f32.mxu0 0.0
      %5882 = vmatmul.mubr.f32.gmra.mrb[0].mxu0 %v5775
      %v5883 = vpop.f32.mrb[0].mxu0
      %v5884 = vadd.f32 0.0, %v5883
      %v5885 = vpop.f32.mrb[0].mxu0
      %5886 = vmatprep.mubr.f32.mxu0 0.0
      %5887 = vmatmul.mubr.f32.gmra.mrb[0].mxu0 %v5776
      %v5888 = vpop.f32.mrb[0].mxu0
      %v5889 = vadd.f32 0.0, %v5888
      %v5890 = vpop.f32.mrb[0].mxu0
      %5891 = vmatprep.mubr.f32.mxu0 0.0
      %5892 = vmatmul.mubr.f32.gmra.mrb[0].mxu0 %v5777
      %v5893 = vpop.f32.mrb[0].mxu0
      %v5894 = vadd.f32 0.0, %v5893
      %v5895 = vpop.f32.mrb[0].mxu0
      %5896 = vmatprep.mubr.f32.mxu0 0.0
      %5897 = vmatmul.mubr.f32.gmra.mrb[0].mxu0 %v5778
      %v5898 = vpop.f32.mrb[0].mxu0
      %v5899 = vadd.f32 0.0, %v5898
      %v5900 = vpop.f32.mrb[0].mxu0
      %5901 = vmatprep.mubr.f32.mxu0 0.0
      %5902 = vmatmul.mubr.f32.gmra.mrb[0].mxu0 %v5779
      %v5903 = vpop.f32.mrb[0].mxu0
      %v5904 = vadd.f32 0.0, %v5903
      %v5905 = vpop.f32.mrb[0].mxu0
      %5906 = vmatprep.mubr.f32.mxu0 0.0
      %5907 = vmatmul.mubr.f32.gmra.mrb[0].mxu0 %v5780
      %v5908 = vpop.f32.mrb[0].mxu0
      %v5909 = vadd.f32 0.0, %v5908
      %v5910 = vpop.f32.mrb[0].mxu0
      %5911 = vmatprep.mubr.f32.mxu0 0.0
      %5912 = vmatmul.mubr.f32.gmra.mrb[0].mxu0 %v5781
      %v5913 = vpop.f32.mrb[0].mxu0
      %v5914 = vadd.f32 0.0, %v5913
      %v5915 = vpop.f32.mrb[0].mxu0
      %5916 = vmatprep.mubr.f32.mxu0 0.0
      %5917 = vmatmul.mubr.f32.gmra.mrb[0].mxu0 %v5782
      %v5918 = vpop.f32.mrb[0].mxu0
      %v5919 = vadd.f32 0.0, %v5918
      %v5920 = vpop.f32.mrb[0].mxu0
      %5921 = vmatprep.mubr.f32.mxu0 0.0
      %5922 = vmatmul.mubr.f32.gmra.mrb[0].mxu0 %v5783
      %v5923 = vpop.f32.mrb[0].mxu0
      %v5924 = vadd.f32 0.0, %v5923
      %v5925 = vpop.f32.mrb[0].mxu0
      %5926 = vmatprep.mubr.f32.mxu0 0.0
      %5927 = vmatmul.mubr.f32.gmra.mrb[0].mxu0 %v5784
      %v5928 = vpop.f32.mrb[0].mxu0
      %v5929 = vadd.f32 0.0, %v5928
      %v5930 = vpop.f32.mrb[0].mxu0
      %5931 = vmatprep.mubr.f32.mxu0 0.0
      %5932 = vmatmul.mubr.f32.gmra.mrb[0].mxu0 %v5785
      %v5933 = vpop.f32.mrb[0].mxu0
      %v5934 = vadd.f32 0.0, %v5933
      %v5935 = vpop.f32.mrb[0].mxu0
      %5936 = vmatprep.mubr.f32.mxu0 0.0
      %5937 = vmatmul.mubr.f32.gmra.mrb[0].mxu0 %v5786
      %v5938 = vpop.f32.mrb[0].mxu0
      %v5939 = vadd.f32 0.0, %v5938
      %v5940 = vpop.f32.mrb[0].mxu0
      %5941 = vmatprep.mubr.f32.mxu0 0.0
      %5942 = vmatmul.mubr.f32.gmra.mrb[0].mxu0 %v5787
      %v5943 = vpop.f32.mrb[0].mxu0
      %v5944 = vadd.f32 0.0, %v5943
      %v5945 = vpop.f32.mrb[0].mxu0
      %5946 = vmatprep.mubr.f32.mxu0 0.0
      %5947 = vmatmul.mubr.f32.gmra.mrb[0].mxu0 %v5788
      %v5948 = vpop.f32.mrb[0].mxu0
      %v5949 = vadd.f32 0.0, %v5948
      %v5950 = vpop.f32.mrb[0].mxu0
      %5951 = vmatprep.mubr.f32.mxu0 0.0
      %5952 = vmatmul.mubr.f32.gmra.mrb[0].mxu0 %v5789
      %v5953 = vpop.f32.mrb[0].mxu0
      %v5954 = vadd.f32 0.0, %v5953
      %v5955 = vpop.f32.mrb[0].mxu0
      %5956 = vmatprep.mubr.f32.mxu0 0.0
      %5957 = vmatmul.mubr.f32.gmra.mrb[0].mxu0 %v5790
      %v5958 = vpop.f32.mrb[0].mxu0
      %v5959 = vadd.f32 0.0, %v5958
      %v5960 = vpop.f32.mrb[0].mxu0
      %5961 = vdwg.mxu0
      %v5962 = vadd.f32 %v5755, %v5874
      %v5963 = vadd.f32 %v5756, %v5879
      %v5964 = vadd.f32 %v5757, %v5884
      %v5965 = vadd.f32 %v5758, %v5889
      %v5966 = vadd.f32 %v5759, %v5894
      %v5967 = vadd.f32 %v5760, %v5899
      %v5968 = vadd.f32 %v5761, %v5904
      %v5969 = vadd.f32 %v5762, %v5909
      %v5970 = vadd.f32 %v5763, %v5914
      %v5971 = vadd.f32 %v5764, %v5919
      %v5972 = vadd.f32 %v5765, %v5924
      %v5973 = vadd.f32 %v5766, %v5929
      %v5974 = vadd.f32 %v5767, %v5934
      %v5975 = vadd.f32 %v5768, %v5939
      %v5976 = vadd.f32 %v5769, %v5944
      %v5977 = vadd.f32 %v5770, %v5949
      %v5978 = vadd.f32 %v5771, %v5954
      %v5979 = vadd.f32 %v5772, %v5959
      %v5980 = vld [vmem:[#allocation2 + $0x3a] sm:$0xff]
      %v5981 = vld [vmem:[#allocation2 + $0x42] sm:$0xff]
      %v5982 = vld [vmem:[#allocation2 + $0x4a] sm:$0xff]
      %v5983 = vld [vmem:[#allocation2 + $0x52] sm:$0xff]
      %v5984 = vld [vmem:[#allocation2 + $0x5a] sm:$0xff]
      %v5985 = vld [vmem:[#allocation2 + $0x62] sm:$0xff]
      %v5986 = vld [vmem:[#allocation2 + $0x6a] sm:$0xff]
      %v5987 = vld [vmem:[#allocation2 + $0x72] sm:$0xff]
      %v5988 = vld [vmem:[#allocation2 + $0x7a] sm:$0xff]
      %v5989 = vld [vmem:[#allocation2 + $0x82] sm:$0xff]
      %v5990 = vld [vmem:[#allocation2 + $0x8a] sm:$0xff]
      %v5991 = vld [vmem:[#allocation2 + $0x92] sm:$0xff]
      %v5992 = vld [vmem:[#allocation2 + $0x9a] sm:$0xff]
      %v5993 = vld [vmem:[#allocation2 + $0xa2] sm:$0xff]
      %v5994 = vld [vmem:[#allocation2 + $0xaa] sm:$0xff]
      %v5995 = vld [vmem:[#allocation2 + $0xb2] sm:$0xff]
      %v5996 = vld [vmem:[#allocation2 + $0xba] sm:$0xff]
      %v5997 = vld [vmem:[#allocation2 + $0xc2] sm:$0xf]
      %v5998 = vld [vmem:[%s3 + $0xb00] sm:$0xff]
      %v5999 = vld [vmem:[%s3 + $0xb08] sm:$0xff]
      %v6000 = vld [vmem:[%s3 + $0xb10] sm:$0xff]
      %v6001 = vld [vmem:[%s3 + $0xb18] sm:$0xff]
      %v6002 = vld [vmem:[%s3 + $0xb20] sm:$0xff]
      %v6003 = vld [vmem:[%s3 + $0xb28] sm:$0xff]
      %v6004 = vld [vmem:[%s3 + $0xb30] sm:$0xff]
      %v6005 = vld [vmem:[%s3 + $0xb38] sm:$0xff]
      %v6006 = vld [vmem:[%s3 + $0xb40] sm:$0xff]
      %v6007 = vld [vmem:[%s3 + $0xb48] sm:$0xff]
      %v6008 = vld [vmem:[%s3 + $0xb50] sm:$0xff]
      %v6009 = vld [vmem:[%s3 + $0xb58] sm:$0xff]
      %v6010 = vld [vmem:[%s3 + $0xb60] sm:$0xff]
      %v6011 = vld [vmem:[%s3 + $0xb68] sm:$0xff]
      %v6012 = vld [vmem:[%s3 + $0xb70] sm:$0xff]
      %v6013 = vld [vmem:[%s3 + $0xb78] sm:$0xff]
      %6014 = vmatprep.subr.mxu0 0.0
      %6015 = vmatpush1.msra.mxu0 %v5998
      %6016 = vmatprep.subr.mxu0 0.0
      %6017 = vmatpush1.msra.mxu0 %v5999
      %6018 = vmatprep.subr.mxu0 0.0
      %6019 = vmatpush1.msra.mxu0 %v6000
      %6020 = vmatprep.subr.mxu0 0.0
      %6021 = vmatpush1.msra.mxu0 %v6001
      %6022 = vmatprep.subr.mxu0 0.0
      %6023 = vmatpush1.msra.mxu0 %v6002
      %6024 = vmatprep.subr.mxu0 0.0
      %6025 = vmatpush1.msra.mxu0 %v6003
      %6026 = vmatprep.subr.mxu0 0.0
      %6027 = vmatpush1.msra.mxu0 %v6004
      %6028 = vmatprep.subr.mxu0 0.0
      %6029 = vmatpush1.msra.mxu0 %v6005
      %6030 = vmatprep.subr.mxu0 0.0
      %6031 = vmatpush1.msra.mxu0 %v6006
      %6032 = vmatprep.subr.mxu0 0.0
      %6033 = vmatpush1.msra.mxu0 %v6007
      %6034 = vmatprep.subr.mxu0 0.0
      %6035 = vmatpush1.msra.mxu0 %v6008
      %6036 = vmatprep.subr.mxu0 0.0
      %6037 = vmatpush1.msra.mxu0 %v6009
      %6038 = vmatprep.subr.mxu0 0.0
      %6039 = vmatpush1.msra.mxu0 %v6010
      %6040 = vmatprep.subr.mxu0 0.0
      %6041 = vmatpush1.msra.mxu0 %v6011
      %6042 = vmatprep.subr.mxu0 0.0
      %6043 = vmatpush1.msra.mxu0 %v6012
      %6044 = vmatprep.subr.mxu0 0.0
      %6045 = vmatpush1.msra.mxu0 %v6013
      %6046 = vmatprep.subr.mxu0 0.0
      %6047 = vmatpush1.msra.mxu0 0.0
      %6048 = vmatprep.subr.mxu0 0.0
      %6049 = vmatpush1.msra.mxu0 0.0
      %6050 = vmatprep.subr.mxu0 0.0
      %6051 = vmatpush1.msra.mxu0 0.0
      %6052 = vmatprep.subr.mxu0 0.0
      %6053 = vmatpush1.msra.mxu0 0.0
      %6054 = vmatprep.subr.mxu0 0.0
      %6055 = vmatpush1.msra.mxu0 0.0
      %6056 = vmatprep.subr.mxu0 0.0
      %6057 = vmatpush1.msra.mxu0 0.0
      %6058 = vmatprep.subr.mxu0 0.0
      %6059 = vmatpush1.msra.mxu0 0.0
      %6060 = vmatprep.subr.mxu0 0.0
      %6061 = vmatpush1.msra.mxu0 0.0
      %6062 = vmatprep.subr.mxu0 0.0
      %6063 = vmatpush1.msra.mxu0 0.0
      %6064 = vmatprep.subr.mxu0 0.0
      %6065 = vmatpush1.msra.mxu0 0.0
      %6066 = vmatprep.subr.mxu0 0.0
      %6067 = vmatpush1.msra.mxu0 0.0
      %6068 = vmatprep.subr.mxu0 0.0
      %6069 = vmatpush1.msra.mxu0 0.0
      %6070 = vmatprep.subr.mxu0 0.0
      %6071 = vmatpush1.msra.mxu0 0.0
      %6072 = vmatprep.subr.mxu0 0.0
      %6073 = vmatpush1.msra.mxu0 0.0
      %6074 = vmatprep.subr.mxu0 0.0
      %6075 = vmatpush1.msra.mxu0 0.0
      %6076 = vmatprep.subr.mxu0 0.0
      %6077 = vmatpush1.msra.mxu0 0.0
      %6078 = vmatprep.mubr.f32.mxu0 0.0
      %6079 = vmatmul.mubr.f32.gmra.mrb[0].mxu0 %v5980
      %v6080 = vpop.f32.mrb[0].mxu0
      %v6081 = vadd.f32 0.0, %v6080
      %v6082 = vpop.f32.mrb[0].mxu0
      %6083 = vmatprep.mubr.f32.mxu0 0.0
      %6084 = vmatmul.mubr.f32.gmra.mrb[0].mxu0 %v5981
      %v6085 = vpop.f32.mrb[0].mxu0
      %v6086 = vadd.f32 0.0, %v6085
      %v6087 = vpop.f32.mrb[0].mxu0
      %6088 = vmatprep.mubr.f32.mxu0 0.0
      %6089 = vmatmul.mubr.f32.gmra.mrb[0].mxu0 %v5982
      %v6090 = vpop.f32.mrb[0].mxu0
      %v6091 = vadd.f32 0.0, %v6090
      %v6092 = vpop.f32.mrb[0].mxu0
      %6093 = vmatprep.mubr.f32.mxu0 0.0
      %6094 = vmatmul.mubr.f32.gmra.mrb[0].mxu0 %v5983
      %v6095 = vpop.f32.mrb[0].mxu0
      %v6096 = vadd.f32 0.0, %v6095
      %v6097 = vpop.f32.mrb[0].mxu0
      %6098 = vmatprep.mubr.f32.mxu0 0.0
      %6099 = vmatmul.mubr.f32.gmra.mrb[0].mxu0 %v5984
      %v6100 = vpop.f32.mrb[0].mxu0
      %v6101 = vadd.f32 0.0, %v6100
      %v6102 = vpop.f32.mrb[0].mxu0
      %6103 = vmatprep.mubr.f32.mxu0 0.0
      %6104 = vmatmul.mubr.f32.gmra.mrb[0].mxu0 %v5985
      %v6105 = vpop.f32.mrb[0].mxu0
      %v6106 = vadd.f32 0.0, %v6105
      %v6107 = vpop.f32.mrb[0].mxu0
      %6108 = vmatprep.mubr.f32.mxu0 0.0
      %6109 = vmatmul.mubr.f32.gmra.mrb[0].mxu0 %v5986
      %v6110 = vpop.f32.mrb[0].mxu0
      %v6111 = vadd.f32 0.0, %v6110
      %v6112 = vpop.f32.mrb[0].mxu0
      %6113 = vmatprep.mubr.f32.mxu0 0.0
      %6114 = vmatmul.mubr.f32.gmra.mrb[0].mxu0 %v5987
      %v6115 = vpop.f32.mrb[0].mxu0
      %v6116 = vadd.f32 0.0, %v6115
      %v6117 = vpop.f32.mrb[0].mxu0
      %6118 = vmatprep.mubr.f32.mxu0 0.0
      %6119 = vmatmul.mubr.f32.gmra.mrb[0].mxu0 %v5988
      %v6120 = vpop.f32.mrb[0].mxu0
      %v6121 = vadd.f32 0.0, %v6120
      %v6122 = vpop.f32.mrb[0].mxu0
      %6123 = vmatprep.mubr.f32.mxu0 0.0
      %6124 = vmatmul.mubr.f32.gmra.mrb[0].mxu0 %v5989
      %v6125 = vpop.f32.mrb[0].mxu0
      %v6126 = vadd.f32 0.0, %v6125
      %v6127 = vpop.f32.mrb[0].mxu0
      %6128 = vmatprep.mubr.f32.mxu0 0.0
      %6129 = vmatmul.mubr.f32.gmra.mrb[0].mxu0 %v5990
      %v6130 = vpop.f32.mrb[0].mxu0
      %v6131 = vadd.f32 0.0, %v6130
      %v6132 = vpop.f32.mrb[0].mxu0
      %6133 = vmatprep.mubr.f32.mxu0 0.0
      %6134 = vmatmul.mubr.f32.gmra.mrb[0].mxu0 %v5991
      %v6135 = vpop.f32.mrb[0].mxu0
      %v6136 = vadd.f32 0.0, %v6135
      %v6137 = vpop.f32.mrb[0].mxu0
      %6138 = vmatprep.mubr.f32.mxu0 0.0
      %6139 = vmatmul.mubr.f32.gmra.mrb[0].mxu0 %v5992
      %v6140 = vpop.f32.mrb[0].mxu0
      %v6141 = vadd.f32 0.0, %v6140
      %v6142 = vpop.f32.mrb[0].mxu0
      %6143 = vmatprep.mubr.f32.mxu0 0.0
      %6144 = vmatmul.mubr.f32.gmra.mrb[0].mxu0 %v5993
      %v6145 = vpop.f32.mrb[0].mxu0
      %v6146 = vadd.f32 0.0, %v6145
      %v6147 = vpop.f32.mrb[0].mxu0
      %6148 = vmatprep.mubr.f32.mxu0 0.0
      %6149 = vmatmul.mubr.f32.gmra.mrb[0].mxu0 %v5994
      %v6150 = vpop.f32.mrb[0].mxu0
      %v6151 = vadd.f32 0.0, %v6150
      %v6152 = vpop.f32.mrb[0].mxu0
      %6153 = vmatprep.mubr.f32.mxu0 0.0
      %6154 = vmatmul.mubr.f32.gmra.mrb[0].mxu0 %v5995
      %v6155 = vpop.f32.mrb[0].mxu0
      %v6156 = vadd.f32 0.0, %v6155
      %v6157 = vpop.f32.mrb[0].mxu0
      %6158 = vmatprep.mubr.f32.mxu0 0.0
      %6159 = vmatmul.mubr.f32.gmra.mrb[0].mxu0 %v5996
      %v6160 = vpop.f32.mrb[0].mxu0
      %v6161 = vadd.f32 0.0, %v6160
      %v6162 = vpop.f32.mrb[0].mxu0
      %6163 = vmatprep.mubr.f32.mxu0 0.0
      %6164 = vmatmul.mubr.f32.gmra.mrb[0].mxu0 %v5997
      %v6165 = vpop.f32.mrb[0].mxu0
      %v6166 = vadd.f32 0.0, %v6165
      %v6167 = vpop.f32.mrb[0].mxu0
      %6168 = vdwg.mxu0
      %v6169 = vadd.f32 %v5962, %v6081
      %v6170 = vadd.f32 %v5963, %v6086
      %v6171 = vadd.f32 %v5964, %v6091
      %v6172 = vadd.f32 %v5965, %v6096
      %v6173 = vadd.f32 %v5966, %v6101
      %v6174 = vadd.f32 %v5967, %v6106
      %v6175 = vadd.f32 %v5968, %v6111
      %v6176 = vadd.f32 %v5969, %v6116
      %v6177 = vadd.f32 %v5970, %v6121
      %v6178 = vadd.f32 %v5971, %v6126
      %v6179 = vadd.f32 %v5972, %v6131
      %v6180 = vadd.f32 %v5973, %v6136
      %v6181 = vadd.f32 %v5974, %v6141
      %v6182 = vadd.f32 %v5975, %v6146
      %v6183 = vadd.f32 %v5976, %v6151
      %v6184 = vadd.f32 %v5977, %v6156
      %v6185 = vadd.f32 %v5978, %v6161
      %v6186 = vadd.f32 %v5979, %v6166
      %v6187 = vld [vmem:[#allocation2 + $0x3b] sm:$0xff]
      %v6188 = vld [vmem:[#allocation2 + $0x43] sm:$0xff]
      %v6189 = vld [vmem:[#allocation2 + $0x4b] sm:$0xff]
      %v6190 = vld [vmem:[#allocation2 + $0x53] sm:$0xff]
      %v6191 = vld [vmem:[#allocation2 + $0x5b] sm:$0xff]
      %v6192 = vld [vmem:[#allocation2 + $0x63] sm:$0xff]
      %v6193 = vld [vmem:[#allocation2 + $0x6b] sm:$0xff]
      %v6194 = vld [vmem:[#allocation2 + $0x73] sm:$0xff]
      %v6195 = vld [vmem:[#allocation2 + $0x7b] sm:$0xff]
      %v6196 = vld [vmem:[#allocation2 + $0x83] sm:$0xff]
      %v6197 = vld [vmem:[#allocation2 + $0x8b] sm:$0xff]
      %v6198 = vld [vmem:[#allocation2 + $0x93] sm:$0xff]
      %v6199 = vld [vmem:[#allocation2 + $0x9b] sm:$0xff]
      %v6200 = vld [vmem:[#allocation2 + $0xa3] sm:$0xff]
      %v6201 = vld [vmem:[#allocation2 + $0xab] sm:$0xff]
      %v6202 = vld [vmem:[#allocation2 + $0xb3] sm:$0xff]
      %v6203 = vld [vmem:[#allocation2 + $0xbb] sm:$0xff]
      %v6204 = vld [vmem:[#allocation2 + $0xc3] sm:$0xf]
      %v6205 = vld [vmem:[%s3 + $0xb80] sm:$0xff]
      %v6206 = vld [vmem:[%s3 + $0xb88] sm:$0xff]
      %v6207 = vld [vmem:[%s3 + $0xb90] sm:$0xff]
      %v6208 = vld [vmem:[%s3 + $0xb98] sm:$0xff]
      %v6209 = vld [vmem:[%s3 + $0xba0] sm:$0xff]
      %v6210 = vld [vmem:[%s3 + $0xba8] sm:$0xff]
      %v6211 = vld [vmem:[%s3 + $0xbb0] sm:$0xff]
      %v6212 = vld [vmem:[%s3 + $0xbb8] sm:$0xff]
      %v6213 = vld [vmem:[%s3 + $0xbc0] sm:$0xff]
      %v6214 = vld [vmem:[%s3 + $0xbc8] sm:$0xff]
      %v6215 = vld [vmem:[%s3 + $0xbd0] sm:$0xff]
      %v6216 = vld [vmem:[%s3 + $0xbd8] sm:$0xff]
      %v6217 = vld [vmem:[%s3 + $0xbe0] sm:$0xff]
      %v6218 = vld [vmem:[%s3 + $0xbe8] sm:$0xff]
      %v6219 = vld [vmem:[%s3 + $0xbf0] sm:$0xff]
      %v6220 = vld [vmem:[%s3 + $0xbf8] sm:$0xff]
      %6221 = vmatprep.subr.mxu0 0.0
      %6222 = vmatpush1.msra.mxu0 %v6205
      %6223 = vmatprep.subr.mxu0 0.0
      %6224 = vmatpush1.msra.mxu0 %v6206
      %6225 = vmatprep.subr.mxu0 0.0
      %6226 = vmatpush1.msra.mxu0 %v6207
      %6227 = vmatprep.subr.mxu0 0.0
      %6228 = vmatpush1.msra.mxu0 %v6208
      %6229 = vmatprep.subr.mxu0 0.0
      %6230 = vmatpush1.msra.mxu0 %v6209
      %6231 = vmatprep.subr.mxu0 0.0
      %6232 = vmatpush1.msra.mxu0 %v6210
      %6233 = vmatprep.subr.mxu0 0.0
      %6234 = vmatpush1.msra.mxu0 %v6211
      %6235 = vmatprep.subr.mxu0 0.0
      %6236 = vmatpush1.msra.mxu0 %v6212
      %6237 = vmatprep.subr.mxu0 0.0
      %6238 = vmatpush1.msra.mxu0 %v6213
      %6239 = vmatprep.subr.mxu0 0.0
      %6240 = vmatpush1.msra.mxu0 %v6214
      %6241 = vmatprep.subr.mxu0 0.0
      %6242 = vmatpush1.msra.mxu0 %v6215
      %6243 = vmatprep.subr.mxu0 0.0
      %6244 = vmatpush1.msra.mxu0 %v6216
      %6245 = vmatprep.subr.mxu0 0.0
      %6246 = vmatpush1.msra.mxu0 %v6217
      %6247 = vmatprep.subr.mxu0 0.0
      %6248 = vmatpush1.msra.mxu0 %v6218
      %6249 = vmatprep.subr.mxu0 0.0
      %6250 = vmatpush1.msra.mxu0 %v6219
      %6251 = vmatprep.subr.mxu0 0.0
      %6252 = vmatpush1.msra.mxu0 %v6220
      %6253 = vmatprep.subr.mxu0 0.0
      %6254 = vmatpush1.msra.mxu0 0.0
      %6255 = vmatprep.subr.mxu0 0.0
      %6256 = vmatpush1.msra.mxu0 0.0
      %6257 = vmatprep.subr.mxu0 0.0
      %6258 = vmatpush1.msra.mxu0 0.0
      %6259 = vmatprep.subr.mxu0 0.0
      %6260 = vmatpush1.msra.mxu0 0.0
      %6261 = vmatprep.subr.mxu0 0.0
      %6262 = vmatpush1.msra.mxu0 0.0
      %6263 = vmatprep.subr.mxu0 0.0
      %6264 = vmatpush1.msra.mxu0 0.0
      %6265 = vmatprep.subr.mxu0 0.0
      %6266 = vmatpush1.msra.mxu0 0.0
      %6267 = vmatprep.subr.mxu0 0.0
      %6268 = vmatpush1.msra.mxu0 0.0
      %6269 = vmatprep.subr.mxu0 0.0
      %6270 = vmatpush1.msra.mxu0 0.0
      %6271 = vmatprep.subr.mxu0 0.0
      %6272 = vmatpush1.msra.mxu0 0.0
      %6273 = vmatprep.subr.mxu0 0.0
      %6274 = vmatpush1.msra.mxu0 0.0
      %6275 = vmatprep.subr.mxu0 0.0
      %6276 = vmatpush1.msra.mxu0 0.0
      %6277 = vmatprep.subr.mxu0 0.0
      %6278 = vmatpush1.msra.mxu0 0.0
      %6279 = vmatprep.subr.mxu0 0.0
      %6280 = vmatpush1.msra.mxu0 0.0
      %6281 = vmatprep.subr.mxu0 0.0
      %6282 = vmatpush1.msra.mxu0 0.0
      %6283 = vmatprep.subr.mxu0 0.0
      %6284 = vmatpush1.msra.mxu0 0.0
      %6285 = vmatprep.mubr.f32.mxu0 0.0
      %6286 = vmatmul.mubr.f32.gmra.mrb[0].mxu0 %v6187
      %v6287 = vpop.f32.mrb[0].mxu0
      %v6288 = vadd.f32 0.0, %v6287
      %v6289 = vpop.f32.mrb[0].mxu0
      %6290 = vmatprep.mubr.f32.mxu0 0.0
      %6291 = vmatmul.mubr.f32.gmra.mrb[0].mxu0 %v6188
      %v6292 = vpop.f32.mrb[0].mxu0
      %v6293 = vadd.f32 0.0, %v6292
      %v6294 = vpop.f32.mrb[0].mxu0
      %6295 = vmatprep.mubr.f32.mxu0 0.0
      %6296 = vmatmul.mubr.f32.gmra.mrb[0].mxu0 %v6189
      %v6297 = vpop.f32.mrb[0].mxu0
      %v6298 = vadd.f32 0.0, %v6297
      %v6299 = vpop.f32.mrb[0].mxu0
      %6300 = vmatprep.mubr.f32.mxu0 0.0
      %6301 = vmatmul.mubr.f32.gmra.mrb[0].mxu0 %v6190
      %v6302 = vpop.f32.mrb[0].mxu0
      %v6303 = vadd.f32 0.0, %v6302
      %v6304 = vpop.f32.mrb[0].mxu0
      %6305 = vmatprep.mubr.f32.mxu0 0.0
      %6306 = vmatmul.mubr.f32.gmra.mrb[0].mxu0 %v6191
      %v6307 = vpop.f32.mrb[0].mxu0
      %v6308 = vadd.f32 0.0, %v6307
      %v6309 = vpop.f32.mrb[0].mxu0
      %6310 = vmatprep.mubr.f32.mxu0 0.0
      %6311 = vmatmul.mubr.f32.gmra.mrb[0].mxu0 %v6192
      %v6312 = vpop.f32.mrb[0].mxu0
      %v6313 = vadd.f32 0.0, %v6312
      %v6314 = vpop.f32.mrb[0].mxu0
      %6315 = vmatprep.mubr.f32.mxu0 0.0
      %6316 = vmatmul.mubr.f32.gmra.mrb[0].mxu0 %v6193
      %v6317 = vpop.f32.mrb[0].mxu0
      %v6318 = vadd.f32 0.0, %v6317
      %v6319 = vpop.f32.mrb[0].mxu0
      %6320 = vmatprep.mubr.f32.mxu0 0.0
      %6321 = vmatmul.mubr.f32.gmra.mrb[0].mxu0 %v6194
      %v6322 = vpop.f32.mrb[0].mxu0
      %v6323 = vadd.f32 0.0, %v6322
      %v6324 = vpop.f32.mrb[0].mxu0
      %6325 = vmatprep.mubr.f32.mxu0 0.0
      %6326 = vmatmul.mubr.f32.gmra.mrb[0].mxu0 %v6195
      %v6327 = vpop.f32.mrb[0].mxu0
      %v6328 = vadd.f32 0.0, %v6327
      %v6329 = vpop.f32.mrb[0].mxu0
      %6330 = vmatprep.mubr.f32.mxu0 0.0
      %6331 = vmatmul.mubr.f32.gmra.mrb[0].mxu0 %v6196
      %v6332 = vpop.f32.mrb[0].mxu0
      %v6333 = vadd.f32 0.0, %v6332
      %v6334 = vpop.f32.mrb[0].mxu0
      %6335 = vmatprep.mubr.f32.mxu0 0.0
      %6336 = vmatmul.mubr.f32.gmra.mrb[0].mxu0 %v6197
      %v6337 = vpop.f32.mrb[0].mxu0
      %v6338 = vadd.f32 0.0, %v6337
      %v6339 = vpop.f32.mrb[0].mxu0
      %6340 = vmatprep.mubr.f32.mxu0 0.0
      %6341 = vmatmul.mubr.f32.gmra.mrb[0].mxu0 %v6198
      %v6342 = vpop.f32.mrb[0].mxu0
      %v6343 = vadd.f32 0.0, %v6342
      %v6344 = vpop.f32.mrb[0].mxu0
      %6345 = vmatprep.mubr.f32.mxu0 0.0
      %6346 = vmatmul.mubr.f32.gmra.mrb[0].mxu0 %v6199
      %v6347 = vpop.f32.mrb[0].mxu0
      %v6348 = vadd.f32 0.0, %v6347
      %v6349 = vpop.f32.mrb[0].mxu0
      %6350 = vmatprep.mubr.f32.mxu0 0.0
      %6351 = vmatmul.mubr.f32.gmra.mrb[0].mxu0 %v6200
      %v6352 = vpop.f32.mrb[0].mxu0
      %v6353 = vadd.f32 0.0, %v6352
      %v6354 = vpop.f32.mrb[0].mxu0
      %6355 = vmatprep.mubr.f32.mxu0 0.0
      %6356 = vmatmul.mubr.f32.gmra.mrb[0].mxu0 %v6201
      %v6357 = vpop.f32.mrb[0].mxu0
      %v6358 = vadd.f32 0.0, %v6357
      %v6359 = vpop.f32.mrb[0].mxu0
      %6360 = vmatprep.mubr.f32.mxu0 0.0
      %6361 = vmatmul.mubr.f32.gmra.mrb[0].mxu0 %v6202
      %v6362 = vpop.f32.mrb[0].mxu0
      %v6363 = vadd.f32 0.0, %v6362
      %v6364 = vpop.f32.mrb[0].mxu0
      %6365 = vmatprep.mubr.f32.mxu0 0.0
      %6366 = vmatmul.mubr.f32.gmra.mrb[0].mxu0 %v6203
      %v6367 = vpop.f32.mrb[0].mxu0
      %v6368 = vadd.f32 0.0, %v6367
      %v6369 = vpop.f32.mrb[0].mxu0
      %6370 = vmatprep.mubr.f32.mxu0 0.0
      %6371 = vmatmul.mubr.f32.gmra.mrb[0].mxu0 %v6204
      %v6372 = vpop.f32.mrb[0].mxu0
      %v6373 = vadd.f32 0.0, %v6372
      %v6374 = vpop.f32.mrb[0].mxu0
      %6375 = vdwg.mxu0
      %v6376 = vadd.f32 %v6169, %v6288
      %v6377 = vadd.f32 %v6170, %v6293
      %v6378 = vadd.f32 %v6171, %v6298
      %v6379 = vadd.f32 %v6172, %v6303
      %v6380 = vadd.f32 %v6173, %v6308
      %v6381 = vadd.f32 %v6174, %v6313
      %v6382 = vadd.f32 %v6175, %v6318
      %v6383 = vadd.f32 %v6176, %v6323
      %v6384 = vadd.f32 %v6177, %v6328
      %v6385 = vadd.f32 %v6178, %v6333
      %v6386 = vadd.f32 %v6179, %v6338
      %v6387 = vadd.f32 %v6180, %v6343
      %v6388 = vadd.f32 %v6181, %v6348
      %v6389 = vadd.f32 %v6182, %v6353
      %v6390 = vadd.f32 %v6183, %v6358
      %v6391 = vadd.f32 %v6184, %v6363
      %v6392 = vadd.f32 %v6185, %v6368
      %v6393 = vadd.f32 %v6186, %v6373
      %v6394 = vld [vmem:[#allocation2 + $0x3c] sm:$0xff]
      %v6395 = vld [vmem:[#allocation2 + $0x44] sm:$0xff]
      %v6396 = vld [vmem:[#allocation2 + $0x4c] sm:$0xff]
      %v6397 = vld [vmem:[#allocation2 + $0x54] sm:$0xff]
      %v6398 = vld [vmem:[#allocation2 + $0x5c] sm:$0xff]
      %v6399 = vld [vmem:[#allocation2 + $0x64] sm:$0xff]
      %v6400 = vld [vmem:[#allocation2 + $0x6c] sm:$0xff]
      %v6401 = vld [vmem:[#allocation2 + $0x74] sm:$0xff]
      %v6402 = vld [vmem:[#allocation2 + $0x7c] sm:$0xff]
      %v6403 = vld [vmem:[#allocation2 + $0x84] sm:$0xff]
      %v6404 = vld [vmem:[#allocation2 + $0x8c] sm:$0xff]
      %v6405 = vld [vmem:[#allocation2 + $0x94] sm:$0xff]
      %v6406 = vld [vmem:[#allocation2 + $0x9c] sm:$0xff]
      %v6407 = vld [vmem:[#allocation2 + $0xa4] sm:$0xff]
      %v6408 = vld [vmem:[#allocation2 + $0xac] sm:$0xff]
      %v6409 = vld [vmem:[#allocation2 + $0xb4] sm:$0xff]
      %v6410 = vld [vmem:[#allocation2 + $0xbc] sm:$0xff]
      %v6411 = vld [vmem:[#allocation2 + $0xc4] sm:$0xf]
      %v6412 = vld [vmem:[%s3 + $0xc00] sm:$0xff]
      %v6413 = vld [vmem:[%s3 + $0xc08] sm:$0xff]
      %v6414 = vld [vmem:[%s3 + $0xc10] sm:$0xff]
      %v6415 = vld [vmem:[%s3 + $0xc18] sm:$0xff]
      %v6416 = vld [vmem:[%s3 + $0xc20] sm:$0xff]
      %v6417 = vld [vmem:[%s3 + $0xc28] sm:$0xff]
      %v6418 = vld [vmem:[%s3 + $0xc30] sm:$0xff]
      %v6419 = vld [vmem:[%s3 + $0xc38] sm:$0xff]
      %v6420 = vld [vmem:[%s3 + $0xc40] sm:$0xff]
      %v6421 = vld [vmem:[%s3 + $0xc48] sm:$0xff]
      %v6422 = vld [vmem:[%s3 + $0xc50] sm:$0xff]
      %v6423 = vld [vmem:[%s3 + $0xc58] sm:$0xff]
      %v6424 = vld [vmem:[%s3 + $0xc60] sm:$0xff]
      %v6425 = vld [vmem:[%s3 + $0xc68] sm:$0xff]
      %v6426 = vld [vmem:[%s3 + $0xc70] sm:$0xff]
      %v6427 = vld [vmem:[%s3 + $0xc78] sm:$0xff]
      %6428 = vmatprep.subr.mxu0 0.0
      %6429 = vmatpush1.msra.mxu0 %v6412
      %6430 = vmatprep.subr.mxu0 0.0
      %6431 = vmatpush1.msra.mxu0 %v6413
      %6432 = vmatprep.subr.mxu0 0.0
      %6433 = vmatpush1.msra.mxu0 %v6414
      %6434 = vmatprep.subr.mxu0 0.0
      %6435 = vmatpush1.msra.mxu0 %v6415
      %6436 = vmatprep.subr.mxu0 0.0
      %6437 = vmatpush1.msra.mxu0 %v6416
      %6438 = vmatprep.subr.mxu0 0.0
      %6439 = vmatpush1.msra.mxu0 %v6417
      %6440 = vmatprep.subr.mxu0 0.0
      %6441 = vmatpush1.msra.mxu0 %v6418
      %6442 = vmatprep.subr.mxu0 0.0
      %6443 = vmatpush1.msra.mxu0 %v6419
      %6444 = vmatprep.subr.mxu0 0.0
      %6445 = vmatpush1.msra.mxu0 %v6420
      %6446 = vmatprep.subr.mxu0 0.0
      %6447 = vmatpush1.msra.mxu0 %v6421
      %6448 = vmatprep.subr.mxu0 0.0
      %6449 = vmatpush1.msra.mxu0 %v6422
      %6450 = vmatprep.subr.mxu0 0.0
      %6451 = vmatpush1.msra.mxu0 %v6423
      %6452 = vmatprep.subr.mxu0 0.0
      %6453 = vmatpush1.msra.mxu0 %v6424
      %6454 = vmatprep.subr.mxu0 0.0
      %6455 = vmatpush1.msra.mxu0 %v6425
      %6456 = vmatprep.subr.mxu0 0.0
      %6457 = vmatpush1.msra.mxu0 %v6426
      %6458 = vmatprep.subr.mxu0 0.0
      %6459 = vmatpush1.msra.mxu0 %v6427
      %6460 = vmatprep.subr.mxu0 0.0
      %6461 = vmatpush1.msra.mxu0 0.0
      %6462 = vmatprep.subr.mxu0 0.0
      %6463 = vmatpush1.msra.mxu0 0.0
      %6464 = vmatprep.subr.mxu0 0.0
      %6465 = vmatpush1.msra.mxu0 0.0
      %6466 = vmatprep.subr.mxu0 0.0
      %6467 = vmatpush1.msra.mxu0 0.0
      %6468 = vmatprep.subr.mxu0 0.0
      %6469 = vmatpush1.msra.mxu0 0.0
      %6470 = vmatprep.subr.mxu0 0.0
      %6471 = vmatpush1.msra.mxu0 0.0
      %6472 = vmatprep.subr.mxu0 0.0
      %6473 = vmatpush1.msra.mxu0 0.0
      %6474 = vmatprep.subr.mxu0 0.0
      %6475 = vmatpush1.msra.mxu0 0.0
      %6476 = vmatprep.subr.mxu0 0.0
      %6477 = vmatpush1.msra.mxu0 0.0
      %6478 = vmatprep.subr.mxu0 0.0
      %6479 = vmatpush1.msra.mxu0 0.0
      %6480 = vmatprep.subr.mxu0 0.0
      %6481 = vmatpush1.msra.mxu0 0.0
      %6482 = vmatprep.subr.mxu0 0.0
      %6483 = vmatpush1.msra.mxu0 0.0
      %6484 = vmatprep.subr.mxu0 0.0
      %6485 = vmatpush1.msra.mxu0 0.0
      %6486 = vmatprep.subr.mxu0 0.0
      %6487 = vmatpush1.msra.mxu0 0.0
      %6488 = vmatprep.subr.mxu0 0.0
      %6489 = vmatpush1.msra.mxu0 0.0
      %6490 = vmatprep.subr.mxu0 0.0
      %6491 = vmatpush1.msra.mxu0 0.0
      %6492 = vmatprep.mubr.f32.mxu0 0.0
      %6493 = vmatmul.mubr.f32.gmra.mrb[0].mxu0 %v6394
      %v6494 = vpop.f32.mrb[0].mxu0
      %v6495 = vadd.f32 0.0, %v6494
      %v6496 = vpop.f32.mrb[0].mxu0
      %6497 = vmatprep.mubr.f32.mxu0 0.0
      %6498 = vmatmul.mubr.f32.gmra.mrb[0].mxu0 %v6395
      %v6499 = vpop.f32.mrb[0].mxu0
      %v6500 = vadd.f32 0.0, %v6499
      %v6501 = vpop.f32.mrb[0].mxu0
      %6502 = vmatprep.mubr.f32.mxu0 0.0
      %6503 = vmatmul.mubr.f32.gmra.mrb[0].mxu0 %v6396
      %v6504 = vpop.f32.mrb[0].mxu0
      %v6505 = vadd.f32 0.0, %v6504
      %v6506 = vpop.f32.mrb[0].mxu0
      %6507 = vmatprep.mubr.f32.mxu0 0.0
      %6508 = vmatmul.mubr.f32.gmra.mrb[0].mxu0 %v6397
      %v6509 = vpop.f32.mrb[0].mxu0
      %v6510 = vadd.f32 0.0, %v6509
      %v6511 = vpop.f32.mrb[0].mxu0
      %6512 = vmatprep.mubr.f32.mxu0 0.0
      %6513 = vmatmul.mubr.f32.gmra.mrb[0].mxu0 %v6398
      %v6514 = vpop.f32.mrb[0].mxu0
      %v6515 = vadd.f32 0.0, %v6514
      %v6516 = vpop.f32.mrb[0].mxu0
      %6517 = vmatprep.mubr.f32.mxu0 0.0
      %6518 = vmatmul.mubr.f32.gmra.mrb[0].mxu0 %v6399
      %v6519 = vpop.f32.mrb[0].mxu0
      %v6520 = vadd.f32 0.0, %v6519
      %v6521 = vpop.f32.mrb[0].mxu0
      %6522 = vmatprep.mubr.f32.mxu0 0.0
      %6523 = vmatmul.mubr.f32.gmra.mrb[0].mxu0 %v6400
      %v6524 = vpop.f32.mrb[0].mxu0
      %v6525 = vadd.f32 0.0, %v6524
      %v6526 = vpop.f32.mrb[0].mxu0
      %6527 = vmatprep.mubr.f32.mxu0 0.0
      %6528 = vmatmul.mubr.f32.gmra.mrb[0].mxu0 %v6401
      %v6529 = vpop.f32.mrb[0].mxu0
      %v6530 = vadd.f32 0.0, %v6529
      %v6531 = vpop.f32.mrb[0].mxu0
      %6532 = vmatprep.mubr.f32.mxu0 0.0
      %6533 = vmatmul.mubr.f32.gmra.mrb[0].mxu0 %v6402
      %v6534 = vpop.f32.mrb[0].mxu0
      %v6535 = vadd.f32 0.0, %v6534
      %v6536 = vpop.f32.mrb[0].mxu0
      %6537 = vmatprep.mubr.f32.mxu0 0.0
      %6538 = vmatmul.mubr.f32.gmra.mrb[0].mxu0 %v6403
      %v6539 = vpop.f32.mrb[0].mxu0
      %v6540 = vadd.f32 0.0, %v6539
      %v6541 = vpop.f32.mrb[0].mxu0
      %6542 = vmatprep.mubr.f32.mxu0 0.0
      %6543 = vmatmul.mubr.f32.gmra.mrb[0].mxu0 %v6404
      %v6544 = vpop.f32.mrb[0].mxu0
      %v6545 = vadd.f32 0.0, %v6544
      %v6546 = vpop.f32.mrb[0].mxu0
      %6547 = vmatprep.mubr.f32.mxu0 0.0
      %6548 = vmatmul.mubr.f32.gmra.mrb[0].mxu0 %v6405
      %v6549 = vpop.f32.mrb[0].mxu0
      %v6550 = vadd.f32 0.0, %v6549
      %v6551 = vpop.f32.mrb[0].mxu0
      %6552 = vmatprep.mubr.f32.mxu0 0.0
      %6553 = vmatmul.mubr.f32.gmra.mrb[0].mxu0 %v6406
      %v6554 = vpop.f32.mrb[0].mxu0
      %v6555 = vadd.f32 0.0, %v6554
      %v6556 = vpop.f32.mrb[0].mxu0
      %6557 = vmatprep.mubr.f32.mxu0 0.0
      %6558 = vmatmul.mubr.f32.gmra.mrb[0].mxu0 %v6407
      %v6559 = vpop.f32.mrb[0].mxu0
      %v6560 = vadd.f32 0.0, %v6559
      %v6561 = vpop.f32.mrb[0].mxu0
      %6562 = vmatprep.mubr.f32.mxu0 0.0
      %6563 = vmatmul.mubr.f32.gmra.mrb[0].mxu0 %v6408
      %v6564 = vpop.f32.mrb[0].mxu0
      %v6565 = vadd.f32 0.0, %v6564
      %v6566 = vpop.f32.mrb[0].mxu0
      %6567 = vmatprep.mubr.f32.mxu0 0.0
      %6568 = vmatmul.mubr.f32.gmra.mrb[0].mxu0 %v6409
      %v6569 = vpop.f32.mrb[0].mxu0
      %v6570 = vadd.f32 0.0, %v6569
      %v6571 = vpop.f32.mrb[0].mxu0
      %6572 = vmatprep.mubr.f32.mxu0 0.0
      %6573 = vmatmul.mubr.f32.gmra.mrb[0].mxu0 %v6410
      %v6574 = vpop.f32.mrb[0].mxu0
      %v6575 = vadd.f32 0.0, %v6574
      %v6576 = vpop.f32.mrb[0].mxu0
      %6577 = vmatprep.mubr.f32.mxu0 0.0
      %6578 = vmatmul.mubr.f32.gmra.mrb[0].mxu0 %v6411
      %v6579 = vpop.f32.mrb[0].mxu0
      %v6580 = vadd.f32 0.0, %v6579
      %v6581 = vpop.f32.mrb[0].mxu0
      %6582 = vdwg.mxu0
      %v6583 = vadd.f32 %v6376, %v6495
      %v6584 = vadd.f32 %v6377, %v6500
      %v6585 = vadd.f32 %v6378, %v6505
      %v6586 = vadd.f32 %v6379, %v6510
      %v6587 = vadd.f32 %v6380, %v6515
      %v6588 = vadd.f32 %v6381, %v6520
      %v6589 = vadd.f32 %v6382, %v6525
      %v6590 = vadd.f32 %v6383, %v6530
      %v6591 = vadd.f32 %v6384, %v6535
      %v6592 = vadd.f32 %v6385, %v6540
      %v6593 = vadd.f32 %v6386, %v6545
      %v6594 = vadd.f32 %v6387, %v6550
      %v6595 = vadd.f32 %v6388, %v6555
      %v6596 = vadd.f32 %v6389, %v6560
      %v6597 = vadd.f32 %v6390, %v6565
      %v6598 = vadd.f32 %v6391, %v6570
      %v6599 = vadd.f32 %v6392, %v6575
      %v6600 = vadd.f32 %v6393, %v6580
      %v6601 = vld [vmem:[%s4] sm:$0x1]
      %v6603 = vlaneseq
      %v6604 = vshrl.u32 %v6603, 7
      %v6605 = vsub.s32 0, %v6604
      %v6606 = vrot.slane %v6601, %v6605
      %v6608 = vadd.f32 %v6583, %v6606
      %v6609 = vadd.f32 %v6584, %v6606
      %v6610 = vadd.f32 %v6585, %v6606
      %v6611 = vadd.f32 %v6586, %v6606
      %v6612 = vadd.f32 %v6587, %v6606
      %v6613 = vadd.f32 %v6588, %v6606
      %v6614 = vadd.f32 %v6589, %v6606
      %v6615 = vadd.f32 %v6590, %v6606
      %v6616 = vadd.f32 %v6591, %v6606
      %v6617 = vadd.f32 %v6592, %v6606
      %v6618 = vadd.f32 %v6593, %v6606
      %v6619 = vadd.f32 %v6594, %v6606
      %v6620 = vadd.f32 %v6595, %v6606
      %v6621 = vadd.f32 %v6596, %v6606
      %v6622 = vadd.f32 %v6597, %v6606
      %v6623 = vadd.f32 %v6598, %v6606
      %v6624 = vadd.f32 %v6599, %v6606
      %v6625 = vadd.f32 %v6600, %v6606
      %v6626 = vmax.f32 %v6608, 0.0
      %v6627 = vmax.f32 %v6609, 0.0
      %v6628 = vmax.f32 %v6610, 0.0
      %v6629 = vmax.f32 %v6611, 0.0
      %v6630 = vmax.f32 %v6612, 0.0
      %v6631 = vmax.f32 %v6613, 0.0
      %v6632 = vmax.f32 %v6614, 0.0
      %v6633 = vmax.f32 %v6615, 0.0
      %v6634 = vmax.f32 %v6616, 0.0
      %v6635 = vmax.f32 %v6617, 0.0
      %v6636 = vmax.f32 %v6618, 0.0
      %v6637 = vmax.f32 %v6619, 0.0
      %v6638 = vmax.f32 %v6620, 0.0
      %v6639 = vmax.f32 %v6621, 0.0
      %v6640 = vmax.f32 %v6622, 0.0
      %v6641 = vmax.f32 %v6623, 0.0
      %v6642 = vmax.f32 %v6624, 0.0
      %v6643 = vmax.f32 %v6625, 0.0
      %vm6647 = vcmask 1041408
      %v6648 = vrot.slane %v6627, 6
      %v6649 = vrot.slane %v6628, 6
      %v6650 = vsel %vm6647, %v6648, %v6649
      %v6651 = vrot.slane %v6629, 6
      %v6652 = vsel %vm6647, %v6649, %v6651
      %v6655 = vmax.f32 %v6626, %v6650
      %v6656 = vmax.f32 %v6627, %v6652
      %v6658 = vrot.slane %v6655, 1
      %v6660 = vmax.f32 %v6655, %v6658
      %v6662 = vrot.slane %v6656, 1
      %v6664 = vmax.f32 %v6656, %v6662
      %v6667 = vrot.slane %v6631, 6
      %v6668 = vrot.slane %v6632, 6
      %v6669 = vsel %vm6647, %v6667, %v6668
      %v6672 = vmax.f32 %v6629, %v6667
      %v6673 = vmax.f32 %v6630, %v6669
      %v6675 = vrot.slane %v6672, 1
      %v6677 = vmax.f32 %v6672, %v6675
      %v6679 = vrot.slane %v6673, 1
      %v6681 = vmax.f32 %v6673, %v6679
      %v6685 = vrot.slane %v6634, 6
      %v6686 = vrot.slane %v6635, 6
      %v6687 = vsel %vm6647, %v6685, %v6686
      %v6688 = vrot.slane %v6636, 6
      %v6689 = vsel %vm6647, %v6686, %v6688
      %v6692 = vmax.f32 %v6633, %v6687
      %v6693 = vmax.f32 %v6634, %v6689
      %v6695 = vrot.slane %v6692, 1
      %v6697 = vmax.f32 %v6692, %v6695
      %v6699 = vrot.slane %v6693, 1
      %v6701 = vmax.f32 %v6693, %v6699
      %v6704 = vrot.slane %v6638, 6
      %v6705 = vrot.slane %v6639, 6
      %v6706 = vsel %vm6647, %v6704, %v6705
      %v6709 = vmax.f32 %v6636, %v6704
      %v6710 = vmax.f32 %v6637, %v6706
      %v6712 = vrot.slane %v6709, 1
      %v6714 = vmax.f32 %v6709, %v6712
      %v6716 = vrot.slane %v6710, 1
      %v6718 = vmax.f32 %v6710, %v6716
      %v6722 = vrot.slane %v6641, 6
      %v6723 = vrot.slane %v6642, 6
      %v6724 = vsel %vm6647, %v6722, %v6723
      %v6725 = vrot.slane %v6643, 6
      %v6726 = vsel %vm6647, %v6723, %v6725
      %v6729 = vmax.f32 %v6640, %v6724
      %v6730 = vmax.f32 %v6641, %v6726
      %v6732 = vrot.slane %v6729, 1
      %v6734 = vmax.f32 %v6729, %v6732
      %v6736 = vrot.slane %v6730, 1
      %v6738 = vmax.f32 %v6730, %v6736
      %v6740 = vrot.slane %v6660, 2
      %v6742 = vrot.slane %v6660, 4
      %v6744 = vrot.slane %v6660, 6
      %v6747 = vrot.slane %v6677, 4
      %v6749 = vrot.slane %v6677, 6
      %v6752 = vrot.slane %v6681, 2
      %v6754 = vrot.slane %v6681, 4
      %v6757 = vrot.slane %v6697, 2
      %v6759 = vrot.slane %v6697, 4
      %v6761 = vrot.slane %v6697, 6
      %v6764 = vrot.slane %v6714, 4
      %v6767 = vrot.slane %v6718, 2
      %v6768 = vrot.slane %v6718, 4
      %v6769 = vrot.slane %v6718, 6
      %v6771 = vrot.slane %v6734, 2
      %v6772 = vrot.slane %v6734, 4
      %v6773 = vrot.slane %v6734, 6
      %v6775 = vrot.slane %v6738, 2
      %v6776 = vrot.slane %v6714, 6
      %v6777 = vrot.slane %v6767, 6
      %v6778 = vrot.slane %v6768, 6
      %v6779 = vrot.slane %v6769, 6
      %v6780 = vrot.slane %v6771, 6
      %v6781 = vrot.slane %v6772, 6
      %v6782 = vrot.slane %v6773, 6
      %v6783 = vrot.slane %v6775, 6
      %v6793 = vld [vmem:[%s5] sm:$0xff]
      %v6794 = vld [vmem:[%s5 + $0x8] sm:$0xff]
      %v6795 = vld [vmem:[%s5 + $0x10] sm:$0xff]
      %v6796 = vld [vmem:[%s5 + $0x18] sm:$0xff]
      %v6797 = vld [vmem:[%s5 + $0x20] sm:$0xff]
      %v6798 = vld [vmem:[%s5 + $0x28] sm:$0xff]
      %v6799 = vld [vmem:[%s5 + $0x30] sm:$0xff]
      %v6800 = vld [vmem:[%s5 + $0x38] sm:$0xff]
      %v6801 = vld [vmem:[%s5 + $0x40] sm:$0xff]
      %v6802 = vld [vmem:[%s5 + $0x48] sm:$0xff]
      %v6803 = vld [vmem:[%s5 + $0x50] sm:$0xff]
      %v6804 = vld [vmem:[%s5 + $0x58] sm:$0xff]
      %v6805 = vld [vmem:[%s5 + $0x60] sm:$0xff]
      %v6806 = vld [vmem:[%s5 + $0x68] sm:$0xff]
      %v6807 = vld [vmem:[%s5 + $0x70] sm:$0xff]
      %v6808 = vld [vmem:[%s5 + $0x78] sm:$0xff]
      %v6809 = vld [vmem:[%s5 + $0x80] sm:$0xff]
      %v6810 = vld [vmem:[%s5 + $0x88] sm:$0xff]
      %v6811 = vld [vmem:[%s5 + $0x90] sm:$0xff]
      %v6812 = vld [vmem:[%s5 + $0x98] sm:$0xff]
      %v6813 = vld [vmem:[%s5 + $0xa0] sm:$0xff]
      %v6814 = vld [vmem:[%s5 + $0xa8] sm:$0xff]
      %v6815 = vld [vmem:[%s5 + $0xb0] sm:$0xff]
      %v6816 = vld [vmem:[%s5 + $0xb8] sm:$0xff]
      %v6817 = vld [vmem:[%s5 + $0xc0] sm:$0xff]
      %v6818 = vld [vmem:[%s5 + $0xc8] sm:$0xff]
      %v6819 = vld [vmem:[%s5 + $0xd0] sm:$0xff]
      %v6820 = vld [vmem:[%s5 + $0xd8] sm:$0xff]
      %v6821 = vld [vmem:[%s5 + $0xe0] sm:$0xff]
      %v6822 = vld [vmem:[%s5 + $0xe8] sm:$0xff]
      %v6823 = vld [vmem:[%s5 + $0xf0] sm:$0xff]
      %v6824 = vld [vmem:[%s5 + $0xf8] sm:$0xff]
      %v6825 = vld [vmem:[%s5 + $0x100] sm:$0xff]
      %v6826 = vld [vmem:[%s5 + $0x108] sm:$0xff]
      %v6827 = vld [vmem:[%s5 + $0x110] sm:$0xff]
      %v6828 = vld [vmem:[%s5 + $0x118] sm:$0xff]
      %v6829 = vld [vmem:[%s5 + $0x120] sm:$0xff]
      %v6830 = vld [vmem:[%s5 + $0x128] sm:$0xff]
      %v6831 = vld [vmem:[%s5 + $0x130] sm:$0xff]
      %v6832 = vld [vmem:[%s5 + $0x138] sm:$0xff]
      %v6833 = vld [vmem:[%s5 + $0x140] sm:$0xff]
      %v6834 = vld [vmem:[%s5 + $0x148] sm:$0xff]
      %v6835 = vld [vmem:[%s5 + $0x150] sm:$0xff]
      %v6836 = vld [vmem:[%s5 + $0x158] sm:$0xff]
      %v6837 = vld [vmem:[%s5 + $0x160] sm:$0xff]
      %v6838 = vld [vmem:[%s5 + $0x168] sm:$0xff]
      %v6839 = vld [vmem:[%s5 + $0x170] sm:$0xff]
      %v6840 = vld [vmem:[%s5 + $0x178] sm:$0xff]
      %v6841 = vld [vmem:[%s5 + $0x180] sm:$0xff]
      %v6842 = vld [vmem:[%s5 + $0x188] sm:$0xff]
      %v6843 = vld [vmem:[%s5 + $0x190] sm:$0xff]
      %v6844 = vld [vmem:[%s5 + $0x198] sm:$0xff]
      %v6845 = vld [vmem:[%s5 + $0x1a0] sm:$0xff]
      %v6846 = vld [vmem:[%s5 + $0x1a8] sm:$0xff]
      %v6847 = vld [vmem:[%s5 + $0x1b0] sm:$0xff]
      %v6848 = vld [vmem:[%s5 + $0x1b8] sm:$0xff]
      %v6849 = vld [vmem:[%s5 + $0x1c0] sm:$0xff]
      %v6850 = vld [vmem:[%s5 + $0x1c8] sm:$0xff]
      %v6851 = vld [vmem:[%s5 + $0x1d0] sm:$0xff]
      %v6852 = vld [vmem:[%s5 + $0x1d8] sm:$0xff]
      %v6853 = vld [vmem:[%s5 + $0x1e0] sm:$0xff]
      %v6854 = vld [vmem:[%s5 + $0x1e8] sm:$0xff]
      %v6855 = vld [vmem:[%s5 + $0x1f0] sm:$0xff]
      %v6856 = vld [vmem:[%s5 + $0x1f8] sm:$0xff]
      %v6857 = vld [vmem:[%s5 + $0x200] sm:$0xff]
      %v6858 = vld [vmem:[%s5 + $0x208] sm:$0xff]
      %v6859 = vld [vmem:[%s5 + $0x210] sm:$0xff]
      %v6860 = vld [vmem:[%s5 + $0x218] sm:$0xff]
      %v6861 = vld [vmem:[%s5 + $0x220] sm:$0xff]
      %v6862 = vld [vmem:[%s5 + $0x228] sm:$0xff]
      %v6863 = vld [vmem:[%s5 + $0x230] sm:$0xff]
      %v6864 = vld [vmem:[%s5 + $0x238] sm:$0xff]
      %v6865 = vld [vmem:[%s5 + $0x240] sm:$0xff]
      %v6866 = vld [vmem:[%s5 + $0x248] sm:$0xff]
      %v6867 = vld [vmem:[%s5 + $0x250] sm:$0xff]
      %v6868 = vld [vmem:[%s5 + $0x258] sm:$0xff]
      %v6869 = vld [vmem:[%s5 + $0x260] sm:$0xff]
      %v6870 = vld [vmem:[%s5 + $0x268] sm:$0xff]
      %v6871 = vld [vmem:[%s5 + $0x270] sm:$0xff]
      %v6872 = vld [vmem:[%s5 + $0x278] sm:$0xff]
      %v6873 = vld [vmem:[%s5 + $0x280] sm:$0xff]
      %v6874 = vld [vmem:[%s5 + $0x288] sm:$0xff]
      %v6875 = vld [vmem:[%s5 + $0x290] sm:$0xff]
      %v6876 = vld [vmem:[%s5 + $0x298] sm:$0xff]
      %v6877 = vld [vmem:[%s5 + $0x2a0] sm:$0xff]
      %v6878 = vld [vmem:[%s5 + $0x2a8] sm:$0xff]
      %v6879 = vld [vmem:[%s5 + $0x2b0] sm:$0xff]
      %v6880 = vld [vmem:[%s5 + $0x2b8] sm:$0xff]
      %v6881 = vld [vmem:[%s5 + $0x2c0] sm:$0xff]
      %v6882 = vld [vmem:[%s5 + $0x2c8] sm:$0xff]
      %v6883 = vld [vmem:[%s5 + $0x2d0] sm:$0xff]
      %v6884 = vld [vmem:[%s5 + $0x2d8] sm:$0xff]
      %v6885 = vld [vmem:[%s5 + $0x2e0] sm:$0xff]
      %v6886 = vld [vmem:[%s5 + $0x2e8] sm:$0xff]
      %v6887 = vld [vmem:[%s5 + $0x2f0] sm:$0xff]
      %v6888 = vld [vmem:[%s5 + $0x2f8] sm:$0xff]
      %v6889 = vld [vmem:[%s5 + $0x300] sm:$0xff]
      %v6890 = vld [vmem:[%s5 + $0x308] sm:$0xff]
      %v6891 = vld [vmem:[%s5 + $0x310] sm:$0xff]
      %v6892 = vld [vmem:[%s5 + $0x318] sm:$0xff]
      %v6893 = vld [vmem:[%s5 + $0x320] sm:$0xff]
      %v6894 = vld [vmem:[%s5 + $0x328] sm:$0xff]
      %v6895 = vld [vmem:[%s5 + $0x330] sm:$0xff]
      %v6896 = vld [vmem:[%s5 + $0x338] sm:$0xff]
      %v6897 = vld [vmem:[%s5 + $0x340] sm:$0xff]
      %v6898 = vld [vmem:[%s5 + $0x348] sm:$0xff]
      %v6899 = vld [vmem:[%s5 + $0x350] sm:$0xff]
      %v6900 = vld [vmem:[%s5 + $0x358] sm:$0xff]
      %v6901 = vld [vmem:[%s5 + $0x360] sm:$0xff]
      %v6902 = vld [vmem:[%s5 + $0x368] sm:$0xff]
      %v6903 = vld [vmem:[%s5 + $0x370] sm:$0xff]
      %v6904 = vld [vmem:[%s5 + $0x378] sm:$0xff]
      %v6905 = vld [vmem:[%s5 + $0x380] sm:$0xff]
      %v6906 = vld [vmem:[%s5 + $0x388] sm:$0xff]
      %v6907 = vld [vmem:[%s5 + $0x390] sm:$0xff]
      %v6908 = vld [vmem:[%s5 + $0x398] sm:$0xff]
      %v6909 = vld [vmem:[%s5 + $0x3a0] sm:$0xff]
      %v6910 = vld [vmem:[%s5 + $0x3a8] sm:$0xff]
      %v6911 = vld [vmem:[%s5 + $0x3b0] sm:$0xff]
      %v6912 = vld [vmem:[%s5 + $0x3b8] sm:$0xff]
      %v6913 = vld [vmem:[%s5 + $0x3c0] sm:$0xff]
      %v6914 = vld [vmem:[%s5 + $0x3c8] sm:$0xff]
      %v6915 = vld [vmem:[%s5 + $0x3d0] sm:$0xff]
      %v6916 = vld [vmem:[%s5 + $0x3d8] sm:$0xff]
      %v6917 = vld [vmem:[%s5 + $0x3e0] sm:$0xff]
      %v6918 = vld [vmem:[%s5 + $0x3e8] sm:$0xff]
      %v6919 = vld [vmem:[%s5 + $0x3f0] sm:$0xff]
      %v6920 = vld [vmem:[%s5 + $0x3f8] sm:$0xff]
      %v6921 = vld [vmem:[%s5 + $0x400] sm:$0xff]
      %v6922 = vld [vmem:[%s5 + $0x408] sm:$0xff]
      %v6923 = vld [vmem:[%s5 + $0x410] sm:$0xff]
      %v6924 = vld [vmem:[%s5 + $0x418] sm:$0xff]
      %v6925 = vld [vmem:[%s5 + $0x420] sm:$0xff]
      %v6926 = vld [vmem:[%s5 + $0x428] sm:$0xff]
      %v6927 = vld [vmem:[%s5 + $0x430] sm:$0xff]
      %v6928 = vld [vmem:[%s5 + $0x438] sm:$0xff]
      %v6929 = vld [vmem:[%s5 + $0x440] sm:$0xff]
      %v6930 = vld [vmem:[%s5 + $0x448] sm:$0xff]
      %v6931 = vld [vmem:[%s5 + $0x450] sm:$0xff]
      %v6932 = vld [vmem:[%s5 + $0x458] sm:$0xff]
      %v6933 = vld [vmem:[%s5 + $0x460] sm:$0xff]
      %v6934 = vld [vmem:[%s5 + $0x468] sm:$0xff]
      %v6935 = vld [vmem:[%s5 + $0x470] sm:$0xff]
      %v6936 = vld [vmem:[%s5 + $0x478] sm:$0xff]
      %v6937 = vld [vmem:[%s5 + $0x480] sm:$0xff]
      %v6938 = vld [vmem:[%s5 + $0x488] sm:$0xff]
      %v6939 = vld [vmem:[%s5 + $0x490] sm:$0xff]
      %v6940 = vld [vmem:[%s5 + $0x498] sm:$0xff]
      %v6941 = vld [vmem:[%s5 + $0x4a0] sm:$0xff]
      %v6942 = vld [vmem:[%s5 + $0x4a8] sm:$0xff]
      %v6943 = vld [vmem:[%s5 + $0x4b0] sm:$0xff]
      %v6944 = vld [vmem:[%s5 + $0x4b8] sm:$0xff]
      %v6945 = vld [vmem:[%s5 + $0x4c0] sm:$0xff]
      %v6946 = vld [vmem:[%s5 + $0x4c8] sm:$0xff]
      %v6947 = vld [vmem:[%s5 + $0x4d0] sm:$0xff]
      %v6948 = vld [vmem:[%s5 + $0x4d8] sm:$0xff]
      %v6949 = vld [vmem:[%s5 + $0x4e0] sm:$0xff]
      %v6950 = vld [vmem:[%s5 + $0x4e8] sm:$0xff]
      %v6951 = vld [vmem:[%s5 + $0x4f0] sm:$0xff]
      %v6952 = vld [vmem:[%s5 + $0x4f8] sm:$0xff]
      %v6953 = vld [vmem:[%s5 + $0x500] sm:$0xff]
      %v6954 = vld [vmem:[%s5 + $0x508] sm:$0xff]
      %v6955 = vld [vmem:[%s5 + $0x510] sm:$0xff]
      %v6956 = vld [vmem:[%s5 + $0x518] sm:$0xff]
      %v6957 = vld [vmem:[%s5 + $0x520] sm:$0xff]
      %v6958 = vld [vmem:[%s5 + $0x528] sm:$0xff]
      %v6959 = vld [vmem:[%s5 + $0x530] sm:$0xff]
      %v6960 = vld [vmem:[%s5 + $0x538] sm:$0xff]
      %v6961 = vld [vmem:[%s5 + $0x540] sm:$0xff]
      %v6962 = vld [vmem:[%s5 + $0x548] sm:$0xff]
      %v6963 = vld [vmem:[%s5 + $0x550] sm:$0xff]
      %v6964 = vld [vmem:[%s5 + $0x558] sm:$0xff]
      %v6965 = vld [vmem:[%s5 + $0x560] sm:$0xff]
      %v6966 = vld [vmem:[%s5 + $0x568] sm:$0xff]
      %v6967 = vld [vmem:[%s5 + $0x570] sm:$0xff]
      %v6968 = vld [vmem:[%s5 + $0x578] sm:$0xff]
      %v6969 = vld [vmem:[%s5 + $0x580] sm:$0xff]
      %v6970 = vld [vmem:[%s5 + $0x588] sm:$0xff]
      %v6971 = vld [vmem:[%s5 + $0x590] sm:$0xff]
      %v6972 = vld [vmem:[%s5 + $0x598] sm:$0xff]
      %v6973 = vld [vmem:[%s5 + $0x5a0] sm:$0xff]
      %v6974 = vld [vmem:[%s5 + $0x5a8] sm:$0xff]
      %v6975 = vld [vmem:[%s5 + $0x5b0] sm:$0xff]
      %v6976 = vld [vmem:[%s5 + $0x5b8] sm:$0xff]
      %v6977 = vld [vmem:[%s5 + $0x5c0] sm:$0xff]
      %v6978 = vld [vmem:[%s5 + $0x5c8] sm:$0xff]
      %v6979 = vld [vmem:[%s5 + $0x5d0] sm:$0xff]
      %v6980 = vld [vmem:[%s5 + $0x5d8] sm:$0xff]
      %v6981 = vld [vmem:[%s5 + $0x5e0] sm:$0xff]
      %v6982 = vld [vmem:[%s5 + $0x5e8] sm:$0xff]
      %v6983 = vld [vmem:[%s5 + $0x5f0] sm:$0xff]
      %v6984 = vld [vmem:[%s5 + $0x5f8] sm:$0xff]
      %v6985 = vld [vmem:[%s5 + $0x600] sm:$0xff]
      %v6986 = vld [vmem:[%s5 + $0x608] sm:$0xff]
      %v6987 = vld [vmem:[%s5 + $0x610] sm:$0xff]
      %v6988 = vld [vmem:[%s5 + $0x618] sm:$0xff]
      %v6989 = vld [vmem:[%s5 + $0x620] sm:$0xff]
      %v6990 = vld [vmem:[%s5 + $0x628] sm:$0xff]
      %v6991 = vld [vmem:[%s5 + $0x630] sm:$0xff]
      %v6992 = vld [vmem:[%s5 + $0x638] sm:$0xff]
      %v6993 = vld [vmem:[%s5 + $0x640] sm:$0xff]
      %v6994 = vld [vmem:[%s5 + $0x648] sm:$0xff]
      %v6995 = vld [vmem:[%s5 + $0x650] sm:$0xff]
      %v6996 = vld [vmem:[%s5 + $0x658] sm:$0xff]
      %v6997 = vld [vmem:[%s5 + $0x660] sm:$0xff]
      %v6998 = vld [vmem:[%s5 + $0x668] sm:$0xff]
      %v6999 = vld [vmem:[%s5 + $0x670] sm:$0xff]
      %v7000 = vld [vmem:[%s5 + $0x678] sm:$0xff]
      %v7001 = vld [vmem:[%s5 + $0x680] sm:$0xff]
      %v7002 = vld [vmem:[%s5 + $0x688] sm:$0xff]
      %v7003 = vld [vmem:[%s5 + $0x690] sm:$0xff]
      %v7004 = vld [vmem:[%s5 + $0x698] sm:$0xff]
      %v7005 = vld [vmem:[%s5 + $0x6a0] sm:$0xff]
      %v7006 = vld [vmem:[%s5 + $0x6a8] sm:$0xff]
      %v7007 = vld [vmem:[%s5 + $0x6b0] sm:$0xff]
      %v7008 = vld [vmem:[%s5 + $0x6b8] sm:$0xff]
      %v7009 = vld [vmem:[%s5 + $0x6c0] sm:$0xff]
      %v7010 = vld [vmem:[%s5 + $0x6c8] sm:$0xff]
      %v7011 = vld [vmem:[%s5 + $0x6d0] sm:$0xff]
      %v7012 = vld [vmem:[%s5 + $0x6d8] sm:$0xff]
      %v7013 = vld [vmem:[%s5 + $0x6e0] sm:$0xff]
      %v7014 = vld [vmem:[%s5 + $0x6e8] sm:$0xff]
      %v7015 = vld [vmem:[%s5 + $0x6f0] sm:$0xff]
      %v7016 = vld [vmem:[%s5 + $0x6f8] sm:$0xff]
      %v7017 = vld [vmem:[%s5 + $0x700] sm:$0xff]
      %v7018 = vld [vmem:[%s5 + $0x708] sm:$0xff]
      %v7019 = vld [vmem:[%s5 + $0x710] sm:$0xff]
      %v7020 = vld [vmem:[%s5 + $0x718] sm:$0xff]
      %v7021 = vld [vmem:[%s5 + $0x720] sm:$0xff]
      %v7022 = vld [vmem:[%s5 + $0x728] sm:$0xff]
      %v7023 = vld [vmem:[%s5 + $0x730] sm:$0xff]
      %v7024 = vld [vmem:[%s5 + $0x738] sm:$0xff]
      %v7025 = vld [vmem:[%s5 + $0x740] sm:$0xff]
      %v7026 = vld [vmem:[%s5 + $0x748] sm:$0xff]
      %v7027 = vld [vmem:[%s5 + $0x750] sm:$0xff]
      %v7028 = vld [vmem:[%s5 + $0x758] sm:$0xff]
      %v7029 = vld [vmem:[%s5 + $0x760] sm:$0xff]
      %v7030 = vld [vmem:[%s5 + $0x768] sm:$0xff]
      %v7031 = vld [vmem:[%s5 + $0x770] sm:$0xff]
      %v7032 = vld [vmem:[%s5 + $0x778] sm:$0xff]
      %v7033 = vld [vmem:[%s5 + $0x780] sm:$0xff]
      %v7034 = vld [vmem:[%s5 + $0x788] sm:$0xff]
      %v7035 = vld [vmem:[%s5 + $0x790] sm:$0xff]
      %v7036 = vld [vmem:[%s5 + $0x798] sm:$0xff]
      %v7037 = vld [vmem:[%s5 + $0x7a0] sm:$0xff]
      %v7038 = vld [vmem:[%s5 + $0x7a8] sm:$0xff]
      %v7039 = vld [vmem:[%s5 + $0x7b0] sm:$0xff]
      %v7040 = vld [vmem:[%s5 + $0x7b8] sm:$0xff]
      %v7041 = vld [vmem:[%s5 + $0x7c0] sm:$0xff]
      %v7042 = vld [vmem:[%s5 + $0x7c8] sm:$0xff]
      %v7043 = vld [vmem:[%s5 + $0x7d0] sm:$0xff]
      %v7044 = vld [vmem:[%s5 + $0x7d8] sm:$0xff]
      %v7045 = vld [vmem:[%s5 + $0x7e0] sm:$0xff]
      %v7046 = vld [vmem:[%s5 + $0x7e8] sm:$0xff]
      %v7047 = vld [vmem:[%s5 + $0x7f0] sm:$0xff]
      %v7048 = vld [vmem:[%s5 + $0x7f8] sm:$0xff]
      %v7049 = vld [vmem:[%s5 + $0x800] sm:$0xff]
      %v7050 = vld [vmem:[%s5 + $0x808] sm:$0xff]
      %v7051 = vld [vmem:[%s5 + $0x810] sm:$0xff]
      %v7052 = vld [vmem:[%s5 + $0x818] sm:$0xff]
      %v7053 = vld [vmem:[%s5 + $0x820] sm:$0xff]
      %v7054 = vld [vmem:[%s5 + $0x828] sm:$0xff]
      %v7055 = vld [vmem:[%s5 + $0x830] sm:$0xff]
      %v7056 = vld [vmem:[%s5 + $0x838] sm:$0xff]
      %v7057 = vld [vmem:[%s5 + $0x840] sm:$0xff]
      %v7058 = vld [vmem:[%s5 + $0x848] sm:$0xff]
      %v7059 = vld [vmem:[%s5 + $0x850] sm:$0xff]
      %v7060 = vld [vmem:[%s5 + $0x858] sm:$0xff]
      %v7061 = vld [vmem:[%s5 + $0x860] sm:$0xff]
      %v7062 = vld [vmem:[%s5 + $0x868] sm:$0xff]
      %v7063 = vld [vmem:[%s5 + $0x870] sm:$0xff]
      %v7064 = vld [vmem:[%s5 + $0x878] sm:$0xff]
      %v7065 = vld [vmem:[%s5 + $0x880] sm:$0xff]
      %v7066 = vld [vmem:[%s5 + $0x888] sm:$0xff]
      %v7067 = vld [vmem:[%s5 + $0x890] sm:$0xff]
      %v7068 = vld [vmem:[%s5 + $0x898] sm:$0xff]
      %v7069 = vld [vmem:[%s5 + $0x8a0] sm:$0xff]
      %v7070 = vld [vmem:[%s5 + $0x8a8] sm:$0xff]
      %v7071 = vld [vmem:[%s5 + $0x8b0] sm:$0xff]
      %v7072 = vld [vmem:[%s5 + $0x8b8] sm:$0xff]
      %v7073 = vld [vmem:[%s5 + $0x8c0] sm:$0xff]
      %v7074 = vld [vmem:[%s5 + $0x8c8] sm:$0xff]
      %v7075 = vld [vmem:[%s5 + $0x8d0] sm:$0xff]
      %v7076 = vld [vmem:[%s5 + $0x8d8] sm:$0xff]
      %v7077 = vld [vmem:[%s5 + $0x8e0] sm:$0xff]
      %v7078 = vld [vmem:[%s5 + $0x8e8] sm:$0xff]
      %v7079 = vld [vmem:[%s5 + $0x8f0] sm:$0xff]
      %v7080 = vld [vmem:[%s5 + $0x8f8] sm:$0xff]
      %v7081 = vld [vmem:[%s5 + $0x900] sm:$0xff]
      %v7082 = vld [vmem:[%s5 + $0x908] sm:$0xff]
      %v7083 = vld [vmem:[%s5 + $0x910] sm:$0xff]
      %v7084 = vld [vmem:[%s5 + $0x918] sm:$0xff]
      %v7085 = vld [vmem:[%s5 + $0x920] sm:$0xff]
      %v7086 = vld [vmem:[%s5 + $0x928] sm:$0xff]
      %v7087 = vld [vmem:[%s5 + $0x930] sm:$0xff]
      %v7088 = vld [vmem:[%s5 + $0x938] sm:$0xff]
      %v7089 = vld [vmem:[%s5 + $0x940] sm:$0xff]
      %v7090 = vld [vmem:[%s5 + $0x948] sm:$0xff]
      %v7091 = vld [vmem:[%s5 + $0x950] sm:$0xff]
      %v7092 = vld [vmem:[%s5 + $0x958] sm:$0xff]
      %v7093 = vld [vmem:[%s5 + $0x960] sm:$0xff]
      %v7094 = vld [vmem:[%s5 + $0x968] sm:$0xff]
      %v7095 = vld [vmem:[%s5 + $0x970] sm:$0xff]
      %v7096 = vld [vmem:[%s5 + $0x978] sm:$0xff]
      %v7097 = vld [vmem:[%s5 + $0x980] sm:$0xff]
      %v7098 = vld [vmem:[%s5 + $0x988] sm:$0xff]
      %v7099 = vld [vmem:[%s5 + $0x990] sm:$0xff]
      %v7100 = vld [vmem:[%s5 + $0x998] sm:$0xff]
      %v7101 = vld [vmem:[%s5 + $0x9a0] sm:$0xff]
      %v7102 = vld [vmem:[%s5 + $0x9a8] sm:$0xff]
      %v7103 = vld [vmem:[%s5 + $0x9b0] sm:$0xff]
      %v7104 = vld [vmem:[%s5 + $0x9b8] sm:$0xff]
      %v7105 = vld [vmem:[%s5 + $0x9c0] sm:$0xff]
      %v7106 = vld [vmem:[%s5 + $0x9c8] sm:$0xff]
      %v7107 = vld [vmem:[%s5 + $0x9d0] sm:$0xff]
      %v7108 = vld [vmem:[%s5 + $0x9d8] sm:$0xff]
      %v7109 = vld [vmem:[%s5 + $0x9e0] sm:$0xff]
      %v7110 = vld [vmem:[%s5 + $0x9e8] sm:$0xff]
      %v7111 = vld [vmem:[%s5 + $0x9f0] sm:$0xff]
      %v7112 = vld [vmem:[%s5 + $0x9f8] sm:$0xff]
      %v7113 = vld [vmem:[%s5 + $0xa00] sm:$0xff]
      %v7114 = vld [vmem:[%s5 + $0xa08] sm:$0xff]
      %v7115 = vld [vmem:[%s5 + $0xa10] sm:$0xff]
      %v7116 = vld [vmem:[%s5 + $0xa18] sm:$0xff]
      %v7117 = vld [vmem:[%s5 + $0xa20] sm:$0xff]
      %v7118 = vld [vmem:[%s5 + $0xa28] sm:$0xff]
      %v7119 = vld [vmem:[%s5 + $0xa30] sm:$0xff]
      %v7120 = vld [vmem:[%s5 + $0xa38] sm:$0xff]
      %v7121 = vld [vmem:[%s5 + $0xa40] sm:$0xff]
      %v7122 = vld [vmem:[%s5 + $0xa48] sm:$0xff]
      %v7123 = vld [vmem:[%s5 + $0xa50] sm:$0xff]
      %v7124 = vld [vmem:[%s5 + $0xa58] sm:$0xff]
      %v7125 = vld [vmem:[%s5 + $0xa60] sm:$0xff]
      %v7126 = vld [vmem:[%s5 + $0xa68] sm:$0xff]
      %v7127 = vld [vmem:[%s5 + $0xa70] sm:$0xff]
      %v7128 = vld [vmem:[%s5 + $0xa78] sm:$0xff]
      %v7129 = vld [vmem:[%s5 + $0xa80] sm:$0xff]
      %v7130 = vld [vmem:[%s5 + $0xa88] sm:$0xff]
      %v7131 = vld [vmem:[%s5 + $0xa90] sm:$0xff]
      %v7132 = vld [vmem:[%s5 + $0xa98] sm:$0xff]
      %v7133 = vld [vmem:[%s5 + $0xaa0] sm:$0xff]
      %v7134 = vld [vmem:[%s5 + $0xaa8] sm:$0xff]
      %v7135 = vld [vmem:[%s5 + $0xab0] sm:$0xff]
      %v7136 = vld [vmem:[%s5 + $0xab8] sm:$0xff]
      %v7137 = vld [vmem:[%s5 + $0xac0] sm:$0xff]
      %v7138 = vld [vmem:[%s5 + $0xac8] sm:$0xff]
      %v7139 = vld [vmem:[%s5 + $0xad0] sm:$0xff]
      %v7140 = vld [vmem:[%s5 + $0xad8] sm:$0xff]
      %v7141 = vld [vmem:[%s5 + $0xae0] sm:$0xff]
      %v7142 = vld [vmem:[%s5 + $0xae8] sm:$0xff]
      %v7143 = vld [vmem:[%s5 + $0xaf0] sm:$0xff]
      %v7144 = vld [vmem:[%s5 + $0xaf8] sm:$0xff]
      %v7145 = vld [vmem:[%s5 + $0xb00] sm:$0xff]
      %v7146 = vld [vmem:[%s5 + $0xb08] sm:$0xff]
      %v7147 = vld [vmem:[%s5 + $0xb10] sm:$0xff]
      %v7148 = vld [vmem:[%s5 + $0xb18] sm:$0xff]
      %v7149 = vld [vmem:[%s5 + $0xb20] sm:$0xff]
      %v7150 = vld [vmem:[%s5 + $0xb28] sm:$0xff]
      %v7151 = vld [vmem:[%s5 + $0xb30] sm:$0xff]
      %v7152 = vld [vmem:[%s5 + $0xb38] sm:$0xff]
      %v7153 = vld [vmem:[%s5 + $0xb40] sm:$0xff]
      %v7154 = vld [vmem:[%s5 + $0xb48] sm:$0xff]
      %v7155 = vld [vmem:[%s5 + $0xb50] sm:$0xff]
      %v7156 = vld [vmem:[%s5 + $0xb58] sm:$0xff]
      %v7157 = vld [vmem:[%s5 + $0xb60] sm:$0xff]
      %v7158 = vld [vmem:[%s5 + $0xb68] sm:$0xff]
      %v7159 = vld [vmem:[%s5 + $0xb70] sm:$0xff]
      %v7160 = vld [vmem:[%s5 + $0xb78] sm:$0xff]
      %v7161 = vld [vmem:[%s5 + $0xb80] sm:$0xff]
      %v7162 = vld [vmem:[%s5 + $0xb88] sm:$0xff]
      %v7163 = vld [vmem:[%s5 + $0xb90] sm:$0xff]
      %v7164 = vld [vmem:[%s5 + $0xb98] sm:$0xff]
      %v7165 = vld [vmem:[%s5 + $0xba0] sm:$0xff]
      %v7166 = vld [vmem:[%s5 + $0xba8] sm:$0xff]
      %v7167 = vld [vmem:[%s5 + $0xbb0] sm:$0xff]
      %v7168 = vld [vmem:[%s5 + $0xbb8] sm:$0xff]
      %v7169 = vld [vmem:[%s5 + $0xbc0] sm:$0xff]
      %v7170 = vld [vmem:[%s5 + $0xbc8] sm:$0xff]
      %v7171 = vld [vmem:[%s5 + $0xbd0] sm:$0xff]
      %v7172 = vld [vmem:[%s5 + $0xbd8] sm:$0xff]
      %v7173 = vld [vmem:[%s5 + $0xbe0] sm:$0xff]
      %v7174 = vld [vmem:[%s5 + $0xbe8] sm:$0xff]
      %v7175 = vld [vmem:[%s5 + $0xbf0] sm:$0xff]
      %v7176 = vld [vmem:[%s5 + $0xbf8] sm:$0xff]
      %v7177 = vld [vmem:[%s5 + $0xc00] sm:$0xff]
      %v7178 = vld [vmem:[%s5 + $0xc08] sm:$0xff]
      %v7179 = vld [vmem:[%s5 + $0xc10] sm:$0xff]
      %v7180 = vld [vmem:[%s5 + $0xc18] sm:$0xff]
      %v7181 = vld [vmem:[%s5 + $0xc20] sm:$0xff]
      %v7182 = vld [vmem:[%s5 + $0xc28] sm:$0xff]
      %v7183 = vld [vmem:[%s5 + $0xc30] sm:$0xff]
      %v7184 = vld [vmem:[%s5 + $0xc38] sm:$0xff]
      %v7185 = vld [vmem:[%s5 + $0xc40] sm:$0xff]
      %v7186 = vld [vmem:[%s5 + $0xc48] sm:$0xff]
      %v7187 = vld [vmem:[%s5 + $0xc50] sm:$0xff]
      %v7188 = vld [vmem:[%s5 + $0xc58] sm:$0xff]
      %v7189 = vld [vmem:[%s5 + $0xc60] sm:$0xff]
      %v7190 = vld [vmem:[%s5 + $0xc68] sm:$0xff]
      %v7191 = vld [vmem:[%s5 + $0xc70] sm:$0xff]
      %v7192 = vld [vmem:[%s5 + $0xc78] sm:$0xff]
      %v7193 = vld [vmem:[%s5 + $0xc80] sm:$0xff]
      %v7194 = vld [vmem:[%s5 + $0xc88] sm:$0xff]
      %v7195 = vld [vmem:[%s5 + $0xc90] sm:$0xff]
      %v7196 = vld [vmem:[%s5 + $0xc98] sm:$0xff]
      %v7197 = vld [vmem:[%s5 + $0xca0] sm:$0xff]
      %v7198 = vld [vmem:[%s5 + $0xca8] sm:$0xff]
      %v7199 = vld [vmem:[%s5 + $0xcb0] sm:$0xff]
      %v7200 = vld [vmem:[%s5 + $0xcb8] sm:$0xff]
      %v7201 = vld [vmem:[%s5 + $0xcc0] sm:$0xff]
      %v7202 = vld [vmem:[%s5 + $0xcc8] sm:$0xff]
      %v7203 = vld [vmem:[%s5 + $0xcd0] sm:$0xff]
      %v7204 = vld [vmem:[%s5 + $0xcd8] sm:$0xff]
      %v7205 = vld [vmem:[%s5 + $0xce0] sm:$0xff]
      %v7206 = vld [vmem:[%s5 + $0xce8] sm:$0xff]
      %v7207 = vld [vmem:[%s5 + $0xcf0] sm:$0xff]
      %v7208 = vld [vmem:[%s5 + $0xcf8] sm:$0xff]
      %v7209 = vld [vmem:[%s5 + $0xd00] sm:$0xff]
      %v7210 = vld [vmem:[%s5 + $0xd08] sm:$0xff]
      %v7211 = vld [vmem:[%s5 + $0xd10] sm:$0xff]
      %v7212 = vld [vmem:[%s5 + $0xd18] sm:$0xff]
      %v7213 = vld [vmem:[%s5 + $0xd20] sm:$0xff]
      %v7214 = vld [vmem:[%s5 + $0xd28] sm:$0xff]
      %v7215 = vld [vmem:[%s5 + $0xd30] sm:$0xff]
      %v7216 = vld [vmem:[%s5 + $0xd38] sm:$0xff]
      %v7217 = vld [vmem:[%s5 + $0xd40] sm:$0xff]
      %v7218 = vld [vmem:[%s5 + $0xd48] sm:$0xff]
      %v7219 = vld [vmem:[%s5 + $0xd50] sm:$0xff]
      %v7220 = vld [vmem:[%s5 + $0xd58] sm:$0xff]
      %v7221 = vld [vmem:[%s5 + $0xd60] sm:$0xff]
      %v7222 = vld [vmem:[%s5 + $0xd68] sm:$0xff]
      %v7223 = vld [vmem:[%s5 + $0xd70] sm:$0xff]
      %v7224 = vld [vmem:[%s5 + $0xd78] sm:$0xff]
      %v7225 = vld [vmem:[%s5 + $0xd80] sm:$0xff]
      %v7226 = vld [vmem:[%s5 + $0xd88] sm:$0xff]
      %v7227 = vld [vmem:[%s5 + $0xd90] sm:$0xff]
      %v7228 = vld [vmem:[%s5 + $0xd98] sm:$0xff]
      %v7229 = vld [vmem:[%s5 + $0xda0] sm:$0xff]
      %v7230 = vld [vmem:[%s5 + $0xda8] sm:$0xff]
      %v7231 = vld [vmem:[%s5 + $0xdb0] sm:$0xff]
      %v7232 = vld [vmem:[%s5 + $0xdb8] sm:$0xff]
      %v7233 = vld [vmem:[%s5 + $0xdc0] sm:$0xff]
      %v7234 = vld [vmem:[%s5 + $0xdc8] sm:$0xff]
      %v7235 = vld [vmem:[%s5 + $0xdd0] sm:$0xff]
      %v7236 = vld [vmem:[%s5 + $0xdd8] sm:$0xff]
      %v7237 = vld [vmem:[%s5 + $0xde0] sm:$0xff]
      %v7238 = vld [vmem:[%s5 + $0xde8] sm:$0xff]
      %v7239 = vld [vmem:[%s5 + $0xdf0] sm:$0xff]
      %v7240 = vld [vmem:[%s5 + $0xdf8] sm:$0xff]
      %v7241 = vld [vmem:[%s5 + $0xe00] sm:$0xff]
      %v7242 = vld [vmem:[%s5 + $0xe08] sm:$0xff]
      %v7243 = vld [vmem:[%s5 + $0xe10] sm:$0xff]
      %v7244 = vld [vmem:[%s5 + $0xe18] sm:$0xff]
      %v7245 = vld [vmem:[%s5 + $0xe20] sm:$0xff]
      %v7246 = vld [vmem:[%s5 + $0xe28] sm:$0xff]
      %v7247 = vld [vmem:[%s5 + $0xe30] sm:$0xff]
      %v7248 = vld [vmem:[%s5 + $0xe38] sm:$0xff]
      %v7249 = vld [vmem:[%s5 + $0xe40] sm:$0xff]
      %v7250 = vld [vmem:[%s5 + $0xe48] sm:$0xff]
      %v7251 = vld [vmem:[%s5 + $0xe50] sm:$0xff]
      %v7252 = vld [vmem:[%s5 + $0xe58] sm:$0xff]
      %v7253 = vld [vmem:[%s5 + $0xe60] sm:$0xff]
      %v7254 = vld [vmem:[%s5 + $0xe68] sm:$0xff]
      %v7255 = vld [vmem:[%s5 + $0xe70] sm:$0xff]
      %v7256 = vld [vmem:[%s5 + $0xe78] sm:$0xff]
      %v7257 = vld [vmem:[%s5 + $0xe80] sm:$0xff]
      %v7258 = vld [vmem:[%s5 + $0xe88] sm:$0xff]
      %v7259 = vld [vmem:[%s5 + $0xe90] sm:$0xff]
      %v7260 = vld [vmem:[%s5 + $0xe98] sm:$0xff]
      %v7261 = vld [vmem:[%s5 + $0xea0] sm:$0xff]
      %v7262 = vld [vmem:[%s5 + $0xea8] sm:$0xff]
      %v7263 = vld [vmem:[%s5 + $0xeb0] sm:$0xff]
      %v7264 = vld [vmem:[%s5 + $0xeb8] sm:$0xff]
      %v7265 = vld [vmem:[%s5 + $0xec0] sm:$0xff]
      %v7266 = vld [vmem:[%s5 + $0xec8] sm:$0xff]
      %v7267 = vld [vmem:[%s5 + $0xed0] sm:$0xff]
      %v7268 = vld [vmem:[%s5 + $0xed8] sm:$0xff]
      %v7269 = vld [vmem:[%s5 + $0xee0] sm:$0xff]
      %v7270 = vld [vmem:[%s5 + $0xee8] sm:$0xff]
      %v7271 = vld [vmem:[%s5 + $0xef0] sm:$0xff]
      %v7272 = vld [vmem:[%s5 + $0xef8] sm:$0xff]
      %v7273 = vld [vmem:[%s5 + $0xf00] sm:$0xff]
      %v7274 = vld [vmem:[%s5 + $0xf08] sm:$0xff]
      %v7275 = vld [vmem:[%s5 + $0xf10] sm:$0xff]
      %v7276 = vld [vmem:[%s5 + $0xf18] sm:$0xff]
      %v7277 = vld [vmem:[%s5 + $0xf20] sm:$0xff]
      %v7278 = vld [vmem:[%s5 + $0xf28] sm:$0xff]
      %v7279 = vld [vmem:[%s5 + $0xf30] sm:$0xff]
      %v7280 = vld [vmem:[%s5 + $0xf38] sm:$0xff]
      %v7281 = vld [vmem:[%s5 + $0xf40] sm:$0xff]
      %v7282 = vld [vmem:[%s5 + $0xf48] sm:$0xff]
      %v7283 = vld [vmem:[%s5 + $0xf50] sm:$0xff]
      %v7284 = vld [vmem:[%s5 + $0xf58] sm:$0xff]
      %v7285 = vld [vmem:[%s5 + $0xf60] sm:$0xff]
      %v7286 = vld [vmem:[%s5 + $0xf68] sm:$0xff]
      %v7287 = vld [vmem:[%s5 + $0xf70] sm:$0xff]
      %v7288 = vld [vmem:[%s5 + $0xf78] sm:$0xff]
      %v7289 = vld [vmem:[%s5 + $0xf80] sm:$0xff]
      %v7290 = vld [vmem:[%s5 + $0xf88] sm:$0xff]
      %v7291 = vld [vmem:[%s5 + $0xf90] sm:$0xff]
      %v7292 = vld [vmem:[%s5 + $0xf98] sm:$0xff]
      %v7293 = vld [vmem:[%s5 + $0xfa0] sm:$0xff]
      %v7294 = vld [vmem:[%s5 + $0xfa8] sm:$0xff]
      %v7295 = vld [vmem:[%s5 + $0xfb0] sm:$0xff]
      %v7296 = vld [vmem:[%s5 + $0xfb8] sm:$0xff]
      %v7297 = vld [vmem:[%s5 + $0xfc0] sm:$0xff]
      %v7298 = vld [vmem:[%s5 + $0xfc8] sm:$0xff]
      %v7299 = vld [vmem:[%s5 + $0xfd0] sm:$0xff]
      %v7300 = vld [vmem:[%s5 + $0xfd8] sm:$0xff]
      %v7301 = vld [vmem:[%s5 + $0xfe0] sm:$0xff]
      %v7302 = vld [vmem:[%s5 + $0xfe8] sm:$0xff]
      %v7303 = vld [vmem:[%s5 + $0xff0] sm:$0xff]
      %v7304 = vld [vmem:[%s5 + $0xff8] sm:$0xff]
      %v7305 = vld [vmem:[%s5 + $0x1000] sm:$0xff]
      %v7306 = vld [vmem:[%s5 + $0x1008] sm:$0xff]
      %v7307 = vld [vmem:[%s5 + $0x1010] sm:$0xff]
      %v7308 = vld [vmem:[%s5 + $0x1018] sm:$0xff]
      %v7309 = vld [vmem:[%s5 + $0x1020] sm:$0xff]
      %v7310 = vld [vmem:[%s5 + $0x1028] sm:$0xff]
      %v7311 = vld [vmem:[%s5 + $0x1030] sm:$0xff]
      %v7312 = vld [vmem:[%s5 + $0x1038] sm:$0xff]
      %v7313 = vld [vmem:[%s5 + $0x1040] sm:$0xff]
      %v7314 = vld [vmem:[%s5 + $0x1048] sm:$0xff]
      %v7315 = vld [vmem:[%s5 + $0x1050] sm:$0xff]
      %v7316 = vld [vmem:[%s5 + $0x1058] sm:$0xff]
      %v7317 = vld [vmem:[%s5 + $0x1060] sm:$0xff]
      %v7318 = vld [vmem:[%s5 + $0x1068] sm:$0xff]
      %v7319 = vld [vmem:[%s5 + $0x1070] sm:$0xff]
      %v7320 = vld [vmem:[%s5 + $0x1078] sm:$0xff]
      %v7321 = vld [vmem:[%s5 + $0x1080] sm:$0xff]
      %v7322 = vld [vmem:[%s5 + $0x1088] sm:$0xff]
      %v7323 = vld [vmem:[%s5 + $0x1090] sm:$0xff]
      %v7324 = vld [vmem:[%s5 + $0x1098] sm:$0xff]
      %v7325 = vld [vmem:[%s5 + $0x10a0] sm:$0xff]
      %v7326 = vld [vmem:[%s5 + $0x10a8] sm:$0xff]
      %v7327 = vld [vmem:[%s5 + $0x10b0] sm:$0xff]
      %v7328 = vld [vmem:[%s5 + $0x10b8] sm:$0xff]
      %v7329 = vld [vmem:[%s5 + $0x10c0] sm:$0xff]
      %v7330 = vld [vmem:[%s5 + $0x10c8] sm:$0xff]
      %v7331 = vld [vmem:[%s5 + $0x10d0] sm:$0xff]
      %v7332 = vld [vmem:[%s5 + $0x10d8] sm:$0xff]
      %v7333 = vld [vmem:[%s5 + $0x10e0] sm:$0xff]
      %v7334 = vld [vmem:[%s5 + $0x10e8] sm:$0xff]
      %v7335 = vld [vmem:[%s5 + $0x10f0] sm:$0xff]
      %v7336 = vld [vmem:[%s5 + $0x10f8] sm:$0xff]
      %v7337 = vld [vmem:[%s5 + $0x1100] sm:$0xff]
      %v7338 = vld [vmem:[%s5 + $0x1108] sm:$0xff]
      %v7339 = vld [vmem:[%s5 + $0x1110] sm:$0xff]
      %v7340 = vld [vmem:[%s5 + $0x1118] sm:$0xff]
      %v7341 = vld [vmem:[%s5 + $0x1120] sm:$0xff]
      %v7342 = vld [vmem:[%s5 + $0x1128] sm:$0xff]
      %v7343 = vld [vmem:[%s5 + $0x1130] sm:$0xff]
      %v7344 = vld [vmem:[%s5 + $0x1138] sm:$0xff]
      %v7345 = vld [vmem:[%s5 + $0x1140] sm:$0xff]
      %v7346 = vld [vmem:[%s5 + $0x1148] sm:$0xff]
      %v7347 = vld [vmem:[%s5 + $0x1150] sm:$0xff]
      %v7348 = vld [vmem:[%s5 + $0x1158] sm:$0xff]
      %v7349 = vld [vmem:[%s5 + $0x1160] sm:$0xff]
      %v7350 = vld [vmem:[%s5 + $0x1168] sm:$0xff]
      %v7351 = vld [vmem:[%s5 + $0x1170] sm:$0xff]
      %v7352 = vld [vmem:[%s5 + $0x1178] sm:$0xff]
      %v7353 = vld [vmem:[%s5 + $0x1180] sm:$0xff]
      %v7354 = vld [vmem:[%s5 + $0x1188] sm:$0xff]
      %v7355 = vld [vmem:[%s5 + $0x1190] sm:$0xff]
      %v7356 = vld [vmem:[%s5 + $0x1198] sm:$0xff]
      %v7357 = vld [vmem:[%s5 + $0x11a0] sm:$0xff]
      %v7358 = vld [vmem:[%s5 + $0x11a8] sm:$0xff]
      %v7359 = vld [vmem:[%s5 + $0x11b0] sm:$0xff]
      %v7360 = vld [vmem:[%s5 + $0x11b8] sm:$0xff]
      %v7361 = vld [vmem:[%s5 + $0x11c0] sm:$0xff]
      %v7362 = vld [vmem:[%s5 + $0x11c8] sm:$0xff]
      %v7363 = vld [vmem:[%s5 + $0x11d0] sm:$0xff]
      %v7364 = vld [vmem:[%s5 + $0x11d8] sm:$0xff]
      %v7365 = vld [vmem:[%s5 + $0x11e0] sm:$0xff]
      %v7366 = vld [vmem:[%s5 + $0x11e8] sm:$0xff]
      %v7367 = vld [vmem:[%s5 + $0x11f0] sm:$0xff]
      %v7368 = vld [vmem:[%s5 + $0x11f8] sm:$0xff]
      %v7369 = vld [vmem:[%s5 + $0x1200] sm:$0xff]
      %v7370 = vld [vmem:[%s5 + $0x1208] sm:$0xff]
      %v7371 = vld [vmem:[%s5 + $0x1210] sm:$0xff]
      %v7372 = vld [vmem:[%s5 + $0x1218] sm:$0xff]
      %v7373 = vld [vmem:[%s5 + $0x1220] sm:$0xff]
      %v7374 = vld [vmem:[%s5 + $0x1228] sm:$0xff]
      %v7375 = vld [vmem:[%s5 + $0x1230] sm:$0xff]
      %v7376 = vld [vmem:[%s5 + $0x1238] sm:$0xff]
      %v7377 = vld [vmem:[%s5 + $0x1240] sm:$0xff]
      %v7378 = vld [vmem:[%s5 + $0x1248] sm:$0xff]
      %v7379 = vld [vmem:[%s5 + $0x1250] sm:$0xff]
      %v7380 = vld [vmem:[%s5 + $0x1258] sm:$0xff]
      %v7381 = vld [vmem:[%s5 + $0x1260] sm:$0xff]
      %v7382 = vld [vmem:[%s5 + $0x1268] sm:$0xff]
      %v7383 = vld [vmem:[%s5 + $0x1270] sm:$0xff]
      %v7384 = vld [vmem:[%s5 + $0x1278] sm:$0xff]
      %v7385 = vld [vmem:[%s5 + $0x1280] sm:$0xff]
      %v7386 = vld [vmem:[%s5 + $0x1288] sm:$0xff]
      %v7387 = vld [vmem:[%s5 + $0x1290] sm:$0xff]
      %v7388 = vld [vmem:[%s5 + $0x1298] sm:$0xff]
      %v7389 = vld [vmem:[%s5 + $0x12a0] sm:$0xff]
      %v7390 = vld [vmem:[%s5 + $0x12a8] sm:$0xff]
      %v7391 = vld [vmem:[%s5 + $0x12b0] sm:$0xff]
      %v7392 = vld [vmem:[%s5 + $0x12b8] sm:$0xff]
      %v7393 = vld [vmem:[%s5 + $0x12c0] sm:$0xff]
      %v7394 = vld [vmem:[%s5 + $0x12c8] sm:$0xff]
      %v7395 = vld [vmem:[%s5 + $0x12d0] sm:$0xff]
      %v7396 = vld [vmem:[%s5 + $0x12d8] sm:$0xff]
      %v7397 = vld [vmem:[%s5 + $0x12e0] sm:$0xff]
      %v7398 = vld [vmem:[%s5 + $0x12e8] sm:$0xff]
      %v7399 = vld [vmem:[%s5 + $0x12f0] sm:$0xff]
      %v7400 = vld [vmem:[%s5 + $0x12f8] sm:$0xff]
      %v7401 = vld [vmem:[%s5 + $0x1300] sm:$0xff]
      %v7402 = vld [vmem:[%s5 + $0x1308] sm:$0xff]
      %v7403 = vld [vmem:[%s5 + $0x1310] sm:$0xff]
      %v7404 = vld [vmem:[%s5 + $0x1318] sm:$0xff]
      %v7405 = vld [vmem:[%s5 + $0x1320] sm:$0xff]
      %v7406 = vld [vmem:[%s5 + $0x1328] sm:$0xff]
      %v7407 = vld [vmem:[%s5 + $0x1330] sm:$0xff]
      %v7408 = vld [vmem:[%s5 + $0x1338] sm:$0xff]
      %v7409 = vld [vmem:[%s5 + $0x1340] sm:$0xff]
      %v7410 = vld [vmem:[%s5 + $0x1348] sm:$0xff]
      %v7411 = vld [vmem:[%s5 + $0x1350] sm:$0xff]
      %v7412 = vld [vmem:[%s5 + $0x1358] sm:$0xff]
      %v7413 = vld [vmem:[%s5 + $0x1360] sm:$0xff]
      %v7414 = vld [vmem:[%s5 + $0x1368] sm:$0xff]
      %v7415 = vld [vmem:[%s5 + $0x1370] sm:$0xff]
      %v7416 = vld [vmem:[%s5 + $0x1378] sm:$0xff]
      %v7417 = vld [vmem:[%s5 + $0x1380] sm:$0xff]
      %v7418 = vld [vmem:[%s5 + $0x1388] sm:$0xff]
      %v7419 = vld [vmem:[%s5 + $0x1390] sm:$0xff]
      %v7420 = vld [vmem:[%s5 + $0x1398] sm:$0xff]
      %v7421 = vld [vmem:[%s5 + $0x13a0] sm:$0xff]
      %v7422 = vld [vmem:[%s5 + $0x13a8] sm:$0xff]
      %v7423 = vld [vmem:[%s5 + $0x13b0] sm:$0xff]
      %v7424 = vld [vmem:[%s5 + $0x13b8] sm:$0xff]
      %v7425 = vld [vmem:[%s5 + $0x13c0] sm:$0xff]
      %v7426 = vld [vmem:[%s5 + $0x13c8] sm:$0xff]
      %v7427 = vld [vmem:[%s5 + $0x13d0] sm:$0xff]
      %v7428 = vld [vmem:[%s5 + $0x13d8] sm:$0xff]
      %v7429 = vld [vmem:[%s5 + $0x13e0] sm:$0xff]
      %v7430 = vld [vmem:[%s5 + $0x13e8] sm:$0xff]
      %v7431 = vld [vmem:[%s5 + $0x13f0] sm:$0xff]
      %v7432 = vld [vmem:[%s5 + $0x13f8] sm:$0xff]
      %v7433 = vld [vmem:[%s5 + $0x1400] sm:$0xff]
      %v7434 = vld [vmem:[%s5 + $0x1408] sm:$0xff]
      %v7435 = vld [vmem:[%s5 + $0x1410] sm:$0xff]
      %v7436 = vld [vmem:[%s5 + $0x1418] sm:$0xff]
      %v7437 = vld [vmem:[%s5 + $0x1420] sm:$0xff]
      %v7438 = vld [vmem:[%s5 + $0x1428] sm:$0xff]
      %v7439 = vld [vmem:[%s5 + $0x1430] sm:$0xff]
      %v7440 = vld [vmem:[%s5 + $0x1438] sm:$0xff]
      %v7441 = vld [vmem:[%s5 + $0x1440] sm:$0xff]
      %v7442 = vld [vmem:[%s5 + $0x1448] sm:$0xff]
      %v7443 = vld [vmem:[%s5 + $0x1450] sm:$0xff]
      %v7444 = vld [vmem:[%s5 + $0x1458] sm:$0xff]
      %v7445 = vld [vmem:[%s5 + $0x1460] sm:$0xff]
      %v7446 = vld [vmem:[%s5 + $0x1468] sm:$0xff]
      %v7447 = vld [vmem:[%s5 + $0x1470] sm:$0xff]
      %v7448 = vld [vmem:[%s5 + $0x1478] sm:$0xff]
      %v7449 = vld [vmem:[%s5 + $0x1480] sm:$0xff]
      %v7450 = vld [vmem:[%s5 + $0x1488] sm:$0xff]
      %v7451 = vld [vmem:[%s5 + $0x1490] sm:$0xff]
      %v7452 = vld [vmem:[%s5 + $0x1498] sm:$0xff]
      %v7453 = vld [vmem:[%s5 + $0x14a0] sm:$0xff]
      %v7454 = vld [vmem:[%s5 + $0x14a8] sm:$0xff]
      %v7455 = vld [vmem:[%s5 + $0x14b0] sm:$0xff]
      %v7456 = vld [vmem:[%s5 + $0x14b8] sm:$0xff]
      %v7457 = vld [vmem:[%s5 + $0x14c0] sm:$0xff]
      %v7458 = vld [vmem:[%s5 + $0x14c8] sm:$0xff]
      %v7459 = vld [vmem:[%s5 + $0x14d0] sm:$0xff]
      %v7460 = vld [vmem:[%s5 + $0x14d8] sm:$0xff]
      %v7461 = vld [vmem:[%s5 + $0x14e0] sm:$0xff]
      %v7462 = vld [vmem:[%s5 + $0x14e8] sm:$0xff]
      %v7463 = vld [vmem:[%s5 + $0x14f0] sm:$0xff]
      %v7464 = vld [vmem:[%s5 + $0x14f8] sm:$0xff]
      %v7465 = vld [vmem:[%s5 + $0x1500] sm:$0xff]
      %v7466 = vld [vmem:[%s5 + $0x1508] sm:$0xff]
      %v7467 = vld [vmem:[%s5 + $0x1510] sm:$0xff]
      %v7468 = vld [vmem:[%s5 + $0x1518] sm:$0xff]
      %v7469 = vld [vmem:[%s5 + $0x1520] sm:$0xff]
      %v7470 = vld [vmem:[%s5 + $0x1528] sm:$0xff]
      %v7471 = vld [vmem:[%s5 + $0x1530] sm:$0xff]
      %v7472 = vld [vmem:[%s5 + $0x1538] sm:$0xff]
      %v7473 = vld [vmem:[%s5 + $0x1540] sm:$0xff]
      %v7474 = vld [vmem:[%s5 + $0x1548] sm:$0xff]
      %v7475 = vld [vmem:[%s5 + $0x1550] sm:$0xff]
      %v7476 = vld [vmem:[%s5 + $0x1558] sm:$0xff]
      %v7477 = vld [vmem:[%s5 + $0x1560] sm:$0xff]
      %v7478 = vld [vmem:[%s5 + $0x1568] sm:$0xff]
      %v7479 = vld [vmem:[%s5 + $0x1570] sm:$0xff]
      %v7480 = vld [vmem:[%s5 + $0x1578] sm:$0xff]
      %v7481 = vld [vmem:[%s5 + $0x1580] sm:$0xff]
      %v7482 = vld [vmem:[%s5 + $0x1588] sm:$0xff]
      %v7483 = vld [vmem:[%s5 + $0x1590] sm:$0xff]
      %v7484 = vld [vmem:[%s5 + $0x1598] sm:$0xff]
      %v7485 = vld [vmem:[%s5 + $0x15a0] sm:$0xff]
      %v7486 = vld [vmem:[%s5 + $0x15a8] sm:$0xff]
      %v7487 = vld [vmem:[%s5 + $0x15b0] sm:$0xff]
      %v7488 = vld [vmem:[%s5 + $0x15b8] sm:$0xff]
      %v7489 = vld [vmem:[%s5 + $0x15c0] sm:$0xff]
      %v7490 = vld [vmem:[%s5 + $0x15c8] sm:$0xff]
      %v7491 = vld [vmem:[%s5 + $0x15d0] sm:$0xff]
      %v7492 = vld [vmem:[%s5 + $0x15d8] sm:$0xff]
      %v7493 = vld [vmem:[%s5 + $0x15e0] sm:$0xff]
      %v7494 = vld [vmem:[%s5 + $0x15e8] sm:$0xff]
      %v7495 = vld [vmem:[%s5 + $0x15f0] sm:$0xff]
      %v7496 = vld [vmem:[%s5 + $0x15f8] sm:$0xff]
      %v7497 = vld [vmem:[%s5 + $0x1600] sm:$0xff]
      %v7498 = vld [vmem:[%s5 + $0x1608] sm:$0xff]
      %v7499 = vld [vmem:[%s5 + $0x1610] sm:$0xff]
      %v7500 = vld [vmem:[%s5 + $0x1618] sm:$0xff]
      %v7501 = vld [vmem:[%s5 + $0x1620] sm:$0xff]
      %v7502 = vld [vmem:[%s5 + $0x1628] sm:$0xff]
      %v7503 = vld [vmem:[%s5 + $0x1630] sm:$0xff]
      %v7504 = vld [vmem:[%s5 + $0x1638] sm:$0xff]
      %v7505 = vld [vmem:[%s5 + $0x1640] sm:$0xff]
      %v7506 = vld [vmem:[%s5 + $0x1648] sm:$0xff]
      %v7507 = vld [vmem:[%s5 + $0x1650] sm:$0xff]
      %v7508 = vld [vmem:[%s5 + $0x1658] sm:$0xff]
      %v7509 = vld [vmem:[%s5 + $0x1660] sm:$0xff]
      %v7510 = vld [vmem:[%s5 + $0x1668] sm:$0xff]
      %v7511 = vld [vmem:[%s5 + $0x1670] sm:$0xff]
      %v7512 = vld [vmem:[%s5 + $0x1678] sm:$0xff]
      %v7513 = vld [vmem:[%s5 + $0x1680] sm:$0xff]
      %v7514 = vld [vmem:[%s5 + $0x1688] sm:$0xff]
      %v7515 = vld [vmem:[%s5 + $0x1690] sm:$0xff]
      %v7516 = vld [vmem:[%s5 + $0x1698] sm:$0xff]
      %v7517 = vld [vmem:[%s5 + $0x16a0] sm:$0xff]
      %v7518 = vld [vmem:[%s5 + $0x16a8] sm:$0xff]
      %v7519 = vld [vmem:[%s5 + $0x16b0] sm:$0xff]
      %v7520 = vld [vmem:[%s5 + $0x16b8] sm:$0xff]
      %v7521 = vld [vmem:[%s5 + $0x16c0] sm:$0xff]
      %v7522 = vld [vmem:[%s5 + $0x16c8] sm:$0xff]
      %v7523 = vld [vmem:[%s5 + $0x16d0] sm:$0xff]
      %v7524 = vld [vmem:[%s5 + $0x16d8] sm:$0xff]
      %v7525 = vld [vmem:[%s5 + $0x16e0] sm:$0xff]
      %v7526 = vld [vmem:[%s5 + $0x16e8] sm:$0xff]
      %v7527 = vld [vmem:[%s5 + $0x16f0] sm:$0xff]
      %v7528 = vld [vmem:[%s5 + $0x16f8] sm:$0xff]
      %v7529 = vld [vmem:[%s5 + $0x1700] sm:$0xff]
      %v7530 = vld [vmem:[%s5 + $0x1708] sm:$0xff]
      %v7531 = vld [vmem:[%s5 + $0x1710] sm:$0xff]
      %v7532 = vld [vmem:[%s5 + $0x1718] sm:$0xff]
      %v7533 = vld [vmem:[%s5 + $0x1720] sm:$0xff]
      %v7534 = vld [vmem:[%s5 + $0x1728] sm:$0xff]
      %v7535 = vld [vmem:[%s5 + $0x1730] sm:$0xff]
      %v7536 = vld [vmem:[%s5 + $0x1738] sm:$0xff]
      %v7537 = vld [vmem:[%s5 + $0x1740] sm:$0xff]
      %v7538 = vld [vmem:[%s5 + $0x1748] sm:$0xff]
      %v7539 = vld [vmem:[%s5 + $0x1750] sm:$0xff]
      %v7540 = vld [vmem:[%s5 + $0x1758] sm:$0xff]
      %v7541 = vld [vmem:[%s5 + $0x1760] sm:$0xff]
      %v7542 = vld [vmem:[%s5 + $0x1768] sm:$0xff]
      %v7543 = vld [vmem:[%s5 + $0x1770] sm:$0xff]
      %v7544 = vld [vmem:[%s5 + $0x1778] sm:$0xff]
      %v7545 = vld [vmem:[%s5 + $0x1780] sm:$0xff]
      %v7546 = vld [vmem:[%s5 + $0x1788] sm:$0xff]
      %v7547 = vld [vmem:[%s5 + $0x1790] sm:$0xff]
      %v7548 = vld [vmem:[%s5 + $0x1798] sm:$0xff]
      %v7549 = vld [vmem:[%s5 + $0x17a0] sm:$0xff]
      %v7550 = vld [vmem:[%s5 + $0x17a8] sm:$0xff]
      %v7551 = vld [vmem:[%s5 + $0x17b0] sm:$0xff]
      %v7552 = vld [vmem:[%s5 + $0x17b8] sm:$0xff]
      %v7553 = vld [vmem:[%s5 + $0x17c0] sm:$0xff]
      %v7554 = vld [vmem:[%s5 + $0x17c8] sm:$0xff]
      %v7555 = vld [vmem:[%s5 + $0x17d0] sm:$0xff]
      %v7556 = vld [vmem:[%s5 + $0x17d8] sm:$0xff]
      %v7557 = vld [vmem:[%s5 + $0x17e0] sm:$0xff]
      %v7558 = vld [vmem:[%s5 + $0x17e8] sm:$0xff]
      %v7559 = vld [vmem:[%s5 + $0x17f0] sm:$0xff]
      %v7560 = vld [vmem:[%s5 + $0x17f8] sm:$0xff]
      %v7561 = vld [vmem:[%s5 + $0x1800] sm:$0xff]
      %v7562 = vld [vmem:[%s5 + $0x1808] sm:$0xff]
      %v7563 = vld [vmem:[%s5 + $0x1810] sm:$0xff]
      %v7564 = vld [vmem:[%s5 + $0x1818] sm:$0xff]
      %v7565 = vld [vmem:[%s5 + $0x1820] sm:$0xff]
      %v7566 = vld [vmem:[%s5 + $0x1828] sm:$0xff]
      %v7567 = vld [vmem:[%s5 + $0x1830] sm:$0xff]
      %v7568 = vld [vmem:[%s5 + $0x1838] sm:$0xff]
      %v7569 = vld [vmem:[%s5 + $0x1840] sm:$0xff]
      %v7570 = vld [vmem:[%s5 + $0x1848] sm:$0xff]
      %v7571 = vld [vmem:[%s5 + $0x1850] sm:$0xff]
      %v7572 = vld [vmem:[%s5 + $0x1858] sm:$0xff]
      %v7573 = vld [vmem:[%s5 + $0x1860] sm:$0xff]
      %v7574 = vld [vmem:[%s5 + $0x1868] sm:$0xff]
      %v7575 = vld [vmem:[%s5 + $0x1870] sm:$0xff]
      %v7576 = vld [vmem:[%s5 + $0x1878] sm:$0xff]
      %v7577 = vld [vmem:[%s5 + $0x1880] sm:$0xff]
      %v7578 = vld [vmem:[%s5 + $0x1888] sm:$0xff]
      %v7579 = vld [vmem:[%s5 + $0x1890] sm:$0xff]
      %v7580 = vld [vmem:[%s5 + $0x1898] sm:$0xff]
      %v7581 = vld [vmem:[%s5 + $0x18a0] sm:$0xff]
      %v7582 = vld [vmem:[%s5 + $0x18a8] sm:$0xff]
      %v7583 = vld [vmem:[%s5 + $0x18b0] sm:$0xff]
      %v7584 = vld [vmem:[%s5 + $0x18b8] sm:$0xff]
      %v7585 = vld [vmem:[%s5 + $0x18c0] sm:$0xff]
      %v7586 = vld [vmem:[%s5 + $0x18c8] sm:$0xff]
      %v7587 = vld [vmem:[%s5 + $0x18d0] sm:$0xff]
      %v7588 = vld [vmem:[%s5 + $0x18d8] sm:$0xff]
      %v7589 = vld [vmem:[%s5 + $0x18e0] sm:$0xff]
      %v7590 = vld [vmem:[%s5 + $0x18e8] sm:$0xff]
      %v7591 = vld [vmem:[%s5 + $0x18f0] sm:$0xff]
      %v7592 = vld [vmem:[%s5 + $0x18f8] sm:$0xff]
      %v7593 = vld [vmem:[%s6] sm:$0x3]
      %v7595 = vlaneseq
      %v7596 = vshrl.u32 %v7595, 7
      %v7597 = vsub.s32 0, %v7596
      %v7598 = vrot.slane %v7593, %v7597
      %v7599 = vlaneseq
      %v7600 = vshrl.u32 %v7599, 7
      %v7601 = vsub.s32 1, %v7600
      %v7602 = vrot.slane %v7593, %v7601
      %7605 = vmatprep.subr.mxu0 %v6794
      %7606 = vmatpush1.msra.mxu0 %v6793
      %7607 = vmatprep.subr.mxu0 %v6796
      %7608 = vmatpush1.msra.mxu0 %v6795
      %7609 = vmatprep.subr.mxu0 %v6798
      %7610 = vmatpush1.msra.mxu0 %v6797
      %7611 = vmatprep.subr.mxu0 %v6800
      %7612 = vmatpush1.msra.mxu0 %v6799
      %7613 = vmatprep.subr.mxu0 %v6802
      %7614 = vmatpush1.msra.mxu0 %v6801
      %7615 = vmatprep.subr.mxu0 %v6804
      %7616 = vmatpush1.msra.mxu0 %v6803
      %7617 = vmatprep.subr.mxu0 %v6806
      %7618 = vmatpush1.msra.mxu0 %v6805
      %7619 = vmatprep.subr.mxu0 %v6808
      %7620 = vmatpush1.msra.mxu0 %v6807
      %7621 = vmatprep.subr.mxu0 %v6810
      %7622 = vmatpush1.msra.mxu0 %v6809
      %7623 = vmatprep.subr.mxu0 %v6812
      %7624 = vmatpush1.msra.mxu0 %v6811
      %7625 = vmatprep.subr.mxu0 %v6814
      %7626 = vmatpush1.msra.mxu0 %v6813
      %7627 = vmatprep.subr.mxu0 %v6816
      %7628 = vmatpush1.msra.mxu0 %v6815
      %7629 = vmatprep.subr.mxu0 %v6818
      %7630 = vmatpush1.msra.mxu0 %v6817
      %7631 = vmatprep.subr.mxu0 %v6820
      %7632 = vmatpush1.msra.mxu0 %v6819
      %7633 = vmatprep.subr.mxu0 %v6822
      %7634 = vmatpush1.msra.mxu0 %v6821
      %7635 = vmatprep.subr.mxu0 %v6824
      %7636 = vmatpush1.msra.mxu0 %v6823
      %7637 = vmatprep.subr.mxu0 %v6826
      %7638 = vmatpush1.msra.mxu0 %v6825
      %7639 = vmatprep.subr.mxu0 %v6828
      %7640 = vmatpush1.msra.mxu0 %v6827
      %7641 = vmatprep.subr.mxu0 %v6830
      %7642 = vmatpush1.msra.mxu0 %v6829
      %7643 = vmatprep.subr.mxu0 %v6832
      %7644 = vmatpush1.msra.mxu0 %v6831
      %7645 = vmatprep.subr.mxu0 %v6834
      %7646 = vmatpush1.msra.mxu0 %v6833
      %7647 = vmatprep.subr.mxu0 %v6836
      %7648 = vmatpush1.msra.mxu0 %v6835
      %7649 = vmatprep.subr.mxu0 %v6838
      %7650 = vmatpush1.msra.mxu0 %v6837
      %7651 = vmatprep.subr.mxu0 %v6840
      %7652 = vmatpush1.msra.mxu0 %v6839
      %7653 = vmatprep.subr.mxu0 %v6842
      %7654 = vmatpush1.msra.mxu0 %v6841
      %7655 = vmatprep.subr.mxu0 %v6844
      %7656 = vmatpush1.msra.mxu0 %v6843
      %7657 = vmatprep.subr.mxu0 %v6846
      %7658 = vmatpush1.msra.mxu0 %v6845
      %7659 = vmatprep.subr.mxu0 %v6848
      %7660 = vmatpush1.msra.mxu0 %v6847
      %7661 = vmatprep.subr.mxu0 %v6850
      %7662 = vmatpush1.msra.mxu0 %v6849
      %7663 = vmatprep.subr.mxu0 %v6852
      %7664 = vmatpush1.msra.mxu0 %v6851
      %7665 = vmatprep.subr.mxu0 %v6854
      %7666 = vmatpush1.msra.mxu0 %v6853
      %7667 = vmatprep.subr.mxu0 %v6856
      %7668 = vmatpush1.msra.mxu0 %v6855
      %7669 = vmatprep.mubr.f32.mxu0 %v6740
      %7670 = vmatmul.mubr.f32.gmra.mrb[0].mxu0 %v6660
      %v7671 = vpop.f32.mrb[0].mxu0
      %v7672 = vadd.f32 %v7598, %v7671
      %v7673 = vpop.f32.mrb[0].mxu0
      %v7674 = vadd.f32 %v7602, %v7673
      %7675 = vdwg.mxu0
      %7676 = vmatprep.subr.mxu0 %v6858
      %7677 = vmatpush1.msra.mxu0 %v6857
      %7678 = vmatprep.subr.mxu0 %v6860
      %7679 = vmatpush1.msra.mxu0 %v6859
      %7680 = vmatprep.subr.mxu0 %v6862
      %7681 = vmatpush1.msra.mxu0 %v6861
      %7682 = vmatprep.subr.mxu0 %v6864
      %7683 = vmatpush1.msra.mxu0 %v6863
      %7684 = vmatprep.subr.mxu0 %v6866
      %7685 = vmatpush1.msra.mxu0 %v6865
      %7686 = vmatprep.subr.mxu0 %v6868
      %7687 = vmatpush1.msra.mxu0 %v6867
      %7688 = vmatprep.subr.mxu0 %v6870
      %7689 = vmatpush1.msra.mxu0 %v6869
      %7690 = vmatprep.subr.mxu0 %v6872
      %7691 = vmatpush1.msra.mxu0 %v6871
      %7692 = vmatprep.subr.mxu0 %v6874
      %7693 = vmatpush1.msra.mxu0 %v6873
      %7694 = vmatprep.subr.mxu0 %v6876
      %7695 = vmatpush1.msra.mxu0 %v6875
      %7696 = vmatprep.subr.mxu0 %v6878
      %7697 = vmatpush1.msra.mxu0 %v6877
      %7698 = vmatprep.subr.mxu0 %v6880
      %7699 = vmatpush1.msra.mxu0 %v6879
      %7700 = vmatprep.subr.mxu0 %v6882
      %7701 = vmatpush1.msra.mxu0 %v6881
      %7702 = vmatprep.subr.mxu0 %v6884
      %7703 = vmatpush1.msra.mxu0 %v6883
      %7704 = vmatprep.subr.mxu0 %v6886
      %7705 = vmatpush1.msra.mxu0 %v6885
      %7706 = vmatprep.subr.mxu0 %v6888
      %7707 = vmatpush1.msra.mxu0 %v6887
      %7708 = vmatprep.subr.mxu0 %v6890
      %7709 = vmatpush1.msra.mxu0 %v6889
      %7710 = vmatprep.subr.mxu0 %v6892
      %7711 = vmatpush1.msra.mxu0 %v6891
      %7712 = vmatprep.subr.mxu0 %v6894
      %7713 = vmatpush1.msra.mxu0 %v6893
      %7714 = vmatprep.subr.mxu0 %v6896
      %7715 = vmatpush1.msra.mxu0 %v6895
      %7716 = vmatprep.subr.mxu0 %v6898
      %7717 = vmatpush1.msra.mxu0 %v6897
      %7718 = vmatprep.subr.mxu0 %v6900
      %7719 = vmatpush1.msra.mxu0 %v6899
      %7720 = vmatprep.subr.mxu0 %v6902
      %7721 = vmatpush1.msra.mxu0 %v6901
      %7722 = vmatprep.subr.mxu0 %v6904
      %7723 = vmatpush1.msra.mxu0 %v6903
      %7724 = vmatprep.subr.mxu0 %v6906
      %7725 = vmatpush1.msra.mxu0 %v6905
      %7726 = vmatprep.subr.mxu0 %v6908
      %7727 = vmatpush1.msra.mxu0 %v6907
      %7728 = vmatprep.subr.mxu0 %v6910
      %7729 = vmatpush1.msra.mxu0 %v6909
      %7730 = vmatprep.subr.mxu0 %v6912
      %7731 = vmatpush1.msra.mxu0 %v6911
      %7732 = vmatprep.subr.mxu0 %v6914
      %7733 = vmatpush1.msra.mxu0 %v6913
      %7734 = vmatprep.subr.mxu0 %v6916
      %7735 = vmatpush1.msra.mxu0 %v6915
      %7736 = vmatprep.subr.mxu0 %v6918
      %7737 = vmatpush1.msra.mxu0 %v6917
      %7738 = vmatprep.subr.mxu0 %v6920
      %7739 = vmatpush1.msra.mxu0 %v6919
      %7740 = vmatprep.mubr.f32.mxu0 %v6744
      %7741 = vmatmul.mubr.f32.gmra.mrb[0].mxu0 %v6742
      %v7742 = vpop.f32.mrb[0].mxu0
      %v7743 = vadd.f32 %v7672, %v7742
      %v7744 = vpop.f32.mrb[0].mxu0
      %v7745 = vadd.f32 %v7674, %v7744
      %7746 = vdwg.mxu0
      %7747 = vmatprep.subr.mxu0 %v6922
      %7748 = vmatpush1.msra.mxu0 %v6921
      %7749 = vmatprep.subr.mxu0 %v6924
      %7750 = vmatpush1.msra.mxu0 %v6923
      %7751 = vmatprep.subr.mxu0 %v6926
      %7752 = vmatpush1.msra.mxu0 %v6925
      %7753 = vmatprep.subr.mxu0 %v6928
      %7754 = vmatpush1.msra.mxu0 %v6927
      %7755 = vmatprep.subr.mxu0 %v6930
      %7756 = vmatpush1.msra.mxu0 %v6929
      %7757 = vmatprep.subr.mxu0 %v6932
      %7758 = vmatpush1.msra.mxu0 %v6931
      %7759 = vmatprep.subr.mxu0 %v6934
      %7760 = vmatpush1.msra.mxu0 %v6933
      %7761 = vmatprep.subr.mxu0 %v6936
      %7762 = vmatpush1.msra.mxu0 %v6935
      %7763 = vmatprep.subr.mxu0 %v6938
      %7764 = vmatpush1.msra.mxu0 %v6937
      %7765 = vmatprep.subr.mxu0 %v6940
      %7766 = vmatpush1.msra.mxu0 %v6939
      %7767 = vmatprep.subr.mxu0 %v6942
      %7768 = vmatpush1.msra.mxu0 %v6941
      %7769 = vmatprep.subr.mxu0 %v6944
      %7770 = vmatpush1.msra.mxu0 %v6943
      %7771 = vmatprep.subr.mxu0 %v6946
      %7772 = vmatpush1.msra.mxu0 %v6945
      %7773 = vmatprep.subr.mxu0 %v6948
      %7774 = vmatpush1.msra.mxu0 %v6947
      %7775 = vmatprep.subr.mxu0 %v6950
      %7776 = vmatpush1.msra.mxu0 %v6949
      %7777 = vmatprep.subr.mxu0 %v6952
      %7778 = vmatpush1.msra.mxu0 %v6951
      %7779 = vmatprep.subr.mxu0 %v6954
      %7780 = vmatpush1.msra.mxu0 %v6953
      %7781 = vmatprep.subr.mxu0 %v6956
      %7782 = vmatpush1.msra.mxu0 %v6955
      %7783 = vmatprep.subr.mxu0 %v6958
      %7784 = vmatpush1.msra.mxu0 %v6957
      %7785 = vmatprep.subr.mxu0 %v6960
      %7786 = vmatpush1.msra.mxu0 %v6959
      %7787 = vmatprep.subr.mxu0 %v6962
      %7788 = vmatpush1.msra.mxu0 %v6961
      %7789 = vmatprep.subr.mxu0 %v6964
      %7790 = vmatpush1.msra.mxu0 %v6963
      %7791 = vmatprep.subr.mxu0 %v6966
      %7792 = vmatpush1.msra.mxu0 %v6965
      %7793 = vmatprep.subr.mxu0 %v6968
      %7794 = vmatpush1.msra.mxu0 %v6967
      %7795 = vmatprep.subr.mxu0 %v6970
      %7796 = vmatpush1.msra.mxu0 %v6969
      %7797 = vmatprep.subr.mxu0 %v6972
      %7798 = vmatpush1.msra.mxu0 %v6971
      %7799 = vmatprep.subr.mxu0 %v6974
      %7800 = vmatpush1.msra.mxu0 %v6973
      %7801 = vmatprep.subr.mxu0 %v6976
      %7802 = vmatpush1.msra.mxu0 %v6975
      %7803 = vmatprep.subr.mxu0 %v6978
      %7804 = vmatpush1.msra.mxu0 %v6977
      %7805 = vmatprep.subr.mxu0 %v6980
      %7806 = vmatpush1.msra.mxu0 %v6979
      %7807 = vmatprep.subr.mxu0 %v6982
      %7808 = vmatpush1.msra.mxu0 %v6981
      %7809 = vmatprep.subr.mxu0 %v6984
      %7810 = vmatpush1.msra.mxu0 %v6983
      %7811 = vmatprep.mubr.f32.mxu0 %v6747
      %7812 = vmatmul.mubr.f32.gmra.mrb[0].mxu0 %v6664
      %v7813 = vpop.f32.mrb[0].mxu0
      %v7814 = vadd.f32 %v7743, %v7813
      %v7815 = vpop.f32.mrb[0].mxu0
      %v7816 = vadd.f32 %v7745, %v7815
      %7817 = vdwg.mxu0
      %7818 = vmatprep.subr.mxu0 %v6986
      %7819 = vmatpush1.msra.mxu0 %v6985
      %7820 = vmatprep.subr.mxu0 %v6988
      %7821 = vmatpush1.msra.mxu0 %v6987
      %7822 = vmatprep.subr.mxu0 %v6990
      %7823 = vmatpush1.msra.mxu0 %v6989
      %7824 = vmatprep.subr.mxu0 %v6992
      %7825 = vmatpush1.msra.mxu0 %v6991
      %7826 = vmatprep.subr.mxu0 %v6994
      %7827 = vmatpush1.msra.mxu0 %v6993
      %7828 = vmatprep.subr.mxu0 %v6996
      %7829 = vmatpush1.msra.mxu0 %v6995
      %7830 = vmatprep.subr.mxu0 %v6998
      %7831 = vmatpush1.msra.mxu0 %v6997
      %7832 = vmatprep.subr.mxu0 %v7000
      %7833 = vmatpush1.msra.mxu0 %v6999
      %7834 = vmatprep.subr.mxu0 %v7002
      %7835 = vmatpush1.msra.mxu0 %v7001
      %7836 = vmatprep.subr.mxu0 %v7004
      %7837 = vmatpush1.msra.mxu0 %v7003
      %7838 = vmatprep.subr.mxu0 %v7006
      %7839 = vmatpush1.msra.mxu0 %v7005
      %7840 = vmatprep.subr.mxu0 %v7008
      %7841 = vmatpush1.msra.mxu0 %v7007
      %7842 = vmatprep.subr.mxu0 %v7010
      %7843 = vmatpush1.msra.mxu0 %v7009
      %7844 = vmatprep.subr.mxu0 %v7012
      %7845 = vmatpush1.msra.mxu0 %v7011
      %7846 = vmatprep.subr.mxu0 %v7014
      %7847 = vmatpush1.msra.mxu0 %v7013
      %7848 = vmatprep.subr.mxu0 %v7016
      %7849 = vmatpush1.msra.mxu0 %v7015
      %7850 = vmatprep.subr.mxu0 %v7018
      %7851 = vmatpush1.msra.mxu0 %v7017
      %7852 = vmatprep.subr.mxu0 %v7020
      %7853 = vmatpush1.msra.mxu0 %v7019
      %7854 = vmatprep.subr.mxu0 %v7022
      %7855 = vmatpush1.msra.mxu0 %v7021
      %7856 = vmatprep.subr.mxu0 %v7024
      %7857 = vmatpush1.msra.mxu0 %v7023
      %7858 = vmatprep.subr.mxu0 %v7026
      %7859 = vmatpush1.msra.mxu0 %v7025
      %7860 = vmatprep.subr.mxu0 %v7028
      %7861 = vmatpush1.msra.mxu0 %v7027
      %7862 = vmatprep.subr.mxu0 %v7030
      %7863 = vmatpush1.msra.mxu0 %v7029
      %7864 = vmatprep.subr.mxu0 %v7032
      %7865 = vmatpush1.msra.mxu0 %v7031
      %7866 = vmatprep.subr.mxu0 %v7034
      %7867 = vmatpush1.msra.mxu0 %v7033
      %7868 = vmatprep.subr.mxu0 %v7036
      %7869 = vmatpush1.msra.mxu0 %v7035
      %7870 = vmatprep.subr.mxu0 %v7038
      %7871 = vmatpush1.msra.mxu0 %v7037
      %7872 = vmatprep.subr.mxu0 %v7040
      %7873 = vmatpush1.msra.mxu0 %v7039
      %7874 = vmatprep.subr.mxu0 %v7042
      %7875 = vmatpush1.msra.mxu0 %v7041
      %7876 = vmatprep.subr.mxu0 %v7044
      %7877 = vmatpush1.msra.mxu0 %v7043
      %7878 = vmatprep.subr.mxu0 %v7046
      %7879 = vmatpush1.msra.mxu0 %v7045
      %7880 = vmatprep.subr.mxu0 %v7048
      %7881 = vmatpush1.msra.mxu0 %v7047
      %7882 = vmatprep.mubr.f32.mxu0 %v6681
      %7883 = vmatmul.mubr.f32.gmra.mrb[0].mxu0 %v6749
      %v7884 = vpop.f32.mrb[0].mxu0
      %v7885 = vadd.f32 %v7814, %v7884
      %v7886 = vpop.f32.mrb[0].mxu0
      %v7887 = vadd.f32 %v7816, %v7886
      %7888 = vdwg.mxu0
      %7889 = vmatprep.subr.mxu0 %v7050
      %7890 = vmatpush1.msra.mxu0 %v7049
      %7891 = vmatprep.subr.mxu0 %v7052
      %7892 = vmatpush1.msra.mxu0 %v7051
      %7893 = vmatprep.subr.mxu0 %v7054
      %7894 = vmatpush1.msra.mxu0 %v7053
      %7895 = vmatprep.subr.mxu0 %v7056
      %7896 = vmatpush1.msra.mxu0 %v7055
      %7897 = vmatprep.subr.mxu0 %v7058
      %7898 = vmatpush1.msra.mxu0 %v7057
      %7899 = vmatprep.subr.mxu0 %v7060
      %7900 = vmatpush1.msra.mxu0 %v7059
      %7901 = vmatprep.subr.mxu0 %v7062
      %7902 = vmatpush1.msra.mxu0 %v7061
      %7903 = vmatprep.subr.mxu0 %v7064
      %7904 = vmatpush1.msra.mxu0 %v7063
      %7905 = vmatprep.subr.mxu0 %v7066
      %7906 = vmatpush1.msra.mxu0 %v7065
      %7907 = vmatprep.subr.mxu0 %v7068
      %7908 = vmatpush1.msra.mxu0 %v7067
      %7909 = vmatprep.subr.mxu0 %v7070
      %7910 = vmatpush1.msra.mxu0 %v7069
      %7911 = vmatprep.subr.mxu0 %v7072
      %7912 = vmatpush1.msra.mxu0 %v7071
      %7913 = vmatprep.subr.mxu0 %v7074
      %7914 = vmatpush1.msra.mxu0 %v7073
      %7915 = vmatprep.subr.mxu0 %v7076
      %7916 = vmatpush1.msra.mxu0 %v7075
      %7917 = vmatprep.subr.mxu0 %v7078
      %7918 = vmatpush1.msra.mxu0 %v7077
      %7919 = vmatprep.subr.mxu0 %v7080
      %7920 = vmatpush1.msra.mxu0 %v7079
      %7921 = vmatprep.subr.mxu0 %v7082
      %7922 = vmatpush1.msra.mxu0 %v7081
      %7923 = vmatprep.subr.mxu0 %v7084
      %7924 = vmatpush1.msra.mxu0 %v7083
      %7925 = vmatprep.subr.mxu0 %v7086
      %7926 = vmatpush1.msra.mxu0 %v7085
      %7927 = vmatprep.subr.mxu0 %v7088
      %7928 = vmatpush1.msra.mxu0 %v7087
      %7929 = vmatprep.subr.mxu0 %v7090
      %7930 = vmatpush1.msra.mxu0 %v7089
      %7931 = vmatprep.subr.mxu0 %v7092
      %7932 = vmatpush1.msra.mxu0 %v7091
      %7933 = vmatprep.subr.mxu0 %v7094
      %7934 = vmatpush1.msra.mxu0 %v7093
      %7935 = vmatprep.subr.mxu0 %v7096
      %7936 = vmatpush1.msra.mxu0 %v7095
      %7937 = vmatprep.subr.mxu0 %v7098
      %7938 = vmatpush1.msra.mxu0 %v7097
      %7939 = vmatprep.subr.mxu0 %v7100
      %7940 = vmatpush1.msra.mxu0 %v7099
      %7941 = vmatprep.subr.mxu0 %v7102
      %7942 = vmatpush1.msra.mxu0 %v7101
      %7943 = vmatprep.subr.mxu0 %v7104
      %7944 = vmatpush1.msra.mxu0 %v7103
      %7945 = vmatprep.subr.mxu0 %v7106
      %7946 = vmatpush1.msra.mxu0 %v7105
      %7947 = vmatprep.subr.mxu0 %v7108
      %7948 = vmatpush1.msra.mxu0 %v7107
      %7949 = vmatprep.subr.mxu0 %v7110
      %7950 = vmatpush1.msra.mxu0 %v7109
      %7951 = vmatprep.subr.mxu0 %v7112
      %7952 = vmatpush1.msra.mxu0 %v7111
      %7953 = vmatprep.mubr.f32.mxu0 %v6754
      %7954 = vmatmul.mubr.f32.gmra.mrb[0].mxu0 %v6752
      %v7955 = vpop.f32.mrb[0].mxu0
      %v7956 = vadd.f32 %v7885, %v7955
      %v7957 = vpop.f32.mrb[0].mxu0
      %v7958 = vadd.f32 %v7887, %v7957
      %7959 = vdwg.mxu0
      %7960 = vmatprep.subr.mxu0 %v7114
      %7961 = vmatpush1.msra.mxu0 %v7113
      %7962 = vmatprep.subr.mxu0 %v7116
      %7963 = vmatpush1.msra.mxu0 %v7115
      %7964 = vmatprep.subr.mxu0 %v7118
      %7965 = vmatpush1.msra.mxu0 %v7117
      %7966 = vmatprep.subr.mxu0 %v7120
      %7967 = vmatpush1.msra.mxu0 %v7119
      %7968 = vmatprep.subr.mxu0 %v7122
      %7969 = vmatpush1.msra.mxu0 %v7121
      %7970 = vmatprep.subr.mxu0 %v7124
      %7971 = vmatpush1.msra.mxu0 %v7123
      %7972 = vmatprep.subr.mxu0 %v7126
      %7973 = vmatpush1.msra.mxu0 %v7125
      %7974 = vmatprep.subr.mxu0 %v7128
      %7975 = vmatpush1.msra.mxu0 %v7127
      %7976 = vmatprep.subr.mxu0 %v7130
      %7977 = vmatpush1.msra.mxu0 %v7129
      %7978 = vmatprep.subr.mxu0 %v7132
      %7979 = vmatpush1.msra.mxu0 %v7131
      %7980 = vmatprep.subr.mxu0 %v7134
      %7981 = vmatpush1.msra.mxu0 %v7133
      %7982 = vmatprep.subr.mxu0 %v7136
      %7983 = vmatpush1.msra.mxu0 %v7135
      %7984 = vmatprep.subr.mxu0 %v7138
      %7985 = vmatpush1.msra.mxu0 %v7137
      %7986 = vmatprep.subr.mxu0 %v7140
      %7987 = vmatpush1.msra.mxu0 %v7139
      %7988 = vmatprep.subr.mxu0 %v7142
      %7989 = vmatpush1.msra.mxu0 %v7141
      %7990 = vmatprep.subr.mxu0 %v7144
      %7991 = vmatpush1.msra.mxu0 %v7143
      %7992 = vmatprep.subr.mxu0 %v7146
      %7993 = vmatpush1.msra.mxu0 %v7145
      %7994 = vmatprep.subr.mxu0 %v7148
      %7995 = vmatpush1.msra.mxu0 %v7147
      %7996 = vmatprep.subr.mxu0 %v7150
      %7997 = vmatpush1.msra.mxu0 %v7149
      %7998 = vmatprep.subr.mxu0 %v7152
      %7999 = vmatpush1.msra.mxu0 %v7151
      %8000 = vmatprep.subr.mxu0 %v7154
      %8001 = vmatpush1.msra.mxu0 %v7153
      %8002 = vmatprep.subr.mxu0 %v7156
      %8003 = vmatpush1.msra.mxu0 %v7155
      %8004 = vmatprep.subr.mxu0 %v7158
      %8005 = vmatpush1.msra.mxu0 %v7157
      %8006 = vmatprep.subr.mxu0 %v7160
      %8007 = vmatpush1.msra.mxu0 %v7159
      %8008 = vmatprep.subr.mxu0 %v7162
      %8009 = vmatpush1.msra.mxu0 %v7161
      %8010 = vmatprep.subr.mxu0 %v7164
      %8011 = vmatpush1.msra.mxu0 %v7163
      %8012 = vmatprep.subr.mxu0 %v7166
      %8013 = vmatpush1.msra.mxu0 %v7165
      %8014 = vmatprep.subr.mxu0 %v7168
      %8015 = vmatpush1.msra.mxu0 %v7167
      %8016 = vmatprep.subr.mxu0 %v7170
      %8017 = vmatpush1.msra.mxu0 %v7169
      %8018 = vmatprep.subr.mxu0 %v7172
      %8019 = vmatpush1.msra.mxu0 %v7171
      %8020 = vmatprep.subr.mxu0 %v7174
      %8021 = vmatpush1.msra.mxu0 %v7173
      %8022 = vmatprep.subr.mxu0 %v7176
      %8023 = vmatpush1.msra.mxu0 %v7175
      %8024 = vmatprep.mubr.f32.mxu0 %v6757
      %8025 = vmatmul.mubr.f32.gmra.mrb[0].mxu0 %v6697
      %v8026 = vpop.f32.mrb[0].mxu0
      %v8027 = vadd.f32 %v7956, %v8026
      %v8028 = vpop.f32.mrb[0].mxu0
      %v8029 = vadd.f32 %v7958, %v8028
      %8030 = vdwg.mxu0
      %8031 = vmatprep.subr.mxu0 %v7178
      %8032 = vmatpush1.msra.mxu0 %v7177
      %8033 = vmatprep.subr.mxu0 %v7180
      %8034 = vmatpush1.msra.mxu0 %v7179
      %8035 = vmatprep.subr.mxu0 %v7182
      %8036 = vmatpush1.msra.mxu0 %v7181
      %8037 = vmatprep.subr.mxu0 %v7184
      %8038 = vmatpush1.msra.mxu0 %v7183
      %8039 = vmatprep.subr.mxu0 %v7186
      %8040 = vmatpush1.msra.mxu0 %v7185
      %8041 = vmatprep.subr.mxu0 %v7188
      %8042 = vmatpush1.msra.mxu0 %v7187
      %8043 = vmatprep.subr.mxu0 %v7190
      %8044 = vmatpush1.msra.mxu0 %v7189
      %8045 = vmatprep.subr.mxu0 %v7192
      %8046 = vmatpush1.msra.mxu0 %v7191
      %8047 = vmatprep.subr.mxu0 %v7194
      %8048 = vmatpush1.msra.mxu0 %v7193
      %8049 = vmatprep.subr.mxu0 %v7196
      %8050 = vmatpush1.msra.mxu0 %v7195
      %8051 = vmatprep.subr.mxu0 %v7198
      %8052 = vmatpush1.msra.mxu0 %v7197
      %8053 = vmatprep.subr.mxu0 %v7200
      %8054 = vmatpush1.msra.mxu0 %v7199
      %8055 = vmatprep.subr.mxu0 %v7202
      %8056 = vmatpush1.msra.mxu0 %v7201
      %8057 = vmatprep.subr.mxu0 %v7204
      %8058 = vmatpush1.msra.mxu0 %v7203
      %8059 = vmatprep.subr.mxu0 %v7206
      %8060 = vmatpush1.msra.mxu0 %v7205
      %8061 = vmatprep.subr.mxu0 %v7208
      %8062 = vmatpush1.msra.mxu0 %v7207
      %8063 = vmatprep.subr.mxu0 %v7210
      %8064 = vmatpush1.msra.mxu0 %v7209
      %8065 = vmatprep.subr.mxu0 %v7212
      %8066 = vmatpush1.msra.mxu0 %v7211
      %8067 = vmatprep.subr.mxu0 %v7214
      %8068 = vmatpush1.msra.mxu0 %v7213
      %8069 = vmatprep.subr.mxu0 %v7216
      %8070 = vmatpush1.msra.mxu0 %v7215
      %8071 = vmatprep.subr.mxu0 %v7218
      %8072 = vmatpush1.msra.mxu0 %v7217
      %8073 = vmatprep.subr.mxu0 %v7220
      %8074 = vmatpush1.msra.mxu0 %v7219
      %8075 = vmatprep.subr.mxu0 %v7222
      %8076 = vmatpush1.msra.mxu0 %v7221
      %8077 = vmatprep.subr.mxu0 %v7224
      %8078 = vmatpush1.msra.mxu0 %v7223
      %8079 = vmatprep.subr.mxu0 %v7226
      %8080 = vmatpush1.msra.mxu0 %v7225
      %8081 = vmatprep.subr.mxu0 %v7228
      %8082 = vmatpush1.msra.mxu0 %v7227
      %8083 = vmatprep.subr.mxu0 %v7230
      %8084 = vmatpush1.msra.mxu0 %v7229
      %8085 = vmatprep.subr.mxu0 %v7232
      %8086 = vmatpush1.msra.mxu0 %v7231
      %8087 = vmatprep.subr.mxu0 %v7234
      %8088 = vmatpush1.msra.mxu0 %v7233
      %8089 = vmatprep.subr.mxu0 %v7236
      %8090 = vmatpush1.msra.mxu0 %v7235
      %8091 = vmatprep.subr.mxu0 %v7238
      %8092 = vmatpush1.msra.mxu0 %v7237
      %8093 = vmatprep.subr.mxu0 %v7240
      %8094 = vmatpush1.msra.mxu0 %v7239
      %8095 = vmatprep.mubr.f32.mxu0 %v6761
      %8096 = vmatmul.mubr.f32.gmra.mrb[0].mxu0 %v6759
      %v8097 = vpop.f32.mrb[0].mxu0
      %v8098 = vadd.f32 %v8027, %v8097
      %v8099 = vpop.f32.mrb[0].mxu0
      %v8100 = vadd.f32 %v8029, %v8099
      %8101 = vdwg.mxu0
      %8102 = vmatprep.subr.mxu0 %v7242
      %8103 = vmatpush1.msra.mxu0 %v7241
      %8104 = vmatprep.subr.mxu0 %v7244
      %8105 = vmatpush1.msra.mxu0 %v7243
      %8106 = vmatprep.subr.mxu0 %v7246
      %8107 = vmatpush1.msra.mxu0 %v7245
      %8108 = vmatprep.subr.mxu0 %v7248
      %8109 = vmatpush1.msra.mxu0 %v7247
      %8110 = vmatprep.subr.mxu0 %v7250
      %8111 = vmatpush1.msra.mxu0 %v7249
      %8112 = vmatprep.subr.mxu0 %v7252
      %8113 = vmatpush1.msra.mxu0 %v7251
      %8114 = vmatprep.subr.mxu0 %v7254
      %8115 = vmatpush1.msra.mxu0 %v7253
      %8116 = vmatprep.subr.mxu0 %v7256
      %8117 = vmatpush1.msra.mxu0 %v7255
      %8118 = vmatprep.subr.mxu0 %v7258
      %8119 = vmatpush1.msra.mxu0 %v7257
      %8120 = vmatprep.subr.mxu0 %v7260
      %8121 = vmatpush1.msra.mxu0 %v7259
      %8122 = vmatprep.subr.mxu0 %v7262
      %8123 = vmatpush1.msra.mxu0 %v7261
      %8124 = vmatprep.subr.mxu0 %v7264
      %8125 = vmatpush1.msra.mxu0 %v7263
      %8126 = vmatprep.subr.mxu0 %v7266
      %8127 = vmatpush1.msra.mxu0 %v7265
      %8128 = vmatprep.subr.mxu0 %v7268
      %8129 = vmatpush1.msra.mxu0 %v7267
      %8130 = vmatprep.subr.mxu0 %v7270
      %8131 = vmatpush1.msra.mxu0 %v7269
      %8132 = vmatprep.subr.mxu0 %v7272
      %8133 = vmatpush1.msra.mxu0 %v7271
      %8134 = vmatprep.subr.mxu0 %v7274
      %8135 = vmatpush1.msra.mxu0 %v7273
      %8136 = vmatprep.subr.mxu0 %v7276
      %8137 = vmatpush1.msra.mxu0 %v7275
      %8138 = vmatprep.subr.mxu0 %v7278
      %8139 = vmatpush1.msra.mxu0 %v7277
      %8140 = vmatprep.subr.mxu0 %v7280
      %8141 = vmatpush1.msra.mxu0 %v7279
      %8142 = vmatprep.subr.mxu0 %v7282
      %8143 = vmatpush1.msra.mxu0 %v7281
      %8144 = vmatprep.subr.mxu0 %v7284
      %8145 = vmatpush1.msra.mxu0 %v7283
      %8146 = vmatprep.subr.mxu0 %v7286
      %8147 = vmatpush1.msra.mxu0 %v7285
      %8148 = vmatprep.subr.mxu0 %v7288
      %8149 = vmatpush1.msra.mxu0 %v7287
      %8150 = vmatprep.subr.mxu0 %v7290
      %8151 = vmatpush1.msra.mxu0 %v7289
      %8152 = vmatprep.subr.mxu0 %v7292
      %8153 = vmatpush1.msra.mxu0 %v7291
      %8154 = vmatprep.subr.mxu0 %v7294
      %8155 = vmatpush1.msra.mxu0 %v7293
      %8156 = vmatprep.subr.mxu0 %v7296
      %8157 = vmatpush1.msra.mxu0 %v7295
      %8158 = vmatprep.subr.mxu0 %v7298
      %8159 = vmatpush1.msra.mxu0 %v7297
      %8160 = vmatprep.subr.mxu0 %v7300
      %8161 = vmatpush1.msra.mxu0 %v7299
      %8162 = vmatprep.subr.mxu0 %v7302
      %8163 = vmatpush1.msra.mxu0 %v7301
      %8164 = vmatprep.subr.mxu0 %v7304
      %8165 = vmatpush1.msra.mxu0 %v7303
      %8166 = vmatprep.mubr.f32.mxu0 %v6764
      %8167 = vmatmul.mubr.f32.gmra.mrb[0].mxu0 %v6701
      %v8168 = vpop.f32.mrb[0].mxu0
      %v8169 = vadd.f32 %v8098, %v8168
      %v8170 = vpop.f32.mrb[0].mxu0
      %v8171 = vadd.f32 %v8100, %v8170
      %8172 = vdwg.mxu0
      %8173 = vmatprep.subr.mxu0 %v7306
      %8174 = vmatpush1.msra.mxu0 %v7305
      %8175 = vmatprep.subr.mxu0 %v7308
      %8176 = vmatpush1.msra.mxu0 %v7307
      %8177 = vmatprep.subr.mxu0 %v7310
      %8178 = vmatpush1.msra.mxu0 %v7309
      %8179 = vmatprep.subr.mxu0 %v7312
      %8180 = vmatpush1.msra.mxu0 %v7311
      %8181 = vmatprep.subr.mxu0 %v7314
      %8182 = vmatpush1.msra.mxu0 %v7313
      %8183 = vmatprep.subr.mxu0 %v7316
      %8184 = vmatpush1.msra.mxu0 %v7315
      %8185 = vmatprep.subr.mxu0 %v7318
      %8186 = vmatpush1.msra.mxu0 %v7317
      %8187 = vmatprep.subr.mxu0 %v7320
      %8188 = vmatpush1.msra.mxu0 %v7319
      %8189 = vmatprep.subr.mxu0 %v7322
      %8190 = vmatpush1.msra.mxu0 %v7321
      %8191 = vmatprep.subr.mxu0 %v7324
      %8192 = vmatpush1.msra.mxu0 %v7323
      %8193 = vmatprep.subr.mxu0 %v7326
      %8194 = vmatpush1.msra.mxu0 %v7325
      %8195 = vmatprep.subr.mxu0 %v7328
      %8196 = vmatpush1.msra.mxu0 %v7327
      %8197 = vmatprep.subr.mxu0 %v7330
      %8198 = vmatpush1.msra.mxu0 %v7329
      %8199 = vmatprep.subr.mxu0 %v7332
      %8200 = vmatpush1.msra.mxu0 %v7331
      %8201 = vmatprep.subr.mxu0 %v7334
      %8202 = vmatpush1.msra.mxu0 %v7333
      %8203 = vmatprep.subr.mxu0 %v7336
      %8204 = vmatpush1.msra.mxu0 %v7335
      %8205 = vmatprep.subr.mxu0 %v7338
      %8206 = vmatpush1.msra.mxu0 %v7337
      %8207 = vmatprep.subr.mxu0 %v7340
      %8208 = vmatpush1.msra.mxu0 %v7339
      %8209 = vmatprep.subr.mxu0 %v7342
      %8210 = vmatpush1.msra.mxu0 %v7341
      %8211 = vmatprep.subr.mxu0 %v7344
      %8212 = vmatpush1.msra.mxu0 %v7343
      %8213 = vmatprep.subr.mxu0 %v7346
      %8214 = vmatpush1.msra.mxu0 %v7345
      %8215 = vmatprep.subr.mxu0 %v7348
      %8216 = vmatpush1.msra.mxu0 %v7347
      %8217 = vmatprep.subr.mxu0 %v7350
      %8218 = vmatpush1.msra.mxu0 %v7349
      %8219 = vmatprep.subr.mxu0 %v7352
      %8220 = vmatpush1.msra.mxu0 %v7351
      %8221 = vmatprep.subr.mxu0 %v7354
      %8222 = vmatpush1.msra.mxu0 %v7353
      %8223 = vmatprep.subr.mxu0 %v7356
      %8224 = vmatpush1.msra.mxu0 %v7355
      %8225 = vmatprep.subr.mxu0 %v7358
      %8226 = vmatpush1.msra.mxu0 %v7357
      %8227 = vmatprep.subr.mxu0 %v7360
      %8228 = vmatpush1.msra.mxu0 %v7359
      %8229 = vmatprep.subr.mxu0 %v7362
      %8230 = vmatpush1.msra.mxu0 %v7361
      %8231 = vmatprep.subr.mxu0 %v7364
      %8232 = vmatpush1.msra.mxu0 %v7363
      %8233 = vmatprep.subr.mxu0 %v7366
      %8234 = vmatpush1.msra.mxu0 %v7365
      %8235 = vmatprep.subr.mxu0 %v7368
      %8236 = vmatpush1.msra.mxu0 %v7367
      %8237 = vmatprep.mubr.f32.mxu0 %v6777
      %8238 = vmatmul.mubr.f32.gmra.mrb[0].mxu0 %v6776
      %v8239 = vpop.f32.mrb[0].mxu0
      %v8240 = vadd.f32 %v8169, %v8239
      %v8241 = vpop.f32.mrb[0].mxu0
      %v8242 = vadd.f32 %v8171, %v8241
      %8243 = vdwg.mxu0
      %8244 = vmatprep.subr.mxu0 %v7370
      %8245 = vmatpush1.msra.mxu0 %v7369
      %8246 = vmatprep.subr.mxu0 %v7372
      %8247 = vmatpush1.msra.mxu0 %v7371
      %8248 = vmatprep.subr.mxu0 %v7374
      %8249 = vmatpush1.msra.mxu0 %v7373
      %8250 = vmatprep.subr.mxu0 %v7376
      %8251 = vmatpush1.msra.mxu0 %v7375
      %8252 = vmatprep.subr.mxu0 %v7378
      %8253 = vmatpush1.msra.mxu0 %v7377
      %8254 = vmatprep.subr.mxu0 %v7380
      %8255 = vmatpush1.msra.mxu0 %v7379
      %8256 = vmatprep.subr.mxu0 %v7382
      %8257 = vmatpush1.msra.mxu0 %v7381
      %8258 = vmatprep.subr.mxu0 %v7384
      %8259 = vmatpush1.msra.mxu0 %v7383
      %8260 = vmatprep.subr.mxu0 %v7386
      %8261 = vmatpush1.msra.mxu0 %v7385
      %8262 = vmatprep.subr.mxu0 %v7388
      %8263 = vmatpush1.msra.mxu0 %v7387
      %8264 = vmatprep.subr.mxu0 %v7390
      %8265 = vmatpush1.msra.mxu0 %v7389
      %8266 = vmatprep.subr.mxu0 %v7392
      %8267 = vmatpush1.msra.mxu0 %v7391
      %8268 = vmatprep.subr.mxu0 %v7394
      %8269 = vmatpush1.msra.mxu0 %v7393
      %8270 = vmatprep.subr.mxu0 %v7396
      %8271 = vmatpush1.msra.mxu0 %v7395
      %8272 = vmatprep.subr.mxu0 %v7398
      %8273 = vmatpush1.msra.mxu0 %v7397
      %8274 = vmatprep.subr.mxu0 %v7400
      %8275 = vmatpush1.msra.mxu0 %v7399
      %8276 = vmatprep.subr.mxu0 %v7402
      %8277 = vmatpush1.msra.mxu0 %v7401
      %8278 = vmatprep.subr.mxu0 %v7404
      %8279 = vmatpush1.msra.mxu0 %v7403
      %8280 = vmatprep.subr.mxu0 %v7406
      %8281 = vmatpush1.msra.mxu0 %v7405
      %8282 = vmatprep.subr.mxu0 %v7408
      %8283 = vmatpush1.msra.mxu0 %v7407
      %8284 = vmatprep.subr.mxu0 %v7410
      %8285 = vmatpush1.msra.mxu0 %v7409
      %8286 = vmatprep.subr.mxu0 %v7412
      %8287 = vmatpush1.msra.mxu0 %v7411
      %8288 = vmatprep.subr.mxu0 %v7414
      %8289 = vmatpush1.msra.mxu0 %v7413
      %8290 = vmatprep.subr.mxu0 %v7416
      %8291 = vmatpush1.msra.mxu0 %v7415
      %8292 = vmatprep.subr.mxu0 %v7418
      %8293 = vmatpush1.msra.mxu0 %v7417
      %8294 = vmatprep.subr.mxu0 %v7420
      %8295 = vmatpush1.msra.mxu0 %v7419
      %8296 = vmatprep.subr.mxu0 %v7422
      %8297 = vmatpush1.msra.mxu0 %v7421
      %8298 = vmatprep.subr.mxu0 %v7424
      %8299 = vmatpush1.msra.mxu0 %v7423
      %8300 = vmatprep.subr.mxu0 %v7426
      %8301 = vmatpush1.msra.mxu0 %v7425
      %8302 = vmatprep.subr.mxu0 %v7428
      %8303 = vmatpush1.msra.mxu0 %v7427
      %8304 = vmatprep.subr.mxu0 %v7430
      %8305 = vmatpush1.msra.mxu0 %v7429
      %8306 = vmatprep.subr.mxu0 %v7432
      %8307 = vmatpush1.msra.mxu0 %v7431
      %8308 = vmatprep.mubr.f32.mxu0 %v6779
      %8309 = vmatmul.mubr.f32.gmra.mrb[0].mxu0 %v6778
      %v8310 = vpop.f32.mrb[0].mxu0
      %v8311 = vadd.f32 %v8240, %v8310
      %v8312 = vpop.f32.mrb[0].mxu0
      %v8313 = vadd.f32 %v8242, %v8312
      %8314 = vdwg.mxu0
      %8315 = vmatprep.subr.mxu0 %v7434
      %8316 = vmatpush1.msra.mxu0 %v7433
      %8317 = vmatprep.subr.mxu0 %v7436
      %8318 = vmatpush1.msra.mxu0 %v7435
      %8319 = vmatprep.subr.mxu0 %v7438
      %8320 = vmatpush1.msra.mxu0 %v7437
      %8321 = vmatprep.subr.mxu0 %v7440
      %8322 = vmatpush1.msra.mxu0 %v7439
      %8323 = vmatprep.subr.mxu0 %v7442
      %8324 = vmatpush1.msra.mxu0 %v7441
      %8325 = vmatprep.subr.mxu0 %v7444
      %8326 = vmatpush1.msra.mxu0 %v7443
      %8327 = vmatprep.subr.mxu0 %v7446
      %8328 = vmatpush1.msra.mxu0 %v7445
      %8329 = vmatprep.subr.mxu0 %v7448
      %8330 = vmatpush1.msra.mxu0 %v7447
      %8331 = vmatprep.subr.mxu0 %v7450
      %8332 = vmatpush1.msra.mxu0 %v7449
      %8333 = vmatprep.subr.mxu0 %v7452
      %8334 = vmatpush1.msra.mxu0 %v7451
      %8335 = vmatprep.subr.mxu0 %v7454
      %8336 = vmatpush1.msra.mxu0 %v7453
      %8337 = vmatprep.subr.mxu0 %v7456
      %8338 = vmatpush1.msra.mxu0 %v7455
      %8339 = vmatprep.subr.mxu0 %v7458
      %8340 = vmatpush1.msra.mxu0 %v7457
      %8341 = vmatprep.subr.mxu0 %v7460
      %8342 = vmatpush1.msra.mxu0 %v7459
      %8343 = vmatprep.subr.mxu0 %v7462
      %8344 = vmatpush1.msra.mxu0 %v7461
      %8345 = vmatprep.subr.mxu0 %v7464
      %8346 = vmatpush1.msra.mxu0 %v7463
      %8347 = vmatprep.subr.mxu0 %v7466
      %8348 = vmatpush1.msra.mxu0 %v7465
      %8349 = vmatprep.subr.mxu0 %v7468
      %8350 = vmatpush1.msra.mxu0 %v7467
      %8351 = vmatprep.subr.mxu0 %v7470
      %8352 = vmatpush1.msra.mxu0 %v7469
      %8353 = vmatprep.subr.mxu0 %v7472
      %8354 = vmatpush1.msra.mxu0 %v7471
      %8355 = vmatprep.subr.mxu0 %v7474
      %8356 = vmatpush1.msra.mxu0 %v7473
      %8357 = vmatprep.subr.mxu0 %v7476
      %8358 = vmatpush1.msra.mxu0 %v7475
      %8359 = vmatprep.subr.mxu0 %v7478
      %8360 = vmatpush1.msra.mxu0 %v7477
      %8361 = vmatprep.subr.mxu0 %v7480
      %8362 = vmatpush1.msra.mxu0 %v7479
      %8363 = vmatprep.subr.mxu0 %v7482
      %8364 = vmatpush1.msra.mxu0 %v7481
      %8365 = vmatprep.subr.mxu0 %v7484
      %8366 = vmatpush1.msra.mxu0 %v7483
      %8367 = vmatprep.subr.mxu0 %v7486
      %8368 = vmatpush1.msra.mxu0 %v7485
      %8369 = vmatprep.subr.mxu0 %v7488
      %8370 = vmatpush1.msra.mxu0 %v7487
      %8371 = vmatprep.subr.mxu0 %v7490
      %8372 = vmatpush1.msra.mxu0 %v7489
      %8373 = vmatprep.subr.mxu0 %v7492
      %8374 = vmatpush1.msra.mxu0 %v7491
      %8375 = vmatprep.subr.mxu0 %v7494
      %8376 = vmatpush1.msra.mxu0 %v7493
      %8377 = vmatprep.subr.mxu0 %v7496
      %8378 = vmatpush1.msra.mxu0 %v7495
      %8379 = vmatprep.mubr.f32.mxu0 %v6781
      %8380 = vmatmul.mubr.f32.gmra.mrb[0].mxu0 %v6780
      %v8381 = vpop.f32.mrb[0].mxu0
      %v8382 = vadd.f32 %v8311, %v8381
      %v8383 = vpop.f32.mrb[0].mxu0
      %v8384 = vadd.f32 %v8313, %v8383
      %8385 = vdwg.mxu0
      %8386 = vmatprep.subr.mxu0 %v7498
      %8387 = vmatpush1.msra.mxu0 %v7497
      %8388 = vmatprep.subr.mxu0 %v7500
      %8389 = vmatpush1.msra.mxu0 %v7499
      %8390 = vmatprep.subr.mxu0 %v7502
      %8391 = vmatpush1.msra.mxu0 %v7501
      %8392 = vmatprep.subr.mxu0 %v7504
      %8393 = vmatpush1.msra.mxu0 %v7503
      %8394 = vmatprep.subr.mxu0 %v7506
      %8395 = vmatpush1.msra.mxu0 %v7505
      %8396 = vmatprep.subr.mxu0 %v7508
      %8397 = vmatpush1.msra.mxu0 %v7507
      %8398 = vmatprep.subr.mxu0 %v7510
      %8399 = vmatpush1.msra.mxu0 %v7509
      %8400 = vmatprep.subr.mxu0 %v7512
      %8401 = vmatpush1.msra.mxu0 %v7511
      %8402 = vmatprep.subr.mxu0 %v7514
      %8403 = vmatpush1.msra.mxu0 %v7513
      %8404 = vmatprep.subr.mxu0 %v7516
      %8405 = vmatpush1.msra.mxu0 %v7515
      %8406 = vmatprep.subr.mxu0 %v7518
      %8407 = vmatpush1.msra.mxu0 %v7517
      %8408 = vmatprep.subr.mxu0 %v7520
      %8409 = vmatpush1.msra.mxu0 %v7519
      %8410 = vmatprep.subr.mxu0 %v7522
      %8411 = vmatpush1.msra.mxu0 %v7521
      %8412 = vmatprep.subr.mxu0 %v7524
      %8413 = vmatpush1.msra.mxu0 %v7523
      %8414 = vmatprep.subr.mxu0 %v7526
      %8415 = vmatpush1.msra.mxu0 %v7525
      %8416 = vmatprep.subr.mxu0 %v7528
      %8417 = vmatpush1.msra.mxu0 %v7527
      %8418 = vmatprep.subr.mxu0 %v7530
      %8419 = vmatpush1.msra.mxu0 %v7529
      %8420 = vmatprep.subr.mxu0 %v7532
      %8421 = vmatpush1.msra.mxu0 %v7531
      %8422 = vmatprep.subr.mxu0 %v7534
      %8423 = vmatpush1.msra.mxu0 %v7533
      %8424 = vmatprep.subr.mxu0 %v7536
      %8425 = vmatpush1.msra.mxu0 %v7535
      %8426 = vmatprep.subr.mxu0 %v7538
      %8427 = vmatpush1.msra.mxu0 %v7537
      %8428 = vmatprep.subr.mxu0 %v7540
      %8429 = vmatpush1.msra.mxu0 %v7539
      %8430 = vmatprep.subr.mxu0 %v7542
      %8431 = vmatpush1.msra.mxu0 %v7541
      %8432 = vmatprep.subr.mxu0 %v7544
      %8433 = vmatpush1.msra.mxu0 %v7543
      %8434 = vmatprep.subr.mxu0 %v7546
      %8435 = vmatpush1.msra.mxu0 %v7545
      %8436 = vmatprep.subr.mxu0 %v7548
      %8437 = vmatpush1.msra.mxu0 %v7547
      %8438 = vmatprep.subr.mxu0 %v7550
      %8439 = vmatpush1.msra.mxu0 %v7549
      %8440 = vmatprep.subr.mxu0 %v7552
      %8441 = vmatpush1.msra.mxu0 %v7551
      %8442 = vmatprep.subr.mxu0 %v7554
      %8443 = vmatpush1.msra.mxu0 %v7553
      %8444 = vmatprep.subr.mxu0 %v7556
      %8445 = vmatpush1.msra.mxu0 %v7555
      %8446 = vmatprep.subr.mxu0 %v7558
      %8447 = vmatpush1.msra.mxu0 %v7557
      %8448 = vmatprep.subr.mxu0 %v7560
      %8449 = vmatpush1.msra.mxu0 %v7559
      %8450 = vmatprep.mubr.f32.mxu0 %v6773
      %8451 = vmatmul.mubr.f32.gmra.mrb[0].mxu0 %v6782
      %v8452 = vpop.f32.mrb[0].mxu0
      %v8453 = vadd.f32 %v8382, %v8452
      %v8454 = vpop.f32.mrb[0].mxu0
      %v8455 = vadd.f32 %v8384, %v8454
      %8456 = vdwg.mxu0
      %8457 = vmatprep.subr.mxu0 %v7562
      %8458 = vmatpush1.msra.mxu0 %v7561
      %8459 = vmatprep.subr.mxu0 %v7564
      %8460 = vmatpush1.msra.mxu0 %v7563
      %8461 = vmatprep.subr.mxu0 %v7566
      %8462 = vmatpush1.msra.mxu0 %v7565
      %8463 = vmatprep.subr.mxu0 %v7568
      %8464 = vmatpush1.msra.mxu0 %v7567
      %8465 = vmatprep.subr.mxu0 %v7570
      %8466 = vmatpush1.msra.mxu0 %v7569
      %8467 = vmatprep.subr.mxu0 %v7572
      %8468 = vmatpush1.msra.mxu0 %v7571
      %8469 = vmatprep.subr.mxu0 %v7574
      %8470 = vmatpush1.msra.mxu0 %v7573
      %8471 = vmatprep.subr.mxu0 %v7576
      %8472 = vmatpush1.msra.mxu0 %v7575
      %8473 = vmatprep.subr.mxu0 %v7578
      %8474 = vmatpush1.msra.mxu0 %v7577
      %8475 = vmatprep.subr.mxu0 %v7580
      %8476 = vmatpush1.msra.mxu0 %v7579
      %8477 = vmatprep.subr.mxu0 %v7582
      %8478 = vmatpush1.msra.mxu0 %v7581
      %8479 = vmatprep.subr.mxu0 %v7584
      %8480 = vmatpush1.msra.mxu0 %v7583
      %8481 = vmatprep.subr.mxu0 %v7586
      %8482 = vmatpush1.msra.mxu0 %v7585
      %8483 = vmatprep.subr.mxu0 %v7588
      %8484 = vmatpush1.msra.mxu0 %v7587
      %8485 = vmatprep.subr.mxu0 %v7590
      %8486 = vmatpush1.msra.mxu0 %v7589
      %8487 = vmatprep.subr.mxu0 %v7592
      %8488 = vmatpush1.msra.mxu0 %v7591
      %8489 = vmatprep.subr.mxu0 0.0
      %8490 = vmatpush1.msra.mxu0 0.0
      %8491 = vmatprep.subr.mxu0 0.0
      %8492 = vmatpush1.msra.mxu0 0.0
      %8493 = vmatprep.subr.mxu0 0.0
      %8494 = vmatpush1.msra.mxu0 0.0
      %8495 = vmatprep.subr.mxu0 0.0
      %8496 = vmatpush1.msra.mxu0 0.0
      %8497 = vmatprep.subr.mxu0 0.0
      %8498 = vmatpush1.msra.mxu0 0.0
      %8499 = vmatprep.subr.mxu0 0.0
      %8500 = vmatpush1.msra.mxu0 0.0
      %8501 = vmatprep.subr.mxu0 0.0
      %8502 = vmatpush1.msra.mxu0 0.0
      %8503 = vmatprep.subr.mxu0 0.0
      %8504 = vmatpush1.msra.mxu0 0.0
      %8505 = vmatprep.subr.mxu0 0.0
      %8506 = vmatpush1.msra.mxu0 0.0
      %8507 = vmatprep.subr.mxu0 0.0
      %8508 = vmatpush1.msra.mxu0 0.0
      %8509 = vmatprep.subr.mxu0 0.0
      %8510 = vmatpush1.msra.mxu0 0.0
      %8511 = vmatprep.subr.mxu0 0.0
      %8512 = vmatpush1.msra.mxu0 0.0
      %8513 = vmatprep.subr.mxu0 0.0
      %8514 = vmatpush1.msra.mxu0 0.0
      %8515 = vmatprep.subr.mxu0 0.0
      %8516 = vmatpush1.msra.mxu0 0.0
      %8517 = vmatprep.subr.mxu0 0.0
      %8518 = vmatpush1.msra.mxu0 0.0
      %8519 = vmatprep.subr.mxu0 0.0
      %8520 = vmatpush1.msra.mxu0 0.0
      %8521 = vmatprep.mubr.f32.mxu0 0.0
      %8522 = vmatmul.mubr.f32.gmra.mrb[0].mxu0 %v6783
      %v8523 = vpop.f32.mrb[0].mxu0
      %v8524 = vadd.f32 %v8453, %v8523
      %v8525 = vpop.f32.mrb[0].mxu0
      %v8526 = vadd.f32 %v8455, %v8525
      %8527 = vdwg.mxu0
      %v8528 = vld [vmem:[%s7] sm:$0xff]
      %v8529 = vld [vmem:[%s7 + $0x8] sm:$0xff]
      %v8530 = vld [vmem:[%s7 + $0x10] sm:$0xff]
      %v8531 = vld [vmem:[%s7 + $0x18] sm:$0xff]
      %v8532 = vld [vmem:[%s7 + $0x20] sm:$0xff]
      %v8533 = vld [vmem:[%s7 + $0x28] sm:$0xff]
      %v8534 = vld [vmem:[%s7 + $0x30] sm:$0xff]
      %v8535 = vld [vmem:[%s7 + $0x38] sm:$0xff]
      %v8536 = vld [vmem:[%s7 + $0x40] sm:$0xff]
      %v8537 = vld [vmem:[%s7 + $0x48] sm:$0xff]
      %v8538 = vld [vmem:[%s7 + $0x50] sm:$0xff]
      %v8539 = vld [vmem:[%s7 + $0x58] sm:$0xff]
      %v8540 = vld [vmem:[%s7 + $0x60] sm:$0xff]
      %v8541 = vld [vmem:[%s7 + $0x68] sm:$0xff]
      %v8542 = vld [vmem:[%s7 + $0x70] sm:$0xff]
      %v8543 = vld [vmem:[%s7 + $0x78] sm:$0xff]
      %v8544 = vld [vmem:[%s7 + $0x80] sm:$0xff]
      %v8545 = vld [vmem:[%s7 + $0x88] sm:$0xff]
      %v8546 = vld [vmem:[%s7 + $0x90] sm:$0xff]
      %v8547 = vld [vmem:[%s7 + $0x98] sm:$0xff]
      %v8548 = vld [vmem:[%s7 + $0xa0] sm:$0xff]
      %v8549 = vld [vmem:[%s7 + $0xa8] sm:$0xff]
      %v8550 = vld [vmem:[%s7 + $0xb0] sm:$0xff]
      %v8551 = vld [vmem:[%s7 + $0xb8] sm:$0xff]
      %v8552 = vld [vmem:[%s7 + $0xc0] sm:$0xff]
      %v8553 = vld [vmem:[%s7 + $0xc8] sm:$0xff]
      %v8554 = vld [vmem:[%s7 + $0xd0] sm:$0xff]
      %v8555 = vld [vmem:[%s7 + $0xd8] sm:$0xff]
      %v8556 = vld [vmem:[%s7 + $0xe0] sm:$0xff]
      %v8557 = vld [vmem:[%s7 + $0xe8] sm:$0xff]
      %v8558 = vld [vmem:[%s7 + $0xf0] sm:$0xff]
      %v8559 = vld [vmem:[%s7 + $0xf8] sm:$0xff]
      %v8560 = vld [vmem:[%s8] sm:$0x1]
      %8561 = vmatprep.subr.mxu0 0.0
      %8562 = vmatpush1.msra.mxu0 %v8528
      %8563 = vmatprep.subr.mxu0 0.0
      %8564 = vmatpush1.msra.mxu0 %v8529
      %8565 = vmatprep.subr.mxu0 0.0
      %8566 = vmatpush1.msra.mxu0 %v8530
      %8567 = vmatprep.subr.mxu0 0.0
      %8568 = vmatpush1.msra.mxu0 %v8531
      %8569 = vmatprep.subr.mxu0 0.0
      %8570 = vmatpush1.msra.mxu0 %v8532
      %8571 = vmatprep.subr.mxu0 0.0
      %8572 = vmatpush1.msra.mxu0 %v8533
      %8573 = vmatprep.subr.mxu0 0.0
      %8574 = vmatpush1.msra.mxu0 %v8534
      %8575 = vmatprep.subr.mxu0 0.0
      %8576 = vmatpush1.msra.mxu0 %v8535
      %8577 = vmatprep.subr.mxu0 0.0
      %8578 = vmatpush1.msra.mxu0 %v8536
      %8579 = vmatprep.subr.mxu0 0.0
      %8580 = vmatpush1.msra.mxu0 %v8537
      %8581 = vmatprep.subr.mxu0 0.0
      %8582 = vmatpush1.msra.mxu0 %v8538
      %8583 = vmatprep.subr.mxu0 0.0
      %8584 = vmatpush1.msra.mxu0 %v8539
      %8585 = vmatprep.subr.mxu0 0.0
      %8586 = vmatpush1.msra.mxu0 %v8540
      %8587 = vmatprep.subr.mxu0 0.0
      %8588 = vmatpush1.msra.mxu0 %v8541
      %8589 = vmatprep.subr.mxu0 0.0
      %8590 = vmatpush1.msra.mxu0 %v8542
      %8591 = vmatprep.subr.mxu0 0.0
      %8592 = vmatpush1.msra.mxu0 %v8543
      %8593 = vmatprep.subr.mxu0 0.0
      %8594 = vmatpush1.msra.mxu0 %v8544
      %8595 = vmatprep.subr.mxu0 0.0
      %8596 = vmatpush1.msra.mxu0 %v8545
      %8597 = vmatprep.subr.mxu0 0.0
      %8598 = vmatpush1.msra.mxu0 %v8546
      %8599 = vmatprep.subr.mxu0 0.0
      %8600 = vmatpush1.msra.mxu0 %v8547
      %8601 = vmatprep.subr.mxu0 0.0
      %8602 = vmatpush1.msra.mxu0 %v8548
      %8603 = vmatprep.subr.mxu0 0.0
      %8604 = vmatpush1.msra.mxu0 %v8549
      %8605 = vmatprep.subr.mxu0 0.0
      %8606 = vmatpush1.msra.mxu0 %v8550
      %8607 = vmatprep.subr.mxu0 0.0
      %8608 = vmatpush1.msra.mxu0 %v8551
      %8609 = vmatprep.subr.mxu0 0.0
      %8610 = vmatpush1.msra.mxu0 %v8552
      %8611 = vmatprep.subr.mxu0 0.0
      %8612 = vmatpush1.msra.mxu0 %v8553
      %8613 = vmatprep.subr.mxu0 0.0
      %8614 = vmatpush1.msra.mxu0 %v8554
      %8615 = vmatprep.subr.mxu0 0.0
      %8616 = vmatpush1.msra.mxu0 %v8555
      %8617 = vmatprep.subr.mxu0 0.0
      %8618 = vmatpush1.msra.mxu0 %v8556
      %8619 = vmatprep.subr.mxu0 0.0
      %8620 = vmatpush1.msra.mxu0 %v8557
      %8621 = vmatprep.subr.mxu0 0.0
      %8622 = vmatpush1.msra.mxu0 %v8558
      %8623 = vmatprep.subr.mxu0 0.0
      %8624 = vmatpush1.msra.mxu0 %v8559
      %8625 = vmatprep.mubr.f32.mxu0 %v8526
      %8626 = vmatmul.mubr.f32.gmra.mrb[0].mxu0 %v8524
      %v8627 = vpop.f32.mrb[0].mxu0
      %v8628 = vadd.f32 %v8560, %v8627
      %v8629 = vpop.f32.mrb[0].mxu0
      %8630 = vdwg.mxu0
      %v8631 = vld [vmem:[%s9] sm:$0xff]
      %v8632 = vld [vmem:[%s9 + $0x8] sm:$0xff]
      %v8633 = vld [vmem:[%s9 + $0x10] sm:$0xff]
      %v8634 = vld [vmem:[%s9 + $0x18] sm:$0xff]
      %v8635 = vld [vmem:[%s9 + $0x20] sm:$0xff]
      %v8636 = vld [vmem:[%s9 + $0x28] sm:$0xff]
      %v8637 = vld [vmem:[%s9 + $0x30] sm:$0xff]
      %v8638 = vld [vmem:[%s9 + $0x38] sm:$0xff]
      %v8639 = vld [vmem:[%s9 + $0x40] sm:$0xff]
      %v8640 = vld [vmem:[%s9 + $0x48] sm:$0xff]
      %v8641 = vld [vmem:[%s9 + $0x50] sm:$0xff]
      %v8642 = vld [vmem:[%s9 + $0x58] sm:$0xff]
      %v8643 = vld [vmem:[%s9 + $0x60] sm:$0xff]
      %v8644 = vld [vmem:[%s9 + $0x68] sm:$0xff]
      %v8645 = vld [vmem:[%s9 + $0x70] sm:$0xff]
      %v8646 = vld [vmem:[%s9 + $0x78] sm:$0xff]
      %v8647 = vld [vmem:[%s10] sm:$0x1]
      %8648 = vmatprep.subr.mxu0 0.0
      %8649 = vmatpush1.msra.mxu0 %v8631
      %8650 = vmatprep.subr.mxu0 0.0
      %8651 = vmatpush1.msra.mxu0 %v8632
      %8652 = vmatprep.subr.mxu0 0.0
      %8653 = vmatpush1.msra.mxu0 %v8633
      %8654 = vmatprep.subr.mxu0 0.0
      %8655 = vmatpush1.msra.mxu0 %v8634
      %8656 = vmatprep.subr.mxu0 0.0
      %8657 = vmatpush1.msra.mxu0 %v8635
      %8658 = vmatprep.subr.mxu0 0.0
      %8659 = vmatpush1.msra.mxu0 %v8636
      %8660 = vmatprep.subr.mxu0 0.0
      %8661 = vmatpush1.msra.mxu0 %v8637
      %8662 = vmatprep.subr.mxu0 0.0
      %8663 = vmatpush1.msra.mxu0 %v8638
      %8664 = vmatprep.subr.mxu0 0.0
      %8665 = vmatpush1.msra.mxu0 %v8639
      %8666 = vmatprep.subr.mxu0 0.0
      %8667 = vmatpush1.msra.mxu0 %v8640
      %8668 = vmatprep.subr.mxu0 0.0
      %8669 = vmatpush1.msra.mxu0 %v8641
      %8670 = vmatprep.subr.mxu0 0.0
      %8671 = vmatpush1.msra.mxu0 %v8642
      %8672 = vmatprep.subr.mxu0 0.0
      %8673 = vmatpush1.msra.mxu0 %v8643
      %8674 = vmatprep.subr.mxu0 0.0
      %8675 = vmatpush1.msra.mxu0 %v8644
      %8676 = vmatprep.subr.mxu0 0.0
      %8677 = vmatpush1.msra.mxu0 %v8645
      %8678 = vmatprep.subr.mxu0 0.0
      %8679 = vmatpush1.msra.mxu0 %v8646
      %8680 = vmatprep.subr.mxu0 0.0
      %8681 = vmatpush1.msra.mxu0 0.0
      %8682 = vmatprep.subr.mxu0 0.0
      %8683 = vmatpush1.msra.mxu0 0.0
      %8684 = vmatprep.subr.mxu0 0.0
      %8685 = vmatpush1.msra.mxu0 0.0
      %8686 = vmatprep.subr.mxu0 0.0
      %8687 = vmatpush1.msra.mxu0 0.0
      %8688 = vmatprep.subr.mxu0 0.0
      %8689 = vmatpush1.msra.mxu0 0.0
      %8690 = vmatprep.subr.mxu0 0.0
      %8691 = vmatpush1.msra.mxu0 0.0
      %8692 = vmatprep.subr.mxu0 0.0
      %8693 = vmatpush1.msra.mxu0 0.0
      %8694 = vmatprep.subr.mxu0 0.0
      %8695 = vmatpush1.msra.mxu0 0.0
      %8696 = vmatprep.subr.mxu0 0.0
      %8697 = vmatpush1.msra.mxu0 0.0
      %8698 = vmatprep.subr.mxu0 0.0
      %8699 = vmatpush1.msra.mxu0 0.0
      %8700 = vmatprep.subr.mxu0 0.0
      %8701 = vmatpush1.msra.mxu0 0.0
      %8702 = vmatprep.subr.mxu0 0.0
      %8703 = vmatpush1.msra.mxu0 0.0
      %8704 = vmatprep.subr.mxu0 0.0
      %8705 = vmatpush1.msra.mxu0 0.0
      %8706 = vmatprep.subr.mxu0 0.0
      %8707 = vmatpush1.msra.mxu0 0.0
      %8708 = vmatprep.subr.mxu0 0.0
      %8709 = vmatpush1.msra.mxu0 0.0
      %8710 = vmatprep.subr.mxu0 0.0
      %8711 = vmatpush1.msra.mxu0 0.0
      %8712 = vmatprep.mubr.f32.mxu0 0.0
      %8713 = vmatmul.mubr.f32.gmra.mrb[0].mxu0 %v8628
      %v8714 = vpop.f32.mrb[0].mxu0
      %v8715 = vadd.f32 %v8647, %v8714
      %v8716 = vpop.f32.mrb[0].mxu0
      %8717 = vdwg.mxu0
      %v8718 = vlaneseq
      %v8719 = vshrl.u32 %v8718, 7
      %v8720 = vsub.s32 0, %v8719
      %v8721 = vrot.slane %v8715, %v8720
      %8722 = vst [vmem:[%s386] sm:$0xff] %v8721
      %p8723 = scmp.lt.s32.totalorder %s22, 1
      %s8724 = scalar_select %p8723, %s22, 1
      %s8725 = smul.addr %s8724, 8
      %s8726 = scalar_lea.vmem %s11, %s8725
      // Predicated region
      $region65: #{lenet5_forward.1} parent=63 // pred_check
        %p8727 = pneg %p276
      $region66: #{lenet5_forward.1} parent=63 // pred_check_branch
        %8729 = sbr.rel (%p8727) target = $region68
      $region67: #{lenet5_forward.1} parent=63 // pred_region
        _
      $region68: #{lenet5_forward.1} parent=63 // pred_fallthru
        _
    $region64: #{lenet5_forward.1} parent=5 // pred_fallthru
      _
    %p8730 = scmp.le.s32.totalorder 2, %s17
    // Predicated region
    $region69: #{lenet5_forward.1} parent=5 // pred_check
      %p8731 = pneg %p8730
    $region70: #{lenet5_forward.1} parent=5 // pred_check_branch
      %8733 = sbr.rel (%p8731) target = $region72
    $region71: #{lenet5_forward.1} parent=5 // pred_region
      %s8734 = ssub.s32 %s17, 2
      // Predicated region
      $region73: #{lenet5_forward.1} parent=71 // pred_check
        %p8735 = pneg %p282
      $region74: #{lenet5_forward.1} parent=71 // pred_check_branch
        %8737 = sbr.rel (%p8735) target = $region76
      $region75: #{lenet5_forward.1} parent=71 // pred_region
        %p8738 = scmp.lt.s32.totalorder %s23, 1
        %s8739 = scalar_select %p8738, %s23, 1
        %s8740 = smul.addr %s8739, 8
        %s8741 = scalar_lea.vmem %s11, %s8740
      $region76: #{lenet5_forward.1} parent=71 // pred_fallthru
        _
    $region72: #{lenet5_forward.1} parent=5 // pred_fallthru
      _
  $region6: #{lenet5_forward.1} parent=0 // loop_footer
    %s21 = sadd.s32 1, %s17
  $region7: #{lenet5_forward.1} parent=0 // loop_footer_branch
    %16 = sbr.rel target = $region3
  $region8: #{lenet5_forward.1} parent=0 // loop_exit
    _

</llo_original>
